<compile_context>
chip_gen: v6e
topology: v6e:2x2x1
jax: 0.10.0
libtpu: 0.0.40
codegen_flags: <defaults>
</compile_context>

<pallas_src>
import numpy as np
import jax
import jax.numpy as jnp
from jax.experimental import pallas as pl
from jax.experimental.pallas import tpu as pltpu

INPUT_MEAN = jnp.array([0.2788, 0.2657, 0.2629], dtype=jnp.float32)
INPUT_STD = jnp.array([0.2064, 0.1944, 0.2252], dtype=jnp.float32)
BN_EPS = 1e-5
N_WAYPOINTS = 3
K1_PAD = 256      # layer-1 im2col K = 9*9*3 = 243, zero-padded to 256
HEAD_PAD = 128    # head output 2*n_waypoints = 6, zero-padded to 128 lanes

# Static geometry for a 32x32 input (spec shapes): per-image rows per layer.
ROWS_L2_IN = 16 * 16   # layer-1 output / layer-2 input pixels per image
O2 = 8 * 8             # layer-2 output pixels per image
O3 = 4 * 4             # layer-3 output pixels per image
O4 = 2 * 2             # layer-4 output pixels per image
O4_PAD = 8             # padded per-tap row stride for layer 4 (8-aligned)


# ----------------------------------------------------------------------------
# Fused Pallas kernel
# ----------------------------------------------------------------------------
def _cnn_fused_kernel(patches_ref, w1_ref, b1_ref,
                      g2_ref, w2_ref, b2_ref,
                      g3_ref, w3_ref, b3_ref,
                      g4_ref, w4_ref, b4_ref,
                      w5_ref, b5_ref, out_ref):
    f32 = jnp.float32
    batch = out_ref.shape[0]

    # ---- Layer 1 (whole batch at once): im2col patches @ BN-folded weights.
    x = jnp.dot(patches_ref[...], w1_ref[...], preferred_element_type=f32)
    x = jnp.maximum(x + b1_ref[...], 0.0)                   # (B*256, 64)

    # bf16-stored gathers / weights: one f32 upcast each, reused per image.
    g2 = g2_ref[...].astype(f32)
    w2 = w2_ref[...].astype(f32)
    g3 = g3_ref[...].astype(f32)
    w3 = w3_ref[...].astype(f32)
    g4 = g4_ref[...].astype(f32)
    w4 = w4_ref[...].astype(f32)

    ys = []
    for b in range(batch):
        xb = x[b * ROWS_L2_IN:(b + 1) * ROWS_L2_IN, :]      # (256, 64)

        # -- Layer 2 (Cin=64, not lane-aligned): gather + 9 per-tap dots,
        #    pure dot-accumulate chain, bias added once at the end.
        p = jnp.dot(g2, xb, preferred_element_type=f32)     # (9*64, 64)
        acc = jnp.dot(p[0:O2, :], w2[0], preferred_element_type=f32)
        for t in range(1, 9):
            acc = acc + jnp.dot(p[t * O2:(t + 1) * O2, :], w2[t],
                                preferred_element_type=f32)
        xb = jnp.maximum(acc + b2_ref[...], 0.0)            # (64, 128)

        # -- Layer 3 (Cin=128 lane-aligned): one long-K matmul per image.
        p = jnp.dot(g3, xb, preferred_element_type=f32)     # (9*16, 128)
        pw = jnp.concatenate([p[t * O3:(t + 1) * O3, :] for t in range(9)],
                             axis=1)                        # (16, 9*128)
        xb = jnp.maximum(jnp.dot(pw, w3, preferred_element_type=f32)
                         + b3_ref[...], 0.0)                # (16, 256)

        # -- Layer 4 (Cin=256): gather rows padded 4->8 per tap so every
        #    slice stays 8-aligned, then one long-K matmul per image.
        p = jnp.dot(g4, xb, preferred_element_type=f32)     # (9*8, 256)
        pw = jnp.concatenate([p[t * O4_PAD:(t + 1) * O4_PAD, :]
                              for t in range(9)], axis=1)   # (8, 9*256)
        y = jnp.maximum(jnp.dot(pw, w4, preferred_element_type=f32)
                        + b4_ref[...], 0.0)                 # (8, 512), rows 4..7 pad
        ys.append(y)

    # ---- AdaptiveAvgPool2d(1): in-kernel pooling matrix (no HBM operand)
    # selects the 4 real rows of each image's 8-row block and averages them.
    y_all = jnp.concatenate(ys, axis=0)                     # (B*8, 512)
    row_i = jax.lax.broadcasted_iota(jnp.int32, (batch, batch * O4_PAD), 0)
    col_i = jax.lax.broadcasted_iota(jnp.int32, (batch, batch * O4_PAD), 1)
    in_blk = (col_i >= row_i * O4_PAD) & (col_i < row_i * O4_PAD + O4)
    m_pool = jnp.where(in_blk, 1.0 / O4, 0.0).astype(f32)   # (B, B*8)
    feat = jnp.dot(m_pool, y_all, preferred_element_type=f32)   # (B, 512)

    # ---- Head: 1x1 conv, output padded 6 -> 128 lanes (lane-dense store).
    out_ref[...] = (jnp.dot(feat, w5_ref[...].astype(f32),
                            preferred_element_type=f32) + b5_ref[...])


def _full_block(a):
    ndim = a.ndim

    def index_map(i):
        return (0,) * ndim

    return pl.BlockSpec(a.shape, index_map)


def cnn_planner_pallas(patches, p):
    operands = (patches, p["w1"], p["b1"],
                p["g2"], p["w2"], p["b2"],
                p["g3"], p["w3"], p["b3"],
                p["g4"], p["w4"], p["b4"],
                p["w5"], p["b5"])
    batch = patches.shape[0] // ROWS_L2_IN
    n_out = p["w5"].shape[1]
    return pl.pallas_call(
        _cnn_fused_kernel,
        out_shape=jax.ShapeDtypeStruct((batch, n_out), jnp.float32),
        grid_spec=pltpu.PrefetchScalarGridSpec(
            num_scalar_prefetch=0,
            grid=(1,),
            in_specs=[_full_block(a) for a in operands],
            out_specs=pl.BlockSpec((batch, n_out), lambda i: (0, 0)),
        ),
        compiler_params=pltpu.CompilerParams(
            dimension_semantics=("arbitrary",),
            # bf16 operands (~4 MB, double-buffered ~8 MB) + hoisted f32
            # upcasts (~7 MB) + activations: ~16 MB peak; 28 MiB leaves
            # headroom and stays well under v7x's 64 MiB physical VMEM.
            vmem_limit_bytes=28 * 1024 * 1024),
    )(*operands)


# ----------------------------------------------------------------------------
# Wrapper-side glue (tiny XLA prologue: normalize + layer-1 im2col)
# ----------------------------------------------------------------------------
def extract_patches(x_nhwc, k, stride, pad, k_cols_pad=None):
    B, H, W, C = x_nhwc.shape
    xp = jnp.pad(x_nhwc, ((0, 0), (pad, pad), (pad, pad), (0, 0)))
    OH = (H + 2 * pad - k) // stride + 1
    OW = (W + 2 * pad - k) // stride + 1
    cols = []
    for ki in range(k):
        for kj in range(k):
            sl = jax.lax.slice(
                xp,
                (0, ki, kj, 0),
                (B, ki + (OH - 1) * stride + 1, kj + (OW - 1) * stride + 1, C),
                (1, stride, stride, 1),
            )  # (B, OH, OW, C)
            cols.append(sl)
    patches = jnp.stack(cols, axis=3).reshape(B * OH * OW, k * k * C)
    if k_cols_pad is not None and k_cols_pad > k * k * C:
        patches = jnp.pad(patches, ((0, 0), (0, k_cols_pad - k * k * C)))
    return patches, OH, OW


def cnn_planner_forward(image_nchw, p, n_waypoints=N_WAYPOINTS):
    batch = image_nchw.shape[0]
    assert image_nchw.shape[1:] == (3, 32, 32), "folded geometry assumes 3x32x32"
    # Normalize BEFORE zero padding / im2col (pad ring must be zero in the
    # normalized domain, exactly like the PyTorch module).
    x = (image_nchw - INPUT_MEAN[None, :, None, None]) / \
        INPUT_STD[None, :, None, None]
    x = jnp.transpose(x, (0, 2, 3, 1))                        # NCHW -> NHWC
    patches, _, _ = extract_patches(x, k=9, stride=2, pad=4,
                                    k_cols_pad=K1_PAD)        # (B*256, 256)
    out = cnn_planner_pallas(patches, p)                      # (B, 128)
    return out[:, :2 * n_waypoints].reshape(batch, n_waypoints, 2)


# ----------------------------------------------------------------------------
# Parameters (deterministic synthetic; BN in eval mode with running stats)
# ----------------------------------------------------------------------------
def init_raw_params(key, n_waypoints=N_WAYPOINTS):
    ks = jax.random.split(key, 32)
    it = iter(range(32))

    def conv_w(cout, cin, ksz):
        fan_in = cin * ksz * ksz
        return jax.random.normal(ks[next(it)], (cout, cin, ksz, ksz),
                                 jnp.float32) * jnp.sqrt(2.0 / fan_in)

    def conv_b(cout):
        return 0.01 * jax.random.normal(ks[next(it)], (cout,), jnp.float32)

    def bn(c):
        gamma = 1.0 + 0.1 * jax.random.normal(ks[next(it)], (c,), jnp.float32)
        beta = 0.05 * jax.random.normal(ks[next(it)], (c,), jnp.float32)
        rmean = 0.02 * jax.random.normal(ks[next(it)], (c,), jnp.float32)
        rvar = 1.0 + 0.1 * jax.random.uniform(ks[next(it)], (c,), jnp.float32)
        return gamma, beta, rmean, rvar

    raw = {"convs": []}
    cfg = [(64, 3, 9, 2, 4), (128, 64, 3, 2, 1),
           (256, 128, 3, 2, 1), (512, 256, 3, 2, 1)]
    for (cout, cin, ksz, stride, pad) in cfg:
        raw["convs"].append(dict(w=conv_w(cout, cin, ksz), b=conv_b(cout),
                                 bn=bn(cout), k=ksz, stride=stride, pad=pad))
    raw["w5"] = conv_w(2 * n_waypoints, 512, 1)   # (6, 512, 1, 1)
    raw["b5"] = conv_b(2 * n_waypoints)
    return raw


def _gather_matrix_image(h, w, rows_per_tap=None):
    """Per-image 0/1 gather matrix for a 3x3 / stride-2 / pad-1 conv.
    Rows = (tap, out_pixel) patch slots (optionally padded to rows_per_tap per
    tap for 8-aligned in-kernel slicing), cols = h*w input pixels of ONE
    image.  All-zero rows implement the zero padding.  Values are exactly
    0/1, so bf16 storage is bit-exact."""
    oh, ow = h // 2, w // 2
    rpt = oh * ow if rows_per_tap is None else rows_per_tap
    g = np.zeros((9, rpt, h * w), np.float32)
    for r in range(oh):
        for c in range(ow):
            mo = r * ow + c
            for ki in range(3):
                for kj in range(3):
                    hh, ww = 2 * r - 1 + ki, 2 * c - 1 + kj
                    if 0 <= hh < h and 0 <= ww < w:
                        g[ki * 3 + kj, mo, hh * w + ww] = 1.0
    return jnp.asarray(g.reshape(9 * rpt, h * w), dtype=jnp.bfloat16)


def fold_params(raw, n_waypoints=N_WAYPOINTS):
    """Fold conv bias + eval-mode BN into (weights, bias); build per-image
    gather matrices.  Large constants are stored bf16 (upcast in-kernel)."""
    p = {}
    geom = [(32, 32), (16, 16), (8, 8), (4, 4)]     # input dims of each conv
    for li, conv in enumerate(raw["convs"]):
        wt, cb = conv["w"], conv["b"]
        gamma, beta, rmean, rvar = conv["bn"]
        scale = gamma / jnp.sqrt(rvar + BN_EPS)
        bias = (beta + (cb - rmean) * scale).reshape(1, -1).astype(jnp.float32)
        cout, cin, kh, kw = wt.shape
        # (Cout, Cin, kh, kw) -> (kh, kw, Cin, Cout), BN scale folded in.
        w_taps = jnp.transpose(wt, (2, 3, 1, 0)) * scale[None, None, None, :]
        if li == 0:
            w_mat = w_taps.reshape(kh * kw * cin, cout)          # (243, 64)
            w_mat = jnp.pad(w_mat, ((0, K1_PAD - w_mat.shape[0]), (0, 0)))
            p["w1"], p["b1"] = w_mat.astype(jnp.float32), bias
        else:
            h, w = geom[li]
            rows_per_tap = O4_PAD if li == 3 else None
            p[f"g{li + 1}"] = _gather_matrix_image(h, w, rows_per_tap)
            if li == 1:
                # layer 2: per-tap weights (Cin=64 not lane-aligned)
                p["w2"] = w_taps.reshape(kh * kw, cin, cout).astype(jnp.bfloat16)
            else:
                # layers 3/4: one (9*Cin, Cout) matrix for the long-K dot
                p[f"w{li + 1}"] = w_taps.reshape(kh * kw * cin,
                                                 cout).astype(jnp.bfloat16)
            p[f"b{li + 1}"] = bias
    # Head: 1x1 conv, output padded 6 -> 128 lanes.
    w5 = raw["w5"][:, :, 0, 0].T                                 # (512, 6)
    p["w5"] = jnp.pad(w5, ((0, 0), (0, HEAD_PAD - w5.shape[1]))).astype(
        jnp.bfloat16)
    p["b5"] = jnp.pad(raw["b5"].reshape(1, -1),
                      ((0, 0), (0, HEAD_PAD - w5.shape[1]))).astype(jnp.float32)
    return p


# ----------------------------------------------------------------------------
# Pure-JAX reference mirroring the PyTorch module (eval-mode BN)
# ----------------------------------------------------------------------------
def reference_forward(image_nchw, raw, n_waypoints=N_WAYPOINTS):
    x = (image_nchw - INPUT_MEAN[None, :, None, None]) / \
        INPUT_STD[None, :, None, None]
    for c in raw["convs"]:
        y = jax.lax.conv_general_dilated(
            x, c["w"], (c["stride"], c["stride"]),
            ((c["pad"], c["pad"]), (c["pad"], c["pad"])),
            dimension_numbers=("NCHW", "OIHW", "NCHW"),
            precision=jax.lax.Precision.HIGHEST)
        y = y + c["b"][None, :, None, None]
        gamma, beta, rmean, rvar = c["bn"]
        y = gamma[None, :, None, None] * (y - rmean[None, :, None, None]) / \
            jnp.sqrt(rvar[None, :, None, None] + BN_EPS) + \
            beta[None, :, None, None]
        x = jnp.maximum(y, 0.0)
    y = jax.lax.conv_general_dilated(
        x, raw["w5"], (1, 1), ((0, 0), (0, 0)),
        dimension_numbers=("NCHW", "OIHW", "NCHW"),
        precision=jax.lax.Precision.HIGHEST)
    y = y + raw["b5"][None, :, None, None]
    y = jnp.mean(y, axis=(2, 3))            # AdaptiveAvgPool2d(1) + Flatten
    return y.reshape(-1, n_waypoints, 2)


# ----------------------------------------------------------------------------
if __name__ == "__main__":
    key = jax.random.PRNGKey(0)
    pkey, xkey = jax.random.split(key)
    raw = init_raw_params(pkey)

    batch, height, width = 2, 32, 32
    # image in [0, 1], NCHW like the PyTorch module
    image = jax.random.uniform(xkey, (batch, 3, height, width),
                               dtype=jnp.float32)

    folded = fold_params(raw)

    fwd = jax.jit(cnn_planner_forward)
    out = jax.block_until_ready(fwd(image, folded))
    ref = jax.block_until_ready(reference_forward(image, raw))

    assert out.shape == (batch, N_WAYPOINTS, 2), out.shape
    assert bool(jnp.all(jnp.isfinite(out)))
    # All matmul math stays f32; the only deliberate rounding is bf16 storage
    # of the folded weights (~1e-3 relative), far inside the 3e-2 budget that
    # also absorbs reduced-precision f32 MXU passes on some generations.
    max_err = float(jnp.max(jnp.abs(out - ref)))
    assert jnp.allclose(out, ref, atol=3e-2, rtol=3e-2), max_err
    print("KERNEL_OK")
</pallas_src>

<mosaic_0001>
module attributes {stable_mosaic.version = 11 : i64} {
  func.func @_cnn_fused_kernel(%arg0: i32, %arg1: memref<512x256xf32, #tpu.memory_space<vmem>>, %arg2: memref<256x64xf32, #tpu.memory_space<vmem>>, %arg3: memref<1x64xf32, #tpu.memory_space<vmem>>, %arg4: memref<576x256xbf16, #tpu.memory_space<vmem>>, %arg5: memref<9x64x128xbf16, #tpu.memory_space<vmem>>, %arg6: memref<1x128xf32, #tpu.memory_space<vmem>>, %arg7: memref<144x64xbf16, #tpu.memory_space<vmem>>, %arg8: memref<1152x256xbf16, #tpu.memory_space<vmem>>, %arg9: memref<1x256xf32, #tpu.memory_space<vmem>>, %arg10: memref<72x16xbf16, #tpu.memory_space<vmem>>, %arg11: memref<2304x512xbf16, #tpu.memory_space<vmem>>, %arg12: memref<1x512xf32, #tpu.memory_space<vmem>>, %arg13: memref<512x128xbf16, #tpu.memory_space<vmem>>, %arg14: memref<1x128xf32, #tpu.memory_space<vmem>>, %arg15: memref<2x128xf32, #tpu.memory_space<vmem>>) attributes {dimension_semantics = [#tpu.dimension_semantics<arbitrary>], iteration_bounds = array<i64: 1>, scalar_prefetch = 0 : i64, scratch_operands = 0 : i64, tpu.core_type = #tpu.core_type<tc>, window_params = [{pipeline_mode = #tpu.pipeline_mode<synchronous>, transform_indices = @transform_0, window_bounds = array<i64: 512, 256>}, {pipeline_mode = #tpu.pipeline_mode<synchronous>, transform_indices = @transform_1, window_bounds = array<i64: 256, 64>}, {pipeline_mode = #tpu.pipeline_mode<synchronous>, transform_indices = @transform_2, window_bounds = array<i64: 1, 64>}, {pipeline_mode = #tpu.pipeline_mode<synchronous>, transform_indices = @transform_3, window_bounds = array<i64: 576, 256>}, {pipeline_mode = #tpu.pipeline_mode<synchronous>, transform_indices = @transform_4, window_bounds = array<i64: 9, 64, 128>}, {pipeline_mode = #tpu.pipeline_mode<synchronous>, transform_indices = @transform_5, window_bounds = array<i64: 1, 128>}, {pipeline_mode = #tpu.pipeline_mode<synchronous>, transform_indices = @transform_6, window_bounds = array<i64: 144, 64>}, {pipeline_mode = #tpu.pipeline_mode<synchronous>, transform_indices = @transform_7, window_bounds = array<i64: 1152, 256>}, {pipeline_mode = #tpu.pipeline_mode<synchronous>, transform_indices = @transform_8, window_bounds = array<i64: 1, 256>}, {pipeline_mode = #tpu.pipeline_mode<synchronous>, transform_indices = @transform_9, window_bounds = array<i64: 72, 16>}, {pipeline_mode = #tpu.pipeline_mode<synchronous>, transform_indices = @transform_10, window_bounds = array<i64: 2304, 512>}, {pipeline_mode = #tpu.pipeline_mode<synchronous>, transform_indices = @transform_11, window_bounds = array<i64: 1, 512>}, {pipeline_mode = #tpu.pipeline_mode<synchronous>, transform_indices = @transform_12, window_bounds = array<i64: 512, 128>}, {pipeline_mode = #tpu.pipeline_mode<synchronous>, transform_indices = @transform_13, window_bounds = array<i64: 1, 128>}, {pipeline_mode = #tpu.pipeline_mode<synchronous>, transform_indices = @transform_14, window_bounds = array<i64: 2, 128>}]} {
    %c0 = arith.constant 0 : index
    %c0_0 = arith.constant 0 : index
    %0 = vector.load %arg1[%c0, %c0_0] : memref<512x256xf32, #tpu.memory_space<vmem>>, vector<512x256xf32>
    %c0_1 = arith.constant 0 : index
    %c0_2 = arith.constant 0 : index
    %1 = vector.load %arg2[%c0_1, %c0_2] : memref<256x64xf32, #tpu.memory_space<vmem>>, vector<256x64xf32>
    %cst = arith.constant dense<0.000000e+00> : vector<512x64xf32>
    %2 = tpu.matmul %0, %1, %cst {dimension_numbers = #tpu.dot_dimension_numbers<[1], [0], [0], [1], [0, 0, 1, 1], [], []>} : vector<512x256xf32>, vector<256x64xf32>, vector<512x64xf32> -> vector<512x64xf32>
    %c0_3 = arith.constant 0 : index
    %c0_4 = arith.constant 0 : index
    %3 = vector.load %arg3[%c0_3, %c0_4] : memref<1x64xf32, #tpu.memory_space<vmem>>, vector<1x64xf32>
    %4 = vector.broadcast %3 : vector<1x64xf32> to vector<512x64xf32>
    %5 = arith.addf %2, %4 : vector<512x64xf32>
    %cst_5 = arith.constant 0.000000e+00 : f32
    %6 = vector.broadcast %cst_5 : f32 to vector<512x64xf32>
    %7 = arith.maximumf %5, %6 : vector<512x64xf32>
    %c0_6 = arith.constant 0 : index
    %c0_7 = arith.constant 0 : index
    %8 = vector.load %arg4[%c0_6, %c0_7] : memref<576x256xbf16, #tpu.memory_space<vmem>>, vector<576x256xbf16>
    %9 = arith.extf %8 : vector<576x256xbf16> to vector<576x256xf32>
    %c0_8 = arith.constant 0 : index
    %c0_9 = arith.constant 0 : index
    %c0_10 = arith.constant 0 : index
    %10 = vector.load %arg5[%c0_8, %c0_9, %c0_10] : memref<9x64x128xbf16, #tpu.memory_space<vmem>>, vector<9x64x128xbf16>
    %11 = arith.extf %10 : vector<9x64x128xbf16> to vector<9x64x128xf32>
    %c0_11 = arith.constant 0 : index
    %c0_12 = arith.constant 0 : index
    %12 = vector.load %arg7[%c0_11, %c0_12] : memref<144x64xbf16, #tpu.memory_space<vmem>>, vector<144x64xbf16>
    %13 = arith.extf %12 : vector<144x64xbf16> to vector<144x64xf32>
    %c0_13 = arith.constant 0 : index
    %c0_14 = arith.constant 0 : index
    %14 = vector.load %arg8[%c0_13, %c0_14] : memref<1152x256xbf16, #tpu.memory_space<vmem>>, vector<1152x256xbf16>
    %15 = arith.extf %14 : vector<1152x256xbf16> to vector<1152x256xf32>
    %c0_15 = arith.constant 0 : index
    %c0_16 = arith.constant 0 : index
    %16 = vector.load %arg10[%c0_15, %c0_16] : memref<72x16xbf16, #tpu.memory_space<vmem>>, vector<72x16xbf16>
    %17 = arith.extf %16 : vector<72x16xbf16> to vector<72x16xf32>
    %c0_17 = arith.constant 0 : index
    %c0_18 = arith.constant 0 : index
    %18 = vector.load %arg11[%c0_17, %c0_18] : memref<2304x512xbf16, #tpu.memory_space<vmem>>, vector<2304x512xbf16>
    %19 = arith.extf %18 : vector<2304x512xbf16> to vector<2304x512xf32>
    %20 = vector.extract_strided_slice %7 {offsets = [0, 0], sizes = [256, 64], strides = [1, 1]} : vector<512x64xf32> to vector<256x64xf32>
    %cst_19 = arith.constant dense<0.000000e+00> : vector<576x64xf32>
    %21 = tpu.matmul %9, %20, %cst_19 {dimension_numbers = #tpu.dot_dimension_numbers<[1], [0], [0], [1], [0, 0, 1, 1], [], []>} : vector<576x256xf32>, vector<256x64xf32>, vector<576x64xf32> -> vector<576x64xf32>
    %22 = vector.extract_strided_slice %21 {offsets = [0, 0], sizes = [64, 64], strides = [1, 1]} : vector<576x64xf32> to vector<64x64xf32>
    %23 = vector.extract_strided_slice %11 {offsets = [0, 0, 0], sizes = [1, 64, 128], strides = [1, 1, 1]} : vector<9x64x128xf32> to vector<1x64x128xf32>
    %24 = vector.shape_cast %23 : vector<1x64x128xf32> to vector<64x128xf32>
    %cst_20 = arith.constant dense<0.000000e+00> : vector<64x128xf32>
    %25 = tpu.matmul %22, %24, %cst_20 {dimension_numbers = #tpu.dot_dimension_numbers<[1], [0], [0], [1], [0, 0, 1, 1], [], []>} : vector<64x64xf32>, vector<64x128xf32>, vector<64x128xf32> -> vector<64x128xf32>
    %26 = vector.extract_strided_slice %21 {offsets = [64, 0], sizes = [64, 64], strides = [1, 1]} : vector<576x64xf32> to vector<64x64xf32>
    %27 = vector.extract_strided_slice %11 {offsets = [1, 0, 0], sizes = [1, 64, 128], strides = [1, 1, 1]} : vector<9x64x128xf32> to vector<1x64x128xf32>
    %28 = vector.shape_cast %27 : vector<1x64x128xf32> to vector<64x128xf32>
    %cst_21 = arith.constant dense<0.000000e+00> : vector<64x128xf32>
    %29 = tpu.matmul %26, %28, %cst_21 {dimension_numbers = #tpu.dot_dimension_numbers<[1], [0], [0], [1], [0, 0, 1, 1], [], []>} : vector<64x64xf32>, vector<64x128xf32>, vector<64x128xf32> -> vector<64x128xf32>
    %30 = arith.addf %25, %29 : vector<64x128xf32>
    %31 = vector.extract_strided_slice %21 {offsets = [128, 0], sizes = [64, 64], strides = [1, 1]} : vector<576x64xf32> to vector<64x64xf32>
    %32 = vector.extract_strided_slice %11 {offsets = [2, 0, 0], sizes = [1, 64, 128], strides = [1, 1, 1]} : vector<9x64x128xf32> to vector<1x64x128xf32>
    %33 = vector.shape_cast %32 : vector<1x64x128xf32> to vector<64x128xf32>
    %cst_22 = arith.constant dense<0.000000e+00> : vector<64x128xf32>
    %34 = tpu.matmul %31, %33, %cst_22 {dimension_numbers = #tpu.dot_dimension_numbers<[1], [0], [0], [1], [0, 0, 1, 1], [], []>} : vector<64x64xf32>, vector<64x128xf32>, vector<64x128xf32> -> vector<64x128xf32>
    %35 = arith.addf %30, %34 : vector<64x128xf32>
    %36 = vector.extract_strided_slice %21 {offsets = [192, 0], sizes = [64, 64], strides = [1, 1]} : vector<576x64xf32> to vector<64x64xf32>
    %37 = vector.extract_strided_slice %11 {offsets = [3, 0, 0], sizes = [1, 64, 128], strides = [1, 1, 1]} : vector<9x64x128xf32> to vector<1x64x128xf32>
    %38 = vector.shape_cast %37 : vector<1x64x128xf32> to vector<64x128xf32>
    %cst_23 = arith.constant dense<0.000000e+00> : vector<64x128xf32>
    %39 = tpu.matmul %36, %38, %cst_23 {dimension_numbers = #tpu.dot_dimension_numbers<[1], [0], [0], [1], [0, 0, 1, 1], [], []>} : vector<64x64xf32>, vector<64x128xf32>, vector<64x128xf32> -> vector<64x128xf32>
    %40 = arith.addf %35, %39 : vector<64x128xf32>
    %41 = vector.extract_strided_slice %21 {offsets = [256, 0], sizes = [64, 64], strides = [1, 1]} : vector<576x64xf32> to vector<64x64xf32>
    %42 = vector.extract_strided_slice %11 {offsets = [4, 0, 0], sizes = [1, 64, 128], strides = [1, 1, 1]} : vector<9x64x128xf32> to vector<1x64x128xf32>
    %43 = vector.shape_cast %42 : vector<1x64x128xf32> to vector<64x128xf32>
    %cst_24 = arith.constant dense<0.000000e+00> : vector<64x128xf32>
    %44 = tpu.matmul %41, %43, %cst_24 {dimension_numbers = #tpu.dot_dimension_numbers<[1], [0], [0], [1], [0, 0, 1, 1], [], []>} : vector<64x64xf32>, vector<64x128xf32>, vector<64x128xf32> -> vector<64x128xf32>
    %45 = arith.addf %40, %44 : vector<64x128xf32>
    %46 = vector.extract_strided_slice %21 {offsets = [320, 0], sizes = [64, 64], strides = [1, 1]} : vector<576x64xf32> to vector<64x64xf32>
    %47 = vector.extract_strided_slice %11 {offsets = [5, 0, 0], sizes = [1, 64, 128], strides = [1, 1, 1]} : vector<9x64x128xf32> to vector<1x64x128xf32>
    %48 = vector.shape_cast %47 : vector<1x64x128xf32> to vector<64x128xf32>
    %cst_25 = arith.constant dense<0.000000e+00> : vector<64x128xf32>
    %49 = tpu.matmul %46, %48, %cst_25 {dimension_numbers = #tpu.dot_dimension_numbers<[1], [0], [0], [1], [0, 0, 1, 1], [], []>} : vector<64x64xf32>, vector<64x128xf32>, vector<64x128xf32> -> vector<64x128xf32>
    %50 = arith.addf %45, %49 : vector<64x128xf32>
    %51 = vector.extract_strided_slice %21 {offsets = [384, 0], sizes = [64, 64], strides = [1, 1]} : vector<576x64xf32> to vector<64x64xf32>
    %52 = vector.extract_strided_slice %11 {offsets = [6, 0, 0], sizes = [1, 64, 128], strides = [1, 1, 1]} : vector<9x64x128xf32> to vector<1x64x128xf32>
    %53 = vector.shape_cast %52 : vector<1x64x128xf32> to vector<64x128xf32>
    %cst_26 = arith.constant dense<0.000000e+00> : vector<64x128xf32>
    %54 = tpu.matmul %51, %53, %cst_26 {dimension_numbers = #tpu.dot_dimension_numbers<[1], [0], [0], [1], [0, 0, 1, 1], [], []>} : vector<64x64xf32>, vector<64x128xf32>, vector<64x128xf32> -> vector<64x128xf32>
    %55 = arith.addf %50, %54 : vector<64x128xf32>
    %56 = vector.extract_strided_slice %21 {offsets = [448, 0], sizes = [64, 64], strides = [1, 1]} : vector<576x64xf32> to vector<64x64xf32>
    %57 = vector.extract_strided_slice %11 {offsets = [7, 0, 0], sizes = [1, 64, 128], strides = [1, 1, 1]} : vector<9x64x128xf32> to vector<1x64x128xf32>
    %58 = vector.shape_cast %57 : vector<1x64x128xf32> to vector<64x128xf32>
    %cst_27 = arith.constant dense<0.000000e+00> : vector<64x128xf32>
    %59 = tpu.matmul %56, %58, %cst_27 {dimension_numbers = #tpu.dot_dimension_numbers<[1], [0], [0], [1], [0, 0, 1, 1], [], []>} : vector<64x64xf32>, vector<64x128xf32>, vector<64x128xf32> -> vector<64x128xf32>
    %60 = arith.addf %55, %59 : vector<64x128xf32>
    %61 = vector.extract_strided_slice %21 {offsets = [512, 0], sizes = [64, 64], strides = [1, 1]} : vector<576x64xf32> to vector<64x64xf32>
    %62 = vector.extract_strided_slice %11 {offsets = [8, 0, 0], sizes = [1, 64, 128], strides = [1, 1, 1]} : vector<9x64x128xf32> to vector<1x64x128xf32>
    %63 = vector.shape_cast %62 : vector<1x64x128xf32> to vector<64x128xf32>
    %cst_28 = arith.constant dense<0.000000e+00> : vector<64x128xf32>
    %64 = tpu.matmul %61, %63, %cst_28 {dimension_numbers = #tpu.dot_dimension_numbers<[1], [0], [0], [1], [0, 0, 1, 1], [], []>} : vector<64x64xf32>, vector<64x128xf32>, vector<64x128xf32> -> vector<64x128xf32>
    %65 = arith.addf %60, %64 : vector<64x128xf32>
    %c0_29 = arith.constant 0 : index
    %c0_30 = arith.constant 0 : index
    %66 = vector.load %arg6[%c0_29, %c0_30] : memref<1x128xf32, #tpu.memory_space<vmem>>, vector<1x128xf32>
    %67 = vector.broadcast %66 : vector<1x128xf32> to vector<64x128xf32>
    %68 = arith.addf %65, %67 : vector<64x128xf32>
    %cst_31 = arith.constant 0.000000e+00 : f32
    %69 = vector.broadcast %cst_31 : f32 to vector<64x128xf32>
    %70 = arith.maximumf %68, %69 : vector<64x128xf32>
    %cst_32 = arith.constant dense<0.000000e+00> : vector<144x128xf32>
    %71 = tpu.matmul %13, %70, %cst_32 {dimension_numbers = #tpu.dot_dimension_numbers<[1], [0], [0], [1], [0, 0, 1, 1], [], []>} : vector<144x64xf32>, vector<64x128xf32>, vector<144x128xf32> -> vector<144x128xf32>
    %72 = vector.extract_strided_slice %71 {offsets = [0, 0], sizes = [16, 128], strides = [1, 1]} : vector<144x128xf32> to vector<16x128xf32>
    %73 = vector.extract_strided_slice %71 {offsets = [16, 0], sizes = [16, 128], strides = [1, 1]} : vector<144x128xf32> to vector<16x128xf32>
    %74 = vector.extract_strided_slice %71 {offsets = [32, 0], sizes = [16, 128], strides = [1, 1]} : vector<144x128xf32> to vector<16x128xf32>
    %75 = vector.extract_strided_slice %71 {offsets = [48, 0], sizes = [16, 128], strides = [1, 1]} : vector<144x128xf32> to vector<16x128xf32>
    %76 = vector.extract_strided_slice %71 {offsets = [64, 0], sizes = [16, 128], strides = [1, 1]} : vector<144x128xf32> to vector<16x128xf32>
    %77 = vector.extract_strided_slice %71 {offsets = [80, 0], sizes = [16, 128], strides = [1, 1]} : vector<144x128xf32> to vector<16x128xf32>
    %78 = vector.extract_strided_slice %71 {offsets = [96, 0], sizes = [16, 128], strides = [1, 1]} : vector<144x128xf32> to vector<16x128xf32>
    %79 = vector.extract_strided_slice %71 {offsets = [112, 0], sizes = [16, 128], strides = [1, 1]} : vector<144x128xf32> to vector<16x128xf32>
    %80 = vector.extract_strided_slice %71 {offsets = [128, 0], sizes = [16, 128], strides = [1, 1]} : vector<144x128xf32> to vector<16x128xf32>
    %81 = tpu.concatenate %72, %73, %74, %75, %76, %77, %78, %79, %80 in 1 : vector<16x128xf32>, vector<16x128xf32>, vector<16x128xf32>, vector<16x128xf32>, vector<16x128xf32>, vector<16x128xf32>, vector<16x128xf32>, vector<16x128xf32>, vector<16x128xf32> -> vector<16x1152xf32>
    %cst_33 = arith.constant dense<0.000000e+00> : vector<16x256xf32>
    %82 = tpu.matmul %81, %15, %cst_33 {dimension_numbers = #tpu.dot_dimension_numbers<[1], [0], [0], [1], [0, 0, 1, 1], [], []>} : vector<16x1152xf32>, vector<1152x256xf32>, vector<16x256xf32> -> vector<16x256xf32>
    %c0_34 = arith.constant 0 : index
    %c0_35 = arith.constant 0 : index
    %83 = vector.load %arg9[%c0_34, %c0_35] : memref<1x256xf32, #tpu.memory_space<vmem>>, vector<1x256xf32>
    %84 = vector.broadcast %83 : vector<1x256xf32> to vector<16x256xf32>
    %85 = arith.addf %82, %84 : vector<16x256xf32>
    %cst_36 = arith.constant 0.000000e+00 : f32
    %86 = vector.broadcast %cst_36 : f32 to vector<16x256xf32>
    %87 = arith.maximumf %85, %86 : vector<16x256xf32>
    %cst_37 = arith.constant dense<0.000000e+00> : vector<72x256xf32>
    %88 = tpu.matmul %17, %87, %cst_37 {dimension_numbers = #tpu.dot_dimension_numbers<[1], [0], [0], [1], [0, 0, 1, 1], [], []>} : vector<72x16xf32>, vector<16x256xf32>, vector<72x256xf32> -> vector<72x256xf32>
    %89 = vector.extract_strided_slice %88 {offsets = [0, 0], sizes = [8, 256], strides = [1, 1]} : vector<72x256xf32> to vector<8x256xf32>
    %90 = vector.extract_strided_slice %88 {offsets = [8, 0], sizes = [8, 256], strides = [1, 1]} : vector<72x256xf32> to vector<8x256xf32>
    %91 = vector.extract_strided_slice %88 {offsets = [16, 0], sizes = [8, 256], strides = [1, 1]} : vector<72x256xf32> to vector<8x256xf32>
    %92 = vector.extract_strided_slice %88 {offsets = [24, 0], sizes = [8, 256], strides = [1, 1]} : vector<72x256xf32> to vector<8x256xf32>
    %93 = vector.extract_strided_slice %88 {offsets = [32, 0], sizes = [8, 256], strides = [1, 1]} : vector<72x256xf32> to vector<8x256xf32>
    %94 = vector.extract_strided_slice %88 {offsets = [40, 0], sizes = [8, 256], strides = [1, 1]} : vector<72x256xf32> to vector<8x256xf32>
    %95 = vector.extract_strided_slice %88 {offsets = [48, 0], sizes = [8, 256], strides = [1, 1]} : vector<72x256xf32> to vector<8x256xf32>
    %96 = vector.extract_strided_slice %88 {offsets = [56, 0], sizes = [8, 256], strides = [1, 1]} : vector<72x256xf32> to vector<8x256xf32>
    %97 = vector.extract_strided_slice %88 {offsets = [64, 0], sizes = [8, 256], strides = [1, 1]} : vector<72x256xf32> to vector<8x256xf32>
    %98 = tpu.concatenate %89, %90, %91, %92, %93, %94, %95, %96, %97 in 1 : vector<8x256xf32>, vector<8x256xf32>, vector<8x256xf32>, vector<8x256xf32>, vector<8x256xf32>, vector<8x256xf32>, vector<8x256xf32>, vector<8x256xf32>, vector<8x256xf32> -> vector<8x2304xf32>
    %cst_38 = arith.constant dense<0.000000e+00> : vector<8x512xf32>
    %99 = tpu.matmul %98, %19, %cst_38 {dimension_numbers = #tpu.dot_dimension_numbers<[1], [0], [0], [1], [0, 0, 1, 1], [], []>} : vector<8x2304xf32>, vector<2304x512xf32>, vector<8x512xf32> -> vector<8x512xf32>
    %c0_39 = arith.constant 0 : index
    %c0_40 = arith.constant 0 : index
    %100 = vector.load %arg12[%c0_39, %c0_40] : memref<1x512xf32, #tpu.memory_space<vmem>>, vector<1x512xf32>
    %101 = vector.broadcast %100 : vector<1x512xf32> to vector<8x512xf32>
    %102 = arith.addf %99, %101 : vector<8x512xf32>
    %cst_41 = arith.constant 0.000000e+00 : f32
    %103 = vector.broadcast %cst_41 : f32 to vector<8x512xf32>
    %104 = arith.maximumf %102, %103 : vector<8x512xf32>
    %105 = vector.extract_strided_slice %7 {offsets = [256, 0], sizes = [256, 64], strides = [1, 1]} : vector<512x64xf32> to vector<256x64xf32>
    %cst_42 = arith.constant dense<0.000000e+00> : vector<576x64xf32>
    %106 = tpu.matmul %9, %105, %cst_42 {dimension_numbers = #tpu.dot_dimension_numbers<[1], [0], [0], [1], [0, 0, 1, 1], [], []>} : vector<576x256xf32>, vector<256x64xf32>, vector<576x64xf32> -> vector<576x64xf32>
    %107 = vector.extract_strided_slice %106 {offsets = [0, 0], sizes = [64, 64], strides = [1, 1]} : vector<576x64xf32> to vector<64x64xf32>
    %108 = vector.extract_strided_slice %11 {offsets = [0, 0, 0], sizes = [1, 64, 128], strides = [1, 1, 1]} : vector<9x64x128xf32> to vector<1x64x128xf32>
    %109 = vector.shape_cast %108 : vector<1x64x128xf32> to vector<64x128xf32>
    %cst_43 = arith.constant dense<0.000000e+00> : vector<64x128xf32>
    %110 = tpu.matmul %107, %109, %cst_43 {dimension_numbers = #tpu.dot_dimension_numbers<[1], [0], [0], [1], [0, 0, 1, 1], [], []>} : vector<64x64xf32>, vector<64x128xf32>, vector<64x128xf32> -> vector<64x128xf32>
    %111 = vector.extract_strided_slice %106 {offsets = [64, 0], sizes = [64, 64], strides = [1, 1]} : vector<576x64xf32> to vector<64x64xf32>
    %112 = vector.extract_strided_slice %11 {offsets = [1, 0, 0], sizes = [1, 64, 128], strides = [1, 1, 1]} : vector<9x64x128xf32> to vector<1x64x128xf32>
    %113 = vector.shape_cast %112 : vector<1x64x128xf32> to vector<64x128xf32>
    %cst_44 = arith.constant dense<0.000000e+00> : vector<64x128xf32>
    %114 = tpu.matmul %111, %113, %cst_44 {dimension_numbers = #tpu.dot_dimension_numbers<[1], [0], [0], [1], [0, 0, 1, 1], [], []>} : vector<64x64xf32>, vector<64x128xf32>, vector<64x128xf32> -> vector<64x128xf32>
    %115 = arith.addf %110, %114 : vector<64x128xf32>
    %116 = vector.extract_strided_slice %106 {offsets = [128, 0], sizes = [64, 64], strides = [1, 1]} : vector<576x64xf32> to vector<64x64xf32>
    %117 = vector.extract_strided_slice %11 {offsets = [2, 0, 0], sizes = [1, 64, 128], strides = [1, 1, 1]} : vector<9x64x128xf32> to vector<1x64x128xf32>
    %118 = vector.shape_cast %117 : vector<1x64x128xf32> to vector<64x128xf32>
    %cst_45 = arith.constant dense<0.000000e+00> : vector<64x128xf32>
    %119 = tpu.matmul %116, %118, %cst_45 {dimension_numbers = #tpu.dot_dimension_numbers<[1], [0], [0], [1], [0, 0, 1, 1], [], []>} : vector<64x64xf32>, vector<64x128xf32>, vector<64x128xf32> -> vector<64x128xf32>
    %120 = arith.addf %115, %119 : vector<64x128xf32>
    %121 = vector.extract_strided_slice %106 {offsets = [192, 0], sizes = [64, 64], strides = [1, 1]} : vector<576x64xf32> to vector<64x64xf32>
    %122 = vector.extract_strided_slice %11 {offsets = [3, 0, 0], sizes = [1, 64, 128], strides = [1, 1, 1]} : vector<9x64x128xf32> to vector<1x64x128xf32>
    %123 = vector.shape_cast %122 : vector<1x64x128xf32> to vector<64x128xf32>
    %cst_46 = arith.constant dense<0.000000e+00> : vector<64x128xf32>
    %124 = tpu.matmul %121, %123, %cst_46 {dimension_numbers = #tpu.dot_dimension_numbers<[1], [0], [0], [1], [0, 0, 1, 1], [], []>} : vector<64x64xf32>, vector<64x128xf32>, vector<64x128xf32> -> vector<64x128xf32>
    %125 = arith.addf %120, %124 : vector<64x128xf32>
    %126 = vector.extract_strided_slice %106 {offsets = [256, 0], sizes = [64, 64], strides = [1, 1]} : vector<576x64xf32> to vector<64x64xf32>
    %127 = vector.extract_strided_slice %11 {offsets = [4, 0, 0], sizes = [1, 64, 128], strides = [1, 1, 1]} : vector<9x64x128xf32> to vector<1x64x128xf32>
    %128 = vector.shape_cast %127 : vector<1x64x128xf32> to vector<64x128xf32>
    %cst_47 = arith.constant dense<0.000000e+00> : vector<64x128xf32>
    %129 = tpu.matmul %126, %128, %cst_47 {dimension_numbers = #tpu.dot_dimension_numbers<[1], [0], [0], [1], [0, 0, 1, 1], [], []>} : vector<64x64xf32>, vector<64x128xf32>, vector<64x128xf32> -> vector<64x128xf32>
    %130 = arith.addf %125, %129 : vector<64x128xf32>
    %131 = vector.extract_strided_slice %106 {offsets = [320, 0], sizes = [64, 64], strides = [1, 1]} : vector<576x64xf32> to vector<64x64xf32>
    %132 = vector.extract_strided_slice %11 {offsets = [5, 0, 0], sizes = [1, 64, 128], strides = [1, 1, 1]} : vector<9x64x128xf32> to vector<1x64x128xf32>
    %133 = vector.shape_cast %132 : vector<1x64x128xf32> to vector<64x128xf32>
    %cst_48 = arith.constant dense<0.000000e+00> : vector<64x128xf32>
    %134 = tpu.matmul %131, %133, %cst_48 {dimension_numbers = #tpu.dot_dimension_numbers<[1], [0], [0], [1], [0, 0, 1, 1], [], []>} : vector<64x64xf32>, vector<64x128xf32>, vector<64x128xf32> -> vector<64x128xf32>
    %135 = arith.addf %130, %134 : vector<64x128xf32>
    %136 = vector.extract_strided_slice %106 {offsets = [384, 0], sizes = [64, 64], strides = [1, 1]} : vector<576x64xf32> to vector<64x64xf32>
    %137 = vector.extract_strided_slice %11 {offsets = [6, 0, 0], sizes = [1, 64, 128], strides = [1, 1, 1]} : vector<9x64x128xf32> to vector<1x64x128xf32>
    %138 = vector.shape_cast %137 : vector<1x64x128xf32> to vector<64x128xf32>
    %cst_49 = arith.constant dense<0.000000e+00> : vector<64x128xf32>
    %139 = tpu.matmul %136, %138, %cst_49 {dimension_numbers = #tpu.dot_dimension_numbers<[1], [0], [0], [1], [0, 0, 1, 1], [], []>} : vector<64x64xf32>, vector<64x128xf32>, vector<64x128xf32> -> vector<64x128xf32>
    %140 = arith.addf %135, %139 : vector<64x128xf32>
    %141 = vector.extract_strided_slice %106 {offsets = [448, 0], sizes = [64, 64], strides = [1, 1]} : vector<576x64xf32> to vector<64x64xf32>
    %142 = vector.extract_strided_slice %11 {offsets = [7, 0, 0], sizes = [1, 64, 128], strides = [1, 1, 1]} : vector<9x64x128xf32> to vector<1x64x128xf32>
    %143 = vector.shape_cast %142 : vector<1x64x128xf32> to vector<64x128xf32>
    %cst_50 = arith.constant dense<0.000000e+00> : vector<64x128xf32>
    %144 = tpu.matmul %141, %143, %cst_50 {dimension_numbers = #tpu.dot_dimension_numbers<[1], [0], [0], [1], [0, 0, 1, 1], [], []>} : vector<64x64xf32>, vector<64x128xf32>, vector<64x128xf32> -> vector<64x128xf32>
    %145 = arith.addf %140, %144 : vector<64x128xf32>
    %146 = vector.extract_strided_slice %106 {offsets = [512, 0], sizes = [64, 64], strides = [1, 1]} : vector<576x64xf32> to vector<64x64xf32>
    %147 = vector.extract_strided_slice %11 {offsets = [8, 0, 0], sizes = [1, 64, 128], strides = [1, 1, 1]} : vector<9x64x128xf32> to vector<1x64x128xf32>
    %148 = vector.shape_cast %147 : vector<1x64x128xf32> to vector<64x128xf32>
    %cst_51 = arith.constant dense<0.000000e+00> : vector<64x128xf32>
    %149 = tpu.matmul %146, %148, %cst_51 {dimension_numbers = #tpu.dot_dimension_numbers<[1], [0], [0], [1], [0, 0, 1, 1], [], []>} : vector<64x64xf32>, vector<64x128xf32>, vector<64x128xf32> -> vector<64x128xf32>
    %150 = arith.addf %145, %149 : vector<64x128xf32>
    %c0_52 = arith.constant 0 : index
    %c0_53 = arith.constant 0 : index
    %151 = vector.load %arg6[%c0_52, %c0_53] : memref<1x128xf32, #tpu.memory_space<vmem>>, vector<1x128xf32>
    %152 = vector.broadcast %151 : vector<1x128xf32> to vector<64x128xf32>
    %153 = arith.addf %150, %152 : vector<64x128xf32>
    %cst_54 = arith.constant 0.000000e+00 : f32
    %154 = vector.broadcast %cst_54 : f32 to vector<64x128xf32>
    %155 = arith.maximumf %153, %154 : vector<64x128xf32>
    %cst_55 = arith.constant dense<0.000000e+00> : vector<144x128xf32>
    %156 = tpu.matmul %13, %155, %cst_55 {dimension_numbers = #tpu.dot_dimension_numbers<[1], [0], [0], [1], [0, 0, 1, 1], [], []>} : vector<144x64xf32>, vector<64x128xf32>, vector<144x128xf32> -> vector<144x128xf32>
    %157 = vector.extract_strided_slice %156 {offsets = [0, 0], sizes = [16, 128], strides = [1, 1]} : vector<144x128xf32> to vector<16x128xf32>
    %158 = vector.extract_strided_slice %156 {offsets = [16, 0], sizes = [16, 128], strides = [1, 1]} : vector<144x128xf32> to vector<16x128xf32>
    %159 = vector.extract_strided_slice %156 {offsets = [32, 0], sizes = [16, 128], strides = [1, 1]} : vector<144x128xf32> to vector<16x128xf32>
    %160 = vector.extract_strided_slice %156 {offsets = [48, 0], sizes = [16, 128], strides = [1, 1]} : vector<144x128xf32> to vector<16x128xf32>
    %161 = vector.extract_strided_slice %156 {offsets = [64, 0], sizes = [16, 128], strides = [1, 1]} : vector<144x128xf32> to vector<16x128xf32>
    %162 = vector.extract_strided_slice %156 {offsets = [80, 0], sizes = [16, 128], strides = [1, 1]} : vector<144x128xf32> to vector<16x128xf32>
    %163 = vector.extract_strided_slice %156 {offsets = [96, 0], sizes = [16, 128], strides = [1, 1]} : vector<144x128xf32> to vector<16x128xf32>
    %164 = vector.extract_strided_slice %156 {offsets = [112, 0], sizes = [16, 128], strides = [1, 1]} : vector<144x128xf32> to vector<16x128xf32>
    %165 = vector.extract_strided_slice %156 {offsets = [128, 0], sizes = [16, 128], strides = [1, 1]} : vector<144x128xf32> to vector<16x128xf32>
    %166 = tpu.concatenate %157, %158, %159, %160, %161, %162, %163, %164, %165 in 1 : vector<16x128xf32>, vector<16x128xf32>, vector<16x128xf32>, vector<16x128xf32>, vector<16x128xf32>, vector<16x128xf32>, vector<16x128xf32>, vector<16x128xf32>, vector<16x128xf32> -> vector<16x1152xf32>
    %cst_56 = arith.constant dense<0.000000e+00> : vector<16x256xf32>
    %167 = tpu.matmul %166, %15, %cst_56 {dimension_numbers = #tpu.dot_dimension_numbers<[1], [0], [0], [1], [0, 0, 1, 1], [], []>} : vector<16x1152xf32>, vector<1152x256xf32>, vector<16x256xf32> -> vector<16x256xf32>
    %c0_57 = arith.constant 0 : index
    %c0_58 = arith.constant 0 : index
    %168 = vector.load %arg9[%c0_57, %c0_58] : memref<1x256xf32, #tpu.memory_space<vmem>>, vector<1x256xf32>
    %169 = vector.broadcast %168 : vector<1x256xf32> to vector<16x256xf32>
    %170 = arith.addf %167, %169 : vector<16x256xf32>
    %cst_59 = arith.constant 0.000000e+00 : f32
    %171 = vector.broadcast %cst_59 : f32 to vector<16x256xf32>
    %172 = arith.maximumf %170, %171 : vector<16x256xf32>
    %cst_60 = arith.constant dense<0.000000e+00> : vector<72x256xf32>
    %173 = tpu.matmul %17, %172, %cst_60 {dimension_numbers = #tpu.dot_dimension_numbers<[1], [0], [0], [1], [0, 0, 1, 1], [], []>} : vector<72x16xf32>, vector<16x256xf32>, vector<72x256xf32> -> vector<72x256xf32>
    %174 = vector.extract_strided_slice %173 {offsets = [0, 0], sizes = [8, 256], strides = [1, 1]} : vector<72x256xf32> to vector<8x256xf32>
    %175 = vector.extract_strided_slice %173 {offsets = [8, 0], sizes = [8, 256], strides = [1, 1]} : vector<72x256xf32> to vector<8x256xf32>
    %176 = vector.extract_strided_slice %173 {offsets = [16, 0], sizes = [8, 256], strides = [1, 1]} : vector<72x256xf32> to vector<8x256xf32>
    %177 = vector.extract_strided_slice %173 {offsets = [24, 0], sizes = [8, 256], strides = [1, 1]} : vector<72x256xf32> to vector<8x256xf32>
    %178 = vector.extract_strided_slice %173 {offsets = [32, 0], sizes = [8, 256], strides = [1, 1]} : vector<72x256xf32> to vector<8x256xf32>
    %179 = vector.extract_strided_slice %173 {offsets = [40, 0], sizes = [8, 256], strides = [1, 1]} : vector<72x256xf32> to vector<8x256xf32>
    %180 = vector.extract_strided_slice %173 {offsets = [48, 0], sizes = [8, 256], strides = [1, 1]} : vector<72x256xf32> to vector<8x256xf32>
    %181 = vector.extract_strided_slice %173 {offsets = [56, 0], sizes = [8, 256], strides = [1, 1]} : vector<72x256xf32> to vector<8x256xf32>
    %182 = vector.extract_strided_slice %173 {offsets = [64, 0], sizes = [8, 256], strides = [1, 1]} : vector<72x256xf32> to vector<8x256xf32>
    %183 = tpu.concatenate %174, %175, %176, %177, %178, %179, %180, %181, %182 in 1 : vector<8x256xf32>, vector<8x256xf32>, vector<8x256xf32>, vector<8x256xf32>, vector<8x256xf32>, vector<8x256xf32>, vector<8x256xf32>, vector<8x256xf32>, vector<8x256xf32> -> vector<8x2304xf32>
    %cst_61 = arith.constant dense<0.000000e+00> : vector<8x512xf32>
    %184 = tpu.matmul %183, %19, %cst_61 {dimension_numbers = #tpu.dot_dimension_numbers<[1], [0], [0], [1], [0, 0, 1, 1], [], []>} : vector<8x2304xf32>, vector<2304x512xf32>, vector<8x512xf32> -> vector<8x512xf32>
    %c0_62 = arith.constant 0 : index
    %c0_63 = arith.constant 0 : index
    %185 = vector.load %arg12[%c0_62, %c0_63] : memref<1x512xf32, #tpu.memory_space<vmem>>, vector<1x512xf32>
    %186 = vector.broadcast %185 : vector<1x512xf32> to vector<8x512xf32>
    %187 = arith.addf %184, %186 : vector<8x512xf32>
    %cst_64 = arith.constant 0.000000e+00 : f32
    %188 = vector.broadcast %cst_64 : f32 to vector<8x512xf32>
    %189 = arith.maximumf %187, %188 : vector<8x512xf32>
    %190 = tpu.concatenate %104, %189 in 0 : vector<8x512xf32>, vector<8x512xf32> -> vector<16x512xf32>
    %191 = tpu.iota {dimensions = array<i32: 0>} : vector<2x16xi32>
    %192 = tpu.iota {dimensions = array<i32: 1>} : vector<2x16xi32>
    %c8_i32 = arith.constant 8 : i32
    %193 = vector.broadcast %c8_i32 : i32 to vector<2x16xi32>
    %194 = arith.muli %191, %193 : vector<2x16xi32>
    %195 = arith.cmpi sge, %192, %194 : vector<2x16xi32>
    %c8_i32_65 = arith.constant 8 : i32
    %196 = vector.broadcast %c8_i32_65 : i32 to vector<2x16xi32>
    %197 = arith.muli %191, %196 : vector<2x16xi32>
    %c4_i32 = arith.constant 4 : i32
    %198 = vector.broadcast %c4_i32 : i32 to vector<2x16xi32>
    %199 = arith.addi %197, %198 : vector<2x16xi32>
    %200 = arith.cmpi slt, %192, %199 : vector<2x16xi32>
    %201 = arith.andi %195, %200 : vector<2x16xi1>
    %cst_66 = arith.constant 2.500000e-01 : f32
    %cst_67 = arith.constant 0.000000e+00 : f32
    %202 = vector.broadcast %cst_66 : f32 to vector<2x16xf32>
    %203 = vector.broadcast %cst_67 : f32 to vector<2x16xf32>
    %204 = arith.select %201, %202, %203 : vector<2x16xi1>, vector<2x16xf32>
    %cst_68 = arith.constant dense<0.000000e+00> : vector<2x512xf32>
    %205 = tpu.matmul %204, %190, %cst_68 {dimension_numbers = #tpu.dot_dimension_numbers<[1], [0], [0], [1], [0, 0, 1, 1], [], []>} : vector<2x16xf32>, vector<16x512xf32>, vector<2x512xf32> -> vector<2x512xf32>
    %c0_69 = arith.constant 0 : index
    %c0_70 = arith.constant 0 : index
    %206 = vector.load %arg13[%c0_69, %c0_70] : memref<512x128xbf16, #tpu.memory_space<vmem>>, vector<512x128xbf16>
    %207 = arith.extf %206 : vector<512x128xbf16> to vector<512x128xf32>
    %cst_71 = arith.constant dense<0.000000e+00> : vector<2x128xf32>
    %208 = tpu.matmul %205, %207, %cst_71 {dimension_numbers = #tpu.dot_dimension_numbers<[1], [0], [0], [1], [0, 0, 1, 1], [], []>} : vector<2x512xf32>, vector<512x128xf32>, vector<2x128xf32> -> vector<2x128xf32>
    %c0_72 = arith.constant 0 : index
    %c0_73 = arith.constant 0 : index
    %209 = vector.load %arg14[%c0_72, %c0_73] : memref<1x128xf32, #tpu.memory_space<vmem>>, vector<1x128xf32>
    %210 = vector.broadcast %209 : vector<1x128xf32> to vector<2x128xf32>
    %211 = arith.addf %208, %210 : vector<2x128xf32>
    %c0_74 = arith.constant 0 : index
    %c0_75 = arith.constant 0 : index
    %212 = vector.load %arg15[%c0_74, %c0_75] : memref<2x128xf32, #tpu.memory_space<vmem>>, vector<2x128xf32>
    tpu.vector_store %arg15[%c0_74, %c0_75], %211 {strides = array<i32>} : memref<2x128xf32, #tpu.memory_space<vmem>>, vector<2x128xf32>,
    return
  }
  func.func @transform_0(%arg0: i32) -> (i32, i32) {
    %c0_i32 = arith.constant 0 : i32
    %c0_i32_0 = arith.constant 0 : i32
    %c0_i32_1 = arith.constant 0 : i32
    return %c0_i32, %c0_i32_0 : i32, i32
  }
  func.func @transform_1(%arg0: i32) -> (i32, i32) {
    %c0_i32 = arith.constant 0 : i32
    %c0_i32_0 = arith.constant 0 : i32
    %c0_i32_1 = arith.constant 0 : i32
    return %c0_i32, %c0_i32_0 : i32, i32
  }
  func.func @transform_2(%arg0: i32) -> (i32, i32) {
    %c0_i32 = arith.constant 0 : i32
    %c0_i32_0 = arith.constant 0 : i32
    %c0_i32_1 = arith.constant 0 : i32
    return %c0_i32, %c0_i32_0 : i32, i32
  }
  func.func @transform_3(%arg0: i32) -> (i32, i32) {
    %c0_i32 = arith.constant 0 : i32
    %c0_i32_0 = arith.constant 0 : i32
    %c0_i32_1 = arith.constant 0 : i32
    return %c0_i32, %c0_i32_0 : i32, i32
  }
  func.func @transform_4(%arg0: i32) -> (i32, i32, i32) {
    %c0_i32 = arith.constant 0 : i32
    %c0_i32_0 = arith.constant 0 : i32
    %c0_i32_1 = arith.constant 0 : i32
    %c0_i32_2 = arith.constant 0 : i32
    return %c0_i32, %c0_i32_0, %c0_i32_1 : i32, i32, i32
  }
  func.func @transform_5(%arg0: i32) -> (i32, i32) {
    %c0_i32 = arith.constant 0 : i32
    %c0_i32_0 = arith.constant 0 : i32
    %c0_i32_1 = arith.constant 0 : i32
    return %c0_i32, %c0_i32_0 : i32, i32
  }
  func.func @transform_6(%arg0: i32) -> (i32, i32) {
    %c0_i32 = arith.constant 0 : i32
    %c0_i32_0 = arith.constant 0 : i32
    %c0_i32_1 = arith.constant 0 : i32
    return %c0_i32, %c0_i32_0 : i32, i32
  }
  func.func @transform_7(%arg0: i32) -> (i32, i32) {
    %c0_i32 = arith.constant 0 : i32
    %c0_i32_0 = arith.constant 0 : i32
    %c0_i32_1 = arith.constant 0 : i32
    return %c0_i32, %c0_i32_0 : i32, i32
  }
  func.func @transform_8(%arg0: i32) -> (i32, i32) {
    %c0_i32 = arith.constant 0 : i32
    %c0_i32_0 = arith.constant 0 : i32
    %c0_i32_1 = arith.constant 0 : i32
    return %c0_i32, %c0_i32_0 : i32, i32
  }
  func.func @transform_9(%arg0: i32) -> (i32, i32) {
    %c0_i32 = arith.constant 0 : i32
    %c0_i32_0 = arith.constant 0 : i32
    %c0_i32_1 = arith.constant 0 : i32
    return %c0_i32, %c0_i32_0 : i32, i32
  }
  func.func @transform_10(%arg0: i32) -> (i32, i32) {
    %c0_i32 = arith.constant 0 : i32
    %c0_i32_0 = arith.constant 0 : i32
    %c0_i32_1 = arith.constant 0 : i32
    return %c0_i32, %c0_i32_0 : i32, i32
  }
  func.func @transform_11(%arg0: i32) -> (i32, i32) {
    %c0_i32 = arith.constant 0 : i32
    %c0_i32_0 = arith.constant 0 : i32
    %c0_i32_1 = arith.constant 0 : i32
    return %c0_i32, %c0_i32_0 : i32, i32
  }
  func.func @transform_12(%arg0: i32) -> (i32, i32) {
    %c0_i32 = arith.constant 0 : i32
    %c0_i32_0 = arith.constant 0 : i32
    %c0_i32_1 = arith.constant 0 : i32
    return %c0_i32, %c0_i32_0 : i32, i32
  }
  func.func @transform_13(%arg0: i32) -> (i32, i32) {
    %c0_i32 = arith.constant 0 : i32
    %c0_i32_0 = arith.constant 0 : i32
    %c0_i32_1 = arith.constant 0 : i32
    return %c0_i32, %c0_i32_0 : i32, i32
  }
  func.func @transform_14(%arg0: i32) -> (i32, i32) {
    %c0_i32 = arith.constant 0 : i32
    %c0_i32_0 = arith.constant 0 : i32
    %c0_i32_1 = arith.constant 0 : i32
    return %c0_i32, %c0_i32_0 : i32, i32
  }
}

</mosaic_0001>

<llo_original>
// kernel: cnn_planner_forward.1
$region0: #{cnn_planner_forward.1}
  #allocation0 [shape = 'u32[]', space=smem, size = 0x4, offset = 0x4, fixed_abs, tag = 'smem constant byte address 0x4 - core index']
  #allocation1 [shape = 'u32[144,128]{1,0:T(1,128)}', space=vmem, size = 0x12000, scoped, tag = 'internal scratch']
  %s0 = inlined_call_operand.vmem [shape: f32[512,256], index: 0, kind: input, shape index: {}]
  %s1 = inlined_call_operand.vmem [shape: f32[256,64], index: 1, kind: input, shape index: {}]
  %s2 = inlined_call_operand.vmem [shape: f32[1,64], index: 2, kind: input, shape index: {}]
  %s3 = inlined_call_operand.vmem [shape: bf16[576,256], index: 3, kind: input, shape index: {}]
  %s4 = inlined_call_operand.vmem [shape: bf16[9,64,128], index: 4, kind: input, shape index: {}]
  %s5 = inlined_call_operand.vmem [shape: f32[1,128], index: 5, kind: input, shape index: {}]
  %s6 = inlined_call_operand.vmem [shape: bf16[144,64], index: 6, kind: input, shape index: {}]
  %s7 = inlined_call_operand.vmem [shape: bf16[1152,256], index: 7, kind: input, shape index: {}]
  %s8 = inlined_call_operand.vmem [shape: f32[1,256], index: 8, kind: input, shape index: {}]
  %s9 = inlined_call_operand.vmem [shape: bf16[72,16], index: 9, kind: input, shape index: {}]
  %s10 = inlined_call_operand.vmem [shape: bf16[2304,512], index: 10, kind: input, shape index: {}]
  %s11 = inlined_call_operand.vmem [shape: f32[1,512], index: 11, kind: input, shape index: {}]
  %s12 = inlined_call_operand.vmem [shape: bf16[512,128], index: 12, kind: input, shape index: {}]
  %s13 = inlined_call_operand.vmem [shape: f32[1,128], index: 13, kind: input, shape index: {}]
  %s14 = inlined_call_operand.vmem [shape: f32[2,128], index: 14, kind: output, shape index: {}]
  %s15 = sld [smem:[#allocation0]]
  $region66: #{cnn_planner_forward.1} parent=0
    _
  %s17 = ssub.s32 1, %s15
  %s18 = scalar_select 0, %s17, %s15
  // Predicated region
  $region2: #{cnn_planner_forward.1} parent=0 // pred_check
    _
  $region3: #{cnn_planner_forward.1} parent=0 // pred_check_branch
    %20 = sbr.rel (0) target = $region5
  $region4: #{cnn_planner_forward.1} parent=0 // pred_region
    _
  $region5: #{cnn_planner_forward.1} parent=0 // pred_fallthru
    _
  // Predicated region
  $region6: #{cnn_planner_forward.1} parent=0 // pred_check
    _
  $region7: #{cnn_planner_forward.1} parent=0 // pred_check_branch
    %22 = sbr.rel (0) target = $region9
  $region8: #{cnn_planner_forward.1} parent=0 // pred_region
    _
  $region9: #{cnn_planner_forward.1} parent=0 // pred_fallthru
    _
  // Predicated region
  $region10: #{cnn_planner_forward.1} parent=0 // pred_check
    _
  $region11: #{cnn_planner_forward.1} parent=0 // pred_check_branch
    %24 = sbr.rel (0) target = $region13
  $region12: #{cnn_planner_forward.1} parent=0 // pred_region
    _
  $region13: #{cnn_planner_forward.1} parent=0 // pred_fallthru
    _
  // Predicated region
  $region14: #{cnn_planner_forward.1} parent=0 // pred_check
    _
  $region15: #{cnn_planner_forward.1} parent=0 // pred_check_branch
    %26 = sbr.rel (0) target = $region17
  $region16: #{cnn_planner_forward.1} parent=0 // pred_region
    _
  $region17: #{cnn_planner_forward.1} parent=0 // pred_fallthru
    _
  // Predicated region
  $region18: #{cnn_planner_forward.1} parent=0 // pred_check
    _
  $region19: #{cnn_planner_forward.1} parent=0 // pred_check_branch
    %28 = sbr.rel (0) target = $region21
  $region20: #{cnn_planner_forward.1} parent=0 // pred_region
    _
  $region21: #{cnn_planner_forward.1} parent=0 // pred_fallthru
    _
  // Predicated region
  $region22: #{cnn_planner_forward.1} parent=0 // pred_check
    _
  $region23: #{cnn_planner_forward.1} parent=0 // pred_check_branch
    %30 = sbr.rel (0) target = $region25
  $region24: #{cnn_planner_forward.1} parent=0 // pred_region
    _
  $region25: #{cnn_planner_forward.1} parent=0 // pred_fallthru
    _
  // Predicated region
  $region26: #{cnn_planner_forward.1} parent=0 // pred_check
    _
  $region27: #{cnn_planner_forward.1} parent=0 // pred_check_branch
    %32 = sbr.rel (0) target = $region29
  $region28: #{cnn_planner_forward.1} parent=0 // pred_region
    _
  $region29: #{cnn_planner_forward.1} parent=0 // pred_fallthru
    _
  // Predicated region
  $region30: #{cnn_planner_forward.1} parent=0 // pred_check
    _
  $region31: #{cnn_planner_forward.1} parent=0 // pred_check_branch
    %34 = sbr.rel (0) target = $region33
  $region32: #{cnn_planner_forward.1} parent=0 // pred_region
    _
  $region33: #{cnn_planner_forward.1} parent=0 // pred_fallthru
    _
  // Predicated region
  $region34: #{cnn_planner_forward.1} parent=0 // pred_check
    _
  $region35: #{cnn_planner_forward.1} parent=0 // pred_check_branch
    %36 = sbr.rel (0) target = $region37
  $region36: #{cnn_planner_forward.1} parent=0 // pred_region
    _
  $region37: #{cnn_planner_forward.1} parent=0 // pred_fallthru
    _
  // Predicated region
  $region38: #{cnn_planner_forward.1} parent=0 // pred_check
    _
  $region39: #{cnn_planner_forward.1} parent=0 // pred_check_branch
    %38 = sbr.rel (0) target = $region41
  $region40: #{cnn_planner_forward.1} parent=0 // pred_region
    _
  $region41: #{cnn_planner_forward.1} parent=0 // pred_fallthru
    _
  // Predicated region
  $region42: #{cnn_planner_forward.1} parent=0 // pred_check
    _
  $region43: #{cnn_planner_forward.1} parent=0 // pred_check_branch
    %40 = sbr.rel (0) target = $region45
  $region44: #{cnn_planner_forward.1} parent=0 // pred_region
    _
  $region45: #{cnn_planner_forward.1} parent=0 // pred_fallthru
    _
  // Predicated region
  $region46: #{cnn_planner_forward.1} parent=0 // pred_check
    _
  $region47: #{cnn_planner_forward.1} parent=0 // pred_check_branch
    %42 = sbr.rel (0) target = $region49
  $region48: #{cnn_planner_forward.1} parent=0 // pred_region
    _
  $region49: #{cnn_planner_forward.1} parent=0 // pred_fallthru
    _
  // Predicated region
  $region50: #{cnn_planner_forward.1} parent=0 // pred_check
    _
  $region51: #{cnn_planner_forward.1} parent=0 // pred_check_branch
    %44 = sbr.rel (0) target = $region53
  $region52: #{cnn_planner_forward.1} parent=0 // pred_region
    _
  $region53: #{cnn_planner_forward.1} parent=0 // pred_fallthru
    _
  // Predicated region
  $region54: #{cnn_planner_forward.1} parent=0 // pred_check
    _
  $region55: #{cnn_planner_forward.1} parent=0 // pred_check_branch
    %46 = sbr.rel (0) target = $region57
  $region56: #{cnn_planner_forward.1} parent=0 // pred_region
    _
  $region57: #{cnn_planner_forward.1} parent=0 // pred_fallthru
    _
  %v47 = vld [vmem:[%s0] sm:$0xff]
  %v48 = vld [vmem:[%s0 + $0x8] sm:$0xff]
  %v49 = vld [vmem:[%s0 + $0x10] sm:$0xff]
  %v50 = vld [vmem:[%s0 + $0x18] sm:$0xff]
  %v51 = vld [vmem:[%s0 + $0x20] sm:$0xff]
  %v52 = vld [vmem:[%s0 + $0x28] sm:$0xff]
  %v53 = vld [vmem:[%s0 + $0x30] sm:$0xff]
  %v54 = vld [vmem:[%s0 + $0x38] sm:$0xff]
  %v55 = vld [vmem:[%s0 + $0x40] sm:$0xff]
  %v56 = vld [vmem:[%s0 + $0x48] sm:$0xff]
  %v57 = vld [vmem:[%s0 + $0x50] sm:$0xff]
  %v58 = vld [vmem:[%s0 + $0x58] sm:$0xff]
  %v59 = vld [vmem:[%s0 + $0x60] sm:$0xff]
  %v60 = vld [vmem:[%s0 + $0x68] sm:$0xff]
  %v61 = vld [vmem:[%s0 + $0x70] sm:$0xff]
  %v62 = vld [vmem:[%s0 + $0x78] sm:$0xff]
  %v63 = vld [vmem:[%s0 + $0x80] sm:$0xff]
  %v64 = vld [vmem:[%s0 + $0x88] sm:$0xff]
  %v65 = vld [vmem:[%s0 + $0x90] sm:$0xff]
  %v66 = vld [vmem:[%s0 + $0x98] sm:$0xff]
  %v67 = vld [vmem:[%s0 + $0xa0] sm:$0xff]
  %v68 = vld [vmem:[%s0 + $0xa8] sm:$0xff]
  %v69 = vld [vmem:[%s0 + $0xb0] sm:$0xff]
  %v70 = vld [vmem:[%s0 + $0xb8] sm:$0xff]
  %v71 = vld [vmem:[%s0 + $0xc0] sm:$0xff]
  %v72 = vld [vmem:[%s0 + $0xc8] sm:$0xff]
  %v73 = vld [vmem:[%s0 + $0xd0] sm:$0xff]
  %v74 = vld [vmem:[%s0 + $0xd8] sm:$0xff]
  %v75 = vld [vmem:[%s0 + $0xe0] sm:$0xff]
  %v76 = vld [vmem:[%s0 + $0xe8] sm:$0xff]
  %v77 = vld [vmem:[%s0 + $0xf0] sm:$0xff]
  %v78 = vld [vmem:[%s0 + $0xf8] sm:$0xff]
  %v79 = vld [vmem:[%s0 + $0x100] sm:$0xff]
  %v80 = vld [vmem:[%s0 + $0x108] sm:$0xff]
  %v81 = vld [vmem:[%s0 + $0x110] sm:$0xff]
  %v82 = vld [vmem:[%s0 + $0x118] sm:$0xff]
  %v83 = vld [vmem:[%s0 + $0x120] sm:$0xff]
  %v84 = vld [vmem:[%s0 + $0x128] sm:$0xff]
  %v85 = vld [vmem:[%s0 + $0x130] sm:$0xff]
  %v86 = vld [vmem:[%s0 + $0x138] sm:$0xff]
  %v87 = vld [vmem:[%s0 + $0x140] sm:$0xff]
  %v88 = vld [vmem:[%s0 + $0x148] sm:$0xff]
  %v89 = vld [vmem:[%s0 + $0x150] sm:$0xff]
  %v90 = vld [vmem:[%s0 + $0x158] sm:$0xff]
  %v91 = vld [vmem:[%s0 + $0x160] sm:$0xff]
  %v92 = vld [vmem:[%s0 + $0x168] sm:$0xff]
  %v93 = vld [vmem:[%s0 + $0x170] sm:$0xff]
  %v94 = vld [vmem:[%s0 + $0x178] sm:$0xff]
  %v95 = vld [vmem:[%s0 + $0x180] sm:$0xff]
  %v96 = vld [vmem:[%s0 + $0x188] sm:$0xff]
  %v97 = vld [vmem:[%s0 + $0x190] sm:$0xff]
  %v98 = vld [vmem:[%s0 + $0x198] sm:$0xff]
  %v99 = vld [vmem:[%s0 + $0x1a0] sm:$0xff]
  %v100 = vld [vmem:[%s0 + $0x1a8] sm:$0xff]
  %v101 = vld [vmem:[%s0 + $0x1b0] sm:$0xff]
  %v102 = vld [vmem:[%s0 + $0x1b8] sm:$0xff]
  %v103 = vld [vmem:[%s0 + $0x1c0] sm:$0xff]
  %v104 = vld [vmem:[%s0 + $0x1c8] sm:$0xff]
  %v105 = vld [vmem:[%s0 + $0x1d0] sm:$0xff]
  %v106 = vld [vmem:[%s0 + $0x1d8] sm:$0xff]
  %v107 = vld [vmem:[%s0 + $0x1e0] sm:$0xff]
  %v108 = vld [vmem:[%s0 + $0x1e8] sm:$0xff]
  %v109 = vld [vmem:[%s0 + $0x1f0] sm:$0xff]
  %v110 = vld [vmem:[%s0 + $0x1f8] sm:$0xff]
  %v111 = vld [vmem:[%s0 + $0x200] sm:$0xff]
  %v112 = vld [vmem:[%s0 + $0x208] sm:$0xff]
  %v113 = vld [vmem:[%s0 + $0x210] sm:$0xff]
  %v114 = vld [vmem:[%s0 + $0x218] sm:$0xff]
  %v115 = vld [vmem:[%s0 + $0x220] sm:$0xff]
  %v116 = vld [vmem:[%s0 + $0x228] sm:$0xff]
  %v117 = vld [vmem:[%s0 + $0x230] sm:$0xff]
  %v118 = vld [vmem:[%s0 + $0x238] sm:$0xff]
  %v119 = vld [vmem:[%s0 + $0x240] sm:$0xff]
  %v120 = vld [vmem:[%s0 + $0x248] sm:$0xff]
  %v121 = vld [vmem:[%s0 + $0x250] sm:$0xff]
  %v122 = vld [vmem:[%s0 + $0x258] sm:$0xff]
  %v123 = vld [vmem:[%s0 + $0x260] sm:$0xff]
  %v124 = vld [vmem:[%s0 + $0x268] sm:$0xff]
  %v125 = vld [vmem:[%s0 + $0x270] sm:$0xff]
  %v126 = vld [vmem:[%s0 + $0x278] sm:$0xff]
  %v127 = vld [vmem:[%s0 + $0x280] sm:$0xff]
  %v128 = vld [vmem:[%s0 + $0x288] sm:$0xff]
  %v129 = vld [vmem:[%s0 + $0x290] sm:$0xff]
  %v130 = vld [vmem:[%s0 + $0x298] sm:$0xff]
  %v131 = vld [vmem:[%s0 + $0x2a0] sm:$0xff]
  %v132 = vld [vmem:[%s0 + $0x2a8] sm:$0xff]
  %v133 = vld [vmem:[%s0 + $0x2b0] sm:$0xff]
  %v134 = vld [vmem:[%s0 + $0x2b8] sm:$0xff]
  %v135 = vld [vmem:[%s0 + $0x2c0] sm:$0xff]
  %v136 = vld [vmem:[%s0 + $0x2c8] sm:$0xff]
  %v137 = vld [vmem:[%s0 + $0x2d0] sm:$0xff]
  %v138 = vld [vmem:[%s0 + $0x2d8] sm:$0xff]
  %v139 = vld [vmem:[%s0 + $0x2e0] sm:$0xff]
  %v140 = vld [vmem:[%s0 + $0x2e8] sm:$0xff]
  %v141 = vld [vmem:[%s0 + $0x2f0] sm:$0xff]
  %v142 = vld [vmem:[%s0 + $0x2f8] sm:$0xff]
  %v143 = vld [vmem:[%s0 + $0x300] sm:$0xff]
  %v144 = vld [vmem:[%s0 + $0x308] sm:$0xff]
  %v145 = vld [vmem:[%s0 + $0x310] sm:$0xff]
  %v146 = vld [vmem:[%s0 + $0x318] sm:$0xff]
  %v147 = vld [vmem:[%s0 + $0x320] sm:$0xff]
  %v148 = vld [vmem:[%s0 + $0x328] sm:$0xff]
  %v149 = vld [vmem:[%s0 + $0x330] sm:$0xff]
  %v150 = vld [vmem:[%s0 + $0x338] sm:$0xff]
  %v151 = vld [vmem:[%s0 + $0x340] sm:$0xff]
  %v152 = vld [vmem:[%s0 + $0x348] sm:$0xff]
  %v153 = vld [vmem:[%s0 + $0x350] sm:$0xff]
  %v154 = vld [vmem:[%s0 + $0x358] sm:$0xff]
  %v155 = vld [vmem:[%s0 + $0x360] sm:$0xff]
  %v156 = vld [vmem:[%s0 + $0x368] sm:$0xff]
  %v157 = vld [vmem:[%s0 + $0x370] sm:$0xff]
  %v158 = vld [vmem:[%s0 + $0x378] sm:$0xff]
  %v159 = vld [vmem:[%s0 + $0x380] sm:$0xff]
  %v160 = vld [vmem:[%s0 + $0x388] sm:$0xff]
  %v161 = vld [vmem:[%s0 + $0x390] sm:$0xff]
  %v162 = vld [vmem:[%s0 + $0x398] sm:$0xff]
  %v163 = vld [vmem:[%s0 + $0x3a0] sm:$0xff]
  %v164 = vld [vmem:[%s0 + $0x3a8] sm:$0xff]
  %v165 = vld [vmem:[%s0 + $0x3b0] sm:$0xff]
  %v166 = vld [vmem:[%s0 + $0x3b8] sm:$0xff]
  %v167 = vld [vmem:[%s0 + $0x3c0] sm:$0xff]
  %v168 = vld [vmem:[%s0 + $0x3c8] sm:$0xff]
  %v169 = vld [vmem:[%s0 + $0x3d0] sm:$0xff]
  %v170 = vld [vmem:[%s0 + $0x3d8] sm:$0xff]
  %v171 = vld [vmem:[%s0 + $0x3e0] sm:$0xff]
  %v172 = vld [vmem:[%s0 + $0x3e8] sm:$0xff]
  %v173 = vld [vmem:[%s0 + $0x3f0] sm:$0xff]
  %v174 = vld [vmem:[%s0 + $0x3f8] sm:$0xff]
  %v175 = vld [vmem:[%s1] sm:$0xff]
  %v176 = vld [vmem:[%s1 + $0x8] sm:$0xff]
  %v177 = vld [vmem:[%s1 + $0x10] sm:$0xff]
  %v178 = vld [vmem:[%s1 + $0x18] sm:$0xff]
  %v179 = vld [vmem:[%s1 + $0x20] sm:$0xff]
  %v180 = vld [vmem:[%s1 + $0x28] sm:$0xff]
  %v181 = vld [vmem:[%s1 + $0x30] sm:$0xff]
  %v182 = vld [vmem:[%s1 + $0x38] sm:$0xff]
  %v183 = vld [vmem:[%s1 + $0x40] sm:$0xff]
  %v184 = vld [vmem:[%s1 + $0x48] sm:$0xff]
  %v185 = vld [vmem:[%s1 + $0x50] sm:$0xff]
  %v186 = vld [vmem:[%s1 + $0x58] sm:$0xff]
  %v187 = vld [vmem:[%s1 + $0x60] sm:$0xff]
  %v188 = vld [vmem:[%s1 + $0x68] sm:$0xff]
  %v189 = vld [vmem:[%s1 + $0x70] sm:$0xff]
  %v190 = vld [vmem:[%s1 + $0x78] sm:$0xff]
  %v191 = vld [vmem:[%s1 + $0x80] sm:$0xff]
  %v192 = vld [vmem:[%s1 + $0x88] sm:$0xff]
  %v193 = vld [vmem:[%s1 + $0x90] sm:$0xff]
  %v194 = vld [vmem:[%s1 + $0x98] sm:$0xff]
  %v195 = vld [vmem:[%s1 + $0xa0] sm:$0xff]
  %v196 = vld [vmem:[%s1 + $0xa8] sm:$0xff]
  %v197 = vld [vmem:[%s1 + $0xb0] sm:$0xff]
  %v198 = vld [vmem:[%s1 + $0xb8] sm:$0xff]
  %v199 = vld [vmem:[%s1 + $0xc0] sm:$0xff]
  %v200 = vld [vmem:[%s1 + $0xc8] sm:$0xff]
  %v201 = vld [vmem:[%s1 + $0xd0] sm:$0xff]
  %v202 = vld [vmem:[%s1 + $0xd8] sm:$0xff]
  %v203 = vld [vmem:[%s1 + $0xe0] sm:$0xff]
  %v204 = vld [vmem:[%s1 + $0xe8] sm:$0xff]
  %v205 = vld [vmem:[%s1 + $0xf0] sm:$0xff]
  %v206 = vld [vmem:[%s1 + $0xf8] sm:$0xff]
  %v207 = vld [vmem:[%s2] sm:$0x1]
  %v209 = vlaneseq
  %v210 = vshrl.u32 %v209, 7
  %v211 = vsub.s32 0, %v210
  %v212 = vrot.slane %v207, %v211
  %214 = vmatprep.subr.mxu0 0.0
  %215 = vmatpush1.msra.mxu0 %v190
  %216 = vmatprep.subr.mxu0 0.0
  %217 = vmatpush1.msra.mxu0 %v189
  %218 = vmatprep.subr.mxu0 0.0
  %219 = vmatpush1.msra.mxu0 %v188
  %220 = vmatprep.subr.mxu0 0.0
  %221 = vmatpush1.msra.mxu0 %v187
  %222 = vmatprep.subr.mxu0 0.0
  %223 = vmatpush1.msra.mxu0 %v186
  %224 = vmatprep.subr.mxu0 0.0
  %225 = vmatpush1.msra.mxu0 %v185
  %226 = vmatprep.subr.mxu0 0.0
  %227 = vmatpush1.msra.mxu0 %v184
  %228 = vmatprep.subr.mxu0 0.0
  %229 = vmatpush1.msra.mxu0 %v183
  %230 = vmatprep.subr.mxu0 0.0
  %231 = vmatpush1.msra.mxu0 %v182
  %232 = vmatprep.subr.mxu0 0.0
  %233 = vmatpush1.msra.mxu0 %v181
  %234 = vmatprep.subr.mxu0 0.0
  %235 = vmatpush1.msra.mxu0 %v180
  %236 = vmatprep.subr.mxu0 0.0
  %237 = vmatpush1.msra.mxu0 %v179
  %238 = vmatprep.subr.mxu0 0.0
  %239 = vmatpush1.msra.mxu0 %v178
  %240 = vmatprep.subr.mxu0 0.0
  %241 = vmatpush1.msra.mxu0 %v177
  %242 = vmatprep.subr.mxu0 0.0
  %243 = vmatpush1.msra.mxu0 %v176
  %244 = vmatprep.subr.mxu0 0.0
  %245 = vmatpush1.msra.mxu0 %v175
  %246 = vmatprep.subr.mxu0 0.0
  %247 = vmatpush2.msra.mxu0 %v206
  %248 = vmatprep.subr.mxu0 0.0
  %249 = vmatpush2.msra.mxu0 %v205
  %250 = vmatprep.subr.mxu0 0.0
  %251 = vmatpush2.msra.mxu0 %v204
  %252 = vmatprep.subr.mxu0 0.0
  %253 = vmatpush2.msra.mxu0 %v203
  %254 = vmatprep.subr.mxu0 0.0
  %255 = vmatpush2.msra.mxu0 %v202
  %256 = vmatprep.subr.mxu0 0.0
  %257 = vmatpush2.msra.mxu0 %v201
  %258 = vmatprep.subr.mxu0 0.0
  %259 = vmatpush2.msra.mxu0 %v200
  %260 = vmatprep.subr.mxu0 0.0
  %261 = vmatpush2.msra.mxu0 %v199
  %262 = vmatprep.subr.mxu0 0.0
  %263 = vmatpush2.msra.mxu0 %v198
  %264 = vmatprep.subr.mxu0 0.0
  %265 = vmatpush2.msra.mxu0 %v197
  %266 = vmatprep.subr.mxu0 0.0
  %267 = vmatpush2.msra.mxu0 %v196
  %268 = vmatprep.subr.mxu0 0.0
  %269 = vmatpush2.msra.mxu0 %v195
  %270 = vmatprep.subr.mxu0 0.0
  %271 = vmatpush2.msra.mxu0 %v194
  %272 = vmatprep.subr.mxu0 0.0
  %273 = vmatpush2.msra.mxu0 %v193
  %274 = vmatprep.subr.mxu0 0.0
  %275 = vmatpush2.msra.mxu0 %v192
  %276 = vmatprep.subr.mxu0 0.0
  %277 = vmatpush2.msra.mxu0 %v191
  %278 = vmatprep.mubr.f32.mxu0 %v48
  %279 = vmatmul.mubr.f32.gmra.mxu0 %v47
  %v280 = vpop.f32.mrf.mxu0
  %v281 = vadd.f32 %v212, %v280
  %v282 = vpop.f32.mrf.mxu0
  %283 = vmatprep.mubr.f32.mxu0 %v50
  %284 = vmatmul.mubr.f32.gmra.mxu0 %v49
  %v285 = vpop.f32.mrf.mxu0
  %v286 = vadd.f32 %v212, %v285
  %v287 = vpop.f32.mrf.mxu0
  %288 = vmatprep.mubr.f32.mxu0 %v52
  %289 = vmatmul.mubr.f32.gmra.mxu0 %v51
  %v290 = vpop.f32.mrf.mxu0
  %v291 = vadd.f32 %v212, %v290
  %v292 = vpop.f32.mrf.mxu0
  %293 = vmatprep.mubr.f32.mxu0 %v54
  %294 = vmatmul.mubr.f32.gmra.mxu0 %v53
  %v295 = vpop.f32.mrf.mxu0
  %v296 = vadd.f32 %v212, %v295
  %v297 = vpop.f32.mrf.mxu0
  %298 = vmatprep.mubr.f32.mxu0 %v56
  %299 = vmatmul.mubr.f32.gmra.mxu0 %v55
  %v300 = vpop.f32.mrf.mxu0
  %v301 = vadd.f32 %v212, %v300
  %v302 = vpop.f32.mrf.mxu0
  %303 = vmatprep.mubr.f32.mxu0 %v58
  %304 = vmatmul.mubr.f32.gmra.mxu0 %v57
  %v305 = vpop.f32.mrf.mxu0
  %v306 = vadd.f32 %v212, %v305
  %v307 = vpop.f32.mrf.mxu0
  %308 = vmatprep.mubr.f32.mxu0 %v60
  %309 = vmatmul.mubr.f32.gmra.mxu0 %v59
  %v310 = vpop.f32.mrf.mxu0
  %v311 = vadd.f32 %v212, %v310
  %v312 = vpop.f32.mrf.mxu0
  %313 = vmatprep.mubr.f32.mxu0 %v62
  %314 = vmatmul.mubr.f32.gmra.mxu0 %v61
  %v315 = vpop.f32.mrf.mxu0
  %v316 = vadd.f32 %v212, %v315
  %v317 = vpop.f32.mrf.mxu0
  %318 = vmatprep.mubr.f32.mxu0 %v64
  %319 = vmatmul.mubr.f32.gmra.mxu0 %v63
  %v320 = vpop.f32.mrf.mxu0
  %v321 = vadd.f32 %v212, %v320
  %v322 = vpop.f32.mrf.mxu0
  %323 = vmatprep.mubr.f32.mxu0 %v66
  %324 = vmatmul.mubr.f32.gmra.mxu0 %v65
  %v325 = vpop.f32.mrf.mxu0
  %v326 = vadd.f32 %v212, %v325
  %v327 = vpop.f32.mrf.mxu0
  %328 = vmatprep.mubr.f32.mxu0 %v68
  %329 = vmatmul.mubr.f32.gmra.mxu0 %v67
  %v330 = vpop.f32.mrf.mxu0
  %v331 = vadd.f32 %v212, %v330
  %v332 = vpop.f32.mrf.mxu0
  %333 = vmatprep.mubr.f32.mxu0 %v70
  %334 = vmatmul.mubr.f32.gmra.mxu0 %v69
  %v335 = vpop.f32.mrf.mxu0
  %v336 = vadd.f32 %v212, %v335
  %v337 = vpop.f32.mrf.mxu0
  %338 = vmatprep.mubr.f32.mxu0 %v72
  %339 = vmatmul.mubr.f32.gmra.mxu0 %v71
  %v340 = vpop.f32.mrf.mxu0
  %v341 = vadd.f32 %v212, %v340
  %v342 = vpop.f32.mrf.mxu0
  %343 = vmatprep.mubr.f32.mxu0 %v74
  %344 = vmatmul.mubr.f32.gmra.mxu0 %v73
  %v345 = vpop.f32.mrf.mxu0
  %v346 = vadd.f32 %v212, %v345
  %v347 = vpop.f32.mrf.mxu0
  %348 = vmatprep.mubr.f32.mxu0 %v76
  %349 = vmatmul.mubr.f32.gmra.mxu0 %v75
  %v350 = vpop.f32.mrf.mxu0
  %v351 = vadd.f32 %v212, %v350
  %v352 = vpop.f32.mrf.mxu0
  %353 = vmatprep.mubr.f32.mxu0 %v78
  %354 = vmatmul.mubr.f32.gmra.mxu0 %v77
  %v355 = vpop.f32.mrf.mxu0
  %v356 = vadd.f32 %v212, %v355
  %v357 = vpop.f32.mrf.mxu0
  %358 = vmatprep.mubr.f32.mxu0 %v80
  %359 = vmatmul.mubr.f32.gmra.mxu0 %v79
  %v360 = vpop.f32.mrf.mxu0
  %v361 = vadd.f32 %v212, %v360
  %v362 = vpop.f32.mrf.mxu0
  %363 = vmatprep.mubr.f32.mxu0 %v82
  %364 = vmatmul.mubr.f32.gmra.mxu0 %v81
  %v365 = vpop.f32.mrf.mxu0
  %v366 = vadd.f32 %v212, %v365
  %v367 = vpop.f32.mrf.mxu0
  %368 = vmatprep.mubr.f32.mxu0 %v84
  %369 = vmatmul.mubr.f32.gmra.mxu0 %v83
  %v370 = vpop.f32.mrf.mxu0
  %v371 = vadd.f32 %v212, %v370
  %v372 = vpop.f32.mrf.mxu0
  %373 = vmatprep.mubr.f32.mxu0 %v86
  %374 = vmatmul.mubr.f32.gmra.mxu0 %v85
  %v375 = vpop.f32.mrf.mxu0
  %v376 = vadd.f32 %v212, %v375
  %v377 = vpop.f32.mrf.mxu0
  %378 = vmatprep.mubr.f32.mxu0 %v88
  %379 = vmatmul.mubr.f32.gmra.mxu0 %v87
  %v380 = vpop.f32.mrf.mxu0
  %v381 = vadd.f32 %v212, %v380
  %v382 = vpop.f32.mrf.mxu0
  %383 = vmatprep.mubr.f32.mxu0 %v90
  %384 = vmatmul.mubr.f32.gmra.mxu0 %v89
  %v385 = vpop.f32.mrf.mxu0
  %v386 = vadd.f32 %v212, %v385
  %v387 = vpop.f32.mrf.mxu0
  %388 = vmatprep.mubr.f32.mxu0 %v92
  %389 = vmatmul.mubr.f32.gmra.mxu0 %v91
  %v390 = vpop.f32.mrf.mxu0
  %v391 = vadd.f32 %v212, %v390
  %v392 = vpop.f32.mrf.mxu0
  %393 = vmatprep.mubr.f32.mxu0 %v94
  %394 = vmatmul.mubr.f32.gmra.mxu0 %v93
  %v395 = vpop.f32.mrf.mxu0
  %v396 = vadd.f32 %v212, %v395
  %v397 = vpop.f32.mrf.mxu0
  %398 = vmatprep.mubr.f32.mxu0 %v96
  %399 = vmatmul.mubr.f32.gmra.mxu0 %v95
  %v400 = vpop.f32.mrf.mxu0
  %v401 = vadd.f32 %v212, %v400
  %v402 = vpop.f32.mrf.mxu0
  %403 = vmatprep.mubr.f32.mxu0 %v98
  %404 = vmatmul.mubr.f32.gmra.mxu0 %v97
  %v405 = vpop.f32.mrf.mxu0
  %v406 = vadd.f32 %v212, %v405
  %v407 = vpop.f32.mrf.mxu0
  %408 = vmatprep.mubr.f32.mxu0 %v100
  %409 = vmatmul.mubr.f32.gmra.mxu0 %v99
  %v410 = vpop.f32.mrf.mxu0
  %v411 = vadd.f32 %v212, %v410
  %v412 = vpop.f32.mrf.mxu0
  %413 = vmatprep.mubr.f32.mxu0 %v102
  %414 = vmatmul.mubr.f32.gmra.mxu0 %v101
  %v415 = vpop.f32.mrf.mxu0
  %v416 = vadd.f32 %v212, %v415
  %v417 = vpop.f32.mrf.mxu0
  %418 = vmatprep.mubr.f32.mxu0 %v104
  %419 = vmatmul.mubr.f32.gmra.mxu0 %v103
  %v420 = vpop.f32.mrf.mxu0
  %v421 = vadd.f32 %v212, %v420
  %v422 = vpop.f32.mrf.mxu0
  %423 = vmatprep.mubr.f32.mxu0 %v106
  %424 = vmatmul.mubr.f32.gmra.mxu0 %v105
  %v425 = vpop.f32.mrf.mxu0
  %v426 = vadd.f32 %v212, %v425
  %v427 = vpop.f32.mrf.mxu0
  %428 = vmatprep.mubr.f32.mxu0 %v108
  %429 = vmatmul.mubr.f32.gmra.mxu0 %v107
  %v430 = vpop.f32.mrf.mxu0
  %v431 = vadd.f32 %v212, %v430
  %v432 = vpop.f32.mrf.mxu0
  %433 = vmatprep.mubr.f32.mxu0 %v110
  %434 = vmatmul.mubr.f32.gmra.mxu0 %v109
  %v435 = vpop.f32.mrf.mxu0
  %v436 = vadd.f32 %v212, %v435
  %v437 = vpop.f32.mrf.mxu0
  %438 = vmatprep.mubr.f32.mxu0 %v112
  %439 = vmatmul.mubr.f32.gmra.mxu0 %v111
  %v440 = vpop.f32.mrf.mxu0
  %v441 = vadd.f32 %v212, %v440
  %v442 = vpop.f32.mrf.mxu0
  %443 = vmatprep.mubr.f32.mxu0 %v114
  %444 = vmatmul.mubr.f32.gmra.mxu0 %v113
  %v445 = vpop.f32.mrf.mxu0
  %v446 = vadd.f32 %v212, %v445
  %v447 = vpop.f32.mrf.mxu0
  %448 = vmatprep.mubr.f32.mxu0 %v116
  %449 = vmatmul.mubr.f32.gmra.mxu0 %v115
  %v450 = vpop.f32.mrf.mxu0
  %v451 = vadd.f32 %v212, %v450
  %v452 = vpop.f32.mrf.mxu0
  %453 = vmatprep.mubr.f32.mxu0 %v118
  %454 = vmatmul.mubr.f32.gmra.mxu0 %v117
  %v455 = vpop.f32.mrf.mxu0
  %v456 = vadd.f32 %v212, %v455
  %v457 = vpop.f32.mrf.mxu0
  %458 = vmatprep.mubr.f32.mxu0 %v120
  %459 = vmatmul.mubr.f32.gmra.mxu0 %v119
  %v460 = vpop.f32.mrf.mxu0
  %v461 = vadd.f32 %v212, %v460
  %v462 = vpop.f32.mrf.mxu0
  %463 = vmatprep.mubr.f32.mxu0 %v122
  %464 = vmatmul.mubr.f32.gmra.mxu0 %v121
  %v465 = vpop.f32.mrf.mxu0
  %v466 = vadd.f32 %v212, %v465
  %v467 = vpop.f32.mrf.mxu0
  %468 = vmatprep.mubr.f32.mxu0 %v124
  %469 = vmatmul.mubr.f32.gmra.mxu0 %v123
  %v470 = vpop.f32.mrf.mxu0
  %v471 = vadd.f32 %v212, %v470
  %v472 = vpop.f32.mrf.mxu0
  %473 = vmatprep.mubr.f32.mxu0 %v126
  %474 = vmatmul.mubr.f32.gmra.mxu0 %v125
  %v475 = vpop.f32.mrf.mxu0
  %v476 = vadd.f32 %v212, %v475
  %v477 = vpop.f32.mrf.mxu0
  %478 = vmatprep.mubr.f32.mxu0 %v128
  %479 = vmatmul.mubr.f32.gmra.mxu0 %v127
  %v480 = vpop.f32.mrf.mxu0
  %v481 = vadd.f32 %v212, %v480
  %v482 = vpop.f32.mrf.mxu0
  %483 = vmatprep.mubr.f32.mxu0 %v130
  %484 = vmatmul.mubr.f32.gmra.mxu0 %v129
  %v485 = vpop.f32.mrf.mxu0
  %v486 = vadd.f32 %v212, %v485
  %v487 = vpop.f32.mrf.mxu0
  %488 = vmatprep.mubr.f32.mxu0 %v132
  %489 = vmatmul.mubr.f32.gmra.mxu0 %v131
  %v490 = vpop.f32.mrf.mxu0
  %v491 = vadd.f32 %v212, %v490
  %v492 = vpop.f32.mrf.mxu0
  %493 = vmatprep.mubr.f32.mxu0 %v134
  %494 = vmatmul.mubr.f32.gmra.mxu0 %v133
  %v495 = vpop.f32.mrf.mxu0
  %v496 = vadd.f32 %v212, %v495
  %v497 = vpop.f32.mrf.mxu0
  %498 = vmatprep.mubr.f32.mxu0 %v136
  %499 = vmatmul.mubr.f32.gmra.mxu0 %v135
  %v500 = vpop.f32.mrf.mxu0
  %v501 = vadd.f32 %v212, %v500
  %v502 = vpop.f32.mrf.mxu0
  %503 = vmatprep.mubr.f32.mxu0 %v138
  %504 = vmatmul.mubr.f32.gmra.mxu0 %v137
  %v505 = vpop.f32.mrf.mxu0
  %v506 = vadd.f32 %v212, %v505
  %v507 = vpop.f32.mrf.mxu0
  %508 = vmatprep.mubr.f32.mxu0 %v140
  %509 = vmatmul.mubr.f32.gmra.mxu0 %v139
  %v510 = vpop.f32.mrf.mxu0
  %v511 = vadd.f32 %v212, %v510
  %v512 = vpop.f32.mrf.mxu0
  %513 = vmatprep.mubr.f32.mxu0 %v142
  %514 = vmatmul.mubr.f32.gmra.mxu0 %v141
  %v515 = vpop.f32.mrf.mxu0
  %v516 = vadd.f32 %v212, %v515
  %v517 = vpop.f32.mrf.mxu0
  %518 = vmatprep.mubr.f32.mxu0 %v144
  %519 = vmatmul.mubr.f32.gmra.mxu0 %v143
  %v520 = vpop.f32.mrf.mxu0
  %v521 = vadd.f32 %v212, %v520
  %v522 = vpop.f32.mrf.mxu0
  %523 = vmatprep.mubr.f32.mxu0 %v146
  %524 = vmatmul.mubr.f32.gmra.mxu0 %v145
  %v525 = vpop.f32.mrf.mxu0
  %v526 = vadd.f32 %v212, %v525
  %v527 = vpop.f32.mrf.mxu0
  %528 = vmatprep.mubr.f32.mxu0 %v148
  %529 = vmatmul.mubr.f32.gmra.mxu0 %v147
  %v530 = vpop.f32.mrf.mxu0
  %v531 = vadd.f32 %v212, %v530
  %v532 = vpop.f32.mrf.mxu0
  %533 = vmatprep.mubr.f32.mxu0 %v150
  %534 = vmatmul.mubr.f32.gmra.mxu0 %v149
  %v535 = vpop.f32.mrf.mxu0
  %v536 = vadd.f32 %v212, %v535
  %v537 = vpop.f32.mrf.mxu0
  %538 = vmatprep.mubr.f32.mxu0 %v152
  %539 = vmatmul.mubr.f32.gmra.mxu0 %v151
  %v540 = vpop.f32.mrf.mxu0
  %v541 = vadd.f32 %v212, %v540
  %v542 = vpop.f32.mrf.mxu0
  %543 = vmatprep.mubr.f32.mxu0 %v154
  %544 = vmatmul.mubr.f32.gmra.mxu0 %v153
  %v545 = vpop.f32.mrf.mxu0
  %v546 = vadd.f32 %v212, %v545
  %v547 = vpop.f32.mrf.mxu0
  %548 = vmatprep.mubr.f32.mxu0 %v156
  %549 = vmatmul.mubr.f32.gmra.mxu0 %v155
  %v550 = vpop.f32.mrf.mxu0
  %v551 = vadd.f32 %v212, %v550
  %v552 = vpop.f32.mrf.mxu0
  %553 = vmatprep.mubr.f32.mxu0 %v158
  %554 = vmatmul.mubr.f32.gmra.mxu0 %v157
  %v555 = vpop.f32.mrf.mxu0
  %v556 = vadd.f32 %v212, %v555
  %v557 = vpop.f32.mrf.mxu0
  %558 = vmatprep.mubr.f32.mxu0 %v160
  %559 = vmatmul.mubr.f32.gmra.mxu0 %v159
  %v560 = vpop.f32.mrf.mxu0
  %v561 = vadd.f32 %v212, %v560
  %v562 = vpop.f32.mrf.mxu0
  %563 = vmatprep.mubr.f32.mxu0 %v162
  %564 = vmatmul.mubr.f32.gmra.mxu0 %v161
  %v565 = vpop.f32.mrf.mxu0
  %v566 = vadd.f32 %v212, %v565
  %v567 = vpop.f32.mrf.mxu0
  %568 = vmatprep.mubr.f32.mxu0 %v164
  %569 = vmatmul.mubr.f32.gmra.mxu0 %v163
  %v570 = vpop.f32.mrf.mxu0
  %v571 = vadd.f32 %v212, %v570
  %v572 = vpop.f32.mrf.mxu0
  %573 = vmatprep.mubr.f32.mxu0 %v166
  %574 = vmatmul.mubr.f32.gmra.mxu0 %v165
  %v575 = vpop.f32.mrf.mxu0
  %v576 = vadd.f32 %v212, %v575
  %v577 = vpop.f32.mrf.mxu0
  %578 = vmatprep.mubr.f32.mxu0 %v168
  %579 = vmatmul.mubr.f32.gmra.mxu0 %v167
  %v580 = vpop.f32.mrf.mxu0
  %v581 = vadd.f32 %v212, %v580
  %v582 = vpop.f32.mrf.mxu0
  %583 = vmatprep.mubr.f32.mxu0 %v170
  %584 = vmatmul.mubr.f32.gmra.mxu0 %v169
  %v585 = vpop.f32.mrf.mxu0
  %v586 = vadd.f32 %v212, %v585
  %v587 = vpop.f32.mrf.mxu0
  %588 = vmatprep.mubr.f32.mxu0 %v172
  %589 = vmatmul.mubr.f32.gmra.mxu0 %v171
  %v590 = vpop.f32.mrf.mxu0
  %v591 = vadd.f32 %v212, %v590
  %v592 = vpop.f32.mrf.mxu0
  %593 = vmatprep.mubr.f32.mxu0 %v174
  %594 = vmatmul.mubr.f32.gmra.mxu0 %v173
  %v595 = vpop.f32.mrf.mxu0
  %v596 = vadd.f32 %v212, %v595
  %v597 = vpop.f32.mrf.mxu0
  %598 = vdwg.mxu0
  %v599 = vmax.f32 %v281, 0.0
  %v600 = vmax.f32 %v286, 0.0
  %v601 = vmax.f32 %v291, 0.0
  %v602 = vmax.f32 %v296, 0.0
  %v603 = vmax.f32 %v301, 0.0
  %v604 = vmax.f32 %v306, 0.0
  %v605 = vmax.f32 %v311, 0.0
  %v606 = vmax.f32 %v316, 0.0
  %v607 = vmax.f32 %v321, 0.0
  %v608 = vmax.f32 %v326, 0.0
  %v609 = vmax.f32 %v331, 0.0
  %v610 = vmax.f32 %v336, 0.0
  %v611 = vmax.f32 %v341, 0.0
  %v612 = vmax.f32 %v346, 0.0
  %v613 = vmax.f32 %v351, 0.0
  %v614 = vmax.f32 %v356, 0.0
  %v615 = vmax.f32 %v361, 0.0
  %v616 = vmax.f32 %v366, 0.0
  %v617 = vmax.f32 %v371, 0.0
  %v618 = vmax.f32 %v376, 0.0
  %v619 = vmax.f32 %v381, 0.0
  %v620 = vmax.f32 %v386, 0.0
  %v621 = vmax.f32 %v391, 0.0
  %v622 = vmax.f32 %v396, 0.0
  %v623 = vmax.f32 %v401, 0.0
  %v624 = vmax.f32 %v406, 0.0
  %v625 = vmax.f32 %v411, 0.0
  %v626 = vmax.f32 %v416, 0.0
  %v627 = vmax.f32 %v421, 0.0
  %v628 = vmax.f32 %v426, 0.0
  %v629 = vmax.f32 %v431, 0.0
  %v630 = vmax.f32 %v436, 0.0
  %v631 = vmax.f32 %v441, 0.0
  %v632 = vmax.f32 %v446, 0.0
  %v633 = vmax.f32 %v451, 0.0
  %v634 = vmax.f32 %v456, 0.0
  %v635 = vmax.f32 %v461, 0.0
  %v636 = vmax.f32 %v466, 0.0
  %v637 = vmax.f32 %v471, 0.0
  %v638 = vmax.f32 %v476, 0.0
  %v639 = vmax.f32 %v481, 0.0
  %v640 = vmax.f32 %v486, 0.0
  %v641 = vmax.f32 %v491, 0.0
  %v642 = vmax.f32 %v496, 0.0
  %v643 = vmax.f32 %v501, 0.0
  %v644 = vmax.f32 %v506, 0.0
  %v645 = vmax.f32 %v511, 0.0
  %v646 = vmax.f32 %v516, 0.0
  %v647 = vmax.f32 %v521, 0.0
  %v648 = vmax.f32 %v526, 0.0
  %v649 = vmax.f32 %v531, 0.0
  %v650 = vmax.f32 %v536, 0.0
  %v651 = vmax.f32 %v541, 0.0
  %v652 = vmax.f32 %v546, 0.0
  %v653 = vmax.f32 %v551, 0.0
  %v654 = vmax.f32 %v556, 0.0
  %v655 = vmax.f32 %v561, 0.0
  %v656 = vmax.f32 %v566, 0.0
  %v657 = vmax.f32 %v571, 0.0
  %v658 = vmax.f32 %v576, 0.0
  %v659 = vmax.f32 %v581, 0.0
  %v660 = vmax.f32 %v586, 0.0
  %v661 = vmax.f32 %v591, 0.0
  %v662 = vmax.f32 %v596, 0.0
  %v663 = vld [vmem:[%s3] sm:$0xff]
  %v664 = vld [vmem:[%s3 + $0x8] sm:$0xff]
  %v665 = vld [vmem:[%s3 + $0x10] sm:$0xff]
  %v666 = vld [vmem:[%s3 + $0x18] sm:$0xff]
  %v667 = vld [vmem:[%s3 + $0x20] sm:$0xff]
  %v668 = vld [vmem:[%s3 + $0x28] sm:$0xff]
  %v669 = vld [vmem:[%s3 + $0x30] sm:$0xff]
  %v670 = vld [vmem:[%s3 + $0x38] sm:$0xff]
  %v671 = vld [vmem:[%s3 + $0x40] sm:$0xff]
  %v672 = vld [vmem:[%s3 + $0x48] sm:$0xff]
  %v673 = vld [vmem:[%s3 + $0x50] sm:$0xff]
  %v674 = vld [vmem:[%s3 + $0x58] sm:$0xff]
  %v675 = vld [vmem:[%s3 + $0x60] sm:$0xff]
  %v676 = vld [vmem:[%s3 + $0x68] sm:$0xff]
  %v677 = vld [vmem:[%s3 + $0x70] sm:$0xff]
  %v678 = vld [vmem:[%s3 + $0x78] sm:$0xff]
  %v679 = vld [vmem:[%s3 + $0x80] sm:$0xff]
  %v680 = vld [vmem:[%s3 + $0x88] sm:$0xff]
  %v681 = vld [vmem:[%s3 + $0x90] sm:$0xff]
  %v682 = vld [vmem:[%s3 + $0x98] sm:$0xff]
  %v683 = vld [vmem:[%s3 + $0xa0] sm:$0xff]
  %v684 = vld [vmem:[%s3 + $0xa8] sm:$0xff]
  %v685 = vld [vmem:[%s3 + $0xb0] sm:$0xff]
  %v686 = vld [vmem:[%s3 + $0xb8] sm:$0xff]
  %v687 = vld [vmem:[%s3 + $0xc0] sm:$0xff]
  %v688 = vld [vmem:[%s3 + $0xc8] sm:$0xff]
  %v689 = vld [vmem:[%s3 + $0xd0] sm:$0xff]
  %v690 = vld [vmem:[%s3 + $0xd8] sm:$0xff]
  %v691 = vld [vmem:[%s3 + $0xe0] sm:$0xff]
  %v692 = vld [vmem:[%s3 + $0xe8] sm:$0xff]
  %v693 = vld [vmem:[%s3 + $0xf0] sm:$0xff]
  %v694 = vld [vmem:[%s3 + $0xf8] sm:$0xff]
  %v695 = vld [vmem:[%s3 + $0x100] sm:$0xff]
  %v696 = vld [vmem:[%s3 + $0x108] sm:$0xff]
  %v697 = vld [vmem:[%s3 + $0x110] sm:$0xff]
  %v698 = vld [vmem:[%s3 + $0x118] sm:$0xff]
  %v699 = vld [vmem:[%s3 + $0x120] sm:$0xff]
  %v700 = vld [vmem:[%s3 + $0x128] sm:$0xff]
  %v701 = vld [vmem:[%s3 + $0x130] sm:$0xff]
  %v702 = vld [vmem:[%s3 + $0x138] sm:$0xff]
  %v703 = vld [vmem:[%s3 + $0x140] sm:$0xff]
  %v704 = vld [vmem:[%s3 + $0x148] sm:$0xff]
  %v705 = vld [vmem:[%s3 + $0x150] sm:$0xff]
  %v706 = vld [vmem:[%s3 + $0x158] sm:$0xff]
  %v707 = vld [vmem:[%s3 + $0x160] sm:$0xff]
  %v708 = vld [vmem:[%s3 + $0x168] sm:$0xff]
  %v709 = vld [vmem:[%s3 + $0x170] sm:$0xff]
  %v710 = vld [vmem:[%s3 + $0x178] sm:$0xff]
  %v711 = vld [vmem:[%s3 + $0x180] sm:$0xff]
  %v712 = vld [vmem:[%s3 + $0x188] sm:$0xff]
  %v713 = vld [vmem:[%s3 + $0x190] sm:$0xff]
  %v714 = vld [vmem:[%s3 + $0x198] sm:$0xff]
  %v715 = vld [vmem:[%s3 + $0x1a0] sm:$0xff]
  %v716 = vld [vmem:[%s3 + $0x1a8] sm:$0xff]
  %v717 = vld [vmem:[%s3 + $0x1b0] sm:$0xff]
  %v718 = vld [vmem:[%s3 + $0x1b8] sm:$0xff]
  %v719 = vld [vmem:[%s3 + $0x1c0] sm:$0xff]
  %v720 = vld [vmem:[%s3 + $0x1c8] sm:$0xff]
  %v721 = vld [vmem:[%s3 + $0x1d0] sm:$0xff]
  %v722 = vld [vmem:[%s3 + $0x1d8] sm:$0xff]
  %v723 = vld [vmem:[%s3 + $0x1e0] sm:$0xff]
  %v724 = vld [vmem:[%s3 + $0x1e8] sm:$0xff]
  %v725 = vld [vmem:[%s3 + $0x1f0] sm:$0xff]
  %v726 = vld [vmem:[%s3 + $0x1f8] sm:$0xff]
  %v727 = vld [vmem:[%s3 + $0x200] sm:$0xff]
  %v728 = vld [vmem:[%s3 + $0x208] sm:$0xff]
  %v729 = vld [vmem:[%s3 + $0x210] sm:$0xff]
  %v730 = vld [vmem:[%s3 + $0x218] sm:$0xff]
  %v731 = vld [vmem:[%s3 + $0x220] sm:$0xff]
  %v732 = vld [vmem:[%s3 + $0x228] sm:$0xff]
  %v733 = vld [vmem:[%s3 + $0x230] sm:$0xff]
  %v734 = vld [vmem:[%s3 + $0x238] sm:$0xff]
  %v735 = vunpack.c.l.bf16 %v663
  %v736 = vunpack.c.h.bf16 %v663
  %v737 = vunpack.c.l.bf16 %v664
  %v738 = vunpack.c.h.bf16 %v664
  %v739 = vunpack.c.l.bf16 %v665
  %v740 = vunpack.c.h.bf16 %v665
  %v741 = vunpack.c.l.bf16 %v666
  %v742 = vunpack.c.h.bf16 %v666
  %v743 = vunpack.c.l.bf16 %v667
  %v744 = vunpack.c.h.bf16 %v667
  %v745 = vunpack.c.l.bf16 %v668
  %v746 = vunpack.c.h.bf16 %v668
  %v747 = vunpack.c.l.bf16 %v669
  %v748 = vunpack.c.h.bf16 %v669
  %v749 = vunpack.c.l.bf16 %v670
  %v750 = vunpack.c.h.bf16 %v670
  %v751 = vunpack.c.l.bf16 %v671
  %v752 = vunpack.c.h.bf16 %v671
  %v753 = vunpack.c.l.bf16 %v672
  %v754 = vunpack.c.h.bf16 %v672
  %v755 = vunpack.c.l.bf16 %v673
  %v756 = vunpack.c.h.bf16 %v673
  %v757 = vunpack.c.l.bf16 %v674
  %v758 = vunpack.c.h.bf16 %v674
  %v759 = vunpack.c.l.bf16 %v675
  %v760 = vunpack.c.h.bf16 %v675
  %v761 = vunpack.c.l.bf16 %v676
  %v762 = vunpack.c.h.bf16 %v676
  %v763 = vunpack.c.l.bf16 %v677
  %v764 = vunpack.c.h.bf16 %v677
  %v765 = vunpack.c.l.bf16 %v678
  %v766 = vunpack.c.h.bf16 %v678
  %v767 = vunpack.c.l.bf16 %v679
  %v768 = vunpack.c.h.bf16 %v679
  %v769 = vunpack.c.l.bf16 %v680
  %v770 = vunpack.c.h.bf16 %v680
  %v771 = vunpack.c.l.bf16 %v681
  %v772 = vunpack.c.h.bf16 %v681
  %v773 = vunpack.c.l.bf16 %v682
  %v774 = vunpack.c.h.bf16 %v682
  %v775 = vunpack.c.l.bf16 %v683
  %v776 = vunpack.c.h.bf16 %v683
  %v777 = vunpack.c.l.bf16 %v684
  %v778 = vunpack.c.h.bf16 %v684
  %v779 = vunpack.c.l.bf16 %v685
  %v780 = vunpack.c.h.bf16 %v685
  %v781 = vunpack.c.l.bf16 %v686
  %v782 = vunpack.c.h.bf16 %v686
  %v783 = vunpack.c.l.bf16 %v687
  %v784 = vunpack.c.h.bf16 %v687
  %v785 = vunpack.c.l.bf16 %v688
  %v786 = vunpack.c.h.bf16 %v688
  %v787 = vunpack.c.l.bf16 %v689
  %v788 = vunpack.c.h.bf16 %v689
  %v789 = vunpack.c.l.bf16 %v690
  %v790 = vunpack.c.h.bf16 %v690
  %v791 = vunpack.c.l.bf16 %v691
  %v792 = vunpack.c.h.bf16 %v691
  %v793 = vunpack.c.l.bf16 %v692
  %v794 = vunpack.c.h.bf16 %v692
  %v795 = vunpack.c.l.bf16 %v693
  %v796 = vunpack.c.h.bf16 %v693
  %v797 = vunpack.c.l.bf16 %v694
  %v798 = vunpack.c.h.bf16 %v694
  %v799 = vunpack.c.l.bf16 %v695
  %v800 = vunpack.c.h.bf16 %v695
  %v801 = vunpack.c.l.bf16 %v696
  %v802 = vunpack.c.h.bf16 %v696
  %v803 = vunpack.c.l.bf16 %v697
  %v804 = vunpack.c.h.bf16 %v697
  %v805 = vunpack.c.l.bf16 %v698
  %v806 = vunpack.c.h.bf16 %v698
  %v807 = vunpack.c.l.bf16 %v699
  %v808 = vunpack.c.h.bf16 %v699
  %v809 = vunpack.c.l.bf16 %v700
  %v810 = vunpack.c.h.bf16 %v700
  %v811 = vunpack.c.l.bf16 %v701
  %v812 = vunpack.c.h.bf16 %v701
  %v813 = vunpack.c.l.bf16 %v702
  %v814 = vunpack.c.h.bf16 %v702
  %v815 = vunpack.c.l.bf16 %v703
  %v816 = vunpack.c.h.bf16 %v703
  %v817 = vunpack.c.l.bf16 %v704
  %v818 = vunpack.c.h.bf16 %v704
  %v819 = vunpack.c.l.bf16 %v705
  %v820 = vunpack.c.h.bf16 %v705
  %v821 = vunpack.c.l.bf16 %v706
  %v822 = vunpack.c.h.bf16 %v706
  %v823 = vunpack.c.l.bf16 %v707
  %v824 = vunpack.c.h.bf16 %v707
  %v825 = vunpack.c.l.bf16 %v708
  %v826 = vunpack.c.h.bf16 %v708
  %v827 = vunpack.c.l.bf16 %v709
  %v828 = vunpack.c.h.bf16 %v709
  %v829 = vunpack.c.l.bf16 %v710
  %v830 = vunpack.c.h.bf16 %v710
  %v831 = vunpack.c.l.bf16 %v711
  %v832 = vunpack.c.h.bf16 %v711
  %v833 = vunpack.c.l.bf16 %v712
  %v834 = vunpack.c.h.bf16 %v712
  %v835 = vunpack.c.l.bf16 %v713
  %v836 = vunpack.c.h.bf16 %v713
  %v837 = vunpack.c.l.bf16 %v714
  %v838 = vunpack.c.h.bf16 %v714
  %v839 = vunpack.c.l.bf16 %v715
  %v840 = vunpack.c.h.bf16 %v715
  %v841 = vunpack.c.l.bf16 %v716
  %v842 = vunpack.c.h.bf16 %v716
  %v843 = vunpack.c.l.bf16 %v717
  %v844 = vunpack.c.h.bf16 %v717
  %v845 = vunpack.c.l.bf16 %v718
  %v846 = vunpack.c.h.bf16 %v718
  %v847 = vunpack.c.l.bf16 %v719
  %v848 = vunpack.c.h.bf16 %v719
  %v849 = vunpack.c.l.bf16 %v720
  %v850 = vunpack.c.h.bf16 %v720
  %v851 = vunpack.c.l.bf16 %v721
  %v852 = vunpack.c.h.bf16 %v721
  %v853 = vunpack.c.l.bf16 %v722
  %v854 = vunpack.c.h.bf16 %v722
  %v855 = vunpack.c.l.bf16 %v723
  %v856 = vunpack.c.h.bf16 %v723
  %v857 = vunpack.c.l.bf16 %v724
  %v858 = vunpack.c.h.bf16 %v724
  %v859 = vunpack.c.l.bf16 %v725
  %v860 = vunpack.c.h.bf16 %v725
  %v861 = vunpack.c.l.bf16 %v726
  %v862 = vunpack.c.h.bf16 %v726
  %v863 = vunpack.c.l.bf16 %v727
  %v864 = vunpack.c.h.bf16 %v727
  %v865 = vunpack.c.l.bf16 %v728
  %v866 = vunpack.c.h.bf16 %v728
  %v867 = vunpack.c.l.bf16 %v729
  %v868 = vunpack.c.h.bf16 %v729
  %v869 = vunpack.c.l.bf16 %v730
  %v870 = vunpack.c.h.bf16 %v730
  %v871 = vunpack.c.l.bf16 %v731
  %v872 = vunpack.c.h.bf16 %v731
  %v873 = vunpack.c.l.bf16 %v732
  %v874 = vunpack.c.h.bf16 %v732
  %v875 = vunpack.c.l.bf16 %v733
  %v876 = vunpack.c.h.bf16 %v733
  %v877 = vunpack.c.l.bf16 %v734
  %v878 = vunpack.c.h.bf16 %v734
  %v879 = vld [vmem:[%s4] sm:$0xf]
  %v880 = vld [vmem:[%s4 + $0x4] sm:$0xf]
  %v881 = vld [vmem:[%s4 + $0x8] sm:$0xf]
  %v882 = vld [vmem:[%s4 + $0xc] sm:$0xf]
  %v883 = vld [vmem:[%s4 + $0x10] sm:$0xf]
  %v884 = vld [vmem:[%s4 + $0x14] sm:$0xf]
  %v885 = vld [vmem:[%s4 + $0x18] sm:$0xf]
  %v886 = vld [vmem:[%s4 + $0x1c] sm:$0xf]
  %v887 = vld [vmem:[%s4 + $0x20] sm:$0xf]
  %v888 = vld [vmem:[%s4 + $0x24] sm:$0xf]
  %v889 = vld [vmem:[%s4 + $0x28] sm:$0xf]
  %v890 = vld [vmem:[%s4 + $0x2c] sm:$0xf]
  %v891 = vld [vmem:[%s4 + $0x30] sm:$0xf]
  %v892 = vld [vmem:[%s4 + $0x34] sm:$0xf]
  %v893 = vld [vmem:[%s4 + $0x38] sm:$0xf]
  %v894 = vld [vmem:[%s4 + $0x3c] sm:$0xf]
  %v895 = vld [vmem:[%s4 + $0x40] sm:$0xf]
  %v896 = vld [vmem:[%s4 + $0x44] sm:$0xf]
  %v897 = vld [vmem:[%s4 + $0x48] sm:$0xf]
  %v898 = vld [vmem:[%s4 + $0x4c] sm:$0xf]
  %v899 = vld [vmem:[%s4 + $0x50] sm:$0xf]
  %v900 = vld [vmem:[%s4 + $0x54] sm:$0xf]
  %v901 = vld [vmem:[%s4 + $0x58] sm:$0xf]
  %v902 = vld [vmem:[%s4 + $0x5c] sm:$0xf]
  %v903 = vld [vmem:[%s4 + $0x60] sm:$0xf]
  %v904 = vld [vmem:[%s4 + $0x64] sm:$0xf]
  %v905 = vld [vmem:[%s4 + $0x68] sm:$0xf]
  %v906 = vld [vmem:[%s4 + $0x6c] sm:$0xf]
  %v907 = vld [vmem:[%s4 + $0x70] sm:$0xf]
  %v908 = vld [vmem:[%s4 + $0x74] sm:$0xf]
  %v909 = vld [vmem:[%s4 + $0x78] sm:$0xf]
  %v910 = vld [vmem:[%s4 + $0x7c] sm:$0xf]
  %v911 = vld [vmem:[%s4 + $0x80] sm:$0xf]
  %v912 = vld [vmem:[%s4 + $0x84] sm:$0xf]
  %v913 = vld [vmem:[%s4 + $0x88] sm:$0xf]
  %v914 = vld [vmem:[%s4 + $0x8c] sm:$0xf]
  %v915 = vld [vmem:[%s4 + $0x90] sm:$0xf]
  %v916 = vld [vmem:[%s4 + $0x94] sm:$0xf]
  %v917 = vld [vmem:[%s4 + $0x98] sm:$0xf]
  %v918 = vld [vmem:[%s4 + $0x9c] sm:$0xf]
  %v919 = vld [vmem:[%s4 + $0xa0] sm:$0xf]
  %v920 = vld [vmem:[%s4 + $0xa4] sm:$0xf]
  %v921 = vld [vmem:[%s4 + $0xa8] sm:$0xf]
  %v922 = vld [vmem:[%s4 + $0xac] sm:$0xf]
  %v923 = vld [vmem:[%s4 + $0xb0] sm:$0xf]
  %v924 = vld [vmem:[%s4 + $0xb4] sm:$0xf]
  %v925 = vld [vmem:[%s4 + $0xb8] sm:$0xf]
  %v926 = vld [vmem:[%s4 + $0xbc] sm:$0xf]
  %v927 = vld [vmem:[%s4 + $0xc0] sm:$0xf]
  %v928 = vld [vmem:[%s4 + $0xc4] sm:$0xf]
  %v929 = vld [vmem:[%s4 + $0xc8] sm:$0xf]
  %v930 = vld [vmem:[%s4 + $0xcc] sm:$0xf]
  %v931 = vld [vmem:[%s4 + $0xd0] sm:$0xf]
  %v932 = vld [vmem:[%s4 + $0xd4] sm:$0xf]
  %v933 = vld [vmem:[%s4 + $0xd8] sm:$0xf]
  %v934 = vld [vmem:[%s4 + $0xdc] sm:$0xf]
  %v935 = vld [vmem:[%s4 + $0xe0] sm:$0xf]
  %v936 = vld [vmem:[%s4 + $0xe4] sm:$0xf]
  %v937 = vld [vmem:[%s4 + $0xe8] sm:$0xf]
  %v938 = vld [vmem:[%s4 + $0xec] sm:$0xf]
  %v939 = vld [vmem:[%s4 + $0xf0] sm:$0xf]
  %v940 = vld [vmem:[%s4 + $0xf4] sm:$0xf]
  %v941 = vld [vmem:[%s4 + $0xf8] sm:$0xf]
  %v942 = vld [vmem:[%s4 + $0xfc] sm:$0xf]
  %v943 = vld [vmem:[%s4 + $0x100] sm:$0xf]
  %v944 = vld [vmem:[%s4 + $0x104] sm:$0xf]
  %v945 = vld [vmem:[%s4 + $0x108] sm:$0xf]
  %v946 = vld [vmem:[%s4 + $0x10c] sm:$0xf]
  %v947 = vld [vmem:[%s4 + $0x110] sm:$0xf]
  %v948 = vld [vmem:[%s4 + $0x114] sm:$0xf]
  %v949 = vld [vmem:[%s4 + $0x118] sm:$0xf]
  %v950 = vld [vmem:[%s4 + $0x11c] sm:$0xf]
  %v951 = vunpack.c.l.bf16 %v879
  %v952 = vunpack.c.l.bf16 %v880
  %v953 = vunpack.c.l.bf16 %v881
  %v954 = vunpack.c.l.bf16 %v882
  %v955 = vunpack.c.l.bf16 %v883
  %v956 = vunpack.c.l.bf16 %v884
  %v957 = vunpack.c.l.bf16 %v885
  %v958 = vunpack.c.l.bf16 %v886
  %v959 = vunpack.c.l.bf16 %v887
  %v960 = vunpack.c.l.bf16 %v888
  %v961 = vunpack.c.l.bf16 %v889
  %v962 = vunpack.c.l.bf16 %v890
  %v963 = vunpack.c.l.bf16 %v891
  %v964 = vunpack.c.l.bf16 %v892
  %v965 = vunpack.c.l.bf16 %v893
  %v966 = vunpack.c.l.bf16 %v894
  %v967 = vunpack.c.l.bf16 %v895
  %v968 = vunpack.c.l.bf16 %v896
  %v969 = vunpack.c.l.bf16 %v897
  %v970 = vunpack.c.l.bf16 %v898
  %v971 = vunpack.c.l.bf16 %v899
  %v972 = vunpack.c.l.bf16 %v900
  %v973 = vunpack.c.l.bf16 %v901
  %v974 = vunpack.c.l.bf16 %v902
  %v975 = vunpack.c.l.bf16 %v903
  %v976 = vunpack.c.l.bf16 %v904
  %v977 = vunpack.c.l.bf16 %v905
  %v978 = vunpack.c.l.bf16 %v906
  %v979 = vunpack.c.l.bf16 %v907
  %v980 = vunpack.c.l.bf16 %v908
  %v981 = vunpack.c.l.bf16 %v909
  %v982 = vunpack.c.l.bf16 %v910
  %v983 = vunpack.c.l.bf16 %v911
  %v984 = vunpack.c.l.bf16 %v912
  %v985 = vunpack.c.l.bf16 %v913
  %v986 = vunpack.c.l.bf16 %v914
  %v987 = vunpack.c.l.bf16 %v915
  %v988 = vunpack.c.l.bf16 %v916
  %v989 = vunpack.c.l.bf16 %v917
  %v990 = vunpack.c.l.bf16 %v918
  %v991 = vunpack.c.l.bf16 %v919
  %v992 = vunpack.c.l.bf16 %v920
  %v993 = vunpack.c.l.bf16 %v921
  %v994 = vunpack.c.l.bf16 %v922
  %v995 = vunpack.c.l.bf16 %v923
  %v996 = vunpack.c.l.bf16 %v924
  %v997 = vunpack.c.l.bf16 %v925
  %v998 = vunpack.c.l.bf16 %v926
  %v999 = vunpack.c.l.bf16 %v927
  %v1000 = vunpack.c.l.bf16 %v928
  %v1001 = vunpack.c.l.bf16 %v929
  %v1002 = vunpack.c.l.bf16 %v930
  %v1003 = vunpack.c.l.bf16 %v931
  %v1004 = vunpack.c.l.bf16 %v932
  %v1005 = vunpack.c.l.bf16 %v933
  %v1006 = vunpack.c.l.bf16 %v934
  %v1007 = vunpack.c.l.bf16 %v935
  %v1008 = vunpack.c.l.bf16 %v936
  %v1009 = vunpack.c.l.bf16 %v937
  %v1010 = vunpack.c.l.bf16 %v938
  %v1011 = vunpack.c.l.bf16 %v939
  %v1012 = vunpack.c.l.bf16 %v940
  %v1013 = vunpack.c.l.bf16 %v941
  %v1014 = vunpack.c.l.bf16 %v942
  %v1015 = vunpack.c.l.bf16 %v943
  %v1016 = vunpack.c.l.bf16 %v944
  %v1017 = vunpack.c.l.bf16 %v945
  %v1018 = vunpack.c.l.bf16 %v946
  %v1019 = vunpack.c.l.bf16 %v947
  %v1020 = vunpack.c.l.bf16 %v948
  %v1021 = vunpack.c.l.bf16 %v949
  %v1022 = vunpack.c.l.bf16 %v950
  %v1023 = vld [vmem:[%s6] sm:$0xf]
  %v1024 = vld [vmem:[%s6 + $0x4] sm:$0xf]
  %v1025 = vld [vmem:[%s6 + $0x8] sm:$0xf]
  %v1026 = vld [vmem:[%s6 + $0xc] sm:$0xf]
  %v1027 = vld [vmem:[%s6 + $0x10] sm:$0xf]
  %v1028 = vld [vmem:[%s6 + $0x14] sm:$0xf]
  %v1029 = vld [vmem:[%s6 + $0x18] sm:$0xf]
  %v1030 = vld [vmem:[%s6 + $0x1c] sm:$0xf]
  %v1031 = vld [vmem:[%s6 + $0x20] sm:$0xf]
  %v1032 = vld [vmem:[%s6 + $0x24] sm:$0xf]
  %v1033 = vld [vmem:[%s6 + $0x28] sm:$0xf]
  %v1034 = vld [vmem:[%s6 + $0x2c] sm:$0xf]
  %v1035 = vld [vmem:[%s6 + $0x30] sm:$0xf]
  %v1036 = vld [vmem:[%s6 + $0x34] sm:$0xf]
  %v1037 = vld [vmem:[%s6 + $0x38] sm:$0xf]
  %v1038 = vld [vmem:[%s6 + $0x3c] sm:$0xf]
  %v1039 = vld [vmem:[%s6 + $0x40] sm:$0xf]
  %v1040 = vld [vmem:[%s6 + $0x44] sm:$0xf]
  %v1041 = vunpack.c.l.bf16 %v1023
  %v1042 = vunpack.c.l.bf16 %v1024
  %v1043 = vunpack.c.l.bf16 %v1025
  %v1044 = vunpack.c.l.bf16 %v1026
  %v1045 = vunpack.c.l.bf16 %v1027
  %v1046 = vunpack.c.l.bf16 %v1028
  %v1047 = vunpack.c.l.bf16 %v1029
  %v1048 = vunpack.c.l.bf16 %v1030
  %v1049 = vunpack.c.l.bf16 %v1031
  %v1050 = vunpack.c.l.bf16 %v1032
  %v1051 = vunpack.c.l.bf16 %v1033
  %v1052 = vunpack.c.l.bf16 %v1034
  %v1053 = vunpack.c.l.bf16 %v1035
  %v1054 = vunpack.c.l.bf16 %v1036
  %v1055 = vunpack.c.l.bf16 %v1037
  %v1056 = vunpack.c.l.bf16 %v1038
  %v1057 = vunpack.c.l.bf16 %v1039
  %v1058 = vunpack.c.l.bf16 %v1040
  %v1059 = vld [vmem:[%s7] sm:$0xff]
  %v1060 = vld [vmem:[%s7 + $0x8] sm:$0xff]
  %v1061 = vld [vmem:[%s7 + $0x10] sm:$0xff]
  %v1062 = vld [vmem:[%s7 + $0x18] sm:$0xff]
  %v1063 = vld [vmem:[%s7 + $0x20] sm:$0xff]
  %v1064 = vld [vmem:[%s7 + $0x28] sm:$0xff]
  %v1065 = vld [vmem:[%s7 + $0x30] sm:$0xff]
  %v1066 = vld [vmem:[%s7 + $0x38] sm:$0xff]
  %v1067 = vld [vmem:[%s7 + $0x40] sm:$0xff]
  %v1068 = vld [vmem:[%s7 + $0x48] sm:$0xff]
  %v1069 = vld [vmem:[%s7 + $0x50] sm:$0xff]
  %v1070 = vld [vmem:[%s7 + $0x58] sm:$0xff]
  %v1071 = vld [vmem:[%s7 + $0x60] sm:$0xff]
  %v1072 = vld [vmem:[%s7 + $0x68] sm:$0xff]
  %v1073 = vld [vmem:[%s7 + $0x70] sm:$0xff]
  %v1074 = vld [vmem:[%s7 + $0x78] sm:$0xff]
  %v1075 = vld [vmem:[%s7 + $0x80] sm:$0xff]
  %v1076 = vld [vmem:[%s7 + $0x88] sm:$0xff]
  %v1077 = vld [vmem:[%s7 + $0x90] sm:$0xff]
  %v1078 = vld [vmem:[%s7 + $0x98] sm:$0xff]
  %v1079 = vld [vmem:[%s7 + $0xa0] sm:$0xff]
  %v1080 = vld [vmem:[%s7 + $0xa8] sm:$0xff]
  %v1081 = vld [vmem:[%s7 + $0xb0] sm:$0xff]
  %v1082 = vld [vmem:[%s7 + $0xb8] sm:$0xff]
  %v1083 = vld [vmem:[%s7 + $0xc0] sm:$0xff]
  %v1084 = vld [vmem:[%s7 + $0xc8] sm:$0xff]
  %v1085 = vld [vmem:[%s7 + $0xd0] sm:$0xff]
  %v1086 = vld [vmem:[%s7 + $0xd8] sm:$0xff]
  %v1087 = vld [vmem:[%s7 + $0xe0] sm:$0xff]
  %v1088 = vld [vmem:[%s7 + $0xe8] sm:$0xff]
  %v1089 = vld [vmem:[%s7 + $0xf0] sm:$0xff]
  %v1090 = vld [vmem:[%s7 + $0xf8] sm:$0xff]
  %v1091 = vld [vmem:[%s7 + $0x100] sm:$0xff]
  %v1092 = vld [vmem:[%s7 + $0x108] sm:$0xff]
  %v1093 = vld [vmem:[%s7 + $0x110] sm:$0xff]
  %v1094 = vld [vmem:[%s7 + $0x118] sm:$0xff]
  %v1095 = vld [vmem:[%s7 + $0x120] sm:$0xff]
  %v1096 = vld [vmem:[%s7 + $0x128] sm:$0xff]
  %v1097 = vld [vmem:[%s7 + $0x130] sm:$0xff]
  %v1098 = vld [vmem:[%s7 + $0x138] sm:$0xff]
  %v1099 = vld [vmem:[%s7 + $0x140] sm:$0xff]
  %v1100 = vld [vmem:[%s7 + $0x148] sm:$0xff]
  %v1101 = vld [vmem:[%s7 + $0x150] sm:$0xff]
  %v1102 = vld [vmem:[%s7 + $0x158] sm:$0xff]
  %v1103 = vld [vmem:[%s7 + $0x160] sm:$0xff]
  %v1104 = vld [vmem:[%s7 + $0x168] sm:$0xff]
  %v1105 = vld [vmem:[%s7 + $0x170] sm:$0xff]
  %v1106 = vld [vmem:[%s7 + $0x178] sm:$0xff]
  %v1107 = vld [vmem:[%s7 + $0x180] sm:$0xff]
  %v1108 = vld [vmem:[%s7 + $0x188] sm:$0xff]
  %v1109 = vld [vmem:[%s7 + $0x190] sm:$0xff]
  %v1110 = vld [vmem:[%s7 + $0x198] sm:$0xff]
  %v1111 = vld [vmem:[%s7 + $0x1a0] sm:$0xff]
  %v1112 = vld [vmem:[%s7 + $0x1a8] sm:$0xff]
  %v1113 = vld [vmem:[%s7 + $0x1b0] sm:$0xff]
  %v1114 = vld [vmem:[%s7 + $0x1b8] sm:$0xff]
  %v1115 = vld [vmem:[%s7 + $0x1c0] sm:$0xff]
  %v1116 = vld [vmem:[%s7 + $0x1c8] sm:$0xff]
  %v1117 = vld [vmem:[%s7 + $0x1d0] sm:$0xff]
  %v1118 = vld [vmem:[%s7 + $0x1d8] sm:$0xff]
  %v1119 = vld [vmem:[%s7 + $0x1e0] sm:$0xff]
  %v1120 = vld [vmem:[%s7 + $0x1e8] sm:$0xff]
  %v1121 = vld [vmem:[%s7 + $0x1f0] sm:$0xff]
  %v1122 = vld [vmem:[%s7 + $0x1f8] sm:$0xff]
  %v1123 = vld [vmem:[%s7 + $0x200] sm:$0xff]
  %v1124 = vld [vmem:[%s7 + $0x208] sm:$0xff]
  %v1125 = vld [vmem:[%s7 + $0x210] sm:$0xff]
  %v1126 = vld [vmem:[%s7 + $0x218] sm:$0xff]
  %v1127 = vld [vmem:[%s7 + $0x220] sm:$0xff]
  %v1128 = vld [vmem:[%s7 + $0x228] sm:$0xff]
  %v1129 = vld [vmem:[%s7 + $0x230] sm:$0xff]
  %v1130 = vld [vmem:[%s7 + $0x238] sm:$0xff]
  %v1131 = vld [vmem:[%s7 + $0x240] sm:$0xff]
  %v1132 = vld [vmem:[%s7 + $0x248] sm:$0xff]
  %v1133 = vld [vmem:[%s7 + $0x250] sm:$0xff]
  %v1134 = vld [vmem:[%s7 + $0x258] sm:$0xff]
  %v1135 = vld [vmem:[%s7 + $0x260] sm:$0xff]
  %v1136 = vld [vmem:[%s7 + $0x268] sm:$0xff]
  %v1137 = vld [vmem:[%s7 + $0x270] sm:$0xff]
  %v1138 = vld [vmem:[%s7 + $0x278] sm:$0xff]
  %v1139 = vld [vmem:[%s7 + $0x280] sm:$0xff]
  %v1140 = vld [vmem:[%s7 + $0x288] sm:$0xff]
  %v1141 = vld [vmem:[%s7 + $0x290] sm:$0xff]
  %v1142 = vld [vmem:[%s7 + $0x298] sm:$0xff]
  %v1143 = vld [vmem:[%s7 + $0x2a0] sm:$0xff]
  %v1144 = vld [vmem:[%s7 + $0x2a8] sm:$0xff]
  %v1145 = vld [vmem:[%s7 + $0x2b0] sm:$0xff]
  %v1146 = vld [vmem:[%s7 + $0x2b8] sm:$0xff]
  %v1147 = vld [vmem:[%s7 + $0x2c0] sm:$0xff]
  %v1148 = vld [vmem:[%s7 + $0x2c8] sm:$0xff]
  %v1149 = vld [vmem:[%s7 + $0x2d0] sm:$0xff]
  %v1150 = vld [vmem:[%s7 + $0x2d8] sm:$0xff]
  %v1151 = vld [vmem:[%s7 + $0x2e0] sm:$0xff]
  %v1152 = vld [vmem:[%s7 + $0x2e8] sm:$0xff]
  %v1153 = vld [vmem:[%s7 + $0x2f0] sm:$0xff]
  %v1154 = vld [vmem:[%s7 + $0x2f8] sm:$0xff]
  %v1155 = vld [vmem:[%s7 + $0x300] sm:$0xff]
  %v1156 = vld [vmem:[%s7 + $0x308] sm:$0xff]
  %v1157 = vld [vmem:[%s7 + $0x310] sm:$0xff]
  %v1158 = vld [vmem:[%s7 + $0x318] sm:$0xff]
  %v1159 = vld [vmem:[%s7 + $0x320] sm:$0xff]
  %v1160 = vld [vmem:[%s7 + $0x328] sm:$0xff]
  %v1161 = vld [vmem:[%s7 + $0x330] sm:$0xff]
  %v1162 = vld [vmem:[%s7 + $0x338] sm:$0xff]
  %v1163 = vld [vmem:[%s7 + $0x340] sm:$0xff]
  %v1164 = vld [vmem:[%s7 + $0x348] sm:$0xff]
  %v1165 = vld [vmem:[%s7 + $0x350] sm:$0xff]
  %v1166 = vld [vmem:[%s7 + $0x358] sm:$0xff]
  %v1167 = vld [vmem:[%s7 + $0x360] sm:$0xff]
  %v1168 = vld [vmem:[%s7 + $0x368] sm:$0xff]
  %v1169 = vld [vmem:[%s7 + $0x370] sm:$0xff]
  %v1170 = vld [vmem:[%s7 + $0x378] sm:$0xff]
  %v1171 = vld [vmem:[%s7 + $0x380] sm:$0xff]
  %v1172 = vld [vmem:[%s7 + $0x388] sm:$0xff]
  %v1173 = vld [vmem:[%s7 + $0x390] sm:$0xff]
  %v1174 = vld [vmem:[%s7 + $0x398] sm:$0xff]
  %v1175 = vld [vmem:[%s7 + $0x3a0] sm:$0xff]
  %v1176 = vld [vmem:[%s7 + $0x3a8] sm:$0xff]
  %v1177 = vld [vmem:[%s7 + $0x3b0] sm:$0xff]
  %v1178 = vld [vmem:[%s7 + $0x3b8] sm:$0xff]
  %v1179 = vld [vmem:[%s7 + $0x3c0] sm:$0xff]
  %v1180 = vld [vmem:[%s7 + $0x3c8] sm:$0xff]
  %v1181 = vld [vmem:[%s7 + $0x3d0] sm:$0xff]
  %v1182 = vld [vmem:[%s7 + $0x3d8] sm:$0xff]
  %v1183 = vld [vmem:[%s7 + $0x3e0] sm:$0xff]
  %v1184 = vld [vmem:[%s7 + $0x3e8] sm:$0xff]
  %v1185 = vld [vmem:[%s7 + $0x3f0] sm:$0xff]
  %v1186 = vld [vmem:[%s7 + $0x3f8] sm:$0xff]
  %v1187 = vld [vmem:[%s7 + $0x400] sm:$0xff]
  %v1188 = vld [vmem:[%s7 + $0x408] sm:$0xff]
  %v1189 = vld [vmem:[%s7 + $0x410] sm:$0xff]
  %v1190 = vld [vmem:[%s7 + $0x418] sm:$0xff]
  %v1191 = vld [vmem:[%s7 + $0x420] sm:$0xff]
  %v1192 = vld [vmem:[%s7 + $0x428] sm:$0xff]
  %v1193 = vld [vmem:[%s7 + $0x430] sm:$0xff]
  %v1194 = vld [vmem:[%s7 + $0x438] sm:$0xff]
  %v1195 = vld [vmem:[%s7 + $0x440] sm:$0xff]
  %v1196 = vld [vmem:[%s7 + $0x448] sm:$0xff]
  %v1197 = vld [vmem:[%s7 + $0x450] sm:$0xff]
  %v1198 = vld [vmem:[%s7 + $0x458] sm:$0xff]
  %v1199 = vld [vmem:[%s7 + $0x460] sm:$0xff]
  %v1200 = vld [vmem:[%s7 + $0x468] sm:$0xff]
  %v1201 = vld [vmem:[%s7 + $0x470] sm:$0xff]
  %v1202 = vld [vmem:[%s7 + $0x478] sm:$0xff]
  %v1203 = vunpack.c.l.bf16 %v1059
  %v1204 = vunpack.c.h.bf16 %v1059
  %v1205 = vunpack.c.l.bf16 %v1060
  %v1206 = vunpack.c.h.bf16 %v1060
  %v1207 = vunpack.c.l.bf16 %v1061
  %v1208 = vunpack.c.h.bf16 %v1061
  %v1209 = vunpack.c.l.bf16 %v1062
  %v1210 = vunpack.c.h.bf16 %v1062
  %v1211 = vunpack.c.l.bf16 %v1063
  %v1212 = vunpack.c.h.bf16 %v1063
  %v1213 = vunpack.c.l.bf16 %v1064
  %v1214 = vunpack.c.h.bf16 %v1064
  %v1215 = vunpack.c.l.bf16 %v1065
  %v1216 = vunpack.c.h.bf16 %v1065
  %v1217 = vunpack.c.l.bf16 %v1066
  %v1218 = vunpack.c.h.bf16 %v1066
  %v1219 = vunpack.c.l.bf16 %v1067
  %v1220 = vunpack.c.h.bf16 %v1067
  %v1221 = vunpack.c.l.bf16 %v1068
  %v1222 = vunpack.c.h.bf16 %v1068
  %v1223 = vunpack.c.l.bf16 %v1069
  %v1224 = vunpack.c.h.bf16 %v1069
  %v1225 = vunpack.c.l.bf16 %v1070
  %v1226 = vunpack.c.h.bf16 %v1070
  %v1227 = vunpack.c.l.bf16 %v1071
  %v1228 = vunpack.c.h.bf16 %v1071
  %v1229 = vunpack.c.l.bf16 %v1072
  %v1230 = vunpack.c.h.bf16 %v1072
  %v1231 = vunpack.c.l.bf16 %v1073
  %v1232 = vunpack.c.h.bf16 %v1073
  %v1233 = vunpack.c.l.bf16 %v1074
  %v1234 = vunpack.c.h.bf16 %v1074
  %v1235 = vunpack.c.l.bf16 %v1075
  %v1236 = vunpack.c.h.bf16 %v1075
  %v1237 = vunpack.c.l.bf16 %v1076
  %v1238 = vunpack.c.h.bf16 %v1076
  %v1239 = vunpack.c.l.bf16 %v1077
  %v1240 = vunpack.c.h.bf16 %v1077
  %v1241 = vunpack.c.l.bf16 %v1078
  %v1242 = vunpack.c.h.bf16 %v1078
  %v1243 = vunpack.c.l.bf16 %v1079
  %v1244 = vunpack.c.h.bf16 %v1079
  %v1245 = vunpack.c.l.bf16 %v1080
  %v1246 = vunpack.c.h.bf16 %v1080
  %v1247 = vunpack.c.l.bf16 %v1081
  %v1248 = vunpack.c.h.bf16 %v1081
  %v1249 = vunpack.c.l.bf16 %v1082
  %v1250 = vunpack.c.h.bf16 %v1082
  %v1251 = vunpack.c.l.bf16 %v1083
  %v1252 = vunpack.c.h.bf16 %v1083
  %v1253 = vunpack.c.l.bf16 %v1084
  %v1254 = vunpack.c.h.bf16 %v1084
  %v1255 = vunpack.c.l.bf16 %v1085
  %v1256 = vunpack.c.h.bf16 %v1085
  %v1257 = vunpack.c.l.bf16 %v1086
  %v1258 = vunpack.c.h.bf16 %v1086
  %v1259 = vunpack.c.l.bf16 %v1087
  %v1260 = vunpack.c.h.bf16 %v1087
  %v1261 = vunpack.c.l.bf16 %v1088
  %v1262 = vunpack.c.h.bf16 %v1088
  %v1263 = vunpack.c.l.bf16 %v1089
  %v1264 = vunpack.c.h.bf16 %v1089
  %v1265 = vunpack.c.l.bf16 %v1090
  %v1266 = vunpack.c.h.bf16 %v1090
  %v1267 = vunpack.c.l.bf16 %v1091
  %v1268 = vunpack.c.h.bf16 %v1091
  %v1269 = vunpack.c.l.bf16 %v1092
  %v1270 = vunpack.c.h.bf16 %v1092
  %v1271 = vunpack.c.l.bf16 %v1093
  %v1272 = vunpack.c.h.bf16 %v1093
  %v1273 = vunpack.c.l.bf16 %v1094
  %v1274 = vunpack.c.h.bf16 %v1094
  %v1275 = vunpack.c.l.bf16 %v1095
  %v1276 = vunpack.c.h.bf16 %v1095
  %v1277 = vunpack.c.l.bf16 %v1096
  %v1278 = vunpack.c.h.bf16 %v1096
  %v1279 = vunpack.c.l.bf16 %v1097
  %v1280 = vunpack.c.h.bf16 %v1097
  %v1281 = vunpack.c.l.bf16 %v1098
  %v1282 = vunpack.c.h.bf16 %v1098
  %v1283 = vunpack.c.l.bf16 %v1099
  %v1284 = vunpack.c.h.bf16 %v1099
  %v1285 = vunpack.c.l.bf16 %v1100
  %v1286 = vunpack.c.h.bf16 %v1100
  %v1287 = vunpack.c.l.bf16 %v1101
  %v1288 = vunpack.c.h.bf16 %v1101
  %v1289 = vunpack.c.l.bf16 %v1102
  %v1290 = vunpack.c.h.bf16 %v1102
  %v1291 = vunpack.c.l.bf16 %v1103
  %v1292 = vunpack.c.h.bf16 %v1103
  %v1293 = vunpack.c.l.bf16 %v1104
  %v1294 = vunpack.c.h.bf16 %v1104
  %v1295 = vunpack.c.l.bf16 %v1105
  %v1296 = vunpack.c.h.bf16 %v1105
  %v1297 = vunpack.c.l.bf16 %v1106
  %v1298 = vunpack.c.h.bf16 %v1106
  %v1299 = vunpack.c.l.bf16 %v1107
  %v1300 = vunpack.c.h.bf16 %v1107
  %v1301 = vunpack.c.l.bf16 %v1108
  %v1302 = vunpack.c.h.bf16 %v1108
  %v1303 = vunpack.c.l.bf16 %v1109
  %v1304 = vunpack.c.h.bf16 %v1109
  %v1305 = vunpack.c.l.bf16 %v1110
  %v1306 = vunpack.c.h.bf16 %v1110
  %v1307 = vunpack.c.l.bf16 %v1111
  %v1308 = vunpack.c.h.bf16 %v1111
  %v1309 = vunpack.c.l.bf16 %v1112
  %v1310 = vunpack.c.h.bf16 %v1112
  %v1311 = vunpack.c.l.bf16 %v1113
  %v1312 = vunpack.c.h.bf16 %v1113
  %v1313 = vunpack.c.l.bf16 %v1114
  %v1314 = vunpack.c.h.bf16 %v1114
  %v1315 = vunpack.c.l.bf16 %v1115
  %v1316 = vunpack.c.h.bf16 %v1115
  %v1317 = vunpack.c.l.bf16 %v1116
  %v1318 = vunpack.c.h.bf16 %v1116
  %v1319 = vunpack.c.l.bf16 %v1117
  %v1320 = vunpack.c.h.bf16 %v1117
  %v1321 = vunpack.c.l.bf16 %v1118
  %v1322 = vunpack.c.h.bf16 %v1118
  %v1323 = vunpack.c.l.bf16 %v1119
  %v1324 = vunpack.c.h.bf16 %v1119
  %v1325 = vunpack.c.l.bf16 %v1120
  %v1326 = vunpack.c.h.bf16 %v1120
  %v1327 = vunpack.c.l.bf16 %v1121
  %v1328 = vunpack.c.h.bf16 %v1121
  %v1329 = vunpack.c.l.bf16 %v1122
  %v1330 = vunpack.c.h.bf16 %v1122
  %v1331 = vunpack.c.l.bf16 %v1123
  %v1332 = vunpack.c.h.bf16 %v1123
  %v1333 = vunpack.c.l.bf16 %v1124
  %v1334 = vunpack.c.h.bf16 %v1124
  %v1335 = vunpack.c.l.bf16 %v1125
  %v1336 = vunpack.c.h.bf16 %v1125
  %v1337 = vunpack.c.l.bf16 %v1126
  %v1338 = vunpack.c.h.bf16 %v1126
  %v1339 = vunpack.c.l.bf16 %v1127
  %v1340 = vunpack.c.h.bf16 %v1127
  %v1341 = vunpack.c.l.bf16 %v1128
  %v1342 = vunpack.c.h.bf16 %v1128
  %v1343 = vunpack.c.l.bf16 %v1129
  %v1344 = vunpack.c.h.bf16 %v1129
  %v1345 = vunpack.c.l.bf16 %v1130
  %v1346 = vunpack.c.h.bf16 %v1130
  %v1347 = vunpack.c.l.bf16 %v1131
  %v1348 = vunpack.c.h.bf16 %v1131
  %v1349 = vunpack.c.l.bf16 %v1132
  %v1350 = vunpack.c.h.bf16 %v1132
  %v1351 = vunpack.c.l.bf16 %v1133
  %v1352 = vunpack.c.h.bf16 %v1133
  %v1353 = vunpack.c.l.bf16 %v1134
  %v1354 = vunpack.c.h.bf16 %v1134
  %v1355 = vunpack.c.l.bf16 %v1135
  %v1356 = vunpack.c.h.bf16 %v1135
  %v1357 = vunpack.c.l.bf16 %v1136
  %v1358 = vunpack.c.h.bf16 %v1136
  %v1359 = vunpack.c.l.bf16 %v1137
  %v1360 = vunpack.c.h.bf16 %v1137
  %v1361 = vunpack.c.l.bf16 %v1138
  %v1362 = vunpack.c.h.bf16 %v1138
  %v1363 = vunpack.c.l.bf16 %v1139
  %v1364 = vunpack.c.h.bf16 %v1139
  %v1365 = vunpack.c.l.bf16 %v1140
  %v1366 = vunpack.c.h.bf16 %v1140
  %v1367 = vunpack.c.l.bf16 %v1141
  %v1368 = vunpack.c.h.bf16 %v1141
  %v1369 = vunpack.c.l.bf16 %v1142
  %v1370 = vunpack.c.h.bf16 %v1142
  %v1371 = vunpack.c.l.bf16 %v1143
  %v1372 = vunpack.c.h.bf16 %v1143
  %v1373 = vunpack.c.l.bf16 %v1144
  %v1374 = vunpack.c.h.bf16 %v1144
  %v1375 = vunpack.c.l.bf16 %v1145
  %v1376 = vunpack.c.h.bf16 %v1145
  %v1377 = vunpack.c.l.bf16 %v1146
  %v1378 = vunpack.c.h.bf16 %v1146
  %v1379 = vunpack.c.l.bf16 %v1147
  %v1380 = vunpack.c.h.bf16 %v1147
  %v1381 = vunpack.c.l.bf16 %v1148
  %v1382 = vunpack.c.h.bf16 %v1148
  %v1383 = vunpack.c.l.bf16 %v1149
  %v1384 = vunpack.c.h.bf16 %v1149
  %v1385 = vunpack.c.l.bf16 %v1150
  %v1386 = vunpack.c.h.bf16 %v1150
  %v1387 = vunpack.c.l.bf16 %v1151
  %v1388 = vunpack.c.h.bf16 %v1151
  %v1389 = vunpack.c.l.bf16 %v1152
  %v1390 = vunpack.c.h.bf16 %v1152
  %v1391 = vunpack.c.l.bf16 %v1153
  %v1392 = vunpack.c.h.bf16 %v1153
  %v1393 = vunpack.c.l.bf16 %v1154
  %v1394 = vunpack.c.h.bf16 %v1154
  %v1395 = vunpack.c.l.bf16 %v1155
  %v1396 = vunpack.c.h.bf16 %v1155
  %v1397 = vunpack.c.l.bf16 %v1156
  %v1398 = vunpack.c.h.bf16 %v1156
  %v1399 = vunpack.c.l.bf16 %v1157
  %v1400 = vunpack.c.h.bf16 %v1157
  %v1401 = vunpack.c.l.bf16 %v1158
  %v1402 = vunpack.c.h.bf16 %v1158
  %v1403 = vunpack.c.l.bf16 %v1159
  %v1404 = vunpack.c.h.bf16 %v1159
  %v1405 = vunpack.c.l.bf16 %v1160
  %v1406 = vunpack.c.h.bf16 %v1160
  %v1407 = vunpack.c.l.bf16 %v1161
  %v1408 = vunpack.c.h.bf16 %v1161
  %v1409 = vunpack.c.l.bf16 %v1162
  %v1410 = vunpack.c.h.bf16 %v1162
  %v1411 = vunpack.c.l.bf16 %v1163
  %v1412 = vunpack.c.h.bf16 %v1163
  %v1413 = vunpack.c.l.bf16 %v1164
  %v1414 = vunpack.c.h.bf16 %v1164
  %v1415 = vunpack.c.l.bf16 %v1165
  %v1416 = vunpack.c.h.bf16 %v1165
  %v1417 = vunpack.c.l.bf16 %v1166
  %v1418 = vunpack.c.h.bf16 %v1166
  %v1419 = vunpack.c.l.bf16 %v1167
  %v1420 = vunpack.c.h.bf16 %v1167
  %v1421 = vunpack.c.l.bf16 %v1168
  %v1422 = vunpack.c.h.bf16 %v1168
  %v1423 = vunpack.c.l.bf16 %v1169
  %v1424 = vunpack.c.h.bf16 %v1169
  %v1425 = vunpack.c.l.bf16 %v1170
  %v1426 = vunpack.c.h.bf16 %v1170
  %v1427 = vunpack.c.l.bf16 %v1171
  %v1428 = vunpack.c.h.bf16 %v1171
  %v1429 = vunpack.c.l.bf16 %v1172
  %v1430 = vunpack.c.h.bf16 %v1172
  %v1431 = vunpack.c.l.bf16 %v1173
  %v1432 = vunpack.c.h.bf16 %v1173
  %v1433 = vunpack.c.l.bf16 %v1174
  %v1434 = vunpack.c.h.bf16 %v1174
  %v1435 = vunpack.c.l.bf16 %v1175
  %v1436 = vunpack.c.h.bf16 %v1175
  %v1437 = vunpack.c.l.bf16 %v1176
  %v1438 = vunpack.c.h.bf16 %v1176
  %v1439 = vunpack.c.l.bf16 %v1177
  %v1440 = vunpack.c.h.bf16 %v1177
  %v1441 = vunpack.c.l.bf16 %v1178
  %v1442 = vunpack.c.h.bf16 %v1178
  %v1443 = vunpack.c.l.bf16 %v1179
  %v1444 = vunpack.c.h.bf16 %v1179
  %v1445 = vunpack.c.l.bf16 %v1180
  %v1446 = vunpack.c.h.bf16 %v1180
  %v1447 = vunpack.c.l.bf16 %v1181
  %v1448 = vunpack.c.h.bf16 %v1181
  %v1449 = vunpack.c.l.bf16 %v1182
  %v1450 = vunpack.c.h.bf16 %v1182
  %v1451 = vunpack.c.l.bf16 %v1183
  %v1452 = vunpack.c.h.bf16 %v1183
  %v1453 = vunpack.c.l.bf16 %v1184
  %v1454 = vunpack.c.h.bf16 %v1184
  %v1455 = vunpack.c.l.bf16 %v1185
  %v1456 = vunpack.c.h.bf16 %v1185
  %v1457 = vunpack.c.l.bf16 %v1186
  %v1458 = vunpack.c.h.bf16 %v1186
  %v1459 = vunpack.c.l.bf16 %v1187
  %v1460 = vunpack.c.h.bf16 %v1187
  %v1461 = vunpack.c.l.bf16 %v1188
  %v1462 = vunpack.c.h.bf16 %v1188
  %v1463 = vunpack.c.l.bf16 %v1189
  %v1464 = vunpack.c.h.bf16 %v1189
  %v1465 = vunpack.c.l.bf16 %v1190
  %v1466 = vunpack.c.h.bf16 %v1190
  %v1467 = vunpack.c.l.bf16 %v1191
  %v1468 = vunpack.c.h.bf16 %v1191
  %v1469 = vunpack.c.l.bf16 %v1192
  %v1470 = vunpack.c.h.bf16 %v1192
  %v1471 = vunpack.c.l.bf16 %v1193
  %v1472 = vunpack.c.h.bf16 %v1193
  %v1473 = vunpack.c.l.bf16 %v1194
  %v1474 = vunpack.c.h.bf16 %v1194
  %v1475 = vunpack.c.l.bf16 %v1195
  %v1476 = vunpack.c.h.bf16 %v1195
  %v1477 = vunpack.c.l.bf16 %v1196
  %v1478 = vunpack.c.h.bf16 %v1196
  %v1479 = vunpack.c.l.bf16 %v1197
  %v1480 = vunpack.c.h.bf16 %v1197
  %v1481 = vunpack.c.l.bf16 %v1198
  %v1482 = vunpack.c.h.bf16 %v1198
  %v1483 = vunpack.c.l.bf16 %v1199
  %v1484 = vunpack.c.h.bf16 %v1199
  %v1485 = vunpack.c.l.bf16 %v1200
  %v1486 = vunpack.c.h.bf16 %v1200
  %v1487 = vunpack.c.l.bf16 %v1201
  %v1488 = vunpack.c.h.bf16 %v1201
  %v1489 = vunpack.c.l.bf16 %v1202
  %v1490 = vunpack.c.h.bf16 %v1202
  %v1491 = vld [vmem:[%s9] sm:$0xf]
  %v1492 = vld [vmem:[%s9 + $0x4] sm:$0xf]
  %v1493 = vld [vmem:[%s9 + $0x8] sm:$0xf]
  %v1494 = vld [vmem:[%s9 + $0xc] sm:$0xf]
  %v1495 = vld [vmem:[%s9 + $0x10] sm:$0xf]
  %v1496 = vld [vmem:[%s9 + $0x14] sm:$0xf]
  %v1497 = vld [vmem:[%s9 + $0x18] sm:$0xf]
  %v1498 = vld [vmem:[%s9 + $0x1c] sm:$0xf]
  %v1499 = vld [vmem:[%s9 + $0x20] sm:$0xf]
  %v1500 = vunpack.c.l.bf16 %v1491
  %v1501 = vunpack.c.l.bf16 %v1492
  %v1502 = vunpack.c.l.bf16 %v1493
  %v1503 = vunpack.c.l.bf16 %v1494
  %v1504 = vunpack.c.l.bf16 %v1495
  %v1505 = vunpack.c.l.bf16 %v1496
  %v1506 = vunpack.c.l.bf16 %v1497
  %v1507 = vunpack.c.l.bf16 %v1498
  %v1508 = vunpack.c.l.bf16 %v1499
  %v1509 = vld [vmem:[%s10] sm:$0xff]
  %v1510 = vld [vmem:[%s10 + $0x8] sm:$0xff]
  %v1511 = vld [vmem:[%s10 + $0x10] sm:$0xff]
  %v1512 = vld [vmem:[%s10 + $0x18] sm:$0xff]
  %v1513 = vld [vmem:[%s10 + $0x20] sm:$0xff]
  %v1514 = vld [vmem:[%s10 + $0x28] sm:$0xff]
  %v1515 = vld [vmem:[%s10 + $0x30] sm:$0xff]
  %v1516 = vld [vmem:[%s10 + $0x38] sm:$0xff]
  %v1517 = vld [vmem:[%s10 + $0x40] sm:$0xff]
  %v1518 = vld [vmem:[%s10 + $0x48] sm:$0xff]
  %v1519 = vld [vmem:[%s10 + $0x50] sm:$0xff]
  %v1520 = vld [vmem:[%s10 + $0x58] sm:$0xff]
  %v1521 = vld [vmem:[%s10 + $0x60] sm:$0xff]
  %v1522 = vld [vmem:[%s10 + $0x68] sm:$0xff]
  %v1523 = vld [vmem:[%s10 + $0x70] sm:$0xff]
  %v1524 = vld [vmem:[%s10 + $0x78] sm:$0xff]
  %v1525 = vld [vmem:[%s10 + $0x80] sm:$0xff]
  %v1526 = vld [vmem:[%s10 + $0x88] sm:$0xff]
  %v1527 = vld [vmem:[%s10 + $0x90] sm:$0xff]
  %v1528 = vld [vmem:[%s10 + $0x98] sm:$0xff]
  %v1529 = vld [vmem:[%s10 + $0xa0] sm:$0xff]
  %v1530 = vld [vmem:[%s10 + $0xa8] sm:$0xff]
  %v1531 = vld [vmem:[%s10 + $0xb0] sm:$0xff]
  %v1532 = vld [vmem:[%s10 + $0xb8] sm:$0xff]
  %v1533 = vld [vmem:[%s10 + $0xc0] sm:$0xff]
  %v1534 = vld [vmem:[%s10 + $0xc8] sm:$0xff]
  %v1535 = vld [vmem:[%s10 + $0xd0] sm:$0xff]
  %v1536 = vld [vmem:[%s10 + $0xd8] sm:$0xff]
  %v1537 = vld [vmem:[%s10 + $0xe0] sm:$0xff]
  %v1538 = vld [vmem:[%s10 + $0xe8] sm:$0xff]
  %v1539 = vld [vmem:[%s10 + $0xf0] sm:$0xff]
  %v1540 = vld [vmem:[%s10 + $0xf8] sm:$0xff]
  %v1541 = vld [vmem:[%s10 + $0x100] sm:$0xff]
  %v1542 = vld [vmem:[%s10 + $0x108] sm:$0xff]
  %v1543 = vld [vmem:[%s10 + $0x110] sm:$0xff]
  %v1544 = vld [vmem:[%s10 + $0x118] sm:$0xff]
  %v1545 = vld [vmem:[%s10 + $0x120] sm:$0xff]
  %v1546 = vld [vmem:[%s10 + $0x128] sm:$0xff]
  %v1547 = vld [vmem:[%s10 + $0x130] sm:$0xff]
  %v1548 = vld [vmem:[%s10 + $0x138] sm:$0xff]
  %v1549 = vld [vmem:[%s10 + $0x140] sm:$0xff]
  %v1550 = vld [vmem:[%s10 + $0x148] sm:$0xff]
  %v1551 = vld [vmem:[%s10 + $0x150] sm:$0xff]
  %v1552 = vld [vmem:[%s10 + $0x158] sm:$0xff]
  %v1553 = vld [vmem:[%s10 + $0x160] sm:$0xff]
  %v1554 = vld [vmem:[%s10 + $0x168] sm:$0xff]
  %v1555 = vld [vmem:[%s10 + $0x170] sm:$0xff]
  %v1556 = vld [vmem:[%s10 + $0x178] sm:$0xff]
  %v1557 = vld [vmem:[%s10 + $0x180] sm:$0xff]
  %v1558 = vld [vmem:[%s10 + $0x188] sm:$0xff]
  %v1559 = vld [vmem:[%s10 + $0x190] sm:$0xff]
  %v1560 = vld [vmem:[%s10 + $0x198] sm:$0xff]
  %v1561 = vld [vmem:[%s10 + $0x1a0] sm:$0xff]
  %v1562 = vld [vmem:[%s10 + $0x1a8] sm:$0xff]
  %v1563 = vld [vmem:[%s10 + $0x1b0] sm:$0xff]
  %v1564 = vld [vmem:[%s10 + $0x1b8] sm:$0xff]
  %v1565 = vld [vmem:[%s10 + $0x1c0] sm:$0xff]
  %v1566 = vld [vmem:[%s10 + $0x1c8] sm:$0xff]
  %v1567 = vld [vmem:[%s10 + $0x1d0] sm:$0xff]
  %v1568 = vld [vmem:[%s10 + $0x1d8] sm:$0xff]
  %v1569 = vld [vmem:[%s10 + $0x1e0] sm:$0xff]
  %v1570 = vld [vmem:[%s10 + $0x1e8] sm:$0xff]
  %v1571 = vld [vmem:[%s10 + $0x1f0] sm:$0xff]
  %v1572 = vld [vmem:[%s10 + $0x1f8] sm:$0xff]
  %v1573 = vld [vmem:[%s10 + $0x200] sm:$0xff]
  %v1574 = vld [vmem:[%s10 + $0x208] sm:$0xff]
  %v1575 = vld [vmem:[%s10 + $0x210] sm:$0xff]
  %v1576 = vld [vmem:[%s10 + $0x218] sm:$0xff]
  %v1577 = vld [vmem:[%s10 + $0x220] sm:$0xff]
  %v1578 = vld [vmem:[%s10 + $0x228] sm:$0xff]
  %v1579 = vld [vmem:[%s10 + $0x230] sm:$0xff]
  %v1580 = vld [vmem:[%s10 + $0x238] sm:$0xff]
  %v1581 = vld [vmem:[%s10 + $0x240] sm:$0xff]
  %v1582 = vld [vmem:[%s10 + $0x248] sm:$0xff]
  %v1583 = vld [vmem:[%s10 + $0x250] sm:$0xff]
  %v1584 = vld [vmem:[%s10 + $0x258] sm:$0xff]
  %v1585 = vld [vmem:[%s10 + $0x260] sm:$0xff]
  %v1586 = vld [vmem:[%s10 + $0x268] sm:$0xff]
  %v1587 = vld [vmem:[%s10 + $0x270] sm:$0xff]
  %v1588 = vld [vmem:[%s10 + $0x278] sm:$0xff]
  %v1589 = vld [vmem:[%s10 + $0x280] sm:$0xff]
  %v1590 = vld [vmem:[%s10 + $0x288] sm:$0xff]
  %v1591 = vld [vmem:[%s10 + $0x290] sm:$0xff]
  %v1592 = vld [vmem:[%s10 + $0x298] sm:$0xff]
  %v1593 = vld [vmem:[%s10 + $0x2a0] sm:$0xff]
  %v1594 = vld [vmem:[%s10 + $0x2a8] sm:$0xff]
  %v1595 = vld [vmem:[%s10 + $0x2b0] sm:$0xff]
  %v1596 = vld [vmem:[%s10 + $0x2b8] sm:$0xff]
  %v1597 = vld [vmem:[%s10 + $0x2c0] sm:$0xff]
  %v1598 = vld [vmem:[%s10 + $0x2c8] sm:$0xff]
  %v1599 = vld [vmem:[%s10 + $0x2d0] sm:$0xff]
  %v1600 = vld [vmem:[%s10 + $0x2d8] sm:$0xff]
  %v1601 = vld [vmem:[%s10 + $0x2e0] sm:$0xff]
  %v1602 = vld [vmem:[%s10 + $0x2e8] sm:$0xff]
  %v1603 = vld [vmem:[%s10 + $0x2f0] sm:$0xff]
  %v1604 = vld [vmem:[%s10 + $0x2f8] sm:$0xff]
  %v1605 = vld [vmem:[%s10 + $0x300] sm:$0xff]
  %v1606 = vld [vmem:[%s10 + $0x308] sm:$0xff]
  %v1607 = vld [vmem:[%s10 + $0x310] sm:$0xff]
  %v1608 = vld [vmem:[%s10 + $0x318] sm:$0xff]
  %v1609 = vld [vmem:[%s10 + $0x320] sm:$0xff]
  %v1610 = vld [vmem:[%s10 + $0x328] sm:$0xff]
  %v1611 = vld [vmem:[%s10 + $0x330] sm:$0xff]
  %v1612 = vld [vmem:[%s10 + $0x338] sm:$0xff]
  %v1613 = vld [vmem:[%s10 + $0x340] sm:$0xff]
  %v1614 = vld [vmem:[%s10 + $0x348] sm:$0xff]
  %v1615 = vld [vmem:[%s10 + $0x350] sm:$0xff]
  %v1616 = vld [vmem:[%s10 + $0x358] sm:$0xff]
  %v1617 = vld [vmem:[%s10 + $0x360] sm:$0xff]
  %v1618 = vld [vmem:[%s10 + $0x368] sm:$0xff]
  %v1619 = vld [vmem:[%s10 + $0x370] sm:$0xff]
  %v1620 = vld [vmem:[%s10 + $0x378] sm:$0xff]
  %v1621 = vld [vmem:[%s10 + $0x380] sm:$0xff]
  %v1622 = vld [vmem:[%s10 + $0x388] sm:$0xff]
  %v1623 = vld [vmem:[%s10 + $0x390] sm:$0xff]
  %v1624 = vld [vmem:[%s10 + $0x398] sm:$0xff]
  %v1625 = vld [vmem:[%s10 + $0x3a0] sm:$0xff]
  %v1626 = vld [vmem:[%s10 + $0x3a8] sm:$0xff]
  %v1627 = vld [vmem:[%s10 + $0x3b0] sm:$0xff]
  %v1628 = vld [vmem:[%s10 + $0x3b8] sm:$0xff]
  %v1629 = vld [vmem:[%s10 + $0x3c0] sm:$0xff]
  %v1630 = vld [vmem:[%s10 + $0x3c8] sm:$0xff]
  %v1631 = vld [vmem:[%s10 + $0x3d0] sm:$0xff]
  %v1632 = vld [vmem:[%s10 + $0x3d8] sm:$0xff]
  %v1633 = vld [vmem:[%s10 + $0x3e0] sm:$0xff]
  %v1634 = vld [vmem:[%s10 + $0x3e8] sm:$0xff]
  %v1635 = vld [vmem:[%s10 + $0x3f0] sm:$0xff]
  %v1636 = vld [vmem:[%s10 + $0x3f8] sm:$0xff]
  %v1637 = vld [vmem:[%s10 + $0x400] sm:$0xff]
  %v1638 = vld [vmem:[%s10 + $0x408] sm:$0xff]
  %v1639 = vld [vmem:[%s10 + $0x410] sm:$0xff]
  %v1640 = vld [vmem:[%s10 + $0x418] sm:$0xff]
  %v1641 = vld [vmem:[%s10 + $0x420] sm:$0xff]
  %v1642 = vld [vmem:[%s10 + $0x428] sm:$0xff]
  %v1643 = vld [vmem:[%s10 + $0x430] sm:$0xff]
  %v1644 = vld [vmem:[%s10 + $0x438] sm:$0xff]
  %v1645 = vld [vmem:[%s10 + $0x440] sm:$0xff]
  %v1646 = vld [vmem:[%s10 + $0x448] sm:$0xff]
  %v1647 = vld [vmem:[%s10 + $0x450] sm:$0xff]
  %v1648 = vld [vmem:[%s10 + $0x458] sm:$0xff]
  %v1649 = vld [vmem:[%s10 + $0x460] sm:$0xff]
  %v1650 = vld [vmem:[%s10 + $0x468] sm:$0xff]
  %v1651 = vld [vmem:[%s10 + $0x470] sm:$0xff]
  %v1652 = vld [vmem:[%s10 + $0x478] sm:$0xff]
  %v1653 = vld [vmem:[%s10 + $0x480] sm:$0xff]
  %v1654 = vld [vmem:[%s10 + $0x488] sm:$0xff]
  %v1655 = vld [vmem:[%s10 + $0x490] sm:$0xff]
  %v1656 = vld [vmem:[%s10 + $0x498] sm:$0xff]
  %v1657 = vld [vmem:[%s10 + $0x4a0] sm:$0xff]
  %v1658 = vld [vmem:[%s10 + $0x4a8] sm:$0xff]
  %v1659 = vld [vmem:[%s10 + $0x4b0] sm:$0xff]
  %v1660 = vld [vmem:[%s10 + $0x4b8] sm:$0xff]
  %v1661 = vld [vmem:[%s10 + $0x4c0] sm:$0xff]
  %v1662 = vld [vmem:[%s10 + $0x4c8] sm:$0xff]
  %v1663 = vld [vmem:[%s10 + $0x4d0] sm:$0xff]
  %v1664 = vld [vmem:[%s10 + $0x4d8] sm:$0xff]
  %v1665 = vld [vmem:[%s10 + $0x4e0] sm:$0xff]
  %v1666 = vld [vmem:[%s10 + $0x4e8] sm:$0xff]
  %v1667 = vld [vmem:[%s10 + $0x4f0] sm:$0xff]
  %v1668 = vld [vmem:[%s10 + $0x4f8] sm:$0xff]
  %v1669 = vld [vmem:[%s10 + $0x500] sm:$0xff]
  %v1670 = vld [vmem:[%s10 + $0x508] sm:$0xff]
  %v1671 = vld [vmem:[%s10 + $0x510] sm:$0xff]
  %v1672 = vld [vmem:[%s10 + $0x518] sm:$0xff]
  %v1673 = vld [vmem:[%s10 + $0x520] sm:$0xff]
  %v1674 = vld [vmem:[%s10 + $0x528] sm:$0xff]
  %v1675 = vld [vmem:[%s10 + $0x530] sm:$0xff]
  %v1676 = vld [vmem:[%s10 + $0x538] sm:$0xff]
  %v1677 = vld [vmem:[%s10 + $0x540] sm:$0xff]
  %v1678 = vld [vmem:[%s10 + $0x548] sm:$0xff]
  %v1679 = vld [vmem:[%s10 + $0x550] sm:$0xff]
  %v1680 = vld [vmem:[%s10 + $0x558] sm:$0xff]
  %v1681 = vld [vmem:[%s10 + $0x560] sm:$0xff]
  %v1682 = vld [vmem:[%s10 + $0x568] sm:$0xff]
  %v1683 = vld [vmem:[%s10 + $0x570] sm:$0xff]
  %v1684 = vld [vmem:[%s10 + $0x578] sm:$0xff]
  %v1685 = vld [vmem:[%s10 + $0x580] sm:$0xff]
  %v1686 = vld [vmem:[%s10 + $0x588] sm:$0xff]
  %v1687 = vld [vmem:[%s10 + $0x590] sm:$0xff]
  %v1688 = vld [vmem:[%s10 + $0x598] sm:$0xff]
  %v1689 = vld [vmem:[%s10 + $0x5a0] sm:$0xff]
  %v1690 = vld [vmem:[%s10 + $0x5a8] sm:$0xff]
  %v1691 = vld [vmem:[%s10 + $0x5b0] sm:$0xff]
  %v1692 = vld [vmem:[%s10 + $0x5b8] sm:$0xff]
  %v1693 = vld [vmem:[%s10 + $0x5c0] sm:$0xff]
  %v1694 = vld [vmem:[%s10 + $0x5c8] sm:$0xff]
  %v1695 = vld [vmem:[%s10 + $0x5d0] sm:$0xff]
  %v1696 = vld [vmem:[%s10 + $0x5d8] sm:$0xff]
  %v1697 = vld [vmem:[%s10 + $0x5e0] sm:$0xff]
  %v1698 = vld [vmem:[%s10 + $0x5e8] sm:$0xff]
  %v1699 = vld [vmem:[%s10 + $0x5f0] sm:$0xff]
  %v1700 = vld [vmem:[%s10 + $0x5f8] sm:$0xff]
  %v1701 = vld [vmem:[%s10 + $0x600] sm:$0xff]
  %v1702 = vld [vmem:[%s10 + $0x608] sm:$0xff]
  %v1703 = vld [vmem:[%s10 + $0x610] sm:$0xff]
  %v1704 = vld [vmem:[%s10 + $0x618] sm:$0xff]
  %v1705 = vld [vmem:[%s10 + $0x620] sm:$0xff]
  %v1706 = vld [vmem:[%s10 + $0x628] sm:$0xff]
  %v1707 = vld [vmem:[%s10 + $0x630] sm:$0xff]
  %v1708 = vld [vmem:[%s10 + $0x638] sm:$0xff]
  %v1709 = vld [vmem:[%s10 + $0x640] sm:$0xff]
  %v1710 = vld [vmem:[%s10 + $0x648] sm:$0xff]
  %v1711 = vld [vmem:[%s10 + $0x650] sm:$0xff]
  %v1712 = vld [vmem:[%s10 + $0x658] sm:$0xff]
  %v1713 = vld [vmem:[%s10 + $0x660] sm:$0xff]
  %v1714 = vld [vmem:[%s10 + $0x668] sm:$0xff]
  %v1715 = vld [vmem:[%s10 + $0x670] sm:$0xff]
  %v1716 = vld [vmem:[%s10 + $0x678] sm:$0xff]
  %v1717 = vld [vmem:[%s10 + $0x680] sm:$0xff]
  %v1718 = vld [vmem:[%s10 + $0x688] sm:$0xff]
  %v1719 = vld [vmem:[%s10 + $0x690] sm:$0xff]
  %v1720 = vld [vmem:[%s10 + $0x698] sm:$0xff]
  %v1721 = vld [vmem:[%s10 + $0x6a0] sm:$0xff]
  %v1722 = vld [vmem:[%s10 + $0x6a8] sm:$0xff]
  %v1723 = vld [vmem:[%s10 + $0x6b0] sm:$0xff]
  %v1724 = vld [vmem:[%s10 + $0x6b8] sm:$0xff]
  %v1725 = vld [vmem:[%s10 + $0x6c0] sm:$0xff]
  %v1726 = vld [vmem:[%s10 + $0x6c8] sm:$0xff]
  %v1727 = vld [vmem:[%s10 + $0x6d0] sm:$0xff]
  %v1728 = vld [vmem:[%s10 + $0x6d8] sm:$0xff]
  %v1729 = vld [vmem:[%s10 + $0x6e0] sm:$0xff]
  %v1730 = vld [vmem:[%s10 + $0x6e8] sm:$0xff]
  %v1731 = vld [vmem:[%s10 + $0x6f0] sm:$0xff]
  %v1732 = vld [vmem:[%s10 + $0x6f8] sm:$0xff]
  %v1733 = vld [vmem:[%s10 + $0x700] sm:$0xff]
  %v1734 = vld [vmem:[%s10 + $0x708] sm:$0xff]
  %v1735 = vld [vmem:[%s10 + $0x710] sm:$0xff]
  %v1736 = vld [vmem:[%s10 + $0x718] sm:$0xff]
  %v1737 = vld [vmem:[%s10 + $0x720] sm:$0xff]
  %v1738 = vld [vmem:[%s10 + $0x728] sm:$0xff]
  %v1739 = vld [vmem:[%s10 + $0x730] sm:$0xff]
  %v1740 = vld [vmem:[%s10 + $0x738] sm:$0xff]
  %v1741 = vld [vmem:[%s10 + $0x740] sm:$0xff]
  %v1742 = vld [vmem:[%s10 + $0x748] sm:$0xff]
  %v1743 = vld [vmem:[%s10 + $0x750] sm:$0xff]
  %v1744 = vld [vmem:[%s10 + $0x758] sm:$0xff]
  %v1745 = vld [vmem:[%s10 + $0x760] sm:$0xff]
  %v1746 = vld [vmem:[%s10 + $0x768] sm:$0xff]
  %v1747 = vld [vmem:[%s10 + $0x770] sm:$0xff]
  %v1748 = vld [vmem:[%s10 + $0x778] sm:$0xff]
  %v1749 = vld [vmem:[%s10 + $0x780] sm:$0xff]
  %v1750 = vld [vmem:[%s10 + $0x788] sm:$0xff]
  %v1751 = vld [vmem:[%s10 + $0x790] sm:$0xff]
  %v1752 = vld [vmem:[%s10 + $0x798] sm:$0xff]
  %v1753 = vld [vmem:[%s10 + $0x7a0] sm:$0xff]
  %v1754 = vld [vmem:[%s10 + $0x7a8] sm:$0xff]
  %v1755 = vld [vmem:[%s10 + $0x7b0] sm:$0xff]
  %v1756 = vld [vmem:[%s10 + $0x7b8] sm:$0xff]
  %v1757 = vld [vmem:[%s10 + $0x7c0] sm:$0xff]
  %v1758 = vld [vmem:[%s10 + $0x7c8] sm:$0xff]
  %v1759 = vld [vmem:[%s10 + $0x7d0] sm:$0xff]
  %v1760 = vld [vmem:[%s10 + $0x7d8] sm:$0xff]
  %v1761 = vld [vmem:[%s10 + $0x7e0] sm:$0xff]
  %v1762 = vld [vmem:[%s10 + $0x7e8] sm:$0xff]
  %v1763 = vld [vmem:[%s10 + $0x7f0] sm:$0xff]
  %v1764 = vld [vmem:[%s10 + $0x7f8] sm:$0xff]
  %v1765 = vld [vmem:[%s10 + $0x800] sm:$0xff]
  %v1766 = vld [vmem:[%s10 + $0x808] sm:$0xff]
  %v1767 = vld [vmem:[%s10 + $0x810] sm:$0xff]
  %v1768 = vld [vmem:[%s10 + $0x818] sm:$0xff]
  %v1769 = vld [vmem:[%s10 + $0x820] sm:$0xff]
  %v1770 = vld [vmem:[%s10 + $0x828] sm:$0xff]
  %v1771 = vld [vmem:[%s10 + $0x830] sm:$0xff]
  %v1772 = vld [vmem:[%s10 + $0x838] sm:$0xff]
  %v1773 = vld [vmem:[%s10 + $0x840] sm:$0xff]
  %v1774 = vld [vmem:[%s10 + $0x848] sm:$0xff]
  %v1775 = vld [vmem:[%s10 + $0x850] sm:$0xff]
  %v1776 = vld [vmem:[%s10 + $0x858] sm:$0xff]
  %v1777 = vld [vmem:[%s10 + $0x860] sm:$0xff]
  %v1778 = vld [vmem:[%s10 + $0x868] sm:$0xff]
  %v1779 = vld [vmem:[%s10 + $0x870] sm:$0xff]
  %v1780 = vld [vmem:[%s10 + $0x878] sm:$0xff]
  %v1781 = vld [vmem:[%s10 + $0x880] sm:$0xff]
  %v1782 = vld [vmem:[%s10 + $0x888] sm:$0xff]
  %v1783 = vld [vmem:[%s10 + $0x890] sm:$0xff]
  %v1784 = vld [vmem:[%s10 + $0x898] sm:$0xff]
  %v1785 = vld [vmem:[%s10 + $0x8a0] sm:$0xff]
  %v1786 = vld [vmem:[%s10 + $0x8a8] sm:$0xff]
  %v1787 = vld [vmem:[%s10 + $0x8b0] sm:$0xff]
  %v1788 = vld [vmem:[%s10 + $0x8b8] sm:$0xff]
  %v1789 = vld [vmem:[%s10 + $0x8c0] sm:$0xff]
  %v1790 = vld [vmem:[%s10 + $0x8c8] sm:$0xff]
  %v1791 = vld [vmem:[%s10 + $0x8d0] sm:$0xff]
  %v1792 = vld [vmem:[%s10 + $0x8d8] sm:$0xff]
  %v1793 = vld [vmem:[%s10 + $0x8e0] sm:$0xff]
  %v1794 = vld [vmem:[%s10 + $0x8e8] sm:$0xff]
  %v1795 = vld [vmem:[%s10 + $0x8f0] sm:$0xff]
  %v1796 = vld [vmem:[%s10 + $0x8f8] sm:$0xff]
  %v1797 = vld [vmem:[%s10 + $0x900] sm:$0xff]
  %v1798 = vld [vmem:[%s10 + $0x908] sm:$0xff]
  %v1799 = vld [vmem:[%s10 + $0x910] sm:$0xff]
  %v1800 = vld [vmem:[%s10 + $0x918] sm:$0xff]
  %v1801 = vld [vmem:[%s10 + $0x920] sm:$0xff]
  %v1802 = vld [vmem:[%s10 + $0x928] sm:$0xff]
  %v1803 = vld [vmem:[%s10 + $0x930] sm:$0xff]
  %v1804 = vld [vmem:[%s10 + $0x938] sm:$0xff]
  %v1805 = vld [vmem:[%s10 + $0x940] sm:$0xff]
  %v1806 = vld [vmem:[%s10 + $0x948] sm:$0xff]
  %v1807 = vld [vmem:[%s10 + $0x950] sm:$0xff]
  %v1808 = vld [vmem:[%s10 + $0x958] sm:$0xff]
  %v1809 = vld [vmem:[%s10 + $0x960] sm:$0xff]
  %v1810 = vld [vmem:[%s10 + $0x968] sm:$0xff]
  %v1811 = vld [vmem:[%s10 + $0x970] sm:$0xff]
  %v1812 = vld [vmem:[%s10 + $0x978] sm:$0xff]
  %v1813 = vld [vmem:[%s10 + $0x980] sm:$0xff]
  %v1814 = vld [vmem:[%s10 + $0x988] sm:$0xff]
  %v1815 = vld [vmem:[%s10 + $0x990] sm:$0xff]
  %v1816 = vld [vmem:[%s10 + $0x998] sm:$0xff]
  %v1817 = vld [vmem:[%s10 + $0x9a0] sm:$0xff]
  %v1818 = vld [vmem:[%s10 + $0x9a8] sm:$0xff]
  %v1819 = vld [vmem:[%s10 + $0x9b0] sm:$0xff]
  %v1820 = vld [vmem:[%s10 + $0x9b8] sm:$0xff]
  %v1821 = vld [vmem:[%s10 + $0x9c0] sm:$0xff]
  %v1822 = vld [vmem:[%s10 + $0x9c8] sm:$0xff]
  %v1823 = vld [vmem:[%s10 + $0x9d0] sm:$0xff]
  %v1824 = vld [vmem:[%s10 + $0x9d8] sm:$0xff]
  %v1825 = vld [vmem:[%s10 + $0x9e0] sm:$0xff]
  %v1826 = vld [vmem:[%s10 + $0x9e8] sm:$0xff]
  %v1827 = vld [vmem:[%s10 + $0x9f0] sm:$0xff]
  %v1828 = vld [vmem:[%s10 + $0x9f8] sm:$0xff]
  %v1829 = vld [vmem:[%s10 + $0xa00] sm:$0xff]
  %v1830 = vld [vmem:[%s10 + $0xa08] sm:$0xff]
  %v1831 = vld [vmem:[%s10 + $0xa10] sm:$0xff]
  %v1832 = vld [vmem:[%s10 + $0xa18] sm:$0xff]
  %v1833 = vld [vmem:[%s10 + $0xa20] sm:$0xff]
  %v1834 = vld [vmem:[%s10 + $0xa28] sm:$0xff]
  %v1835 = vld [vmem:[%s10 + $0xa30] sm:$0xff]
  %v1836 = vld [vmem:[%s10 + $0xa38] sm:$0xff]
  %v1837 = vld [vmem:[%s10 + $0xa40] sm:$0xff]
  %v1838 = vld [vmem:[%s10 + $0xa48] sm:$0xff]
  %v1839 = vld [vmem:[%s10 + $0xa50] sm:$0xff]
  %v1840 = vld [vmem:[%s10 + $0xa58] sm:$0xff]
  %v1841 = vld [vmem:[%s10 + $0xa60] sm:$0xff]
  %v1842 = vld [vmem:[%s10 + $0xa68] sm:$0xff]
  %v1843 = vld [vmem:[%s10 + $0xa70] sm:$0xff]
  %v1844 = vld [vmem:[%s10 + $0xa78] sm:$0xff]
  %v1845 = vld [vmem:[%s10 + $0xa80] sm:$0xff]
  %v1846 = vld [vmem:[%s10 + $0xa88] sm:$0xff]
  %v1847 = vld [vmem:[%s10 + $0xa90] sm:$0xff]
  %v1848 = vld [vmem:[%s10 + $0xa98] sm:$0xff]
  %v1849 = vld [vmem:[%s10 + $0xaa0] sm:$0xff]
  %v1850 = vld [vmem:[%s10 + $0xaa8] sm:$0xff]
  %v1851 = vld [vmem:[%s10 + $0xab0] sm:$0xff]
  %v1852 = vld [vmem:[%s10 + $0xab8] sm:$0xff]
  %v1853 = vld [vmem:[%s10 + $0xac0] sm:$0xff]
  %v1854 = vld [vmem:[%s10 + $0xac8] sm:$0xff]
  %v1855 = vld [vmem:[%s10 + $0xad0] sm:$0xff]
  %v1856 = vld [vmem:[%s10 + $0xad8] sm:$0xff]
  %v1857 = vld [vmem:[%s10 + $0xae0] sm:$0xff]
  %v1858 = vld [vmem:[%s10 + $0xae8] sm:$0xff]
  %v1859 = vld [vmem:[%s10 + $0xaf0] sm:$0xff]
  %v1860 = vld [vmem:[%s10 + $0xaf8] sm:$0xff]
  %v1861 = vld [vmem:[%s10 + $0xb00] sm:$0xff]
  %v1862 = vld [vmem:[%s10 + $0xb08] sm:$0xff]
  %v1863 = vld [vmem:[%s10 + $0xb10] sm:$0xff]
  %v1864 = vld [vmem:[%s10 + $0xb18] sm:$0xff]
  %v1865 = vld [vmem:[%s10 + $0xb20] sm:$0xff]
  %v1866 = vld [vmem:[%s10 + $0xb28] sm:$0xff]
  %v1867 = vld [vmem:[%s10 + $0xb30] sm:$0xff]
  %v1868 = vld [vmem:[%s10 + $0xb38] sm:$0xff]
  %v1869 = vld [vmem:[%s10 + $0xb40] sm:$0xff]
  %v1870 = vld [vmem:[%s10 + $0xb48] sm:$0xff]
  %v1871 = vld [vmem:[%s10 + $0xb50] sm:$0xff]
  %v1872 = vld [vmem:[%s10 + $0xb58] sm:$0xff]
  %v1873 = vld [vmem:[%s10 + $0xb60] sm:$0xff]
  %v1874 = vld [vmem:[%s10 + $0xb68] sm:$0xff]
  %v1875 = vld [vmem:[%s10 + $0xb70] sm:$0xff]
  %v1876 = vld [vmem:[%s10 + $0xb78] sm:$0xff]
  %v1877 = vld [vmem:[%s10 + $0xb80] sm:$0xff]
  %v1878 = vld [vmem:[%s10 + $0xb88] sm:$0xff]
  %v1879 = vld [vmem:[%s10 + $0xb90] sm:$0xff]
  %v1880 = vld [vmem:[%s10 + $0xb98] sm:$0xff]
  %v1881 = vld [vmem:[%s10 + $0xba0] sm:$0xff]
  %v1882 = vld [vmem:[%s10 + $0xba8] sm:$0xff]
  %v1883 = vld [vmem:[%s10 + $0xbb0] sm:$0xff]
  %v1884 = vld [vmem:[%s10 + $0xbb8] sm:$0xff]
  %v1885 = vld [vmem:[%s10 + $0xbc0] sm:$0xff]
  %v1886 = vld [vmem:[%s10 + $0xbc8] sm:$0xff]
  %v1887 = vld [vmem:[%s10 + $0xbd0] sm:$0xff]
  %v1888 = vld [vmem:[%s10 + $0xbd8] sm:$0xff]
  %v1889 = vld [vmem:[%s10 + $0xbe0] sm:$0xff]
  %v1890 = vld [vmem:[%s10 + $0xbe8] sm:$0xff]
  %v1891 = vld [vmem:[%s10 + $0xbf0] sm:$0xff]
  %v1892 = vld [vmem:[%s10 + $0xbf8] sm:$0xff]
  %v1893 = vld [vmem:[%s10 + $0xc00] sm:$0xff]
  %v1894 = vld [vmem:[%s10 + $0xc08] sm:$0xff]
  %v1895 = vld [vmem:[%s10 + $0xc10] sm:$0xff]
  %v1896 = vld [vmem:[%s10 + $0xc18] sm:$0xff]
  %v1897 = vld [vmem:[%s10 + $0xc20] sm:$0xff]
  %v1898 = vld [vmem:[%s10 + $0xc28] sm:$0xff]
  %v1899 = vld [vmem:[%s10 + $0xc30] sm:$0xff]
  %v1900 = vld [vmem:[%s10 + $0xc38] sm:$0xff]
  %v1901 = vld [vmem:[%s10 + $0xc40] sm:$0xff]
  %v1902 = vld [vmem:[%s10 + $0xc48] sm:$0xff]
  %v1903 = vld [vmem:[%s10 + $0xc50] sm:$0xff]
  %v1904 = vld [vmem:[%s10 + $0xc58] sm:$0xff]
  %v1905 = vld [vmem:[%s10 + $0xc60] sm:$0xff]
  %v1906 = vld [vmem:[%s10 + $0xc68] sm:$0xff]
  %v1907 = vld [vmem:[%s10 + $0xc70] sm:$0xff]
  %v1908 = vld [vmem:[%s10 + $0xc78] sm:$0xff]
  %v1909 = vld [vmem:[%s10 + $0xc80] sm:$0xff]
  %v1910 = vld [vmem:[%s10 + $0xc88] sm:$0xff]
  %v1911 = vld [vmem:[%s10 + $0xc90] sm:$0xff]
  %v1912 = vld [vmem:[%s10 + $0xc98] sm:$0xff]
  %v1913 = vld [vmem:[%s10 + $0xca0] sm:$0xff]
  %v1914 = vld [vmem:[%s10 + $0xca8] sm:$0xff]
  %v1915 = vld [vmem:[%s10 + $0xcb0] sm:$0xff]
  %v1916 = vld [vmem:[%s10 + $0xcb8] sm:$0xff]
  %v1917 = vld [vmem:[%s10 + $0xcc0] sm:$0xff]
  %v1918 = vld [vmem:[%s10 + $0xcc8] sm:$0xff]
  %v1919 = vld [vmem:[%s10 + $0xcd0] sm:$0xff]
  %v1920 = vld [vmem:[%s10 + $0xcd8] sm:$0xff]
  %v1921 = vld [vmem:[%s10 + $0xce0] sm:$0xff]
  %v1922 = vld [vmem:[%s10 + $0xce8] sm:$0xff]
  %v1923 = vld [vmem:[%s10 + $0xcf0] sm:$0xff]
  %v1924 = vld [vmem:[%s10 + $0xcf8] sm:$0xff]
  %v1925 = vld [vmem:[%s10 + $0xd00] sm:$0xff]
  %v1926 = vld [vmem:[%s10 + $0xd08] sm:$0xff]
  %v1927 = vld [vmem:[%s10 + $0xd10] sm:$0xff]
  %v1928 = vld [vmem:[%s10 + $0xd18] sm:$0xff]
  %v1929 = vld [vmem:[%s10 + $0xd20] sm:$0xff]
  %v1930 = vld [vmem:[%s10 + $0xd28] sm:$0xff]
  %v1931 = vld [vmem:[%s10 + $0xd30] sm:$0xff]
  %v1932 = vld [vmem:[%s10 + $0xd38] sm:$0xff]
  %v1933 = vld [vmem:[%s10 + $0xd40] sm:$0xff]
  %v1934 = vld [vmem:[%s10 + $0xd48] sm:$0xff]
  %v1935 = vld [vmem:[%s10 + $0xd50] sm:$0xff]
  %v1936 = vld [vmem:[%s10 + $0xd58] sm:$0xff]
  %v1937 = vld [vmem:[%s10 + $0xd60] sm:$0xff]
  %v1938 = vld [vmem:[%s10 + $0xd68] sm:$0xff]
  %v1939 = vld [vmem:[%s10 + $0xd70] sm:$0xff]
  %v1940 = vld [vmem:[%s10 + $0xd78] sm:$0xff]
  %v1941 = vld [vmem:[%s10 + $0xd80] sm:$0xff]
  %v1942 = vld [vmem:[%s10 + $0xd88] sm:$0xff]
  %v1943 = vld [vmem:[%s10 + $0xd90] sm:$0xff]
  %v1944 = vld [vmem:[%s10 + $0xd98] sm:$0xff]
  %v1945 = vld [vmem:[%s10 + $0xda0] sm:$0xff]
  %v1946 = vld [vmem:[%s10 + $0xda8] sm:$0xff]
  %v1947 = vld [vmem:[%s10 + $0xdb0] sm:$0xff]
  %v1948 = vld [vmem:[%s10 + $0xdb8] sm:$0xff]
  %v1949 = vld [vmem:[%s10 + $0xdc0] sm:$0xff]
  %v1950 = vld [vmem:[%s10 + $0xdc8] sm:$0xff]
  %v1951 = vld [vmem:[%s10 + $0xdd0] sm:$0xff]
  %v1952 = vld [vmem:[%s10 + $0xdd8] sm:$0xff]
  %v1953 = vld [vmem:[%s10 + $0xde0] sm:$0xff]
  %v1954 = vld [vmem:[%s10 + $0xde8] sm:$0xff]
  %v1955 = vld [vmem:[%s10 + $0xdf0] sm:$0xff]
  %v1956 = vld [vmem:[%s10 + $0xdf8] sm:$0xff]
  %v1957 = vld [vmem:[%s10 + $0xe00] sm:$0xff]
  %v1958 = vld [vmem:[%s10 + $0xe08] sm:$0xff]
  %v1959 = vld [vmem:[%s10 + $0xe10] sm:$0xff]
  %v1960 = vld [vmem:[%s10 + $0xe18] sm:$0xff]
  %v1961 = vld [vmem:[%s10 + $0xe20] sm:$0xff]
  %v1962 = vld [vmem:[%s10 + $0xe28] sm:$0xff]
  %v1963 = vld [vmem:[%s10 + $0xe30] sm:$0xff]
  %v1964 = vld [vmem:[%s10 + $0xe38] sm:$0xff]
  %v1965 = vld [vmem:[%s10 + $0xe40] sm:$0xff]
  %v1966 = vld [vmem:[%s10 + $0xe48] sm:$0xff]
  %v1967 = vld [vmem:[%s10 + $0xe50] sm:$0xff]
  %v1968 = vld [vmem:[%s10 + $0xe58] sm:$0xff]
  %v1969 = vld [vmem:[%s10 + $0xe60] sm:$0xff]
  %v1970 = vld [vmem:[%s10 + $0xe68] sm:$0xff]
  %v1971 = vld [vmem:[%s10 + $0xe70] sm:$0xff]
  %v1972 = vld [vmem:[%s10 + $0xe78] sm:$0xff]
  %v1973 = vld [vmem:[%s10 + $0xe80] sm:$0xff]
  %v1974 = vld [vmem:[%s10 + $0xe88] sm:$0xff]
  %v1975 = vld [vmem:[%s10 + $0xe90] sm:$0xff]
  %v1976 = vld [vmem:[%s10 + $0xe98] sm:$0xff]
  %v1977 = vld [vmem:[%s10 + $0xea0] sm:$0xff]
  %v1978 = vld [vmem:[%s10 + $0xea8] sm:$0xff]
  %v1979 = vld [vmem:[%s10 + $0xeb0] sm:$0xff]
  %v1980 = vld [vmem:[%s10 + $0xeb8] sm:$0xff]
  %v1981 = vld [vmem:[%s10 + $0xec0] sm:$0xff]
  %v1982 = vld [vmem:[%s10 + $0xec8] sm:$0xff]
  %v1983 = vld [vmem:[%s10 + $0xed0] sm:$0xff]
  %v1984 = vld [vmem:[%s10 + $0xed8] sm:$0xff]
  %v1985 = vld [vmem:[%s10 + $0xee0] sm:$0xff]
  %v1986 = vld [vmem:[%s10 + $0xee8] sm:$0xff]
  %v1987 = vld [vmem:[%s10 + $0xef0] sm:$0xff]
  %v1988 = vld [vmem:[%s10 + $0xef8] sm:$0xff]
  %v1989 = vld [vmem:[%s10 + $0xf00] sm:$0xff]
  %v1990 = vld [vmem:[%s10 + $0xf08] sm:$0xff]
  %v1991 = vld [vmem:[%s10 + $0xf10] sm:$0xff]
  %v1992 = vld [vmem:[%s10 + $0xf18] sm:$0xff]
  %v1993 = vld [vmem:[%s10 + $0xf20] sm:$0xff]
  %v1994 = vld [vmem:[%s10 + $0xf28] sm:$0xff]
  %v1995 = vld [vmem:[%s10 + $0xf30] sm:$0xff]
  %v1996 = vld [vmem:[%s10 + $0xf38] sm:$0xff]
  %v1997 = vld [vmem:[%s10 + $0xf40] sm:$0xff]
  %v1998 = vld [vmem:[%s10 + $0xf48] sm:$0xff]
  %v1999 = vld [vmem:[%s10 + $0xf50] sm:$0xff]
  %v2000 = vld [vmem:[%s10 + $0xf58] sm:$0xff]
  %v2001 = vld [vmem:[%s10 + $0xf60] sm:$0xff]
  %v2002 = vld [vmem:[%s10 + $0xf68] sm:$0xff]
  %v2003 = vld [vmem:[%s10 + $0xf70] sm:$0xff]
  %v2004 = vld [vmem:[%s10 + $0xf78] sm:$0xff]
  %v2005 = vld [vmem:[%s10 + $0xf80] sm:$0xff]
  %v2006 = vld [vmem:[%s10 + $0xf88] sm:$0xff]
  %v2007 = vld [vmem:[%s10 + $0xf90] sm:$0xff]
  %v2008 = vld [vmem:[%s10 + $0xf98] sm:$0xff]
  %v2009 = vld [vmem:[%s10 + $0xfa0] sm:$0xff]
  %v2010 = vld [vmem:[%s10 + $0xfa8] sm:$0xff]
  %v2011 = vld [vmem:[%s10 + $0xfb0] sm:$0xff]
  %v2012 = vld [vmem:[%s10 + $0xfb8] sm:$0xff]
  %v2013 = vld [vmem:[%s10 + $0xfc0] sm:$0xff]
  %v2014 = vld [vmem:[%s10 + $0xfc8] sm:$0xff]
  %v2015 = vld [vmem:[%s10 + $0xfd0] sm:$0xff]
  %v2016 = vld [vmem:[%s10 + $0xfd8] sm:$0xff]
  %v2017 = vld [vmem:[%s10 + $0xfe0] sm:$0xff]
  %v2018 = vld [vmem:[%s10 + $0xfe8] sm:$0xff]
  %v2019 = vld [vmem:[%s10 + $0xff0] sm:$0xff]
  %v2020 = vld [vmem:[%s10 + $0xff8] sm:$0xff]
  %v2021 = vld [vmem:[%s10 + $0x1000] sm:$0xff]
  %v2022 = vld [vmem:[%s10 + $0x1008] sm:$0xff]
  %v2023 = vld [vmem:[%s10 + $0x1010] sm:$0xff]
  %v2024 = vld [vmem:[%s10 + $0x1018] sm:$0xff]
  %v2025 = vld [vmem:[%s10 + $0x1020] sm:$0xff]
  %v2026 = vld [vmem:[%s10 + $0x1028] sm:$0xff]
  %v2027 = vld [vmem:[%s10 + $0x1030] sm:$0xff]
  %v2028 = vld [vmem:[%s10 + $0x1038] sm:$0xff]
  %v2029 = vld [vmem:[%s10 + $0x1040] sm:$0xff]
  %v2030 = vld [vmem:[%s10 + $0x1048] sm:$0xff]
  %v2031 = vld [vmem:[%s10 + $0x1050] sm:$0xff]
  %v2032 = vld [vmem:[%s10 + $0x1058] sm:$0xff]
  %v2033 = vld [vmem:[%s10 + $0x1060] sm:$0xff]
  %v2034 = vld [vmem:[%s10 + $0x1068] sm:$0xff]
  %v2035 = vld [vmem:[%s10 + $0x1070] sm:$0xff]
  %v2036 = vld [vmem:[%s10 + $0x1078] sm:$0xff]
  %v2037 = vld [vmem:[%s10 + $0x1080] sm:$0xff]
  %v2038 = vld [vmem:[%s10 + $0x1088] sm:$0xff]
  %v2039 = vld [vmem:[%s10 + $0x1090] sm:$0xff]
  %v2040 = vld [vmem:[%s10 + $0x1098] sm:$0xff]
  %v2041 = vld [vmem:[%s10 + $0x10a0] sm:$0xff]
  %v2042 = vld [vmem:[%s10 + $0x10a8] sm:$0xff]
  %v2043 = vld [vmem:[%s10 + $0x10b0] sm:$0xff]
  %v2044 = vld [vmem:[%s10 + $0x10b8] sm:$0xff]
  %v2045 = vld [vmem:[%s10 + $0x10c0] sm:$0xff]
  %v2046 = vld [vmem:[%s10 + $0x10c8] sm:$0xff]
  %v2047 = vld [vmem:[%s10 + $0x10d0] sm:$0xff]
  %v2048 = vld [vmem:[%s10 + $0x10d8] sm:$0xff]
  %v2049 = vld [vmem:[%s10 + $0x10e0] sm:$0xff]
  %v2050 = vld [vmem:[%s10 + $0x10e8] sm:$0xff]
  %v2051 = vld [vmem:[%s10 + $0x10f0] sm:$0xff]
  %v2052 = vld [vmem:[%s10 + $0x10f8] sm:$0xff]
  %v2053 = vld [vmem:[%s10 + $0x1100] sm:$0xff]
  %v2054 = vld [vmem:[%s10 + $0x1108] sm:$0xff]
  %v2055 = vld [vmem:[%s10 + $0x1110] sm:$0xff]
  %v2056 = vld [vmem:[%s10 + $0x1118] sm:$0xff]
  %v2057 = vld [vmem:[%s10 + $0x1120] sm:$0xff]
  %v2058 = vld [vmem:[%s10 + $0x1128] sm:$0xff]
  %v2059 = vld [vmem:[%s10 + $0x1130] sm:$0xff]
  %v2060 = vld [vmem:[%s10 + $0x1138] sm:$0xff]
  %v2061 = vld [vmem:[%s10 + $0x1140] sm:$0xff]
  %v2062 = vld [vmem:[%s10 + $0x1148] sm:$0xff]
  %v2063 = vld [vmem:[%s10 + $0x1150] sm:$0xff]
  %v2064 = vld [vmem:[%s10 + $0x1158] sm:$0xff]
  %v2065 = vld [vmem:[%s10 + $0x1160] sm:$0xff]
  %v2066 = vld [vmem:[%s10 + $0x1168] sm:$0xff]
  %v2067 = vld [vmem:[%s10 + $0x1170] sm:$0xff]
  %v2068 = vld [vmem:[%s10 + $0x1178] sm:$0xff]
  %v2069 = vld [vmem:[%s10 + $0x1180] sm:$0xff]
  %v2070 = vld [vmem:[%s10 + $0x1188] sm:$0xff]
  %v2071 = vld [vmem:[%s10 + $0x1190] sm:$0xff]
  %v2072 = vld [vmem:[%s10 + $0x1198] sm:$0xff]
  %v2073 = vld [vmem:[%s10 + $0x11a0] sm:$0xff]
  %v2074 = vld [vmem:[%s10 + $0x11a8] sm:$0xff]
  %v2075 = vld [vmem:[%s10 + $0x11b0] sm:$0xff]
  %v2076 = vld [vmem:[%s10 + $0x11b8] sm:$0xff]
  %v2077 = vld [vmem:[%s10 + $0x11c0] sm:$0xff]
  %v2078 = vld [vmem:[%s10 + $0x11c8] sm:$0xff]
  %v2079 = vld [vmem:[%s10 + $0x11d0] sm:$0xff]
  %v2080 = vld [vmem:[%s10 + $0x11d8] sm:$0xff]
  %v2081 = vld [vmem:[%s10 + $0x11e0] sm:$0xff]
  %v2082 = vld [vmem:[%s10 + $0x11e8] sm:$0xff]
  %v2083 = vld [vmem:[%s10 + $0x11f0] sm:$0xff]
  %v2084 = vld [vmem:[%s10 + $0x11f8] sm:$0xff]
  %v2085 = vunpack.c.l.bf16 %v1509
  %v2086 = vunpack.c.h.bf16 %v1509
  %v2087 = vunpack.c.l.bf16 %v1510
  %v2088 = vunpack.c.h.bf16 %v1510
  %v2089 = vunpack.c.l.bf16 %v1511
  %v2090 = vunpack.c.h.bf16 %v1511
  %v2091 = vunpack.c.l.bf16 %v1512
  %v2092 = vunpack.c.h.bf16 %v1512
  %v2093 = vunpack.c.l.bf16 %v1513
  %v2094 = vunpack.c.h.bf16 %v1513
  %v2095 = vunpack.c.l.bf16 %v1514
  %v2096 = vunpack.c.h.bf16 %v1514
  %v2097 = vunpack.c.l.bf16 %v1515
  %v2098 = vunpack.c.h.bf16 %v1515
  %v2099 = vunpack.c.l.bf16 %v1516
  %v2100 = vunpack.c.h.bf16 %v1516
  %v2101 = vunpack.c.l.bf16 %v1517
  %v2102 = vunpack.c.h.bf16 %v1517
  %v2103 = vunpack.c.l.bf16 %v1518
  %v2104 = vunpack.c.h.bf16 %v1518
  %v2105 = vunpack.c.l.bf16 %v1519
  %v2106 = vunpack.c.h.bf16 %v1519
  %v2107 = vunpack.c.l.bf16 %v1520
  %v2108 = vunpack.c.h.bf16 %v1520
  %v2109 = vunpack.c.l.bf16 %v1521
  %v2110 = vunpack.c.h.bf16 %v1521
  %v2111 = vunpack.c.l.bf16 %v1522
  %v2112 = vunpack.c.h.bf16 %v1522
  %v2113 = vunpack.c.l.bf16 %v1523
  %v2114 = vunpack.c.h.bf16 %v1523
  %v2115 = vunpack.c.l.bf16 %v1524
  %v2116 = vunpack.c.h.bf16 %v1524
  %v2117 = vunpack.c.l.bf16 %v1525
  %v2118 = vunpack.c.h.bf16 %v1525
  %v2119 = vunpack.c.l.bf16 %v1526
  %v2120 = vunpack.c.h.bf16 %v1526
  %v2121 = vunpack.c.l.bf16 %v1527
  %v2122 = vunpack.c.h.bf16 %v1527
  %v2123 = vunpack.c.l.bf16 %v1528
  %v2124 = vunpack.c.h.bf16 %v1528
  %v2125 = vunpack.c.l.bf16 %v1529
  %v2126 = vunpack.c.h.bf16 %v1529
  %v2127 = vunpack.c.l.bf16 %v1530
  %v2128 = vunpack.c.h.bf16 %v1530
  %v2129 = vunpack.c.l.bf16 %v1531
  %v2130 = vunpack.c.h.bf16 %v1531
  %v2131 = vunpack.c.l.bf16 %v1532
  %v2132 = vunpack.c.h.bf16 %v1532
  %v2133 = vunpack.c.l.bf16 %v1533
  %v2134 = vunpack.c.h.bf16 %v1533
  %v2135 = vunpack.c.l.bf16 %v1534
  %v2136 = vunpack.c.h.bf16 %v1534
  %v2137 = vunpack.c.l.bf16 %v1535
  %v2138 = vunpack.c.h.bf16 %v1535
  %v2139 = vunpack.c.l.bf16 %v1536
  %v2140 = vunpack.c.h.bf16 %v1536
  %v2141 = vunpack.c.l.bf16 %v1537
  %v2142 = vunpack.c.h.bf16 %v1537
  %v2143 = vunpack.c.l.bf16 %v1538
  %v2144 = vunpack.c.h.bf16 %v1538
  %v2145 = vunpack.c.l.bf16 %v1539
  %v2146 = vunpack.c.h.bf16 %v1539
  %v2147 = vunpack.c.l.bf16 %v1540
  %v2148 = vunpack.c.h.bf16 %v1540
  %v2149 = vunpack.c.l.bf16 %v1541
  %v2150 = vunpack.c.h.bf16 %v1541
  %v2151 = vunpack.c.l.bf16 %v1542
  %v2152 = vunpack.c.h.bf16 %v1542
  %v2153 = vunpack.c.l.bf16 %v1543
  %v2154 = vunpack.c.h.bf16 %v1543
  %v2155 = vunpack.c.l.bf16 %v1544
  %v2156 = vunpack.c.h.bf16 %v1544
  %v2157 = vunpack.c.l.bf16 %v1545
  %v2158 = vunpack.c.h.bf16 %v1545
  %v2159 = vunpack.c.l.bf16 %v1546
  %v2160 = vunpack.c.h.bf16 %v1546
  %v2161 = vunpack.c.l.bf16 %v1547
  %v2162 = vunpack.c.h.bf16 %v1547
  %v2163 = vunpack.c.l.bf16 %v1548
  %v2164 = vunpack.c.h.bf16 %v1548
  %v2165 = vunpack.c.l.bf16 %v1549
  %v2166 = vunpack.c.h.bf16 %v1549
  %v2167 = vunpack.c.l.bf16 %v1550
  %v2168 = vunpack.c.h.bf16 %v1550
  %v2169 = vunpack.c.l.bf16 %v1551
  %v2170 = vunpack.c.h.bf16 %v1551
  %v2171 = vunpack.c.l.bf16 %v1552
  %v2172 = vunpack.c.h.bf16 %v1552
  %v2173 = vunpack.c.l.bf16 %v1553
  %v2174 = vunpack.c.h.bf16 %v1553
  %v2175 = vunpack.c.l.bf16 %v1554
  %v2176 = vunpack.c.h.bf16 %v1554
  %v2177 = vunpack.c.l.bf16 %v1555
  %v2178 = vunpack.c.h.bf16 %v1555
  %v2179 = vunpack.c.l.bf16 %v1556
  %v2180 = vunpack.c.h.bf16 %v1556
  %v2181 = vunpack.c.l.bf16 %v1557
  %v2182 = vunpack.c.h.bf16 %v1557
  %v2183 = vunpack.c.l.bf16 %v1558
  %v2184 = vunpack.c.h.bf16 %v1558
  %v2185 = vunpack.c.l.bf16 %v1559
  %v2186 = vunpack.c.h.bf16 %v1559
  %v2187 = vunpack.c.l.bf16 %v1560
  %v2188 = vunpack.c.h.bf16 %v1560
  %v2189 = vunpack.c.l.bf16 %v1561
  %v2190 = vunpack.c.h.bf16 %v1561
  %v2191 = vunpack.c.l.bf16 %v1562
  %v2192 = vunpack.c.h.bf16 %v1562
  %v2193 = vunpack.c.l.bf16 %v1563
  %v2194 = vunpack.c.h.bf16 %v1563
  %v2195 = vunpack.c.l.bf16 %v1564
  %v2196 = vunpack.c.h.bf16 %v1564
  %v2197 = vunpack.c.l.bf16 %v1565
  %v2198 = vunpack.c.h.bf16 %v1565
  %v2199 = vunpack.c.l.bf16 %v1566
  %v2200 = vunpack.c.h.bf16 %v1566
  %v2201 = vunpack.c.l.bf16 %v1567
  %v2202 = vunpack.c.h.bf16 %v1567
  %v2203 = vunpack.c.l.bf16 %v1568
  %v2204 = vunpack.c.h.bf16 %v1568
  %v2205 = vunpack.c.l.bf16 %v1569
  %v2206 = vunpack.c.h.bf16 %v1569
  %v2207 = vunpack.c.l.bf16 %v1570
  %v2208 = vunpack.c.h.bf16 %v1570
  %v2209 = vunpack.c.l.bf16 %v1571
  %v2210 = vunpack.c.h.bf16 %v1571
  %v2211 = vunpack.c.l.bf16 %v1572
  %v2212 = vunpack.c.h.bf16 %v1572
  %v2213 = vunpack.c.l.bf16 %v1573
  %v2214 = vunpack.c.h.bf16 %v1573
  %v2215 = vunpack.c.l.bf16 %v1574
  %v2216 = vunpack.c.h.bf16 %v1574
  %v2217 = vunpack.c.l.bf16 %v1575
  %v2218 = vunpack.c.h.bf16 %v1575
  %v2219 = vunpack.c.l.bf16 %v1576
  %v2220 = vunpack.c.h.bf16 %v1576
  %v2221 = vunpack.c.l.bf16 %v1577
  %v2222 = vunpack.c.h.bf16 %v1577
  %v2223 = vunpack.c.l.bf16 %v1578
  %v2224 = vunpack.c.h.bf16 %v1578
  %v2225 = vunpack.c.l.bf16 %v1579
  %v2226 = vunpack.c.h.bf16 %v1579
  %v2227 = vunpack.c.l.bf16 %v1580
  %v2228 = vunpack.c.h.bf16 %v1580
  %v2229 = vunpack.c.l.bf16 %v1581
  %v2230 = vunpack.c.h.bf16 %v1581
  %v2231 = vunpack.c.l.bf16 %v1582
  %v2232 = vunpack.c.h.bf16 %v1582
  %v2233 = vunpack.c.l.bf16 %v1583
  %v2234 = vunpack.c.h.bf16 %v1583
  %v2235 = vunpack.c.l.bf16 %v1584
  %v2236 = vunpack.c.h.bf16 %v1584
  %v2237 = vunpack.c.l.bf16 %v1585
  %v2238 = vunpack.c.h.bf16 %v1585
  %v2239 = vunpack.c.l.bf16 %v1586
  %v2240 = vunpack.c.h.bf16 %v1586
  %v2241 = vunpack.c.l.bf16 %v1587
  %v2242 = vunpack.c.h.bf16 %v1587
  %v2243 = vunpack.c.l.bf16 %v1588
  %v2244 = vunpack.c.h.bf16 %v1588
  %v2245 = vunpack.c.l.bf16 %v1589
  %v2246 = vunpack.c.h.bf16 %v1589
  %v2247 = vunpack.c.l.bf16 %v1590
  %v2248 = vunpack.c.h.bf16 %v1590
  %v2249 = vunpack.c.l.bf16 %v1591
  %v2250 = vunpack.c.h.bf16 %v1591
  %v2251 = vunpack.c.l.bf16 %v1592
  %v2252 = vunpack.c.h.bf16 %v1592
  %v2253 = vunpack.c.l.bf16 %v1593
  %v2254 = vunpack.c.h.bf16 %v1593
  %v2255 = vunpack.c.l.bf16 %v1594
  %v2256 = vunpack.c.h.bf16 %v1594
  %v2257 = vunpack.c.l.bf16 %v1595
  %v2258 = vunpack.c.h.bf16 %v1595
  %v2259 = vunpack.c.l.bf16 %v1596
  %v2260 = vunpack.c.h.bf16 %v1596
  %v2261 = vunpack.c.l.bf16 %v1597
  %v2262 = vunpack.c.h.bf16 %v1597
  %v2263 = vunpack.c.l.bf16 %v1598
  %v2264 = vunpack.c.h.bf16 %v1598
  %v2265 = vunpack.c.l.bf16 %v1599
  %v2266 = vunpack.c.h.bf16 %v1599
  %v2267 = vunpack.c.l.bf16 %v1600
  %v2268 = vunpack.c.h.bf16 %v1600
  %v2269 = vunpack.c.l.bf16 %v1601
  %v2270 = vunpack.c.h.bf16 %v1601
  %v2271 = vunpack.c.l.bf16 %v1602
  %v2272 = vunpack.c.h.bf16 %v1602
  %v2273 = vunpack.c.l.bf16 %v1603
  %v2274 = vunpack.c.h.bf16 %v1603
  %v2275 = vunpack.c.l.bf16 %v1604
  %v2276 = vunpack.c.h.bf16 %v1604
  %v2277 = vunpack.c.l.bf16 %v1605
  %v2278 = vunpack.c.h.bf16 %v1605
  %v2279 = vunpack.c.l.bf16 %v1606
  %v2280 = vunpack.c.h.bf16 %v1606
  %v2281 = vunpack.c.l.bf16 %v1607
  %v2282 = vunpack.c.h.bf16 %v1607
  %v2283 = vunpack.c.l.bf16 %v1608
  %v2284 = vunpack.c.h.bf16 %v1608
  %v2285 = vunpack.c.l.bf16 %v1609
  %v2286 = vunpack.c.h.bf16 %v1609
  %v2287 = vunpack.c.l.bf16 %v1610
  %v2288 = vunpack.c.h.bf16 %v1610
  %v2289 = vunpack.c.l.bf16 %v1611
  %v2290 = vunpack.c.h.bf16 %v1611
  %v2291 = vunpack.c.l.bf16 %v1612
  %v2292 = vunpack.c.h.bf16 %v1612
  %v2293 = vunpack.c.l.bf16 %v1613
  %v2294 = vunpack.c.h.bf16 %v1613
  %v2295 = vunpack.c.l.bf16 %v1614
  %v2296 = vunpack.c.h.bf16 %v1614
  %v2297 = vunpack.c.l.bf16 %v1615
  %v2298 = vunpack.c.h.bf16 %v1615
  %v2299 = vunpack.c.l.bf16 %v1616
  %v2300 = vunpack.c.h.bf16 %v1616
  %v2301 = vunpack.c.l.bf16 %v1617
  %v2302 = vunpack.c.h.bf16 %v1617
  %v2303 = vunpack.c.l.bf16 %v1618
  %v2304 = vunpack.c.h.bf16 %v1618
  %v2305 = vunpack.c.l.bf16 %v1619
  %v2306 = vunpack.c.h.bf16 %v1619
  %v2307 = vunpack.c.l.bf16 %v1620
  %v2308 = vunpack.c.h.bf16 %v1620
  %v2309 = vunpack.c.l.bf16 %v1621
  %v2310 = vunpack.c.h.bf16 %v1621
  %v2311 = vunpack.c.l.bf16 %v1622
  %v2312 = vunpack.c.h.bf16 %v1622
  %v2313 = vunpack.c.l.bf16 %v1623
  %v2314 = vunpack.c.h.bf16 %v1623
  %v2315 = vunpack.c.l.bf16 %v1624
  %v2316 = vunpack.c.h.bf16 %v1624
  %v2317 = vunpack.c.l.bf16 %v1625
  %v2318 = vunpack.c.h.bf16 %v1625
  %v2319 = vunpack.c.l.bf16 %v1626
  %v2320 = vunpack.c.h.bf16 %v1626
  %v2321 = vunpack.c.l.bf16 %v1627
  %v2322 = vunpack.c.h.bf16 %v1627
  %v2323 = vunpack.c.l.bf16 %v1628
  %v2324 = vunpack.c.h.bf16 %v1628
  %v2325 = vunpack.c.l.bf16 %v1629
  %v2326 = vunpack.c.h.bf16 %v1629
  %v2327 = vunpack.c.l.bf16 %v1630
  %v2328 = vunpack.c.h.bf16 %v1630
  %v2329 = vunpack.c.l.bf16 %v1631
  %v2330 = vunpack.c.h.bf16 %v1631
  %v2331 = vunpack.c.l.bf16 %v1632
  %v2332 = vunpack.c.h.bf16 %v1632
  %v2333 = vunpack.c.l.bf16 %v1633
  %v2334 = vunpack.c.h.bf16 %v1633
  %v2335 = vunpack.c.l.bf16 %v1634
  %v2336 = vunpack.c.h.bf16 %v1634
  %v2337 = vunpack.c.l.bf16 %v1635
  %v2338 = vunpack.c.h.bf16 %v1635
  %v2339 = vunpack.c.l.bf16 %v1636
  %v2340 = vunpack.c.h.bf16 %v1636
  %v2341 = vunpack.c.l.bf16 %v1637
  %v2342 = vunpack.c.h.bf16 %v1637
  %v2343 = vunpack.c.l.bf16 %v1638
  %v2344 = vunpack.c.h.bf16 %v1638
  %v2345 = vunpack.c.l.bf16 %v1639
  %v2346 = vunpack.c.h.bf16 %v1639
  %v2347 = vunpack.c.l.bf16 %v1640
  %v2348 = vunpack.c.h.bf16 %v1640
  %v2349 = vunpack.c.l.bf16 %v1641
  %v2350 = vunpack.c.h.bf16 %v1641
  %v2351 = vunpack.c.l.bf16 %v1642
  %v2352 = vunpack.c.h.bf16 %v1642
  %v2353 = vunpack.c.l.bf16 %v1643
  %v2354 = vunpack.c.h.bf16 %v1643
  %v2355 = vunpack.c.l.bf16 %v1644
  %v2356 = vunpack.c.h.bf16 %v1644
  %v2357 = vunpack.c.l.bf16 %v1645
  %v2358 = vunpack.c.h.bf16 %v1645
  %v2359 = vunpack.c.l.bf16 %v1646
  %v2360 = vunpack.c.h.bf16 %v1646
  %v2361 = vunpack.c.l.bf16 %v1647
  %v2362 = vunpack.c.h.bf16 %v1647
  %v2363 = vunpack.c.l.bf16 %v1648
  %v2364 = vunpack.c.h.bf16 %v1648
  %v2365 = vunpack.c.l.bf16 %v1649
  %v2366 = vunpack.c.h.bf16 %v1649
  %v2367 = vunpack.c.l.bf16 %v1650
  %v2368 = vunpack.c.h.bf16 %v1650
  %v2369 = vunpack.c.l.bf16 %v1651
  %v2370 = vunpack.c.h.bf16 %v1651
  %v2371 = vunpack.c.l.bf16 %v1652
  %v2372 = vunpack.c.h.bf16 %v1652
  %v2373 = vunpack.c.l.bf16 %v1653
  %v2374 = vunpack.c.h.bf16 %v1653
  %v2375 = vunpack.c.l.bf16 %v1654
  %v2376 = vunpack.c.h.bf16 %v1654
  %v2377 = vunpack.c.l.bf16 %v1655
  %v2378 = vunpack.c.h.bf16 %v1655
  %v2379 = vunpack.c.l.bf16 %v1656
  %v2380 = vunpack.c.h.bf16 %v1656
  %v2381 = vunpack.c.l.bf16 %v1657
  %v2382 = vunpack.c.h.bf16 %v1657
  %v2383 = vunpack.c.l.bf16 %v1658
  %v2384 = vunpack.c.h.bf16 %v1658
  %v2385 = vunpack.c.l.bf16 %v1659
  %v2386 = vunpack.c.h.bf16 %v1659
  %v2387 = vunpack.c.l.bf16 %v1660
  %v2388 = vunpack.c.h.bf16 %v1660
  %v2389 = vunpack.c.l.bf16 %v1661
  %v2390 = vunpack.c.h.bf16 %v1661
  %v2391 = vunpack.c.l.bf16 %v1662
  %v2392 = vunpack.c.h.bf16 %v1662
  %v2393 = vunpack.c.l.bf16 %v1663
  %v2394 = vunpack.c.h.bf16 %v1663
  %v2395 = vunpack.c.l.bf16 %v1664
  %v2396 = vunpack.c.h.bf16 %v1664
  %v2397 = vunpack.c.l.bf16 %v1665
  %v2398 = vunpack.c.h.bf16 %v1665
  %v2399 = vunpack.c.l.bf16 %v1666
  %v2400 = vunpack.c.h.bf16 %v1666
  %v2401 = vunpack.c.l.bf16 %v1667
  %v2402 = vunpack.c.h.bf16 %v1667
  %v2403 = vunpack.c.l.bf16 %v1668
  %v2404 = vunpack.c.h.bf16 %v1668
  %v2405 = vunpack.c.l.bf16 %v1669
  %v2406 = vunpack.c.h.bf16 %v1669
  %v2407 = vunpack.c.l.bf16 %v1670
  %v2408 = vunpack.c.h.bf16 %v1670
  %v2409 = vunpack.c.l.bf16 %v1671
  %v2410 = vunpack.c.h.bf16 %v1671
  %v2411 = vunpack.c.l.bf16 %v1672
  %v2412 = vunpack.c.h.bf16 %v1672
  %v2413 = vunpack.c.l.bf16 %v1673
  %v2414 = vunpack.c.h.bf16 %v1673
  %v2415 = vunpack.c.l.bf16 %v1674
  %v2416 = vunpack.c.h.bf16 %v1674
  %v2417 = vunpack.c.l.bf16 %v1675
  %v2418 = vunpack.c.h.bf16 %v1675
  %v2419 = vunpack.c.l.bf16 %v1676
  %v2420 = vunpack.c.h.bf16 %v1676
  %v2421 = vunpack.c.l.bf16 %v1677
  %v2422 = vunpack.c.h.bf16 %v1677
  %v2423 = vunpack.c.l.bf16 %v1678
  %v2424 = vunpack.c.h.bf16 %v1678
  %v2425 = vunpack.c.l.bf16 %v1679
  %v2426 = vunpack.c.h.bf16 %v1679
  %v2427 = vunpack.c.l.bf16 %v1680
  %v2428 = vunpack.c.h.bf16 %v1680
  %v2429 = vunpack.c.l.bf16 %v1681
  %v2430 = vunpack.c.h.bf16 %v1681
  %v2431 = vunpack.c.l.bf16 %v1682
  %v2432 = vunpack.c.h.bf16 %v1682
  %v2433 = vunpack.c.l.bf16 %v1683
  %v2434 = vunpack.c.h.bf16 %v1683
  %v2435 = vunpack.c.l.bf16 %v1684
  %v2436 = vunpack.c.h.bf16 %v1684
  %v2437 = vunpack.c.l.bf16 %v1685
  %v2438 = vunpack.c.h.bf16 %v1685
  %v2439 = vunpack.c.l.bf16 %v1686
  %v2440 = vunpack.c.h.bf16 %v1686
  %v2441 = vunpack.c.l.bf16 %v1687
  %v2442 = vunpack.c.h.bf16 %v1687
  %v2443 = vunpack.c.l.bf16 %v1688
  %v2444 = vunpack.c.h.bf16 %v1688
  %v2445 = vunpack.c.l.bf16 %v1689
  %v2446 = vunpack.c.h.bf16 %v1689
  %v2447 = vunpack.c.l.bf16 %v1690
  %v2448 = vunpack.c.h.bf16 %v1690
  %v2449 = vunpack.c.l.bf16 %v1691
  %v2450 = vunpack.c.h.bf16 %v1691
  %v2451 = vunpack.c.l.bf16 %v1692
  %v2452 = vunpack.c.h.bf16 %v1692
  %v2453 = vunpack.c.l.bf16 %v1693
  %v2454 = vunpack.c.h.bf16 %v1693
  %v2455 = vunpack.c.l.bf16 %v1694
  %v2456 = vunpack.c.h.bf16 %v1694
  %v2457 = vunpack.c.l.bf16 %v1695
  %v2458 = vunpack.c.h.bf16 %v1695
  %v2459 = vunpack.c.l.bf16 %v1696
  %v2460 = vunpack.c.h.bf16 %v1696
  %v2461 = vunpack.c.l.bf16 %v1697
  %v2462 = vunpack.c.h.bf16 %v1697
  %v2463 = vunpack.c.l.bf16 %v1698
  %v2464 = vunpack.c.h.bf16 %v1698
  %v2465 = vunpack.c.l.bf16 %v1699
  %v2466 = vunpack.c.h.bf16 %v1699
  %v2467 = vunpack.c.l.bf16 %v1700
  %v2468 = vunpack.c.h.bf16 %v1700
  %v2469 = vunpack.c.l.bf16 %v1701
  %v2470 = vunpack.c.h.bf16 %v1701
  %v2471 = vunpack.c.l.bf16 %v1702
  %v2472 = vunpack.c.h.bf16 %v1702
  %v2473 = vunpack.c.l.bf16 %v1703
  %v2474 = vunpack.c.h.bf16 %v1703
  %v2475 = vunpack.c.l.bf16 %v1704
  %v2476 = vunpack.c.h.bf16 %v1704
  %v2477 = vunpack.c.l.bf16 %v1705
  %v2478 = vunpack.c.h.bf16 %v1705
  %v2479 = vunpack.c.l.bf16 %v1706
  %v2480 = vunpack.c.h.bf16 %v1706
  %v2481 = vunpack.c.l.bf16 %v1707
  %v2482 = vunpack.c.h.bf16 %v1707
  %v2483 = vunpack.c.l.bf16 %v1708
  %v2484 = vunpack.c.h.bf16 %v1708
  %v2485 = vunpack.c.l.bf16 %v1709
  %v2486 = vunpack.c.h.bf16 %v1709
  %v2487 = vunpack.c.l.bf16 %v1710
  %v2488 = vunpack.c.h.bf16 %v1710
  %v2489 = vunpack.c.l.bf16 %v1711
  %v2490 = vunpack.c.h.bf16 %v1711
  %v2491 = vunpack.c.l.bf16 %v1712
  %v2492 = vunpack.c.h.bf16 %v1712
  %v2493 = vunpack.c.l.bf16 %v1713
  %v2494 = vunpack.c.h.bf16 %v1713
  %v2495 = vunpack.c.l.bf16 %v1714
  %v2496 = vunpack.c.h.bf16 %v1714
  %v2497 = vunpack.c.l.bf16 %v1715
  %v2498 = vunpack.c.h.bf16 %v1715
  %v2499 = vunpack.c.l.bf16 %v1716
  %v2500 = vunpack.c.h.bf16 %v1716
  %v2501 = vunpack.c.l.bf16 %v1717
  %v2502 = vunpack.c.h.bf16 %v1717
  %v2503 = vunpack.c.l.bf16 %v1718
  %v2504 = vunpack.c.h.bf16 %v1718
  %v2505 = vunpack.c.l.bf16 %v1719
  %v2506 = vunpack.c.h.bf16 %v1719
  %v2507 = vunpack.c.l.bf16 %v1720
  %v2508 = vunpack.c.h.bf16 %v1720
  %v2509 = vunpack.c.l.bf16 %v1721
  %v2510 = vunpack.c.h.bf16 %v1721
  %v2511 = vunpack.c.l.bf16 %v1722
  %v2512 = vunpack.c.h.bf16 %v1722
  %v2513 = vunpack.c.l.bf16 %v1723
  %v2514 = vunpack.c.h.bf16 %v1723
  %v2515 = vunpack.c.l.bf16 %v1724
  %v2516 = vunpack.c.h.bf16 %v1724
  %v2517 = vunpack.c.l.bf16 %v1725
  %v2518 = vunpack.c.h.bf16 %v1725
  %v2519 = vunpack.c.l.bf16 %v1726
  %v2520 = vunpack.c.h.bf16 %v1726
  %v2521 = vunpack.c.l.bf16 %v1727
  %v2522 = vunpack.c.h.bf16 %v1727
  %v2523 = vunpack.c.l.bf16 %v1728
  %v2524 = vunpack.c.h.bf16 %v1728
  %v2525 = vunpack.c.l.bf16 %v1729
  %v2526 = vunpack.c.h.bf16 %v1729
  %v2527 = vunpack.c.l.bf16 %v1730
  %v2528 = vunpack.c.h.bf16 %v1730
  %v2529 = vunpack.c.l.bf16 %v1731
  %v2530 = vunpack.c.h.bf16 %v1731
  %v2531 = vunpack.c.l.bf16 %v1732
  %v2532 = vunpack.c.h.bf16 %v1732
  %v2533 = vunpack.c.l.bf16 %v1733
  %v2534 = vunpack.c.h.bf16 %v1733
  %v2535 = vunpack.c.l.bf16 %v1734
  %v2536 = vunpack.c.h.bf16 %v1734
  %v2537 = vunpack.c.l.bf16 %v1735
  %v2538 = vunpack.c.h.bf16 %v1735
  %v2539 = vunpack.c.l.bf16 %v1736
  %v2540 = vunpack.c.h.bf16 %v1736
  %v2541 = vunpack.c.l.bf16 %v1737
  %v2542 = vunpack.c.h.bf16 %v1737
  %v2543 = vunpack.c.l.bf16 %v1738
  %v2544 = vunpack.c.h.bf16 %v1738
  %v2545 = vunpack.c.l.bf16 %v1739
  %v2546 = vunpack.c.h.bf16 %v1739
  %v2547 = vunpack.c.l.bf16 %v1740
  %v2548 = vunpack.c.h.bf16 %v1740
  %v2549 = vunpack.c.l.bf16 %v1741
  %v2550 = vunpack.c.h.bf16 %v1741
  %v2551 = vunpack.c.l.bf16 %v1742
  %v2552 = vunpack.c.h.bf16 %v1742
  %v2553 = vunpack.c.l.bf16 %v1743
  %v2554 = vunpack.c.h.bf16 %v1743
  %v2555 = vunpack.c.l.bf16 %v1744
  %v2556 = vunpack.c.h.bf16 %v1744
  %v2557 = vunpack.c.l.bf16 %v1745
  %v2558 = vunpack.c.h.bf16 %v1745
  %v2559 = vunpack.c.l.bf16 %v1746
  %v2560 = vunpack.c.h.bf16 %v1746
  %v2561 = vunpack.c.l.bf16 %v1747
  %v2562 = vunpack.c.h.bf16 %v1747
  %v2563 = vunpack.c.l.bf16 %v1748
  %v2564 = vunpack.c.h.bf16 %v1748
  %v2565 = vunpack.c.l.bf16 %v1749
  %v2566 = vunpack.c.h.bf16 %v1749
  %v2567 = vunpack.c.l.bf16 %v1750
  %v2568 = vunpack.c.h.bf16 %v1750
  %v2569 = vunpack.c.l.bf16 %v1751
  %v2570 = vunpack.c.h.bf16 %v1751
  %v2571 = vunpack.c.l.bf16 %v1752
  %v2572 = vunpack.c.h.bf16 %v1752
  %v2573 = vunpack.c.l.bf16 %v1753
  %v2574 = vunpack.c.h.bf16 %v1753
  %v2575 = vunpack.c.l.bf16 %v1754
  %v2576 = vunpack.c.h.bf16 %v1754
  %v2577 = vunpack.c.l.bf16 %v1755
  %v2578 = vunpack.c.h.bf16 %v1755
  %v2579 = vunpack.c.l.bf16 %v1756
  %v2580 = vunpack.c.h.bf16 %v1756
  %v2581 = vunpack.c.l.bf16 %v1757
  %v2582 = vunpack.c.h.bf16 %v1757
  %v2583 = vunpack.c.l.bf16 %v1758
  %v2584 = vunpack.c.h.bf16 %v1758
  %v2585 = vunpack.c.l.bf16 %v1759
  %v2586 = vunpack.c.h.bf16 %v1759
  %v2587 = vunpack.c.l.bf16 %v1760
  %v2588 = vunpack.c.h.bf16 %v1760
  %v2589 = vunpack.c.l.bf16 %v1761
  %v2590 = vunpack.c.h.bf16 %v1761
  %v2591 = vunpack.c.l.bf16 %v1762
  %v2592 = vunpack.c.h.bf16 %v1762
  %v2593 = vunpack.c.l.bf16 %v1763
  %v2594 = vunpack.c.h.bf16 %v1763
  %v2595 = vunpack.c.l.bf16 %v1764
  %v2596 = vunpack.c.h.bf16 %v1764
  %v2597 = vunpack.c.l.bf16 %v1765
  %v2598 = vunpack.c.h.bf16 %v1765
  %v2599 = vunpack.c.l.bf16 %v1766
  %v2600 = vunpack.c.h.bf16 %v1766
  %v2601 = vunpack.c.l.bf16 %v1767
  %v2602 = vunpack.c.h.bf16 %v1767
  %v2603 = vunpack.c.l.bf16 %v1768
  %v2604 = vunpack.c.h.bf16 %v1768
  %v2605 = vunpack.c.l.bf16 %v1769
  %v2606 = vunpack.c.h.bf16 %v1769
  %v2607 = vunpack.c.l.bf16 %v1770
  %v2608 = vunpack.c.h.bf16 %v1770
  %v2609 = vunpack.c.l.bf16 %v1771
  %v2610 = vunpack.c.h.bf16 %v1771
  %v2611 = vunpack.c.l.bf16 %v1772
  %v2612 = vunpack.c.h.bf16 %v1772
  %v2613 = vunpack.c.l.bf16 %v1773
  %v2614 = vunpack.c.h.bf16 %v1773
  %v2615 = vunpack.c.l.bf16 %v1774
  %v2616 = vunpack.c.h.bf16 %v1774
  %v2617 = vunpack.c.l.bf16 %v1775
  %v2618 = vunpack.c.h.bf16 %v1775
  %v2619 = vunpack.c.l.bf16 %v1776
  %v2620 = vunpack.c.h.bf16 %v1776
  %v2621 = vunpack.c.l.bf16 %v1777
  %v2622 = vunpack.c.h.bf16 %v1777
  %v2623 = vunpack.c.l.bf16 %v1778
  %v2624 = vunpack.c.h.bf16 %v1778
  %v2625 = vunpack.c.l.bf16 %v1779
  %v2626 = vunpack.c.h.bf16 %v1779
  %v2627 = vunpack.c.l.bf16 %v1780
  %v2628 = vunpack.c.h.bf16 %v1780
  %v2629 = vunpack.c.l.bf16 %v1781
  %v2630 = vunpack.c.h.bf16 %v1781
  %v2631 = vunpack.c.l.bf16 %v1782
  %v2632 = vunpack.c.h.bf16 %v1782
  %v2633 = vunpack.c.l.bf16 %v1783
  %v2634 = vunpack.c.h.bf16 %v1783
  %v2635 = vunpack.c.l.bf16 %v1784
  %v2636 = vunpack.c.h.bf16 %v1784
  %v2637 = vunpack.c.l.bf16 %v1785
  %v2638 = vunpack.c.h.bf16 %v1785
  %v2639 = vunpack.c.l.bf16 %v1786
  %v2640 = vunpack.c.h.bf16 %v1786
  %v2641 = vunpack.c.l.bf16 %v1787
  %v2642 = vunpack.c.h.bf16 %v1787
  %v2643 = vunpack.c.l.bf16 %v1788
  %v2644 = vunpack.c.h.bf16 %v1788
  %v2645 = vunpack.c.l.bf16 %v1789
  %v2646 = vunpack.c.h.bf16 %v1789
  %v2647 = vunpack.c.l.bf16 %v1790
  %v2648 = vunpack.c.h.bf16 %v1790
  %v2649 = vunpack.c.l.bf16 %v1791
  %v2650 = vunpack.c.h.bf16 %v1791
  %v2651 = vunpack.c.l.bf16 %v1792
  %v2652 = vunpack.c.h.bf16 %v1792
  %v2653 = vunpack.c.l.bf16 %v1793
  %v2654 = vunpack.c.h.bf16 %v1793
  %v2655 = vunpack.c.l.bf16 %v1794
  %v2656 = vunpack.c.h.bf16 %v1794
  %v2657 = vunpack.c.l.bf16 %v1795
  %v2658 = vunpack.c.h.bf16 %v1795
  %v2659 = vunpack.c.l.bf16 %v1796
  %v2660 = vunpack.c.h.bf16 %v1796
  %v2661 = vunpack.c.l.bf16 %v1797
  %v2662 = vunpack.c.h.bf16 %v1797
  %v2663 = vunpack.c.l.bf16 %v1798
  %v2664 = vunpack.c.h.bf16 %v1798
  %v2665 = vunpack.c.l.bf16 %v1799
  %v2666 = vunpack.c.h.bf16 %v1799
  %v2667 = vunpack.c.l.bf16 %v1800
  %v2668 = vunpack.c.h.bf16 %v1800
  %v2669 = vunpack.c.l.bf16 %v1801
  %v2670 = vunpack.c.h.bf16 %v1801
  %v2671 = vunpack.c.l.bf16 %v1802
  %v2672 = vunpack.c.h.bf16 %v1802
  %v2673 = vunpack.c.l.bf16 %v1803
  %v2674 = vunpack.c.h.bf16 %v1803
  %v2675 = vunpack.c.l.bf16 %v1804
  %v2676 = vunpack.c.h.bf16 %v1804
  %v2677 = vunpack.c.l.bf16 %v1805
  %v2678 = vunpack.c.h.bf16 %v1805
  %v2679 = vunpack.c.l.bf16 %v1806
  %v2680 = vunpack.c.h.bf16 %v1806
  %v2681 = vunpack.c.l.bf16 %v1807
  %v2682 = vunpack.c.h.bf16 %v1807
  %v2683 = vunpack.c.l.bf16 %v1808
  %v2684 = vunpack.c.h.bf16 %v1808
  %v2685 = vunpack.c.l.bf16 %v1809
  %v2686 = vunpack.c.h.bf16 %v1809
  %v2687 = vunpack.c.l.bf16 %v1810
  %v2688 = vunpack.c.h.bf16 %v1810
  %v2689 = vunpack.c.l.bf16 %v1811
  %v2690 = vunpack.c.h.bf16 %v1811
  %v2691 = vunpack.c.l.bf16 %v1812
  %v2692 = vunpack.c.h.bf16 %v1812
  %v2693 = vunpack.c.l.bf16 %v1813
  %v2694 = vunpack.c.h.bf16 %v1813
  %v2695 = vunpack.c.l.bf16 %v1814
  %v2696 = vunpack.c.h.bf16 %v1814
  %v2697 = vunpack.c.l.bf16 %v1815
  %v2698 = vunpack.c.h.bf16 %v1815
  %v2699 = vunpack.c.l.bf16 %v1816
  %v2700 = vunpack.c.h.bf16 %v1816
  %v2701 = vunpack.c.l.bf16 %v1817
  %v2702 = vunpack.c.h.bf16 %v1817
  %v2703 = vunpack.c.l.bf16 %v1818
  %v2704 = vunpack.c.h.bf16 %v1818
  %v2705 = vunpack.c.l.bf16 %v1819
  %v2706 = vunpack.c.h.bf16 %v1819
  %v2707 = vunpack.c.l.bf16 %v1820
  %v2708 = vunpack.c.h.bf16 %v1820
  %v2709 = vunpack.c.l.bf16 %v1821
  %v2710 = vunpack.c.h.bf16 %v1821
  %v2711 = vunpack.c.l.bf16 %v1822
  %v2712 = vunpack.c.h.bf16 %v1822
  %v2713 = vunpack.c.l.bf16 %v1823
  %v2714 = vunpack.c.h.bf16 %v1823
  %v2715 = vunpack.c.l.bf16 %v1824
  %v2716 = vunpack.c.h.bf16 %v1824
  %v2717 = vunpack.c.l.bf16 %v1825
  %v2718 = vunpack.c.h.bf16 %v1825
  %v2719 = vunpack.c.l.bf16 %v1826
  %v2720 = vunpack.c.h.bf16 %v1826
  %v2721 = vunpack.c.l.bf16 %v1827
  %v2722 = vunpack.c.h.bf16 %v1827
  %v2723 = vunpack.c.l.bf16 %v1828
  %v2724 = vunpack.c.h.bf16 %v1828
  %v2725 = vunpack.c.l.bf16 %v1829
  %v2726 = vunpack.c.h.bf16 %v1829
  %v2727 = vunpack.c.l.bf16 %v1830
  %v2728 = vunpack.c.h.bf16 %v1830
  %v2729 = vunpack.c.l.bf16 %v1831
  %v2730 = vunpack.c.h.bf16 %v1831
  %v2731 = vunpack.c.l.bf16 %v1832
  %v2732 = vunpack.c.h.bf16 %v1832
  %v2733 = vunpack.c.l.bf16 %v1833
  %v2734 = vunpack.c.h.bf16 %v1833
  %v2735 = vunpack.c.l.bf16 %v1834
  %v2736 = vunpack.c.h.bf16 %v1834
  %v2737 = vunpack.c.l.bf16 %v1835
  %v2738 = vunpack.c.h.bf16 %v1835
  %v2739 = vunpack.c.l.bf16 %v1836
  %v2740 = vunpack.c.h.bf16 %v1836
  %v2741 = vunpack.c.l.bf16 %v1837
  %v2742 = vunpack.c.h.bf16 %v1837
  %v2743 = vunpack.c.l.bf16 %v1838
  %v2744 = vunpack.c.h.bf16 %v1838
  %v2745 = vunpack.c.l.bf16 %v1839
  %v2746 = vunpack.c.h.bf16 %v1839
  %v2747 = vunpack.c.l.bf16 %v1840
  %v2748 = vunpack.c.h.bf16 %v1840
  %v2749 = vunpack.c.l.bf16 %v1841
  %v2750 = vunpack.c.h.bf16 %v1841
  %v2751 = vunpack.c.l.bf16 %v1842
  %v2752 = vunpack.c.h.bf16 %v1842
  %v2753 = vunpack.c.l.bf16 %v1843
  %v2754 = vunpack.c.h.bf16 %v1843
  %v2755 = vunpack.c.l.bf16 %v1844
  %v2756 = vunpack.c.h.bf16 %v1844
  %v2757 = vunpack.c.l.bf16 %v1845
  %v2758 = vunpack.c.h.bf16 %v1845
  %v2759 = vunpack.c.l.bf16 %v1846
  %v2760 = vunpack.c.h.bf16 %v1846
  %v2761 = vunpack.c.l.bf16 %v1847
  %v2762 = vunpack.c.h.bf16 %v1847
  %v2763 = vunpack.c.l.bf16 %v1848
  %v2764 = vunpack.c.h.bf16 %v1848
  %v2765 = vunpack.c.l.bf16 %v1849
  %v2766 = vunpack.c.h.bf16 %v1849
  %v2767 = vunpack.c.l.bf16 %v1850
  %v2768 = vunpack.c.h.bf16 %v1850
  %v2769 = vunpack.c.l.bf16 %v1851
  %v2770 = vunpack.c.h.bf16 %v1851
  %v2771 = vunpack.c.l.bf16 %v1852
  %v2772 = vunpack.c.h.bf16 %v1852
  %v2773 = vunpack.c.l.bf16 %v1853
  %v2774 = vunpack.c.h.bf16 %v1853
  %v2775 = vunpack.c.l.bf16 %v1854
  %v2776 = vunpack.c.h.bf16 %v1854
  %v2777 = vunpack.c.l.bf16 %v1855
  %v2778 = vunpack.c.h.bf16 %v1855
  %v2779 = vunpack.c.l.bf16 %v1856
  %v2780 = vunpack.c.h.bf16 %v1856
  %v2781 = vunpack.c.l.bf16 %v1857
  %v2782 = vunpack.c.h.bf16 %v1857
  %v2783 = vunpack.c.l.bf16 %v1858
  %v2784 = vunpack.c.h.bf16 %v1858
  %v2785 = vunpack.c.l.bf16 %v1859
  %v2786 = vunpack.c.h.bf16 %v1859
  %v2787 = vunpack.c.l.bf16 %v1860
  %v2788 = vunpack.c.h.bf16 %v1860
  %v2789 = vunpack.c.l.bf16 %v1861
  %v2790 = vunpack.c.h.bf16 %v1861
  %v2791 = vunpack.c.l.bf16 %v1862
  %v2792 = vunpack.c.h.bf16 %v1862
  %v2793 = vunpack.c.l.bf16 %v1863
  %v2794 = vunpack.c.h.bf16 %v1863
  %v2795 = vunpack.c.l.bf16 %v1864
  %v2796 = vunpack.c.h.bf16 %v1864
  %v2797 = vunpack.c.l.bf16 %v1865
  %v2798 = vunpack.c.h.bf16 %v1865
  %v2799 = vunpack.c.l.bf16 %v1866
  %v2800 = vunpack.c.h.bf16 %v1866
  %v2801 = vunpack.c.l.bf16 %v1867
  %v2802 = vunpack.c.h.bf16 %v1867
  %v2803 = vunpack.c.l.bf16 %v1868
  %v2804 = vunpack.c.h.bf16 %v1868
  %v2805 = vunpack.c.l.bf16 %v1869
  %v2806 = vunpack.c.h.bf16 %v1869
  %v2807 = vunpack.c.l.bf16 %v1870
  %v2808 = vunpack.c.h.bf16 %v1870
  %v2809 = vunpack.c.l.bf16 %v1871
  %v2810 = vunpack.c.h.bf16 %v1871
  %v2811 = vunpack.c.l.bf16 %v1872
  %v2812 = vunpack.c.h.bf16 %v1872
  %v2813 = vunpack.c.l.bf16 %v1873
  %v2814 = vunpack.c.h.bf16 %v1873
  %v2815 = vunpack.c.l.bf16 %v1874
  %v2816 = vunpack.c.h.bf16 %v1874
  %v2817 = vunpack.c.l.bf16 %v1875
  %v2818 = vunpack.c.h.bf16 %v1875
  %v2819 = vunpack.c.l.bf16 %v1876
  %v2820 = vunpack.c.h.bf16 %v1876
  %v2821 = vunpack.c.l.bf16 %v1877
  %v2822 = vunpack.c.h.bf16 %v1877
  %v2823 = vunpack.c.l.bf16 %v1878
  %v2824 = vunpack.c.h.bf16 %v1878
  %v2825 = vunpack.c.l.bf16 %v1879
  %v2826 = vunpack.c.h.bf16 %v1879
  %v2827 = vunpack.c.l.bf16 %v1880
  %v2828 = vunpack.c.h.bf16 %v1880
  %v2829 = vunpack.c.l.bf16 %v1881
  %v2830 = vunpack.c.h.bf16 %v1881
  %v2831 = vunpack.c.l.bf16 %v1882
  %v2832 = vunpack.c.h.bf16 %v1882
  %v2833 = vunpack.c.l.bf16 %v1883
  %v2834 = vunpack.c.h.bf16 %v1883
  %v2835 = vunpack.c.l.bf16 %v1884
  %v2836 = vunpack.c.h.bf16 %v1884
  %v2837 = vunpack.c.l.bf16 %v1885
  %v2838 = vunpack.c.h.bf16 %v1885
  %v2839 = vunpack.c.l.bf16 %v1886
  %v2840 = vunpack.c.h.bf16 %v1886
  %v2841 = vunpack.c.l.bf16 %v1887
  %v2842 = vunpack.c.h.bf16 %v1887
  %v2843 = vunpack.c.l.bf16 %v1888
  %v2844 = vunpack.c.h.bf16 %v1888
  %v2845 = vunpack.c.l.bf16 %v1889
  %v2846 = vunpack.c.h.bf16 %v1889
  %v2847 = vunpack.c.l.bf16 %v1890
  %v2848 = vunpack.c.h.bf16 %v1890
  %v2849 = vunpack.c.l.bf16 %v1891
  %v2850 = vunpack.c.h.bf16 %v1891
  %v2851 = vunpack.c.l.bf16 %v1892
  %v2852 = vunpack.c.h.bf16 %v1892
  %v2853 = vunpack.c.l.bf16 %v1893
  %v2854 = vunpack.c.h.bf16 %v1893
  %v2855 = vunpack.c.l.bf16 %v1894
  %v2856 = vunpack.c.h.bf16 %v1894
  %v2857 = vunpack.c.l.bf16 %v1895
  %v2858 = vunpack.c.h.bf16 %v1895
  %v2859 = vunpack.c.l.bf16 %v1896
  %v2860 = vunpack.c.h.bf16 %v1896
  %v2861 = vunpack.c.l.bf16 %v1897
  %v2862 = vunpack.c.h.bf16 %v1897
  %v2863 = vunpack.c.l.bf16 %v1898
  %v2864 = vunpack.c.h.bf16 %v1898
  %v2865 = vunpack.c.l.bf16 %v1899
  %v2866 = vunpack.c.h.bf16 %v1899
  %v2867 = vunpack.c.l.bf16 %v1900
  %v2868 = vunpack.c.h.bf16 %v1900
  %v2869 = vunpack.c.l.bf16 %v1901
  %v2870 = vunpack.c.h.bf16 %v1901
  %v2871 = vunpack.c.l.bf16 %v1902
  %v2872 = vunpack.c.h.bf16 %v1902
  %v2873 = vunpack.c.l.bf16 %v1903
  %v2874 = vunpack.c.h.bf16 %v1903
  %v2875 = vunpack.c.l.bf16 %v1904
  %v2876 = vunpack.c.h.bf16 %v1904
  %v2877 = vunpack.c.l.bf16 %v1905
  %v2878 = vunpack.c.h.bf16 %v1905
  %v2879 = vunpack.c.l.bf16 %v1906
  %v2880 = vunpack.c.h.bf16 %v1906
  %v2881 = vunpack.c.l.bf16 %v1907
  %v2882 = vunpack.c.h.bf16 %v1907
  %v2883 = vunpack.c.l.bf16 %v1908
  %v2884 = vunpack.c.h.bf16 %v1908
  %v2885 = vunpack.c.l.bf16 %v1909
  %v2886 = vunpack.c.h.bf16 %v1909
  %v2887 = vunpack.c.l.bf16 %v1910
  %v2888 = vunpack.c.h.bf16 %v1910
  %v2889 = vunpack.c.l.bf16 %v1911
  %v2890 = vunpack.c.h.bf16 %v1911
  %v2891 = vunpack.c.l.bf16 %v1912
  %v2892 = vunpack.c.h.bf16 %v1912
  %v2893 = vunpack.c.l.bf16 %v1913
  %v2894 = vunpack.c.h.bf16 %v1913
  %v2895 = vunpack.c.l.bf16 %v1914
  %v2896 = vunpack.c.h.bf16 %v1914
  %v2897 = vunpack.c.l.bf16 %v1915
  %v2898 = vunpack.c.h.bf16 %v1915
  %v2899 = vunpack.c.l.bf16 %v1916
  %v2900 = vunpack.c.h.bf16 %v1916
  %v2901 = vunpack.c.l.bf16 %v1917
  %v2902 = vunpack.c.h.bf16 %v1917
  %v2903 = vunpack.c.l.bf16 %v1918
  %v2904 = vunpack.c.h.bf16 %v1918
  %v2905 = vunpack.c.l.bf16 %v1919
  %v2906 = vunpack.c.h.bf16 %v1919
  %v2907 = vunpack.c.l.bf16 %v1920
  %v2908 = vunpack.c.h.bf16 %v1920
  %v2909 = vunpack.c.l.bf16 %v1921
  %v2910 = vunpack.c.h.bf16 %v1921
  %v2911 = vunpack.c.l.bf16 %v1922
  %v2912 = vunpack.c.h.bf16 %v1922
  %v2913 = vunpack.c.l.bf16 %v1923
  %v2914 = vunpack.c.h.bf16 %v1923
  %v2915 = vunpack.c.l.bf16 %v1924
  %v2916 = vunpack.c.h.bf16 %v1924
  %v2917 = vunpack.c.l.bf16 %v1925
  %v2918 = vunpack.c.h.bf16 %v1925
  %v2919 = vunpack.c.l.bf16 %v1926
  %v2920 = vunpack.c.h.bf16 %v1926
  %v2921 = vunpack.c.l.bf16 %v1927
  %v2922 = vunpack.c.h.bf16 %v1927
  %v2923 = vunpack.c.l.bf16 %v1928
  %v2924 = vunpack.c.h.bf16 %v1928
  %v2925 = vunpack.c.l.bf16 %v1929
  %v2926 = vunpack.c.h.bf16 %v1929
  %v2927 = vunpack.c.l.bf16 %v1930
  %v2928 = vunpack.c.h.bf16 %v1930
  %v2929 = vunpack.c.l.bf16 %v1931
  %v2930 = vunpack.c.h.bf16 %v1931
  %v2931 = vunpack.c.l.bf16 %v1932
  %v2932 = vunpack.c.h.bf16 %v1932
  %v2933 = vunpack.c.l.bf16 %v1933
  %v2934 = vunpack.c.h.bf16 %v1933
  %v2935 = vunpack.c.l.bf16 %v1934
  %v2936 = vunpack.c.h.bf16 %v1934
  %v2937 = vunpack.c.l.bf16 %v1935
  %v2938 = vunpack.c.h.bf16 %v1935
  %v2939 = vunpack.c.l.bf16 %v1936
  %v2940 = vunpack.c.h.bf16 %v1936
  %v2941 = vunpack.c.l.bf16 %v1937
  %v2942 = vunpack.c.h.bf16 %v1937
  %v2943 = vunpack.c.l.bf16 %v1938
  %v2944 = vunpack.c.h.bf16 %v1938
  %v2945 = vunpack.c.l.bf16 %v1939
  %v2946 = vunpack.c.h.bf16 %v1939
  %v2947 = vunpack.c.l.bf16 %v1940
  %v2948 = vunpack.c.h.bf16 %v1940
  %v2949 = vunpack.c.l.bf16 %v1941
  %v2950 = vunpack.c.h.bf16 %v1941
  %v2951 = vunpack.c.l.bf16 %v1942
  %v2952 = vunpack.c.h.bf16 %v1942
  %v2953 = vunpack.c.l.bf16 %v1943
  %v2954 = vunpack.c.h.bf16 %v1943
  %v2955 = vunpack.c.l.bf16 %v1944
  %v2956 = vunpack.c.h.bf16 %v1944
  %v2957 = vunpack.c.l.bf16 %v1945
  %v2958 = vunpack.c.h.bf16 %v1945
  %v2959 = vunpack.c.l.bf16 %v1946
  %v2960 = vunpack.c.h.bf16 %v1946
  %v2961 = vunpack.c.l.bf16 %v1947
  %v2962 = vunpack.c.h.bf16 %v1947
  %v2963 = vunpack.c.l.bf16 %v1948
  %v2964 = vunpack.c.h.bf16 %v1948
  %v2965 = vunpack.c.l.bf16 %v1949
  %v2966 = vunpack.c.h.bf16 %v1949
  %v2967 = vunpack.c.l.bf16 %v1950
  %v2968 = vunpack.c.h.bf16 %v1950
  %v2969 = vunpack.c.l.bf16 %v1951
  %v2970 = vunpack.c.h.bf16 %v1951
  %v2971 = vunpack.c.l.bf16 %v1952
  %v2972 = vunpack.c.h.bf16 %v1952
  %v2973 = vunpack.c.l.bf16 %v1953
  %v2974 = vunpack.c.h.bf16 %v1953
  %v2975 = vunpack.c.l.bf16 %v1954
  %v2976 = vunpack.c.h.bf16 %v1954
  %v2977 = vunpack.c.l.bf16 %v1955
  %v2978 = vunpack.c.h.bf16 %v1955
  %v2979 = vunpack.c.l.bf16 %v1956
  %v2980 = vunpack.c.h.bf16 %v1956
  %v2981 = vunpack.c.l.bf16 %v1957
  %v2982 = vunpack.c.h.bf16 %v1957
  %v2983 = vunpack.c.l.bf16 %v1958
  %v2984 = vunpack.c.h.bf16 %v1958
  %v2985 = vunpack.c.l.bf16 %v1959
  %v2986 = vunpack.c.h.bf16 %v1959
  %v2987 = vunpack.c.l.bf16 %v1960
  %v2988 = vunpack.c.h.bf16 %v1960
  %v2989 = vunpack.c.l.bf16 %v1961
  %v2990 = vunpack.c.h.bf16 %v1961
  %v2991 = vunpack.c.l.bf16 %v1962
  %v2992 = vunpack.c.h.bf16 %v1962
  %v2993 = vunpack.c.l.bf16 %v1963
  %v2994 = vunpack.c.h.bf16 %v1963
  %v2995 = vunpack.c.l.bf16 %v1964
  %v2996 = vunpack.c.h.bf16 %v1964
  %v2997 = vunpack.c.l.bf16 %v1965
  %v2998 = vunpack.c.h.bf16 %v1965
  %v2999 = vunpack.c.l.bf16 %v1966
  %v3000 = vunpack.c.h.bf16 %v1966
  %v3001 = vunpack.c.l.bf16 %v1967
  %v3002 = vunpack.c.h.bf16 %v1967
  %v3003 = vunpack.c.l.bf16 %v1968
  %v3004 = vunpack.c.h.bf16 %v1968
  %v3005 = vunpack.c.l.bf16 %v1969
  %v3006 = vunpack.c.h.bf16 %v1969
  %v3007 = vunpack.c.l.bf16 %v1970
  %v3008 = vunpack.c.h.bf16 %v1970
  %v3009 = vunpack.c.l.bf16 %v1971
  %v3010 = vunpack.c.h.bf16 %v1971
  %v3011 = vunpack.c.l.bf16 %v1972
  %v3012 = vunpack.c.h.bf16 %v1972
  %v3013 = vunpack.c.l.bf16 %v1973
  %v3014 = vunpack.c.h.bf16 %v1973
  %v3015 = vunpack.c.l.bf16 %v1974
  %v3016 = vunpack.c.h.bf16 %v1974
  %v3017 = vunpack.c.l.bf16 %v1975
  %v3018 = vunpack.c.h.bf16 %v1975
  %v3019 = vunpack.c.l.bf16 %v1976
  %v3020 = vunpack.c.h.bf16 %v1976
  %v3021 = vunpack.c.l.bf16 %v1977
  %v3022 = vunpack.c.h.bf16 %v1977
  %v3023 = vunpack.c.l.bf16 %v1978
  %v3024 = vunpack.c.h.bf16 %v1978
  %v3025 = vunpack.c.l.bf16 %v1979
  %v3026 = vunpack.c.h.bf16 %v1979
  %v3027 = vunpack.c.l.bf16 %v1980
  %v3028 = vunpack.c.h.bf16 %v1980
  %v3029 = vunpack.c.l.bf16 %v1981
  %v3030 = vunpack.c.h.bf16 %v1981
  %v3031 = vunpack.c.l.bf16 %v1982
  %v3032 = vunpack.c.h.bf16 %v1982
  %v3033 = vunpack.c.l.bf16 %v1983
  %v3034 = vunpack.c.h.bf16 %v1983
  %v3035 = vunpack.c.l.bf16 %v1984
  %v3036 = vunpack.c.h.bf16 %v1984
  %v3037 = vunpack.c.l.bf16 %v1985
  %v3038 = vunpack.c.h.bf16 %v1985
  %v3039 = vunpack.c.l.bf16 %v1986
  %v3040 = vunpack.c.h.bf16 %v1986
  %v3041 = vunpack.c.l.bf16 %v1987
  %v3042 = vunpack.c.h.bf16 %v1987
  %v3043 = vunpack.c.l.bf16 %v1988
  %v3044 = vunpack.c.h.bf16 %v1988
  %v3045 = vunpack.c.l.bf16 %v1989
  %v3046 = vunpack.c.h.bf16 %v1989
  %v3047 = vunpack.c.l.bf16 %v1990
  %v3048 = vunpack.c.h.bf16 %v1990
  %v3049 = vunpack.c.l.bf16 %v1991
  %v3050 = vunpack.c.h.bf16 %v1991
  %v3051 = vunpack.c.l.bf16 %v1992
  %v3052 = vunpack.c.h.bf16 %v1992
  %v3053 = vunpack.c.l.bf16 %v1993
  %v3054 = vunpack.c.h.bf16 %v1993
  %v3055 = vunpack.c.l.bf16 %v1994
  %v3056 = vunpack.c.h.bf16 %v1994
  %v3057 = vunpack.c.l.bf16 %v1995
  %v3058 = vunpack.c.h.bf16 %v1995
  %v3059 = vunpack.c.l.bf16 %v1996
  %v3060 = vunpack.c.h.bf16 %v1996
  %v3061 = vunpack.c.l.bf16 %v1997
  %v3062 = vunpack.c.h.bf16 %v1997
  %v3063 = vunpack.c.l.bf16 %v1998
  %v3064 = vunpack.c.h.bf16 %v1998
  %v3065 = vunpack.c.l.bf16 %v1999
  %v3066 = vunpack.c.h.bf16 %v1999
  %v3067 = vunpack.c.l.bf16 %v2000
  %v3068 = vunpack.c.h.bf16 %v2000
  %v3069 = vunpack.c.l.bf16 %v2001
  %v3070 = vunpack.c.h.bf16 %v2001
  %v3071 = vunpack.c.l.bf16 %v2002
  %v3072 = vunpack.c.h.bf16 %v2002
  %v3073 = vunpack.c.l.bf16 %v2003
  %v3074 = vunpack.c.h.bf16 %v2003
  %v3075 = vunpack.c.l.bf16 %v2004
  %v3076 = vunpack.c.h.bf16 %v2004
  %v3077 = vunpack.c.l.bf16 %v2005
  %v3078 = vunpack.c.h.bf16 %v2005
  %v3079 = vunpack.c.l.bf16 %v2006
  %v3080 = vunpack.c.h.bf16 %v2006
  %v3081 = vunpack.c.l.bf16 %v2007
  %v3082 = vunpack.c.h.bf16 %v2007
  %v3083 = vunpack.c.l.bf16 %v2008
  %v3084 = vunpack.c.h.bf16 %v2008
  %v3085 = vunpack.c.l.bf16 %v2009
  %v3086 = vunpack.c.h.bf16 %v2009
  %v3087 = vunpack.c.l.bf16 %v2010
  %v3088 = vunpack.c.h.bf16 %v2010
  %v3089 = vunpack.c.l.bf16 %v2011
  %v3090 = vunpack.c.h.bf16 %v2011
  %v3091 = vunpack.c.l.bf16 %v2012
  %v3092 = vunpack.c.h.bf16 %v2012
  %v3093 = vunpack.c.l.bf16 %v2013
  %v3094 = vunpack.c.h.bf16 %v2013
  %v3095 = vunpack.c.l.bf16 %v2014
  %v3096 = vunpack.c.h.bf16 %v2014
  %v3097 = vunpack.c.l.bf16 %v2015
  %v3098 = vunpack.c.h.bf16 %v2015
  %v3099 = vunpack.c.l.bf16 %v2016
  %v3100 = vunpack.c.h.bf16 %v2016
  %v3101 = vunpack.c.l.bf16 %v2017
  %v3102 = vunpack.c.h.bf16 %v2017
  %v3103 = vunpack.c.l.bf16 %v2018
  %v3104 = vunpack.c.h.bf16 %v2018
  %v3105 = vunpack.c.l.bf16 %v2019
  %v3106 = vunpack.c.h.bf16 %v2019
  %v3107 = vunpack.c.l.bf16 %v2020
  %v3108 = vunpack.c.h.bf16 %v2020
  %v3109 = vunpack.c.l.bf16 %v2021
  %v3110 = vunpack.c.h.bf16 %v2021
  %v3111 = vunpack.c.l.bf16 %v2022
  %v3112 = vunpack.c.h.bf16 %v2022
  %v3113 = vunpack.c.l.bf16 %v2023
  %v3114 = vunpack.c.h.bf16 %v2023
  %v3115 = vunpack.c.l.bf16 %v2024
  %v3116 = vunpack.c.h.bf16 %v2024
  %v3117 = vunpack.c.l.bf16 %v2025
  %v3118 = vunpack.c.h.bf16 %v2025
  %v3119 = vunpack.c.l.bf16 %v2026
  %v3120 = vunpack.c.h.bf16 %v2026
  %v3121 = vunpack.c.l.bf16 %v2027
  %v3122 = vunpack.c.h.bf16 %v2027
  %v3123 = vunpack.c.l.bf16 %v2028
  %v3124 = vunpack.c.h.bf16 %v2028
  %v3125 = vunpack.c.l.bf16 %v2029
  %v3126 = vunpack.c.h.bf16 %v2029
  %v3127 = vunpack.c.l.bf16 %v2030
  %v3128 = vunpack.c.h.bf16 %v2030
  %v3129 = vunpack.c.l.bf16 %v2031
  %v3130 = vunpack.c.h.bf16 %v2031
  %v3131 = vunpack.c.l.bf16 %v2032
  %v3132 = vunpack.c.h.bf16 %v2032
  %v3133 = vunpack.c.l.bf16 %v2033
  %v3134 = vunpack.c.h.bf16 %v2033
  %v3135 = vunpack.c.l.bf16 %v2034
  %v3136 = vunpack.c.h.bf16 %v2034
  %v3137 = vunpack.c.l.bf16 %v2035
  %v3138 = vunpack.c.h.bf16 %v2035
  %v3139 = vunpack.c.l.bf16 %v2036
  %v3140 = vunpack.c.h.bf16 %v2036
  %v3141 = vunpack.c.l.bf16 %v2037
  %v3142 = vunpack.c.h.bf16 %v2037
  %v3143 = vunpack.c.l.bf16 %v2038
  %v3144 = vunpack.c.h.bf16 %v2038
  %v3145 = vunpack.c.l.bf16 %v2039
  %v3146 = vunpack.c.h.bf16 %v2039
  %v3147 = vunpack.c.l.bf16 %v2040
  %v3148 = vunpack.c.h.bf16 %v2040
  %v3149 = vunpack.c.l.bf16 %v2041
  %v3150 = vunpack.c.h.bf16 %v2041
  %v3151 = vunpack.c.l.bf16 %v2042
  %v3152 = vunpack.c.h.bf16 %v2042
  %v3153 = vunpack.c.l.bf16 %v2043
  %v3154 = vunpack.c.h.bf16 %v2043
  %v3155 = vunpack.c.l.bf16 %v2044
  %v3156 = vunpack.c.h.bf16 %v2044
  %v3157 = vunpack.c.l.bf16 %v2045
  %v3158 = vunpack.c.h.bf16 %v2045
  %v3159 = vunpack.c.l.bf16 %v2046
  %v3160 = vunpack.c.h.bf16 %v2046
  %v3161 = vunpack.c.l.bf16 %v2047
  %v3162 = vunpack.c.h.bf16 %v2047
  %v3163 = vunpack.c.l.bf16 %v2048
  %v3164 = vunpack.c.h.bf16 %v2048
  %v3165 = vunpack.c.l.bf16 %v2049
  %v3166 = vunpack.c.h.bf16 %v2049
  %v3167 = vunpack.c.l.bf16 %v2050
  %v3168 = vunpack.c.h.bf16 %v2050
  %v3169 = vunpack.c.l.bf16 %v2051
  %v3170 = vunpack.c.h.bf16 %v2051
  %v3171 = vunpack.c.l.bf16 %v2052
  %v3172 = vunpack.c.h.bf16 %v2052
  %v3173 = vunpack.c.l.bf16 %v2053
  %v3174 = vunpack.c.h.bf16 %v2053
  %v3175 = vunpack.c.l.bf16 %v2054
  %v3176 = vunpack.c.h.bf16 %v2054
  %v3177 = vunpack.c.l.bf16 %v2055
  %v3178 = vunpack.c.h.bf16 %v2055
  %v3179 = vunpack.c.l.bf16 %v2056
  %v3180 = vunpack.c.h.bf16 %v2056
  %v3181 = vunpack.c.l.bf16 %v2057
  %v3182 = vunpack.c.h.bf16 %v2057
  %v3183 = vunpack.c.l.bf16 %v2058
  %v3184 = vunpack.c.h.bf16 %v2058
  %v3185 = vunpack.c.l.bf16 %v2059
  %v3186 = vunpack.c.h.bf16 %v2059
  %v3187 = vunpack.c.l.bf16 %v2060
  %v3188 = vunpack.c.h.bf16 %v2060
  %v3189 = vunpack.c.l.bf16 %v2061
  %v3190 = vunpack.c.h.bf16 %v2061
  %v3191 = vunpack.c.l.bf16 %v2062
  %v3192 = vunpack.c.h.bf16 %v2062
  %v3193 = vunpack.c.l.bf16 %v2063
  %v3194 = vunpack.c.h.bf16 %v2063
  %v3195 = vunpack.c.l.bf16 %v2064
  %v3196 = vunpack.c.h.bf16 %v2064
  %v3197 = vunpack.c.l.bf16 %v2065
  %v3198 = vunpack.c.h.bf16 %v2065
  %v3199 = vunpack.c.l.bf16 %v2066
  %v3200 = vunpack.c.h.bf16 %v2066
  %v3201 = vunpack.c.l.bf16 %v2067
  %v3202 = vunpack.c.h.bf16 %v2067
  %v3203 = vunpack.c.l.bf16 %v2068
  %v3204 = vunpack.c.h.bf16 %v2068
  %v3205 = vunpack.c.l.bf16 %v2069
  %v3206 = vunpack.c.h.bf16 %v2069
  %v3207 = vunpack.c.l.bf16 %v2070
  %v3208 = vunpack.c.h.bf16 %v2070
  %v3209 = vunpack.c.l.bf16 %v2071
  %v3210 = vunpack.c.h.bf16 %v2071
  %v3211 = vunpack.c.l.bf16 %v2072
  %v3212 = vunpack.c.h.bf16 %v2072
  %v3213 = vunpack.c.l.bf16 %v2073
  %v3214 = vunpack.c.h.bf16 %v2073
  %v3215 = vunpack.c.l.bf16 %v2074
  %v3216 = vunpack.c.h.bf16 %v2074
  %v3217 = vunpack.c.l.bf16 %v2075
  %v3218 = vunpack.c.h.bf16 %v2075
  %v3219 = vunpack.c.l.bf16 %v2076
  %v3220 = vunpack.c.h.bf16 %v2076
  %v3221 = vunpack.c.l.bf16 %v2077
  %v3222 = vunpack.c.h.bf16 %v2077
  %v3223 = vunpack.c.l.bf16 %v2078
  %v3224 = vunpack.c.h.bf16 %v2078
  %v3225 = vunpack.c.l.bf16 %v2079
  %v3226 = vunpack.c.h.bf16 %v2079
  %v3227 = vunpack.c.l.bf16 %v2080
  %v3228 = vunpack.c.h.bf16 %v2080
  %v3229 = vunpack.c.l.bf16 %v2081
  %v3230 = vunpack.c.h.bf16 %v2081
  %v3231 = vunpack.c.l.bf16 %v2082
  %v3232 = vunpack.c.h.bf16 %v2082
  %v3233 = vunpack.c.l.bf16 %v2083
  %v3234 = vunpack.c.h.bf16 %v2083
  %v3235 = vunpack.c.l.bf16 %v2084
  %v3236 = vunpack.c.h.bf16 %v2084
  %3237 = vmatprep.subr.mxu0 0.0
  %3238 = vmatpush1.msra.mxu0 %v614
  %3239 = vmatprep.subr.mxu0 0.0
  %3240 = vmatpush1.msra.mxu0 %v613
  %3241 = vmatprep.subr.mxu0 0.0
  %3242 = vmatpush1.msra.mxu0 %v612
  %3243 = vmatprep.subr.mxu0 0.0
  %3244 = vmatpush1.msra.mxu0 %v611
  %3245 = vmatprep.subr.mxu0 0.0
  %3246 = vmatpush1.msra.mxu0 %v610
  %3247 = vmatprep.subr.mxu0 0.0
  %3248 = vmatpush1.msra.mxu0 %v609
  %3249 = vmatprep.subr.mxu0 0.0
  %3250 = vmatpush1.msra.mxu0 %v608
  %3251 = vmatprep.subr.mxu0 0.0
  %3252 = vmatpush1.msra.mxu0 %v607
  %3253 = vmatprep.subr.mxu0 0.0
  %3254 = vmatpush1.msra.mxu0 %v606
  %3255 = vmatprep.subr.mxu0 0.0
  %3256 = vmatpush1.msra.mxu0 %v605
  %3257 = vmatprep.subr.mxu0 0.0
  %3258 = vmatpush1.msra.mxu0 %v604
  %3259 = vmatprep.subr.mxu0 0.0
  %3260 = vmatpush1.msra.mxu0 %v603
  %3261 = vmatprep.subr.mxu0 0.0
  %3262 = vmatpush1.msra.mxu0 %v602
  %3263 = vmatprep.subr.mxu0 0.0
  %3264 = vmatpush1.msra.mxu0 %v601
  %3265 = vmatprep.subr.mxu0 0.0
  %3266 = vmatpush1.msra.mxu0 %v600
  %3267 = vmatprep.subr.mxu0 0.0
  %3268 = vmatpush1.msra.mxu0 %v599
  %3269 = vmatprep.subr.mxu0 0.0
  %3270 = vmatpush2.msra.mxu0 %v630
  %3271 = vmatprep.subr.mxu0 0.0
  %3272 = vmatpush2.msra.mxu0 %v629
  %3273 = vmatprep.subr.mxu0 0.0
  %3274 = vmatpush2.msra.mxu0 %v628
  %3275 = vmatprep.subr.mxu0 0.0
  %3276 = vmatpush2.msra.mxu0 %v627
  %3277 = vmatprep.subr.mxu0 0.0
  %3278 = vmatpush2.msra.mxu0 %v626
  %3279 = vmatprep.subr.mxu0 0.0
  %3280 = vmatpush2.msra.mxu0 %v625
  %3281 = vmatprep.subr.mxu0 0.0
  %3282 = vmatpush2.msra.mxu0 %v624
  %3283 = vmatprep.subr.mxu0 0.0
  %3284 = vmatpush2.msra.mxu0 %v623
  %3285 = vmatprep.subr.mxu0 0.0
  %3286 = vmatpush2.msra.mxu0 %v622
  %3287 = vmatprep.subr.mxu0 0.0
  %3288 = vmatpush2.msra.mxu0 %v621
  %3289 = vmatprep.subr.mxu0 0.0
  %3290 = vmatpush2.msra.mxu0 %v620
  %3291 = vmatprep.subr.mxu0 0.0
  %3292 = vmatpush2.msra.mxu0 %v619
  %3293 = vmatprep.subr.mxu0 0.0
  %3294 = vmatpush2.msra.mxu0 %v618
  %3295 = vmatprep.subr.mxu0 0.0
  %3296 = vmatpush2.msra.mxu0 %v617
  %3297 = vmatprep.subr.mxu0 0.0
  %3298 = vmatpush2.msra.mxu0 %v616
  %3299 = vmatprep.subr.mxu0 0.0
  %3300 = vmatpush2.msra.mxu0 %v615
  %3301 = vmatprep.mubr.f32.mxu0 %v736
  %3302 = vmatmul.mubr.f32.gmra.mxu0 %v735
  %v3303 = vpop.f32.mrf.mxu0
  %v3304 = vadd.f32 0.0, %v3303
  %v3305 = vpop.f32.mrf.mxu0
  %3306 = vmatprep.mubr.f32.mxu0 %v738
  %3307 = vmatmul.mubr.f32.gmra.mxu0 %v737
  %v3308 = vpop.f32.mrf.mxu0
  %v3309 = vadd.f32 0.0, %v3308
  %v3310 = vpop.f32.mrf.mxu0
  %3311 = vmatprep.mubr.f32.mxu0 %v740
  %3312 = vmatmul.mubr.f32.gmra.mxu0 %v739
  %v3313 = vpop.f32.mrf.mxu0
  %v3314 = vadd.f32 0.0, %v3313
  %v3315 = vpop.f32.mrf.mxu0
  %3316 = vmatprep.mubr.f32.mxu0 %v742
  %3317 = vmatmul.mubr.f32.gmra.mxu0 %v741
  %v3318 = vpop.f32.mrf.mxu0
  %v3319 = vadd.f32 0.0, %v3318
  %v3320 = vpop.f32.mrf.mxu0
  %3321 = vmatprep.mubr.f32.mxu0 %v744
  %3322 = vmatmul.mubr.f32.gmra.mxu0 %v743
  %v3323 = vpop.f32.mrf.mxu0
  %v3324 = vadd.f32 0.0, %v3323
  %v3325 = vpop.f32.mrf.mxu0
  %3326 = vmatprep.mubr.f32.mxu0 %v746
  %3327 = vmatmul.mubr.f32.gmra.mxu0 %v745
  %v3328 = vpop.f32.mrf.mxu0
  %v3329 = vadd.f32 0.0, %v3328
  %v3330 = vpop.f32.mrf.mxu0
  %3331 = vmatprep.mubr.f32.mxu0 %v748
  %3332 = vmatmul.mubr.f32.gmra.mxu0 %v747
  %v3333 = vpop.f32.mrf.mxu0
  %v3334 = vadd.f32 0.0, %v3333
  %v3335 = vpop.f32.mrf.mxu0
  %3336 = vmatprep.mubr.f32.mxu0 %v750
  %3337 = vmatmul.mubr.f32.gmra.mxu0 %v749
  %v3338 = vpop.f32.mrf.mxu0
  %v3339 = vadd.f32 0.0, %v3338
  %v3340 = vpop.f32.mrf.mxu0
  %3341 = vmatprep.mubr.f32.mxu0 %v752
  %3342 = vmatmul.mubr.f32.gmra.mxu0 %v751
  %v3343 = vpop.f32.mrf.mxu0
  %v3344 = vadd.f32 0.0, %v3343
  %v3345 = vpop.f32.mrf.mxu0
  %3346 = vmatprep.mubr.f32.mxu0 %v754
  %3347 = vmatmul.mubr.f32.gmra.mxu0 %v753
  %v3348 = vpop.f32.mrf.mxu0
  %v3349 = vadd.f32 0.0, %v3348
  %v3350 = vpop.f32.mrf.mxu0
  %3351 = vmatprep.mubr.f32.mxu0 %v756
  %3352 = vmatmul.mubr.f32.gmra.mxu0 %v755
  %v3353 = vpop.f32.mrf.mxu0
  %v3354 = vadd.f32 0.0, %v3353
  %v3355 = vpop.f32.mrf.mxu0
  %3356 = vmatprep.mubr.f32.mxu0 %v758
  %3357 = vmatmul.mubr.f32.gmra.mxu0 %v757
  %v3358 = vpop.f32.mrf.mxu0
  %v3359 = vadd.f32 0.0, %v3358
  %v3360 = vpop.f32.mrf.mxu0
  %3361 = vmatprep.mubr.f32.mxu0 %v760
  %3362 = vmatmul.mubr.f32.gmra.mxu0 %v759
  %v3363 = vpop.f32.mrf.mxu0
  %v3364 = vadd.f32 0.0, %v3363
  %v3365 = vpop.f32.mrf.mxu0
  %3366 = vmatprep.mubr.f32.mxu0 %v762
  %3367 = vmatmul.mubr.f32.gmra.mxu0 %v761
  %v3368 = vpop.f32.mrf.mxu0
  %v3369 = vadd.f32 0.0, %v3368
  %v3370 = vpop.f32.mrf.mxu0
  %3371 = vmatprep.mubr.f32.mxu0 %v764
  %3372 = vmatmul.mubr.f32.gmra.mxu0 %v763
  %v3373 = vpop.f32.mrf.mxu0
  %v3374 = vadd.f32 0.0, %v3373
  %v3375 = vpop.f32.mrf.mxu0
  %3376 = vmatprep.mubr.f32.mxu0 %v766
  %3377 = vmatmul.mubr.f32.gmra.mxu0 %v765
  %v3378 = vpop.f32.mrf.mxu0
  %v3379 = vadd.f32 0.0, %v3378
  %v3380 = vpop.f32.mrf.mxu0
  %3381 = vmatprep.mubr.f32.mxu0 %v768
  %3382 = vmatmul.mubr.f32.gmra.mxu0 %v767
  %v3383 = vpop.f32.mrf.mxu0
  %v3384 = vadd.f32 0.0, %v3383
  %v3385 = vpop.f32.mrf.mxu0
  %3386 = vmatprep.mubr.f32.mxu0 %v770
  %3387 = vmatmul.mubr.f32.gmra.mxu0 %v769
  %v3388 = vpop.f32.mrf.mxu0
  %v3389 = vadd.f32 0.0, %v3388
  %v3390 = vpop.f32.mrf.mxu0
  %3391 = vmatprep.mubr.f32.mxu0 %v772
  %3392 = vmatmul.mubr.f32.gmra.mxu0 %v771
  %v3393 = vpop.f32.mrf.mxu0
  %v3394 = vadd.f32 0.0, %v3393
  %v3395 = vpop.f32.mrf.mxu0
  %3396 = vmatprep.mubr.f32.mxu0 %v774
  %3397 = vmatmul.mubr.f32.gmra.mxu0 %v773
  %v3398 = vpop.f32.mrf.mxu0
  %v3399 = vadd.f32 0.0, %v3398
  %v3400 = vpop.f32.mrf.mxu0
  %3401 = vmatprep.mubr.f32.mxu0 %v776
  %3402 = vmatmul.mubr.f32.gmra.mxu0 %v775
  %v3403 = vpop.f32.mrf.mxu0
  %v3404 = vadd.f32 0.0, %v3403
  %v3405 = vpop.f32.mrf.mxu0
  %3406 = vmatprep.mubr.f32.mxu0 %v778
  %3407 = vmatmul.mubr.f32.gmra.mxu0 %v777
  %v3408 = vpop.f32.mrf.mxu0
  %v3409 = vadd.f32 0.0, %v3408
  %v3410 = vpop.f32.mrf.mxu0
  %3411 = vmatprep.mubr.f32.mxu0 %v780
  %3412 = vmatmul.mubr.f32.gmra.mxu0 %v779
  %v3413 = vpop.f32.mrf.mxu0
  %v3414 = vadd.f32 0.0, %v3413
  %v3415 = vpop.f32.mrf.mxu0
  %3416 = vmatprep.mubr.f32.mxu0 %v782
  %3417 = vmatmul.mubr.f32.gmra.mxu0 %v781
  %v3418 = vpop.f32.mrf.mxu0
  %v3419 = vadd.f32 0.0, %v3418
  %v3420 = vpop.f32.mrf.mxu0
  %3421 = vmatprep.mubr.f32.mxu0 %v784
  %3422 = vmatmul.mubr.f32.gmra.mxu0 %v783
  %v3423 = vpop.f32.mrf.mxu0
  %v3424 = vadd.f32 0.0, %v3423
  %v3425 = vpop.f32.mrf.mxu0
  %3426 = vmatprep.mubr.f32.mxu0 %v786
  %3427 = vmatmul.mubr.f32.gmra.mxu0 %v785
  %v3428 = vpop.f32.mrf.mxu0
  %v3429 = vadd.f32 0.0, %v3428
  %v3430 = vpop.f32.mrf.mxu0
  %3431 = vmatprep.mubr.f32.mxu0 %v788
  %3432 = vmatmul.mubr.f32.gmra.mxu0 %v787
  %v3433 = vpop.f32.mrf.mxu0
  %v3434 = vadd.f32 0.0, %v3433
  %v3435 = vpop.f32.mrf.mxu0
  %3436 = vmatprep.mubr.f32.mxu0 %v790
  %3437 = vmatmul.mubr.f32.gmra.mxu0 %v789
  %v3438 = vpop.f32.mrf.mxu0
  %v3439 = vadd.f32 0.0, %v3438
  %v3440 = vpop.f32.mrf.mxu0
  %3441 = vmatprep.mubr.f32.mxu0 %v792
  %3442 = vmatmul.mubr.f32.gmra.mxu0 %v791
  %v3443 = vpop.f32.mrf.mxu0
  %v3444 = vadd.f32 0.0, %v3443
  %v3445 = vpop.f32.mrf.mxu0
  %3446 = vmatprep.mubr.f32.mxu0 %v794
  %3447 = vmatmul.mubr.f32.gmra.mxu0 %v793
  %v3448 = vpop.f32.mrf.mxu0
  %v3449 = vadd.f32 0.0, %v3448
  %v3450 = vpop.f32.mrf.mxu0
  %3451 = vmatprep.mubr.f32.mxu0 %v796
  %3452 = vmatmul.mubr.f32.gmra.mxu0 %v795
  %v3453 = vpop.f32.mrf.mxu0
  %v3454 = vadd.f32 0.0, %v3453
  %v3455 = vpop.f32.mrf.mxu0
  %3456 = vmatprep.mubr.f32.mxu0 %v798
  %3457 = vmatmul.mubr.f32.gmra.mxu0 %v797
  %v3458 = vpop.f32.mrf.mxu0
  %v3459 = vadd.f32 0.0, %v3458
  %v3460 = vpop.f32.mrf.mxu0
  %3461 = vmatprep.mubr.f32.mxu0 %v800
  %3462 = vmatmul.mubr.f32.gmra.mxu0 %v799
  %v3463 = vpop.f32.mrf.mxu0
  %v3464 = vadd.f32 0.0, %v3463
  %v3465 = vpop.f32.mrf.mxu0
  %3466 = vmatprep.mubr.f32.mxu0 %v802
  %3467 = vmatmul.mubr.f32.gmra.mxu0 %v801
  %v3468 = vpop.f32.mrf.mxu0
  %v3469 = vadd.f32 0.0, %v3468
  %v3470 = vpop.f32.mrf.mxu0
  %3471 = vmatprep.mubr.f32.mxu0 %v804
  %3472 = vmatmul.mubr.f32.gmra.mxu0 %v803
  %v3473 = vpop.f32.mrf.mxu0
  %v3474 = vadd.f32 0.0, %v3473
  %v3475 = vpop.f32.mrf.mxu0
  %3476 = vmatprep.mubr.f32.mxu0 %v806
  %3477 = vmatmul.mubr.f32.gmra.mxu0 %v805
  %v3478 = vpop.f32.mrf.mxu0
  %v3479 = vadd.f32 0.0, %v3478
  %v3480 = vpop.f32.mrf.mxu0
  %3481 = vmatprep.mubr.f32.mxu0 %v808
  %3482 = vmatmul.mubr.f32.gmra.mxu0 %v807
  %v3483 = vpop.f32.mrf.mxu0
  %v3484 = vadd.f32 0.0, %v3483
  %v3485 = vpop.f32.mrf.mxu0
  %3486 = vmatprep.mubr.f32.mxu0 %v810
  %3487 = vmatmul.mubr.f32.gmra.mxu0 %v809
  %v3488 = vpop.f32.mrf.mxu0
  %v3489 = vadd.f32 0.0, %v3488
  %v3490 = vpop.f32.mrf.mxu0
  %3491 = vmatprep.mubr.f32.mxu0 %v812
  %3492 = vmatmul.mubr.f32.gmra.mxu0 %v811
  %v3493 = vpop.f32.mrf.mxu0
  %v3494 = vadd.f32 0.0, %v3493
  %v3495 = vpop.f32.mrf.mxu0
  %3496 = vmatprep.mubr.f32.mxu0 %v814
  %3497 = vmatmul.mubr.f32.gmra.mxu0 %v813
  %v3498 = vpop.f32.mrf.mxu0
  %v3499 = vadd.f32 0.0, %v3498
  %v3500 = vpop.f32.mrf.mxu0
  %3501 = vmatprep.mubr.f32.mxu0 %v816
  %3502 = vmatmul.mubr.f32.gmra.mxu0 %v815
  %v3503 = vpop.f32.mrf.mxu0
  %v3504 = vadd.f32 0.0, %v3503
  %v3505 = vpop.f32.mrf.mxu0
  %3506 = vmatprep.mubr.f32.mxu0 %v818
  %3507 = vmatmul.mubr.f32.gmra.mxu0 %v817
  %v3508 = vpop.f32.mrf.mxu0
  %v3509 = vadd.f32 0.0, %v3508
  %v3510 = vpop.f32.mrf.mxu0
  %3511 = vmatprep.mubr.f32.mxu0 %v820
  %3512 = vmatmul.mubr.f32.gmra.mxu0 %v819
  %v3513 = vpop.f32.mrf.mxu0
  %v3514 = vadd.f32 0.0, %v3513
  %v3515 = vpop.f32.mrf.mxu0
  %3516 = vmatprep.mubr.f32.mxu0 %v822
  %3517 = vmatmul.mubr.f32.gmra.mxu0 %v821
  %v3518 = vpop.f32.mrf.mxu0
  %v3519 = vadd.f32 0.0, %v3518
  %v3520 = vpop.f32.mrf.mxu0
  %3521 = vmatprep.mubr.f32.mxu0 %v824
  %3522 = vmatmul.mubr.f32.gmra.mxu0 %v823
  %v3523 = vpop.f32.mrf.mxu0
  %v3524 = vadd.f32 0.0, %v3523
  %v3525 = vpop.f32.mrf.mxu0
  %3526 = vmatprep.mubr.f32.mxu0 %v826
  %3527 = vmatmul.mubr.f32.gmra.mxu0 %v825
  %v3528 = vpop.f32.mrf.mxu0
  %v3529 = vadd.f32 0.0, %v3528
  %v3530 = vpop.f32.mrf.mxu0
  %3531 = vmatprep.mubr.f32.mxu0 %v828
  %3532 = vmatmul.mubr.f32.gmra.mxu0 %v827
  %v3533 = vpop.f32.mrf.mxu0
  %v3534 = vadd.f32 0.0, %v3533
  %v3535 = vpop.f32.mrf.mxu0
  %3536 = vmatprep.mubr.f32.mxu0 %v830
  %3537 = vmatmul.mubr.f32.gmra.mxu0 %v829
  %v3538 = vpop.f32.mrf.mxu0
  %v3539 = vadd.f32 0.0, %v3538
  %v3540 = vpop.f32.mrf.mxu0
  %3541 = vmatprep.mubr.f32.mxu0 %v832
  %3542 = vmatmul.mubr.f32.gmra.mxu0 %v831
  %v3543 = vpop.f32.mrf.mxu0
  %v3544 = vadd.f32 0.0, %v3543
  %v3545 = vpop.f32.mrf.mxu0
  %3546 = vmatprep.mubr.f32.mxu0 %v834
  %3547 = vmatmul.mubr.f32.gmra.mxu0 %v833
  %v3548 = vpop.f32.mrf.mxu0
  %v3549 = vadd.f32 0.0, %v3548
  %v3550 = vpop.f32.mrf.mxu0
  %3551 = vmatprep.mubr.f32.mxu0 %v836
  %3552 = vmatmul.mubr.f32.gmra.mxu0 %v835
  %v3553 = vpop.f32.mrf.mxu0
  %v3554 = vadd.f32 0.0, %v3553
  %v3555 = vpop.f32.mrf.mxu0
  %3556 = vmatprep.mubr.f32.mxu0 %v838
  %3557 = vmatmul.mubr.f32.gmra.mxu0 %v837
  %v3558 = vpop.f32.mrf.mxu0
  %v3559 = vadd.f32 0.0, %v3558
  %v3560 = vpop.f32.mrf.mxu0
  %3561 = vmatprep.mubr.f32.mxu0 %v840
  %3562 = vmatmul.mubr.f32.gmra.mxu0 %v839
  %v3563 = vpop.f32.mrf.mxu0
  %v3564 = vadd.f32 0.0, %v3563
  %v3565 = vpop.f32.mrf.mxu0
  %3566 = vmatprep.mubr.f32.mxu0 %v842
  %3567 = vmatmul.mubr.f32.gmra.mxu0 %v841
  %v3568 = vpop.f32.mrf.mxu0
  %v3569 = vadd.f32 0.0, %v3568
  %v3570 = vpop.f32.mrf.mxu0
  %3571 = vmatprep.mubr.f32.mxu0 %v844
  %3572 = vmatmul.mubr.f32.gmra.mxu0 %v843
  %v3573 = vpop.f32.mrf.mxu0
  %v3574 = vadd.f32 0.0, %v3573
  %v3575 = vpop.f32.mrf.mxu0
  %3576 = vmatprep.mubr.f32.mxu0 %v846
  %3577 = vmatmul.mubr.f32.gmra.mxu0 %v845
  %v3578 = vpop.f32.mrf.mxu0
  %v3579 = vadd.f32 0.0, %v3578
  %v3580 = vpop.f32.mrf.mxu0
  %3581 = vmatprep.mubr.f32.mxu0 %v848
  %3582 = vmatmul.mubr.f32.gmra.mxu0 %v847
  %v3583 = vpop.f32.mrf.mxu0
  %v3584 = vadd.f32 0.0, %v3583
  %v3585 = vpop.f32.mrf.mxu0
  %3586 = vmatprep.mubr.f32.mxu0 %v850
  %3587 = vmatmul.mubr.f32.gmra.mxu0 %v849
  %v3588 = vpop.f32.mrf.mxu0
  %v3589 = vadd.f32 0.0, %v3588
  %v3590 = vpop.f32.mrf.mxu0
  %3591 = vmatprep.mubr.f32.mxu0 %v852
  %3592 = vmatmul.mubr.f32.gmra.mxu0 %v851
  %v3593 = vpop.f32.mrf.mxu0
  %v3594 = vadd.f32 0.0, %v3593
  %v3595 = vpop.f32.mrf.mxu0
  %3596 = vmatprep.mubr.f32.mxu0 %v854
  %3597 = vmatmul.mubr.f32.gmra.mxu0 %v853
  %v3598 = vpop.f32.mrf.mxu0
  %v3599 = vadd.f32 0.0, %v3598
  %v3600 = vpop.f32.mrf.mxu0
  %3601 = vmatprep.mubr.f32.mxu0 %v856
  %3602 = vmatmul.mubr.f32.gmra.mxu0 %v855
  %v3603 = vpop.f32.mrf.mxu0
  %v3604 = vadd.f32 0.0, %v3603
  %v3605 = vpop.f32.mrf.mxu0
  %3606 = vmatprep.mubr.f32.mxu0 %v858
  %3607 = vmatmul.mubr.f32.gmra.mxu0 %v857
  %v3608 = vpop.f32.mrf.mxu0
  %v3609 = vadd.f32 0.0, %v3608
  %v3610 = vpop.f32.mrf.mxu0
  %3611 = vmatprep.mubr.f32.mxu0 %v860
  %3612 = vmatmul.mubr.f32.gmra.mxu0 %v859
  %v3613 = vpop.f32.mrf.mxu0
  %v3614 = vadd.f32 0.0, %v3613
  %v3615 = vpop.f32.mrf.mxu0
  %3616 = vmatprep.mubr.f32.mxu0 %v862
  %3617 = vmatmul.mubr.f32.gmra.mxu0 %v861
  %v3618 = vpop.f32.mrf.mxu0
  %v3619 = vadd.f32 0.0, %v3618
  %v3620 = vpop.f32.mrf.mxu0
  %3621 = vmatprep.mubr.f32.mxu0 %v864
  %3622 = vmatmul.mubr.f32.gmra.mxu0 %v863
  %v3623 = vpop.f32.mrf.mxu0
  %v3624 = vadd.f32 0.0, %v3623
  %v3625 = vpop.f32.mrf.mxu0
  %3626 = vmatprep.mubr.f32.mxu0 %v866
  %3627 = vmatmul.mubr.f32.gmra.mxu0 %v865
  %v3628 = vpop.f32.mrf.mxu0
  %v3629 = vadd.f32 0.0, %v3628
  %v3630 = vpop.f32.mrf.mxu0
  %3631 = vmatprep.mubr.f32.mxu0 %v868
  %3632 = vmatmul.mubr.f32.gmra.mxu0 %v867
  %v3633 = vpop.f32.mrf.mxu0
  %v3634 = vadd.f32 0.0, %v3633
  %v3635 = vpop.f32.mrf.mxu0
  %3636 = vmatprep.mubr.f32.mxu0 %v870
  %3637 = vmatmul.mubr.f32.gmra.mxu0 %v869
  %v3638 = vpop.f32.mrf.mxu0
  %v3639 = vadd.f32 0.0, %v3638
  %v3640 = vpop.f32.mrf.mxu0
  %3641 = vmatprep.mubr.f32.mxu0 %v872
  %3642 = vmatmul.mubr.f32.gmra.mxu0 %v871
  %v3643 = vpop.f32.mrf.mxu0
  %v3644 = vadd.f32 0.0, %v3643
  %v3645 = vpop.f32.mrf.mxu0
  %3646 = vmatprep.mubr.f32.mxu0 %v874
  %3647 = vmatmul.mubr.f32.gmra.mxu0 %v873
  %v3648 = vpop.f32.mrf.mxu0
  %v3649 = vadd.f32 0.0, %v3648
  %v3650 = vpop.f32.mrf.mxu0
  %3651 = vmatprep.mubr.f32.mxu0 %v876
  %3652 = vmatmul.mubr.f32.gmra.mxu0 %v875
  %v3653 = vpop.f32.mrf.mxu0
  %v3654 = vadd.f32 0.0, %v3653
  %v3655 = vpop.f32.mrf.mxu0
  %3656 = vmatprep.mubr.f32.mxu0 %v878
  %3657 = vmatmul.mubr.f32.gmra.mxu0 %v877
  %v3658 = vpop.f32.mrf.mxu0
  %v3659 = vadd.f32 0.0, %v3658
  %v3660 = vpop.f32.mrf.mxu0
  %3661 = vdwg.mxu0
  %vm3662 = vcmask 523264
  %v3664 = vsel %vm3662, %v3344, 0
  %v3667 = vsel %vm3662, %v3349, 0
  %v3670 = vsel %vm3662, %v3354, 0
  %v3673 = vsel %vm3662, %v3359, 0
  %v3676 = vsel %vm3662, %v3364, 0
  %v3679 = vsel %vm3662, %v3369, 0
  %v3682 = vsel %vm3662, %v3374, 0
  %v3685 = vsel %vm3662, %v3379, 0
  %3687 = vmatprep.subr.mxu0 0.0
  %3688 = vmatpush1.msra.mxu0 0.0
  %3689 = vmatprep.subr.mxu0 0.0
  %3690 = vmatpush1.msra.mxu0 0.0
  %3691 = vmatprep.subr.mxu0 0.0
  %3692 = vmatpush1.msra.mxu0 0.0
  %3693 = vmatprep.subr.mxu0 0.0
  %3694 = vmatpush1.msra.mxu0 0.0
  %3695 = vmatprep.subr.mxu0 0.0
  %3696 = vmatpush1.msra.mxu0 0.0
  %3697 = vmatprep.subr.mxu0 0.0
  %3698 = vmatpush1.msra.mxu0 0.0
  %3699 = vmatprep.subr.mxu0 0.0
  %3700 = vmatpush1.msra.mxu0 0.0
  %3701 = vmatprep.subr.mxu0 0.0
  %3702 = vmatpush1.msra.mxu0 0.0
  %3703 = vmatprep.subr.mxu0 0.0
  %3704 = vmatpush1.msra.mxu0 %v966
  %3705 = vmatprep.subr.mxu0 0.0
  %3706 = vmatpush1.msra.mxu0 %v965
  %3707 = vmatprep.subr.mxu0 0.0
  %3708 = vmatpush1.msra.mxu0 %v964
  %3709 = vmatprep.subr.mxu0 0.0
  %3710 = vmatpush1.msra.mxu0 %v963
  %3711 = vmatprep.subr.mxu0 0.0
  %3712 = vmatpush1.msra.mxu0 %v962
  %3713 = vmatprep.subr.mxu0 0.0
  %3714 = vmatpush1.msra.mxu0 %v961
  %3715 = vmatprep.subr.mxu0 0.0
  %3716 = vmatpush1.msra.mxu0 %v960
  %3717 = vmatprep.subr.mxu0 0.0
  %3718 = vmatpush1.msra.mxu0 %v959
  %3719 = vmatprep.subr.mxu0 0.0
  %3720 = vmatpush2.msra.mxu0 0.0
  %3721 = vmatprep.subr.mxu0 0.0
  %3722 = vmatpush2.msra.mxu0 0.0
  %3723 = vmatprep.subr.mxu0 0.0
  %3724 = vmatpush2.msra.mxu0 0.0
  %3725 = vmatprep.subr.mxu0 0.0
  %3726 = vmatpush2.msra.mxu0 0.0
  %3727 = vmatprep.subr.mxu0 0.0
  %3728 = vmatpush2.msra.mxu0 0.0
  %3729 = vmatprep.subr.mxu0 0.0
  %3730 = vmatpush2.msra.mxu0 0.0
  %3731 = vmatprep.subr.mxu0 0.0
  %3732 = vmatpush2.msra.mxu0 0.0
  %3733 = vmatprep.subr.mxu0 0.0
  %3734 = vmatpush2.msra.mxu0 0.0
  %3735 = vmatprep.subr.mxu0 0.0
  %3736 = vmatpush2.msra.mxu0 0.0
  %3737 = vmatprep.subr.mxu0 0.0
  %3738 = vmatpush2.msra.mxu0 0.0
  %3739 = vmatprep.subr.mxu0 0.0
  %3740 = vmatpush2.msra.mxu0 0.0
  %3741 = vmatprep.subr.mxu0 0.0
  %3742 = vmatpush2.msra.mxu0 0.0
  %3743 = vmatprep.subr.mxu0 0.0
  %3744 = vmatpush2.msra.mxu0 0.0
  %3745 = vmatprep.subr.mxu0 0.0
  %3746 = vmatpush2.msra.mxu0 0.0
  %3747 = vmatprep.subr.mxu0 0.0
  %3748 = vmatpush2.msra.mxu0 0.0
  %3749 = vmatprep.subr.mxu0 0.0
  %3750 = vmatpush2.msra.mxu0 0.0
  %3751 = vmatprep.mubr.f32.mxu0 0.0
  %3752 = vmatmul.mubr.f32.gmra.mxu0 %v3664
  %v3753 = vpop.f32.mrf.mxu0
  %v3754 = vadd.f32 0.0, %v3753
  %v3755 = vpop.f32.mrf.mxu0
  %3756 = vmatprep.mubr.f32.mxu0 0.0
  %3757 = vmatmul.mubr.f32.gmra.mxu0 %v3667
  %v3758 = vpop.f32.mrf.mxu0
  %v3759 = vadd.f32 0.0, %v3758
  %v3760 = vpop.f32.mrf.mxu0
  %3761 = vmatprep.mubr.f32.mxu0 0.0
  %3762 = vmatmul.mubr.f32.gmra.mxu0 %v3670
  %v3763 = vpop.f32.mrf.mxu0
  %v3764 = vadd.f32 0.0, %v3763
  %v3765 = vpop.f32.mrf.mxu0
  %3766 = vmatprep.mubr.f32.mxu0 0.0
  %3767 = vmatmul.mubr.f32.gmra.mxu0 %v3673
  %v3768 = vpop.f32.mrf.mxu0
  %v3769 = vadd.f32 0.0, %v3768
  %v3770 = vpop.f32.mrf.mxu0
  %3771 = vmatprep.mubr.f32.mxu0 0.0
  %3772 = vmatmul.mubr.f32.gmra.mxu0 %v3676
  %v3773 = vpop.f32.mrf.mxu0
  %v3774 = vadd.f32 0.0, %v3773
  %v3775 = vpop.f32.mrf.mxu0
  %3776 = vmatprep.mubr.f32.mxu0 0.0
  %3777 = vmatmul.mubr.f32.gmra.mxu0 %v3679
  %v3778 = vpop.f32.mrf.mxu0
  %v3779 = vadd.f32 0.0, %v3778
  %v3780 = vpop.f32.mrf.mxu0
  %3781 = vmatprep.mubr.f32.mxu0 0.0
  %3782 = vmatmul.mubr.f32.gmra.mxu0 %v3682
  %v3783 = vpop.f32.mrf.mxu0
  %v3784 = vadd.f32 0.0, %v3783
  %v3785 = vpop.f32.mrf.mxu0
  %3786 = vmatprep.mubr.f32.mxu0 0.0
  %3787 = vmatmul.mubr.f32.gmra.mxu0 %v3685
  %v3788 = vpop.f32.mrf.mxu0
  %v3789 = vadd.f32 0.0, %v3788
  %v3790 = vpop.f32.mrf.mxu0
  %3791 = vdwg.mxu0
  %v3793 = vsel %vm3662, %v3304, 0
  %v3796 = vsel %vm3662, %v3309, 0
  %v3799 = vsel %vm3662, %v3314, 0
  %v3802 = vsel %vm3662, %v3319, 0
  %v3805 = vsel %vm3662, %v3324, 0
  %v3808 = vsel %vm3662, %v3329, 0
  %v3811 = vsel %vm3662, %v3334, 0
  %v3814 = vsel %vm3662, %v3339, 0
  %3816 = vmatprep.subr.mxu0 0.0
  %3817 = vmatpush1.msra.mxu0 0.0
  %3818 = vmatprep.subr.mxu0 0.0
  %3819 = vmatpush1.msra.mxu0 0.0
  %3820 = vmatprep.subr.mxu0 0.0
  %3821 = vmatpush1.msra.mxu0 0.0
  %3822 = vmatprep.subr.mxu0 0.0
  %3823 = vmatpush1.msra.mxu0 0.0
  %3824 = vmatprep.subr.mxu0 0.0
  %3825 = vmatpush1.msra.mxu0 0.0
  %3826 = vmatprep.subr.mxu0 0.0
  %3827 = vmatpush1.msra.mxu0 0.0
  %3828 = vmatprep.subr.mxu0 0.0
  %3829 = vmatpush1.msra.mxu0 0.0
  %3830 = vmatprep.subr.mxu0 0.0
  %3831 = vmatpush1.msra.mxu0 0.0
  %3832 = vmatprep.subr.mxu0 0.0
  %3833 = vmatpush1.msra.mxu0 %v958
  %3834 = vmatprep.subr.mxu0 0.0
  %3835 = vmatpush1.msra.mxu0 %v957
  %3836 = vmatprep.subr.mxu0 0.0
  %3837 = vmatpush1.msra.mxu0 %v956
  %3838 = vmatprep.subr.mxu0 0.0
  %3839 = vmatpush1.msra.mxu0 %v955
  %3840 = vmatprep.subr.mxu0 0.0
  %3841 = vmatpush1.msra.mxu0 %v954
  %3842 = vmatprep.subr.mxu0 0.0
  %3843 = vmatpush1.msra.mxu0 %v953
  %3844 = vmatprep.subr.mxu0 0.0
  %3845 = vmatpush1.msra.mxu0 %v952
  %3846 = vmatprep.subr.mxu0 0.0
  %3847 = vmatpush1.msra.mxu0 %v951
  %3848 = vmatprep.subr.mxu0 0.0
  %3849 = vmatpush2.msra.mxu0 0.0
  %3850 = vmatprep.subr.mxu0 0.0
  %3851 = vmatpush2.msra.mxu0 0.0
  %3852 = vmatprep.subr.mxu0 0.0
  %3853 = vmatpush2.msra.mxu0 0.0
  %3854 = vmatprep.subr.mxu0 0.0
  %3855 = vmatpush2.msra.mxu0 0.0
  %3856 = vmatprep.subr.mxu0 0.0
  %3857 = vmatpush2.msra.mxu0 0.0
  %3858 = vmatprep.subr.mxu0 0.0
  %3859 = vmatpush2.msra.mxu0 0.0
  %3860 = vmatprep.subr.mxu0 0.0
  %3861 = vmatpush2.msra.mxu0 0.0
  %3862 = vmatprep.subr.mxu0 0.0
  %3863 = vmatpush2.msra.mxu0 0.0
  %3864 = vmatprep.subr.mxu0 0.0
  %3865 = vmatpush2.msra.mxu0 0.0
  %3866 = vmatprep.subr.mxu0 0.0
  %3867 = vmatpush2.msra.mxu0 0.0
  %3868 = vmatprep.subr.mxu0 0.0
  %3869 = vmatpush2.msra.mxu0 0.0
  %3870 = vmatprep.subr.mxu0 0.0
  %3871 = vmatpush2.msra.mxu0 0.0
  %3872 = vmatprep.subr.mxu0 0.0
  %3873 = vmatpush2.msra.mxu0 0.0
  %3874 = vmatprep.subr.mxu0 0.0
  %3875 = vmatpush2.msra.mxu0 0.0
  %3876 = vmatprep.subr.mxu0 0.0
  %3877 = vmatpush2.msra.mxu0 0.0
  %3878 = vmatprep.subr.mxu0 0.0
  %3879 = vmatpush2.msra.mxu0 0.0
  %3880 = vmatprep.mubr.f32.mxu0 0.0
  %3881 = vmatmul.mubr.f32.gmra.mxu0 %v3793
  %v3882 = vpop.f32.mrf.mxu0
  %v3883 = vadd.f32 %v3754, %v3882
  %v3884 = vpop.f32.mrf.mxu0
  %3885 = vmatprep.mubr.f32.mxu0 0.0
  %3886 = vmatmul.mubr.f32.gmra.mxu0 %v3796
  %v3887 = vpop.f32.mrf.mxu0
  %v3888 = vadd.f32 %v3759, %v3887
  %v3889 = vpop.f32.mrf.mxu0
  %3890 = vmatprep.mubr.f32.mxu0 0.0
  %3891 = vmatmul.mubr.f32.gmra.mxu0 %v3799
  %v3892 = vpop.f32.mrf.mxu0
  %v3893 = vadd.f32 %v3764, %v3892
  %v3894 = vpop.f32.mrf.mxu0
  %3895 = vmatprep.mubr.f32.mxu0 0.0
  %3896 = vmatmul.mubr.f32.gmra.mxu0 %v3802
  %v3897 = vpop.f32.mrf.mxu0
  %v3898 = vadd.f32 %v3769, %v3897
  %v3899 = vpop.f32.mrf.mxu0
  %3900 = vmatprep.mubr.f32.mxu0 0.0
  %3901 = vmatmul.mubr.f32.gmra.mxu0 %v3805
  %v3902 = vpop.f32.mrf.mxu0
  %v3903 = vadd.f32 %v3774, %v3902
  %v3904 = vpop.f32.mrf.mxu0
  %3905 = vmatprep.mubr.f32.mxu0 0.0
  %3906 = vmatmul.mubr.f32.gmra.mxu0 %v3808
  %v3907 = vpop.f32.mrf.mxu0
  %v3908 = vadd.f32 %v3779, %v3907
  %v3909 = vpop.f32.mrf.mxu0
  %3910 = vmatprep.mubr.f32.mxu0 0.0
  %3911 = vmatmul.mubr.f32.gmra.mxu0 %v3811
  %v3912 = vpop.f32.mrf.mxu0
  %v3913 = vadd.f32 %v3784, %v3912
  %v3914 = vpop.f32.mrf.mxu0
  %3915 = vmatprep.mubr.f32.mxu0 0.0
  %3916 = vmatmul.mubr.f32.gmra.mxu0 %v3814
  %v3917 = vpop.f32.mrf.mxu0
  %v3918 = vadd.f32 %v3789, %v3917
  %v3919 = vpop.f32.mrf.mxu0
  %3920 = vdwg.mxu0
  %v3922 = vsel %vm3662, %v3384, 0
  %v3925 = vsel %vm3662, %v3389, 0
  %v3928 = vsel %vm3662, %v3394, 0
  %v3931 = vsel %vm3662, %v3399, 0
  %v3934 = vsel %vm3662, %v3404, 0
  %v3937 = vsel %vm3662, %v3409, 0
  %v3940 = vsel %vm3662, %v3414, 0
  %v3943 = vsel %vm3662, %v3419, 0
  %3945 = vmatprep.subr.mxu0 0.0
  %3946 = vmatpush1.msra.mxu0 0.0
  %3947 = vmatprep.subr.mxu0 0.0
  %3948 = vmatpush1.msra.mxu0 0.0
  %3949 = vmatprep.subr.mxu0 0.0
  %3950 = vmatpush1.msra.mxu0 0.0
  %3951 = vmatprep.subr.mxu0 0.0
  %3952 = vmatpush1.msra.mxu0 0.0
  %3953 = vmatprep.subr.mxu0 0.0
  %3954 = vmatpush1.msra.mxu0 0.0
  %3955 = vmatprep.subr.mxu0 0.0
  %3956 = vmatpush1.msra.mxu0 0.0
  %3957 = vmatprep.subr.mxu0 0.0
  %3958 = vmatpush1.msra.mxu0 0.0
  %3959 = vmatprep.subr.mxu0 0.0
  %3960 = vmatpush1.msra.mxu0 0.0
  %3961 = vmatprep.subr.mxu0 0.0
  %3962 = vmatpush1.msra.mxu0 %v974
  %3963 = vmatprep.subr.mxu0 0.0
  %3964 = vmatpush1.msra.mxu0 %v973
  %3965 = vmatprep.subr.mxu0 0.0
  %3966 = vmatpush1.msra.mxu0 %v972
  %3967 = vmatprep.subr.mxu0 0.0
  %3968 = vmatpush1.msra.mxu0 %v971
  %3969 = vmatprep.subr.mxu0 0.0
  %3970 = vmatpush1.msra.mxu0 %v970
  %3971 = vmatprep.subr.mxu0 0.0
  %3972 = vmatpush1.msra.mxu0 %v969
  %3973 = vmatprep.subr.mxu0 0.0
  %3974 = vmatpush1.msra.mxu0 %v968
  %3975 = vmatprep.subr.mxu0 0.0
  %3976 = vmatpush1.msra.mxu0 %v967
  %3977 = vmatprep.subr.mxu0 0.0
  %3978 = vmatpush2.msra.mxu0 0.0
  %3979 = vmatprep.subr.mxu0 0.0
  %3980 = vmatpush2.msra.mxu0 0.0
  %3981 = vmatprep.subr.mxu0 0.0
  %3982 = vmatpush2.msra.mxu0 0.0
  %3983 = vmatprep.subr.mxu0 0.0
  %3984 = vmatpush2.msra.mxu0 0.0
  %3985 = vmatprep.subr.mxu0 0.0
  %3986 = vmatpush2.msra.mxu0 0.0
  %3987 = vmatprep.subr.mxu0 0.0
  %3988 = vmatpush2.msra.mxu0 0.0
  %3989 = vmatprep.subr.mxu0 0.0
  %3990 = vmatpush2.msra.mxu0 0.0
  %3991 = vmatprep.subr.mxu0 0.0
  %3992 = vmatpush2.msra.mxu0 0.0
  %3993 = vmatprep.subr.mxu0 0.0
  %3994 = vmatpush2.msra.mxu0 0.0
  %3995 = vmatprep.subr.mxu0 0.0
  %3996 = vmatpush2.msra.mxu0 0.0
  %3997 = vmatprep.subr.mxu0 0.0
  %3998 = vmatpush2.msra.mxu0 0.0
  %3999 = vmatprep.subr.mxu0 0.0
  %4000 = vmatpush2.msra.mxu0 0.0
  %4001 = vmatprep.subr.mxu0 0.0
  %4002 = vmatpush2.msra.mxu0 0.0
  %4003 = vmatprep.subr.mxu0 0.0
  %4004 = vmatpush2.msra.mxu0 0.0
  %4005 = vmatprep.subr.mxu0 0.0
  %4006 = vmatpush2.msra.mxu0 0.0
  %4007 = vmatprep.subr.mxu0 0.0
  %4008 = vmatpush2.msra.mxu0 0.0
  %4009 = vmatprep.mubr.f32.mxu0 0.0
  %4010 = vmatmul.mubr.f32.gmra.mxu0 %v3922
  %v4011 = vpop.f32.mrf.mxu0
  %v4012 = vadd.f32 0.0, %v4011
  %v4013 = vpop.f32.mrf.mxu0
  %4014 = vmatprep.mubr.f32.mxu0 0.0
  %4015 = vmatmul.mubr.f32.gmra.mxu0 %v3925
  %v4016 = vpop.f32.mrf.mxu0
  %v4017 = vadd.f32 0.0, %v4016
  %v4018 = vpop.f32.mrf.mxu0
  %4019 = vmatprep.mubr.f32.mxu0 0.0
  %4020 = vmatmul.mubr.f32.gmra.mxu0 %v3928
  %v4021 = vpop.f32.mrf.mxu0
  %v4022 = vadd.f32 0.0, %v4021
  %v4023 = vpop.f32.mrf.mxu0
  %4024 = vmatprep.mubr.f32.mxu0 0.0
  %4025 = vmatmul.mubr.f32.gmra.mxu0 %v3931
  %v4026 = vpop.f32.mrf.mxu0
  %v4027 = vadd.f32 0.0, %v4026
  %v4028 = vpop.f32.mrf.mxu0
  %4029 = vmatprep.mubr.f32.mxu0 0.0
  %4030 = vmatmul.mubr.f32.gmra.mxu0 %v3934
  %v4031 = vpop.f32.mrf.mxu0
  %v4032 = vadd.f32 0.0, %v4031
  %v4033 = vpop.f32.mrf.mxu0
  %4034 = vmatprep.mubr.f32.mxu0 0.0
  %4035 = vmatmul.mubr.f32.gmra.mxu0 %v3937
  %v4036 = vpop.f32.mrf.mxu0
  %v4037 = vadd.f32 0.0, %v4036
  %v4038 = vpop.f32.mrf.mxu0
  %4039 = vmatprep.mubr.f32.mxu0 0.0
  %4040 = vmatmul.mubr.f32.gmra.mxu0 %v3940
  %v4041 = vpop.f32.mrf.mxu0
  %v4042 = vadd.f32 0.0, %v4041
  %v4043 = vpop.f32.mrf.mxu0
  %4044 = vmatprep.mubr.f32.mxu0 0.0
  %4045 = vmatmul.mubr.f32.gmra.mxu0 %v3943
  %v4046 = vpop.f32.mrf.mxu0
  %v4047 = vadd.f32 0.0, %v4046
  %v4048 = vpop.f32.mrf.mxu0
  %4049 = vdwg.mxu0
  %v4050 = vadd.f32 %v3883, %v4012
  %v4051 = vadd.f32 %v3888, %v4017
  %v4052 = vadd.f32 %v3893, %v4022
  %v4053 = vadd.f32 %v3898, %v4027
  %v4054 = vadd.f32 %v3903, %v4032
  %v4055 = vadd.f32 %v3908, %v4037
  %v4056 = vadd.f32 %v3913, %v4042
  %v4057 = vadd.f32 %v3918, %v4047
  %v4059 = vsel %vm3662, %v3424, 0
  %v4062 = vsel %vm3662, %v3429, 0
  %v4065 = vsel %vm3662, %v3434, 0
  %v4068 = vsel %vm3662, %v3439, 0
  %v4071 = vsel %vm3662, %v3444, 0
  %v4074 = vsel %vm3662, %v3449, 0
  %v4077 = vsel %vm3662, %v3454, 0
  %v4080 = vsel %vm3662, %v3459, 0
  %4082 = vmatprep.subr.mxu0 0.0
  %4083 = vmatpush1.msra.mxu0 0.0
  %4084 = vmatprep.subr.mxu0 0.0
  %4085 = vmatpush1.msra.mxu0 0.0
  %4086 = vmatprep.subr.mxu0 0.0
  %4087 = vmatpush1.msra.mxu0 0.0
  %4088 = vmatprep.subr.mxu0 0.0
  %4089 = vmatpush1.msra.mxu0 0.0
  %4090 = vmatprep.subr.mxu0 0.0
  %4091 = vmatpush1.msra.mxu0 0.0
  %4092 = vmatprep.subr.mxu0 0.0
  %4093 = vmatpush1.msra.mxu0 0.0
  %4094 = vmatprep.subr.mxu0 0.0
  %4095 = vmatpush1.msra.mxu0 0.0
  %4096 = vmatprep.subr.mxu0 0.0
  %4097 = vmatpush1.msra.mxu0 0.0
  %4098 = vmatprep.subr.mxu0 0.0
  %4099 = vmatpush1.msra.mxu0 %v982
  %4100 = vmatprep.subr.mxu0 0.0
  %4101 = vmatpush1.msra.mxu0 %v981
  %4102 = vmatprep.subr.mxu0 0.0
  %4103 = vmatpush1.msra.mxu0 %v980
  %4104 = vmatprep.subr.mxu0 0.0
  %4105 = vmatpush1.msra.mxu0 %v979
  %4106 = vmatprep.subr.mxu0 0.0
  %4107 = vmatpush1.msra.mxu0 %v978
  %4108 = vmatprep.subr.mxu0 0.0
  %4109 = vmatpush1.msra.mxu0 %v977
  %4110 = vmatprep.subr.mxu0 0.0
  %4111 = vmatpush1.msra.mxu0 %v976
  %4112 = vmatprep.subr.mxu0 0.0
  %4113 = vmatpush1.msra.mxu0 %v975
  %4114 = vmatprep.subr.mxu0 0.0
  %4115 = vmatpush2.msra.mxu0 0.0
  %4116 = vmatprep.subr.mxu0 0.0
  %4117 = vmatpush2.msra.mxu0 0.0
  %4118 = vmatprep.subr.mxu0 0.0
  %4119 = vmatpush2.msra.mxu0 0.0
  %4120 = vmatprep.subr.mxu0 0.0
  %4121 = vmatpush2.msra.mxu0 0.0
  %4122 = vmatprep.subr.mxu0 0.0
  %4123 = vmatpush2.msra.mxu0 0.0
  %4124 = vmatprep.subr.mxu0 0.0
  %4125 = vmatpush2.msra.mxu0 0.0
  %4126 = vmatprep.subr.mxu0 0.0
  %4127 = vmatpush2.msra.mxu0 0.0
  %4128 = vmatprep.subr.mxu0 0.0
  %4129 = vmatpush2.msra.mxu0 0.0
  %4130 = vmatprep.subr.mxu0 0.0
  %4131 = vmatpush2.msra.mxu0 0.0
  %4132 = vmatprep.subr.mxu0 0.0
  %4133 = vmatpush2.msra.mxu0 0.0
  %4134 = vmatprep.subr.mxu0 0.0
  %4135 = vmatpush2.msra.mxu0 0.0
  %4136 = vmatprep.subr.mxu0 0.0
  %4137 = vmatpush2.msra.mxu0 0.0
  %4138 = vmatprep.subr.mxu0 0.0
  %4139 = vmatpush2.msra.mxu0 0.0
  %4140 = vmatprep.subr.mxu0 0.0
  %4141 = vmatpush2.msra.mxu0 0.0
  %4142 = vmatprep.subr.mxu0 0.0
  %4143 = vmatpush2.msra.mxu0 0.0
  %4144 = vmatprep.subr.mxu0 0.0
  %4145 = vmatpush2.msra.mxu0 0.0
  %4146 = vmatprep.mubr.f32.mxu0 0.0
  %4147 = vmatmul.mubr.f32.gmra.mxu0 %v4059
  %v4148 = vpop.f32.mrf.mxu0
  %v4149 = vadd.f32 0.0, %v4148
  %v4150 = vpop.f32.mrf.mxu0
  %4151 = vmatprep.mubr.f32.mxu0 0.0
  %4152 = vmatmul.mubr.f32.gmra.mxu0 %v4062
  %v4153 = vpop.f32.mrf.mxu0
  %v4154 = vadd.f32 0.0, %v4153
  %v4155 = vpop.f32.mrf.mxu0
  %4156 = vmatprep.mubr.f32.mxu0 0.0
  %4157 = vmatmul.mubr.f32.gmra.mxu0 %v4065
  %v4158 = vpop.f32.mrf.mxu0
  %v4159 = vadd.f32 0.0, %v4158
  %v4160 = vpop.f32.mrf.mxu0
  %4161 = vmatprep.mubr.f32.mxu0 0.0
  %4162 = vmatmul.mubr.f32.gmra.mxu0 %v4068
  %v4163 = vpop.f32.mrf.mxu0
  %v4164 = vadd.f32 0.0, %v4163
  %v4165 = vpop.f32.mrf.mxu0
  %4166 = vmatprep.mubr.f32.mxu0 0.0
  %4167 = vmatmul.mubr.f32.gmra.mxu0 %v4071
  %v4168 = vpop.f32.mrf.mxu0
  %v4169 = vadd.f32 0.0, %v4168
  %v4170 = vpop.f32.mrf.mxu0
  %4171 = vmatprep.mubr.f32.mxu0 0.0
  %4172 = vmatmul.mubr.f32.gmra.mxu0 %v4074
  %v4173 = vpop.f32.mrf.mxu0
  %v4174 = vadd.f32 0.0, %v4173
  %v4175 = vpop.f32.mrf.mxu0
  %4176 = vmatprep.mubr.f32.mxu0 0.0
  %4177 = vmatmul.mubr.f32.gmra.mxu0 %v4077
  %v4178 = vpop.f32.mrf.mxu0
  %v4179 = vadd.f32 0.0, %v4178
  %v4180 = vpop.f32.mrf.mxu0
  %4181 = vmatprep.mubr.f32.mxu0 0.0
  %4182 = vmatmul.mubr.f32.gmra.mxu0 %v4080
  %v4183 = vpop.f32.mrf.mxu0
  %v4184 = vadd.f32 0.0, %v4183
  %v4185 = vpop.f32.mrf.mxu0
  %4186 = vdwg.mxu0
  %v4187 = vadd.f32 %v4050, %v4149
  %v4188 = vadd.f32 %v4051, %v4154
  %v4189 = vadd.f32 %v4052, %v4159
  %v4190 = vadd.f32 %v4053, %v4164
  %v4191 = vadd.f32 %v4054, %v4169
  %v4192 = vadd.f32 %v4055, %v4174
  %v4193 = vadd.f32 %v4056, %v4179
  %v4194 = vadd.f32 %v4057, %v4184
  %v4196 = vsel %vm3662, %v3464, 0
  %v4199 = vsel %vm3662, %v3469, 0
  %v4202 = vsel %vm3662, %v3474, 0
  %v4205 = vsel %vm3662, %v3479, 0
  %v4208 = vsel %vm3662, %v3484, 0
  %v4211 = vsel %vm3662, %v3489, 0
  %v4214 = vsel %vm3662, %v3494, 0
  %v4217 = vsel %vm3662, %v3499, 0
  %4219 = vmatprep.subr.mxu0 0.0
  %4220 = vmatpush1.msra.mxu0 0.0
  %4221 = vmatprep.subr.mxu0 0.0
  %4222 = vmatpush1.msra.mxu0 0.0
  %4223 = vmatprep.subr.mxu0 0.0
  %4224 = vmatpush1.msra.mxu0 0.0
  %4225 = vmatprep.subr.mxu0 0.0
  %4226 = vmatpush1.msra.mxu0 0.0
  %4227 = vmatprep.subr.mxu0 0.0
  %4228 = vmatpush1.msra.mxu0 0.0
  %4229 = vmatprep.subr.mxu0 0.0
  %4230 = vmatpush1.msra.mxu0 0.0
  %4231 = vmatprep.subr.mxu0 0.0
  %4232 = vmatpush1.msra.mxu0 0.0
  %4233 = vmatprep.subr.mxu0 0.0
  %4234 = vmatpush1.msra.mxu0 0.0
  %4235 = vmatprep.subr.mxu0 0.0
  %4236 = vmatpush1.msra.mxu0 %v990
  %4237 = vmatprep.subr.mxu0 0.0
  %4238 = vmatpush1.msra.mxu0 %v989
  %4239 = vmatprep.subr.mxu0 0.0
  %4240 = vmatpush1.msra.mxu0 %v988
  %4241 = vmatprep.subr.mxu0 0.0
  %4242 = vmatpush1.msra.mxu0 %v987
  %4243 = vmatprep.subr.mxu0 0.0
  %4244 = vmatpush1.msra.mxu0 %v986
  %4245 = vmatprep.subr.mxu0 0.0
  %4246 = vmatpush1.msra.mxu0 %v985
  %4247 = vmatprep.subr.mxu0 0.0
  %4248 = vmatpush1.msra.mxu0 %v984
  %4249 = vmatprep.subr.mxu0 0.0
  %4250 = vmatpush1.msra.mxu0 %v983
  %4251 = vmatprep.subr.mxu0 0.0
  %4252 = vmatpush2.msra.mxu0 0.0
  %4253 = vmatprep.subr.mxu0 0.0
  %4254 = vmatpush2.msra.mxu0 0.0
  %4255 = vmatprep.subr.mxu0 0.0
  %4256 = vmatpush2.msra.mxu0 0.0
  %4257 = vmatprep.subr.mxu0 0.0
  %4258 = vmatpush2.msra.mxu0 0.0
  %4259 = vmatprep.subr.mxu0 0.0
  %4260 = vmatpush2.msra.mxu0 0.0
  %4261 = vmatprep.subr.mxu0 0.0
  %4262 = vmatpush2.msra.mxu0 0.0
  %4263 = vmatprep.subr.mxu0 0.0
  %4264 = vmatpush2.msra.mxu0 0.0
  %4265 = vmatprep.subr.mxu0 0.0
  %4266 = vmatpush2.msra.mxu0 0.0
  %4267 = vmatprep.subr.mxu0 0.0
  %4268 = vmatpush2.msra.mxu0 0.0
  %4269 = vmatprep.subr.mxu0 0.0
  %4270 = vmatpush2.msra.mxu0 0.0
  %4271 = vmatprep.subr.mxu0 0.0
  %4272 = vmatpush2.msra.mxu0 0.0
  %4273 = vmatprep.subr.mxu0 0.0
  %4274 = vmatpush2.msra.mxu0 0.0
  %4275 = vmatprep.subr.mxu0 0.0
  %4276 = vmatpush2.msra.mxu0 0.0
  %4277 = vmatprep.subr.mxu0 0.0
  %4278 = vmatpush2.msra.mxu0 0.0
  %4279 = vmatprep.subr.mxu0 0.0
  %4280 = vmatpush2.msra.mxu0 0.0
  %4281 = vmatprep.subr.mxu0 0.0
  %4282 = vmatpush2.msra.mxu0 0.0
  %4283 = vmatprep.mubr.f32.mxu0 0.0
  %4284 = vmatmul.mubr.f32.gmra.mxu0 %v4196
  %v4285 = vpop.f32.mrf.mxu0
  %v4286 = vadd.f32 0.0, %v4285
  %v4287 = vpop.f32.mrf.mxu0
  %4288 = vmatprep.mubr.f32.mxu0 0.0
  %4289 = vmatmul.mubr.f32.gmra.mxu0 %v4199
  %v4290 = vpop.f32.mrf.mxu0
  %v4291 = vadd.f32 0.0, %v4290
  %v4292 = vpop.f32.mrf.mxu0
  %4293 = vmatprep.mubr.f32.mxu0 0.0
  %4294 = vmatmul.mubr.f32.gmra.mxu0 %v4202
  %v4295 = vpop.f32.mrf.mxu0
  %v4296 = vadd.f32 0.0, %v4295
  %v4297 = vpop.f32.mrf.mxu0
  %4298 = vmatprep.mubr.f32.mxu0 0.0
  %4299 = vmatmul.mubr.f32.gmra.mxu0 %v4205
  %v4300 = vpop.f32.mrf.mxu0
  %v4301 = vadd.f32 0.0, %v4300
  %v4302 = vpop.f32.mrf.mxu0
  %4303 = vmatprep.mubr.f32.mxu0 0.0
  %4304 = vmatmul.mubr.f32.gmra.mxu0 %v4208
  %v4305 = vpop.f32.mrf.mxu0
  %v4306 = vadd.f32 0.0, %v4305
  %v4307 = vpop.f32.mrf.mxu0
  %4308 = vmatprep.mubr.f32.mxu0 0.0
  %4309 = vmatmul.mubr.f32.gmra.mxu0 %v4211
  %v4310 = vpop.f32.mrf.mxu0
  %v4311 = vadd.f32 0.0, %v4310
  %v4312 = vpop.f32.mrf.mxu0
  %4313 = vmatprep.mubr.f32.mxu0 0.0
  %4314 = vmatmul.mubr.f32.gmra.mxu0 %v4214
  %v4315 = vpop.f32.mrf.mxu0
  %v4316 = vadd.f32 0.0, %v4315
  %v4317 = vpop.f32.mrf.mxu0
  %4318 = vmatprep.mubr.f32.mxu0 0.0
  %4319 = vmatmul.mubr.f32.gmra.mxu0 %v4217
  %v4320 = vpop.f32.mrf.mxu0
  %v4321 = vadd.f32 0.0, %v4320
  %v4322 = vpop.f32.mrf.mxu0
  %4323 = vdwg.mxu0
  %v4324 = vadd.f32 %v4187, %v4286
  %v4325 = vadd.f32 %v4188, %v4291
  %v4326 = vadd.f32 %v4189, %v4296
  %v4327 = vadd.f32 %v4190, %v4301
  %v4328 = vadd.f32 %v4191, %v4306
  %v4329 = vadd.f32 %v4192, %v4311
  %v4330 = vadd.f32 %v4193, %v4316
  %v4331 = vadd.f32 %v4194, %v4321
  %v4333 = vsel %vm3662, %v3504, 0
  %v4336 = vsel %vm3662, %v3509, 0
  %v4339 = vsel %vm3662, %v3514, 0
  %v4342 = vsel %vm3662, %v3519, 0
  %v4345 = vsel %vm3662, %v3524, 0
  %v4348 = vsel %vm3662, %v3529, 0
  %v4351 = vsel %vm3662, %v3534, 0
  %v4354 = vsel %vm3662, %v3539, 0
  %4356 = vmatprep.subr.mxu0 0.0
  %4357 = vmatpush1.msra.mxu0 0.0
  %4358 = vmatprep.subr.mxu0 0.0
  %4359 = vmatpush1.msra.mxu0 0.0
  %4360 = vmatprep.subr.mxu0 0.0
  %4361 = vmatpush1.msra.mxu0 0.0
  %4362 = vmatprep.subr.mxu0 0.0
  %4363 = vmatpush1.msra.mxu0 0.0
  %4364 = vmatprep.subr.mxu0 0.0
  %4365 = vmatpush1.msra.mxu0 0.0
  %4366 = vmatprep.subr.mxu0 0.0
  %4367 = vmatpush1.msra.mxu0 0.0
  %4368 = vmatprep.subr.mxu0 0.0
  %4369 = vmatpush1.msra.mxu0 0.0
  %4370 = vmatprep.subr.mxu0 0.0
  %4371 = vmatpush1.msra.mxu0 0.0
  %4372 = vmatprep.subr.mxu0 0.0
  %4373 = vmatpush1.msra.mxu0 %v998
  %4374 = vmatprep.subr.mxu0 0.0
  %4375 = vmatpush1.msra.mxu0 %v997
  %4376 = vmatprep.subr.mxu0 0.0
  %4377 = vmatpush1.msra.mxu0 %v996
  %4378 = vmatprep.subr.mxu0 0.0
  %4379 = vmatpush1.msra.mxu0 %v995
  %4380 = vmatprep.subr.mxu0 0.0
  %4381 = vmatpush1.msra.mxu0 %v994
  %4382 = vmatprep.subr.mxu0 0.0
  %4383 = vmatpush1.msra.mxu0 %v993
  %4384 = vmatprep.subr.mxu0 0.0
  %4385 = vmatpush1.msra.mxu0 %v992
  %4386 = vmatprep.subr.mxu0 0.0
  %4387 = vmatpush1.msra.mxu0 %v991
  %4388 = vmatprep.subr.mxu0 0.0
  %4389 = vmatpush2.msra.mxu0 0.0
  %4390 = vmatprep.subr.mxu0 0.0
  %4391 = vmatpush2.msra.mxu0 0.0
  %4392 = vmatprep.subr.mxu0 0.0
  %4393 = vmatpush2.msra.mxu0 0.0
  %4394 = vmatprep.subr.mxu0 0.0
  %4395 = vmatpush2.msra.mxu0 0.0
  %4396 = vmatprep.subr.mxu0 0.0
  %4397 = vmatpush2.msra.mxu0 0.0
  %4398 = vmatprep.subr.mxu0 0.0
  %4399 = vmatpush2.msra.mxu0 0.0
  %4400 = vmatprep.subr.mxu0 0.0
  %4401 = vmatpush2.msra.mxu0 0.0
  %4402 = vmatprep.subr.mxu0 0.0
  %4403 = vmatpush2.msra.mxu0 0.0
  %4404 = vmatprep.subr.mxu0 0.0
  %4405 = vmatpush2.msra.mxu0 0.0
  %4406 = vmatprep.subr.mxu0 0.0
  %4407 = vmatpush2.msra.mxu0 0.0
  %4408 = vmatprep.subr.mxu0 0.0
  %4409 = vmatpush2.msra.mxu0 0.0
  %4410 = vmatprep.subr.mxu0 0.0
  %4411 = vmatpush2.msra.mxu0 0.0
  %4412 = vmatprep.subr.mxu0 0.0
  %4413 = vmatpush2.msra.mxu0 0.0
  %4414 = vmatprep.subr.mxu0 0.0
  %4415 = vmatpush2.msra.mxu0 0.0
  %4416 = vmatprep.subr.mxu0 0.0
  %4417 = vmatpush2.msra.mxu0 0.0
  %4418 = vmatprep.subr.mxu0 0.0
  %4419 = vmatpush2.msra.mxu0 0.0
  %4420 = vmatprep.mubr.f32.mxu0 0.0
  %4421 = vmatmul.mubr.f32.gmra.mxu0 %v4333
  %v4422 = vpop.f32.mrf.mxu0
  %v4423 = vadd.f32 0.0, %v4422
  %v4424 = vpop.f32.mrf.mxu0
  %4425 = vmatprep.mubr.f32.mxu0 0.0
  %4426 = vmatmul.mubr.f32.gmra.mxu0 %v4336
  %v4427 = vpop.f32.mrf.mxu0
  %v4428 = vadd.f32 0.0, %v4427
  %v4429 = vpop.f32.mrf.mxu0
  %4430 = vmatprep.mubr.f32.mxu0 0.0
  %4431 = vmatmul.mubr.f32.gmra.mxu0 %v4339
  %v4432 = vpop.f32.mrf.mxu0
  %v4433 = vadd.f32 0.0, %v4432
  %v4434 = vpop.f32.mrf.mxu0
  %4435 = vmatprep.mubr.f32.mxu0 0.0
  %4436 = vmatmul.mubr.f32.gmra.mxu0 %v4342
  %v4437 = vpop.f32.mrf.mxu0
  %v4438 = vadd.f32 0.0, %v4437
  %v4439 = vpop.f32.mrf.mxu0
  %4440 = vmatprep.mubr.f32.mxu0 0.0
  %4441 = vmatmul.mubr.f32.gmra.mxu0 %v4345
  %v4442 = vpop.f32.mrf.mxu0
  %v4443 = vadd.f32 0.0, %v4442
  %v4444 = vpop.f32.mrf.mxu0
  %4445 = vmatprep.mubr.f32.mxu0 0.0
  %4446 = vmatmul.mubr.f32.gmra.mxu0 %v4348
  %v4447 = vpop.f32.mrf.mxu0
  %v4448 = vadd.f32 0.0, %v4447
  %v4449 = vpop.f32.mrf.mxu0
  %4450 = vmatprep.mubr.f32.mxu0 0.0
  %4451 = vmatmul.mubr.f32.gmra.mxu0 %v4351
  %v4452 = vpop.f32.mrf.mxu0
  %v4453 = vadd.f32 0.0, %v4452
  %v4454 = vpop.f32.mrf.mxu0
  %4455 = vmatprep.mubr.f32.mxu0 0.0
  %4456 = vmatmul.mubr.f32.gmra.mxu0 %v4354
  %v4457 = vpop.f32.mrf.mxu0
  %v4458 = vadd.f32 0.0, %v4457
  %v4459 = vpop.f32.mrf.mxu0
  %4460 = vdwg.mxu0
  %v4461 = vadd.f32 %v4324, %v4423
  %v4462 = vadd.f32 %v4325, %v4428
  %v4463 = vadd.f32 %v4326, %v4433
  %v4464 = vadd.f32 %v4327, %v4438
  %v4465 = vadd.f32 %v4328, %v4443
  %v4466 = vadd.f32 %v4329, %v4448
  %v4467 = vadd.f32 %v4330, %v4453
  %v4468 = vadd.f32 %v4331, %v4458
  %v4470 = vsel %vm3662, %v3544, 0
  %v4473 = vsel %vm3662, %v3549, 0
  %v4476 = vsel %vm3662, %v3554, 0
  %v4479 = vsel %vm3662, %v3559, 0
  %v4482 = vsel %vm3662, %v3564, 0
  %v4485 = vsel %vm3662, %v3569, 0
  %v4488 = vsel %vm3662, %v3574, 0
  %v4491 = vsel %vm3662, %v3579, 0
  %4493 = vmatprep.subr.mxu0 0.0
  %4494 = vmatpush1.msra.mxu0 0.0
  %4495 = vmatprep.subr.mxu0 0.0
  %4496 = vmatpush1.msra.mxu0 0.0
  %4497 = vmatprep.subr.mxu0 0.0
  %4498 = vmatpush1.msra.mxu0 0.0
  %4499 = vmatprep.subr.mxu0 0.0
  %4500 = vmatpush1.msra.mxu0 0.0
  %4501 = vmatprep.subr.mxu0 0.0
  %4502 = vmatpush1.msra.mxu0 0.0
  %4503 = vmatprep.subr.mxu0 0.0
  %4504 = vmatpush1.msra.mxu0 0.0
  %4505 = vmatprep.subr.mxu0 0.0
  %4506 = vmatpush1.msra.mxu0 0.0
  %4507 = vmatprep.subr.mxu0 0.0
  %4508 = vmatpush1.msra.mxu0 0.0
  %4509 = vmatprep.subr.mxu0 0.0
  %4510 = vmatpush1.msra.mxu0 %v1006
  %4511 = vmatprep.subr.mxu0 0.0
  %4512 = vmatpush1.msra.mxu0 %v1005
  %4513 = vmatprep.subr.mxu0 0.0
  %4514 = vmatpush1.msra.mxu0 %v1004
  %4515 = vmatprep.subr.mxu0 0.0
  %4516 = vmatpush1.msra.mxu0 %v1003
  %4517 = vmatprep.subr.mxu0 0.0
  %4518 = vmatpush1.msra.mxu0 %v1002
  %4519 = vmatprep.subr.mxu0 0.0
  %4520 = vmatpush1.msra.mxu0 %v1001
  %4521 = vmatprep.subr.mxu0 0.0
  %4522 = vmatpush1.msra.mxu0 %v1000
  %4523 = vmatprep.subr.mxu0 0.0
  %4524 = vmatpush1.msra.mxu0 %v999
  %4525 = vmatprep.subr.mxu0 0.0
  %4526 = vmatpush2.msra.mxu0 0.0
  %4527 = vmatprep.subr.mxu0 0.0
  %4528 = vmatpush2.msra.mxu0 0.0
  %4529 = vmatprep.subr.mxu0 0.0
  %4530 = vmatpush2.msra.mxu0 0.0
  %4531 = vmatprep.subr.mxu0 0.0
  %4532 = vmatpush2.msra.mxu0 0.0
  %4533 = vmatprep.subr.mxu0 0.0
  %4534 = vmatpush2.msra.mxu0 0.0
  %4535 = vmatprep.subr.mxu0 0.0
  %4536 = vmatpush2.msra.mxu0 0.0
  %4537 = vmatprep.subr.mxu0 0.0
  %4538 = vmatpush2.msra.mxu0 0.0
  %4539 = vmatprep.subr.mxu0 0.0
  %4540 = vmatpush2.msra.mxu0 0.0
  %4541 = vmatprep.subr.mxu0 0.0
  %4542 = vmatpush2.msra.mxu0 0.0
  %4543 = vmatprep.subr.mxu0 0.0
  %4544 = vmatpush2.msra.mxu0 0.0
  %4545 = vmatprep.subr.mxu0 0.0
  %4546 = vmatpush2.msra.mxu0 0.0
  %4547 = vmatprep.subr.mxu0 0.0
  %4548 = vmatpush2.msra.mxu0 0.0
  %4549 = vmatprep.subr.mxu0 0.0
  %4550 = vmatpush2.msra.mxu0 0.0
  %4551 = vmatprep.subr.mxu0 0.0
  %4552 = vmatpush2.msra.mxu0 0.0
  %4553 = vmatprep.subr.mxu0 0.0
  %4554 = vmatpush2.msra.mxu0 0.0
  %4555 = vmatprep.subr.mxu0 0.0
  %4556 = vmatpush2.msra.mxu0 0.0
  %4557 = vmatprep.mubr.f32.mxu0 0.0
  %4558 = vmatmul.mubr.f32.gmra.mxu0 %v4470
  %v4559 = vpop.f32.mrf.mxu0
  %v4560 = vadd.f32 0.0, %v4559
  %v4561 = vpop.f32.mrf.mxu0
  %4562 = vmatprep.mubr.f32.mxu0 0.0
  %4563 = vmatmul.mubr.f32.gmra.mxu0 %v4473
  %v4564 = vpop.f32.mrf.mxu0
  %v4565 = vadd.f32 0.0, %v4564
  %v4566 = vpop.f32.mrf.mxu0
  %4567 = vmatprep.mubr.f32.mxu0 0.0
  %4568 = vmatmul.mubr.f32.gmra.mxu0 %v4476
  %v4569 = vpop.f32.mrf.mxu0
  %v4570 = vadd.f32 0.0, %v4569
  %v4571 = vpop.f32.mrf.mxu0
  %4572 = vmatprep.mubr.f32.mxu0 0.0
  %4573 = vmatmul.mubr.f32.gmra.mxu0 %v4479
  %v4574 = vpop.f32.mrf.mxu0
  %v4575 = vadd.f32 0.0, %v4574
  %v4576 = vpop.f32.mrf.mxu0
  %4577 = vmatprep.mubr.f32.mxu0 0.0
  %4578 = vmatmul.mubr.f32.gmra.mxu0 %v4482
  %v4579 = vpop.f32.mrf.mxu0
  %v4580 = vadd.f32 0.0, %v4579
  %v4581 = vpop.f32.mrf.mxu0
  %4582 = vmatprep.mubr.f32.mxu0 0.0
  %4583 = vmatmul.mubr.f32.gmra.mxu0 %v4485
  %v4584 = vpop.f32.mrf.mxu0
  %v4585 = vadd.f32 0.0, %v4584
  %v4586 = vpop.f32.mrf.mxu0
  %4587 = vmatprep.mubr.f32.mxu0 0.0
  %4588 = vmatmul.mubr.f32.gmra.mxu0 %v4488
  %v4589 = vpop.f32.mrf.mxu0
  %v4590 = vadd.f32 0.0, %v4589
  %v4591 = vpop.f32.mrf.mxu0
  %4592 = vmatprep.mubr.f32.mxu0 0.0
  %4593 = vmatmul.mubr.f32.gmra.mxu0 %v4491
  %v4594 = vpop.f32.mrf.mxu0
  %v4595 = vadd.f32 0.0, %v4594
  %v4596 = vpop.f32.mrf.mxu0
  %4597 = vdwg.mxu0
  %v4598 = vadd.f32 %v4461, %v4560
  %v4599 = vadd.f32 %v4462, %v4565
  %v4600 = vadd.f32 %v4463, %v4570
  %v4601 = vadd.f32 %v4464, %v4575
  %v4602 = vadd.f32 %v4465, %v4580
  %v4603 = vadd.f32 %v4466, %v4585
  %v4604 = vadd.f32 %v4467, %v4590
  %v4605 = vadd.f32 %v4468, %v4595
  %v4607 = vsel %vm3662, %v3584, 0
  %v4610 = vsel %vm3662, %v3589, 0
  %v4613 = vsel %vm3662, %v3594, 0
  %v4616 = vsel %vm3662, %v3599, 0
  %v4619 = vsel %vm3662, %v3604, 0
  %v4622 = vsel %vm3662, %v3609, 0
  %v4625 = vsel %vm3662, %v3614, 0
  %v4628 = vsel %vm3662, %v3619, 0
  %4630 = vmatprep.subr.mxu0 0.0
  %4631 = vmatpush1.msra.mxu0 0.0
  %4632 = vmatprep.subr.mxu0 0.0
  %4633 = vmatpush1.msra.mxu0 0.0
  %4634 = vmatprep.subr.mxu0 0.0
  %4635 = vmatpush1.msra.mxu0 0.0
  %4636 = vmatprep.subr.mxu0 0.0
  %4637 = vmatpush1.msra.mxu0 0.0
  %4638 = vmatprep.subr.mxu0 0.0
  %4639 = vmatpush1.msra.mxu0 0.0
  %4640 = vmatprep.subr.mxu0 0.0
  %4641 = vmatpush1.msra.mxu0 0.0
  %4642 = vmatprep.subr.mxu0 0.0
  %4643 = vmatpush1.msra.mxu0 0.0
  %4644 = vmatprep.subr.mxu0 0.0
  %4645 = vmatpush1.msra.mxu0 0.0
  %4646 = vmatprep.subr.mxu0 0.0
  %4647 = vmatpush1.msra.mxu0 %v1014
  %4648 = vmatprep.subr.mxu0 0.0
  %4649 = vmatpush1.msra.mxu0 %v1013
  %4650 = vmatprep.subr.mxu0 0.0
  %4651 = vmatpush1.msra.mxu0 %v1012
  %4652 = vmatprep.subr.mxu0 0.0
  %4653 = vmatpush1.msra.mxu0 %v1011
  %4654 = vmatprep.subr.mxu0 0.0
  %4655 = vmatpush1.msra.mxu0 %v1010
  %4656 = vmatprep.subr.mxu0 0.0
  %4657 = vmatpush1.msra.mxu0 %v1009
  %4658 = vmatprep.subr.mxu0 0.0
  %4659 = vmatpush1.msra.mxu0 %v1008
  %4660 = vmatprep.subr.mxu0 0.0
  %4661 = vmatpush1.msra.mxu0 %v1007
  %4662 = vmatprep.subr.mxu0 0.0
  %4663 = vmatpush2.msra.mxu0 0.0
  %4664 = vmatprep.subr.mxu0 0.0
  %4665 = vmatpush2.msra.mxu0 0.0
  %4666 = vmatprep.subr.mxu0 0.0
  %4667 = vmatpush2.msra.mxu0 0.0
  %4668 = vmatprep.subr.mxu0 0.0
  %4669 = vmatpush2.msra.mxu0 0.0
  %4670 = vmatprep.subr.mxu0 0.0
  %4671 = vmatpush2.msra.mxu0 0.0
  %4672 = vmatprep.subr.mxu0 0.0
  %4673 = vmatpush2.msra.mxu0 0.0
  %4674 = vmatprep.subr.mxu0 0.0
  %4675 = vmatpush2.msra.mxu0 0.0
  %4676 = vmatprep.subr.mxu0 0.0
  %4677 = vmatpush2.msra.mxu0 0.0
  %4678 = vmatprep.subr.mxu0 0.0
  %4679 = vmatpush2.msra.mxu0 0.0
  %4680 = vmatprep.subr.mxu0 0.0
  %4681 = vmatpush2.msra.mxu0 0.0
  %4682 = vmatprep.subr.mxu0 0.0
  %4683 = vmatpush2.msra.mxu0 0.0
  %4684 = vmatprep.subr.mxu0 0.0
  %4685 = vmatpush2.msra.mxu0 0.0
  %4686 = vmatprep.subr.mxu0 0.0
  %4687 = vmatpush2.msra.mxu0 0.0
  %4688 = vmatprep.subr.mxu0 0.0
  %4689 = vmatpush2.msra.mxu0 0.0
  %4690 = vmatprep.subr.mxu0 0.0
  %4691 = vmatpush2.msra.mxu0 0.0
  %4692 = vmatprep.subr.mxu0 0.0
  %4693 = vmatpush2.msra.mxu0 0.0
  %4694 = vmatprep.mubr.f32.mxu0 0.0
  %4695 = vmatmul.mubr.f32.gmra.mxu0 %v4607
  %v4696 = vpop.f32.mrf.mxu0
  %v4697 = vadd.f32 0.0, %v4696
  %v4698 = vpop.f32.mrf.mxu0
  %4699 = vmatprep.mubr.f32.mxu0 0.0
  %4700 = vmatmul.mubr.f32.gmra.mxu0 %v4610
  %v4701 = vpop.f32.mrf.mxu0
  %v4702 = vadd.f32 0.0, %v4701
  %v4703 = vpop.f32.mrf.mxu0
  %4704 = vmatprep.mubr.f32.mxu0 0.0
  %4705 = vmatmul.mubr.f32.gmra.mxu0 %v4613
  %v4706 = vpop.f32.mrf.mxu0
  %v4707 = vadd.f32 0.0, %v4706
  %v4708 = vpop.f32.mrf.mxu0
  %4709 = vmatprep.mubr.f32.mxu0 0.0
  %4710 = vmatmul.mubr.f32.gmra.mxu0 %v4616
  %v4711 = vpop.f32.mrf.mxu0
  %v4712 = vadd.f32 0.0, %v4711
  %v4713 = vpop.f32.mrf.mxu0
  %4714 = vmatprep.mubr.f32.mxu0 0.0
  %4715 = vmatmul.mubr.f32.gmra.mxu0 %v4619
  %v4716 = vpop.f32.mrf.mxu0
  %v4717 = vadd.f32 0.0, %v4716
  %v4718 = vpop.f32.mrf.mxu0
  %4719 = vmatprep.mubr.f32.mxu0 0.0
  %4720 = vmatmul.mubr.f32.gmra.mxu0 %v4622
  %v4721 = vpop.f32.mrf.mxu0
  %v4722 = vadd.f32 0.0, %v4721
  %v4723 = vpop.f32.mrf.mxu0
  %4724 = vmatprep.mubr.f32.mxu0 0.0
  %4725 = vmatmul.mubr.f32.gmra.mxu0 %v4625
  %v4726 = vpop.f32.mrf.mxu0
  %v4727 = vadd.f32 0.0, %v4726
  %v4728 = vpop.f32.mrf.mxu0
  %4729 = vmatprep.mubr.f32.mxu0 0.0
  %4730 = vmatmul.mubr.f32.gmra.mxu0 %v4628
  %v4731 = vpop.f32.mrf.mxu0
  %v4732 = vadd.f32 0.0, %v4731
  %v4733 = vpop.f32.mrf.mxu0
  %4734 = vdwg.mxu0
  %v4735 = vadd.f32 %v4598, %v4697
  %v4736 = vadd.f32 %v4599, %v4702
  %v4737 = vadd.f32 %v4600, %v4707
  %v4738 = vadd.f32 %v4601, %v4712
  %v4739 = vadd.f32 %v4602, %v4717
  %v4740 = vadd.f32 %v4603, %v4722
  %v4741 = vadd.f32 %v4604, %v4727
  %v4742 = vadd.f32 %v4605, %v4732
  %v4744 = vsel %vm3662, %v3624, 0
  %v4747 = vsel %vm3662, %v3629, 0
  %v4750 = vsel %vm3662, %v3634, 0
  %v4753 = vsel %vm3662, %v3639, 0
  %v4756 = vsel %vm3662, %v3644, 0
  %v4759 = vsel %vm3662, %v3649, 0
  %v4762 = vsel %vm3662, %v3654, 0
  %v4765 = vsel %vm3662, %v3659, 0
  %4767 = vmatprep.subr.mxu0 0.0
  %4768 = vmatpush1.msra.mxu0 0.0
  %4769 = vmatprep.subr.mxu0 0.0
  %4770 = vmatpush1.msra.mxu0 0.0
  %4771 = vmatprep.subr.mxu0 0.0
  %4772 = vmatpush1.msra.mxu0 0.0
  %4773 = vmatprep.subr.mxu0 0.0
  %4774 = vmatpush1.msra.mxu0 0.0
  %4775 = vmatprep.subr.mxu0 0.0
  %4776 = vmatpush1.msra.mxu0 0.0
  %4777 = vmatprep.subr.mxu0 0.0
  %4778 = vmatpush1.msra.mxu0 0.0
  %4779 = vmatprep.subr.mxu0 0.0
  %4780 = vmatpush1.msra.mxu0 0.0
  %4781 = vmatprep.subr.mxu0 0.0
  %4782 = vmatpush1.msra.mxu0 0.0
  %4783 = vmatprep.subr.mxu0 0.0
  %4784 = vmatpush1.msra.mxu0 %v1022
  %4785 = vmatprep.subr.mxu0 0.0
  %4786 = vmatpush1.msra.mxu0 %v1021
  %4787 = vmatprep.subr.mxu0 0.0
  %4788 = vmatpush1.msra.mxu0 %v1020
  %4789 = vmatprep.subr.mxu0 0.0
  %4790 = vmatpush1.msra.mxu0 %v1019
  %4791 = vmatprep.subr.mxu0 0.0
  %4792 = vmatpush1.msra.mxu0 %v1018
  %4793 = vmatprep.subr.mxu0 0.0
  %4794 = vmatpush1.msra.mxu0 %v1017
  %4795 = vmatprep.subr.mxu0 0.0
  %4796 = vmatpush1.msra.mxu0 %v1016
  %4797 = vmatprep.subr.mxu0 0.0
  %4798 = vmatpush1.msra.mxu0 %v1015
  %4799 = vmatprep.subr.mxu0 0.0
  %4800 = vmatpush2.msra.mxu0 0.0
  %4801 = vmatprep.subr.mxu0 0.0
  %4802 = vmatpush2.msra.mxu0 0.0
  %4803 = vmatprep.subr.mxu0 0.0
  %4804 = vmatpush2.msra.mxu0 0.0
  %4805 = vmatprep.subr.mxu0 0.0
  %4806 = vmatpush2.msra.mxu0 0.0
  %4807 = vmatprep.subr.mxu0 0.0
  %4808 = vmatpush2.msra.mxu0 0.0
  %4809 = vmatprep.subr.mxu0 0.0
  %4810 = vmatpush2.msra.mxu0 0.0
  %4811 = vmatprep.subr.mxu0 0.0
  %4812 = vmatpush2.msra.mxu0 0.0
  %4813 = vmatprep.subr.mxu0 0.0
  %4814 = vmatpush2.msra.mxu0 0.0
  %4815 = vmatprep.subr.mxu0 0.0
  %4816 = vmatpush2.msra.mxu0 0.0
  %4817 = vmatprep.subr.mxu0 0.0
  %4818 = vmatpush2.msra.mxu0 0.0
  %4819 = vmatprep.subr.mxu0 0.0
  %4820 = vmatpush2.msra.mxu0 0.0
  %4821 = vmatprep.subr.mxu0 0.0
  %4822 = vmatpush2.msra.mxu0 0.0
  %4823 = vmatprep.subr.mxu0 0.0
  %4824 = vmatpush2.msra.mxu0 0.0
  %4825 = vmatprep.subr.mxu0 0.0
  %4826 = vmatpush2.msra.mxu0 0.0
  %4827 = vmatprep.subr.mxu0 0.0
  %4828 = vmatpush2.msra.mxu0 0.0
  %4829 = vmatprep.subr.mxu0 0.0
  %4830 = vmatpush2.msra.mxu0 0.0
  %4831 = vmatprep.mubr.f32.mxu0 0.0
  %4832 = vmatmul.mubr.f32.gmra.mxu0 %v4744
  %v4833 = vpop.f32.mrf.mxu0
  %v4834 = vadd.f32 0.0, %v4833
  %v4835 = vpop.f32.mrf.mxu0
  %4836 = vmatprep.mubr.f32.mxu0 0.0
  %4837 = vmatmul.mubr.f32.gmra.mxu0 %v4747
  %v4838 = vpop.f32.mrf.mxu0
  %v4839 = vadd.f32 0.0, %v4838
  %v4840 = vpop.f32.mrf.mxu0
  %4841 = vmatprep.mubr.f32.mxu0 0.0
  %4842 = vmatmul.mubr.f32.gmra.mxu0 %v4750
  %v4843 = vpop.f32.mrf.mxu0
  %v4844 = vadd.f32 0.0, %v4843
  %v4845 = vpop.f32.mrf.mxu0
  %4846 = vmatprep.mubr.f32.mxu0 0.0
  %4847 = vmatmul.mubr.f32.gmra.mxu0 %v4753
  %v4848 = vpop.f32.mrf.mxu0
  %v4849 = vadd.f32 0.0, %v4848
  %v4850 = vpop.f32.mrf.mxu0
  %4851 = vmatprep.mubr.f32.mxu0 0.0
  %4852 = vmatmul.mubr.f32.gmra.mxu0 %v4756
  %v4853 = vpop.f32.mrf.mxu0
  %v4854 = vadd.f32 0.0, %v4853
  %v4855 = vpop.f32.mrf.mxu0
  %4856 = vmatprep.mubr.f32.mxu0 0.0
  %4857 = vmatmul.mubr.f32.gmra.mxu0 %v4759
  %v4858 = vpop.f32.mrf.mxu0
  %v4859 = vadd.f32 0.0, %v4858
  %v4860 = vpop.f32.mrf.mxu0
  %4861 = vmatprep.mubr.f32.mxu0 0.0
  %4862 = vmatmul.mubr.f32.gmra.mxu0 %v4762
  %v4863 = vpop.f32.mrf.mxu0
  %v4864 = vadd.f32 0.0, %v4863
  %v4865 = vpop.f32.mrf.mxu0
  %4866 = vmatprep.mubr.f32.mxu0 0.0
  %4867 = vmatmul.mubr.f32.gmra.mxu0 %v4765
  %v4868 = vpop.f32.mrf.mxu0
  %v4869 = vadd.f32 0.0, %v4868
  %v4870 = vpop.f32.mrf.mxu0
  %4871 = vdwg.mxu0
  %v4872 = vadd.f32 %v4735, %v4834
  %v4873 = vadd.f32 %v4736, %v4839
  %v4874 = vadd.f32 %v4737, %v4844
  %v4875 = vadd.f32 %v4738, %v4849
  %v4876 = vadd.f32 %v4739, %v4854
  %v4877 = vadd.f32 %v4740, %v4859
  %v4878 = vadd.f32 %v4741, %v4864
  %v4879 = vadd.f32 %v4742, %v4869
  %v4880 = vld [vmem:[%s5] sm:$0x1]
  %v4882 = vlaneseq
  %v4883 = vshrl.u32 %v4882, 7
  %v4884 = vsub.s32 0, %v4883
  %v4885 = vrot.slane %v4880, %v4884
  %v4887 = vadd.f32 %v4872, %v4885
  %v4888 = vadd.f32 %v4873, %v4885
  %v4889 = vadd.f32 %v4874, %v4885
  %v4890 = vadd.f32 %v4875, %v4885
  %v4891 = vadd.f32 %v4876, %v4885
  %v4892 = vadd.f32 %v4877, %v4885
  %v4893 = vadd.f32 %v4878, %v4885
  %v4894 = vadd.f32 %v4879, %v4885
  %v4895 = vmax.f32 %v4887, 0.0
  %v4896 = vmax.f32 %v4888, 0.0
  %v4897 = vmax.f32 %v4889, 0.0
  %v4898 = vmax.f32 %v4890, 0.0
  %v4899 = vmax.f32 %v4891, 0.0
  %v4900 = vmax.f32 %v4892, 0.0
  %v4901 = vmax.f32 %v4893, 0.0
  %v4902 = vmax.f32 %v4894, 0.0
  %v4904 = vsel %vm3662, %v1041, 0
  %v4907 = vsel %vm3662, %v1042, 0
  %v4910 = vsel %vm3662, %v1043, 0
  %v4913 = vsel %vm3662, %v1044, 0
  %v4916 = vsel %vm3662, %v1045, 0
  %v4919 = vsel %vm3662, %v1046, 0
  %v4922 = vsel %vm3662, %v1047, 0
  %v4925 = vsel %vm3662, %v1048, 0
  %v4928 = vsel %vm3662, %v1049, 0
  %v4931 = vsel %vm3662, %v1050, 0
  %v4934 = vsel %vm3662, %v1051, 0
  %v4937 = vsel %vm3662, %v1052, 0
  %v4940 = vsel %vm3662, %v1053, 0
  %v4943 = vsel %vm3662, %v1054, 0
  %v4946 = vsel %vm3662, %v1055, 0
  %v4949 = vsel %vm3662, %v1056, 0
  %v4952 = vsel %vm3662, %v1057, 0
  %v4955 = vsel %vm3662, %v1058, 0
  %4957 = vmatprep.subr.mxu0 0.0
  %4958 = vmatpush1.msra.mxu0 0.0
  %4959 = vmatprep.subr.mxu0 0.0
  %4960 = vmatpush1.msra.mxu0 0.0
  %4961 = vmatprep.subr.mxu0 0.0
  %4962 = vmatpush1.msra.mxu0 0.0
  %4963 = vmatprep.subr.mxu0 0.0
  %4964 = vmatpush1.msra.mxu0 0.0
  %4965 = vmatprep.subr.mxu0 0.0
  %4966 = vmatpush1.msra.mxu0 0.0
  %4967 = vmatprep.subr.mxu0 0.0
  %4968 = vmatpush1.msra.mxu0 0.0
  %4969 = vmatprep.subr.mxu0 0.0
  %4970 = vmatpush1.msra.mxu0 0.0
  %4971 = vmatprep.subr.mxu0 0.0
  %4972 = vmatpush1.msra.mxu0 0.0
  %4973 = vmatprep.subr.mxu0 0.0
  %4974 = vmatpush1.msra.mxu0 %v4902
  %4975 = vmatprep.subr.mxu0 0.0
  %4976 = vmatpush1.msra.mxu0 %v4901
  %4977 = vmatprep.subr.mxu0 0.0
  %4978 = vmatpush1.msra.mxu0 %v4900
  %4979 = vmatprep.subr.mxu0 0.0
  %4980 = vmatpush1.msra.mxu0 %v4899
  %4981 = vmatprep.subr.mxu0 0.0
  %4982 = vmatpush1.msra.mxu0 %v4898
  %4983 = vmatprep.subr.mxu0 0.0
  %4984 = vmatpush1.msra.mxu0 %v4897
  %4985 = vmatprep.subr.mxu0 0.0
  %4986 = vmatpush1.msra.mxu0 %v4896
  %4987 = vmatprep.subr.mxu0 0.0
  %4988 = vmatpush1.msra.mxu0 %v4895
  %4989 = vmatprep.subr.mxu0 0.0
  %4990 = vmatpush2.msra.mxu0 0.0
  %4991 = vmatprep.subr.mxu0 0.0
  %4992 = vmatpush2.msra.mxu0 0.0
  %4993 = vmatprep.subr.mxu0 0.0
  %4994 = vmatpush2.msra.mxu0 0.0
  %4995 = vmatprep.subr.mxu0 0.0
  %4996 = vmatpush2.msra.mxu0 0.0
  %4997 = vmatprep.subr.mxu0 0.0
  %4998 = vmatpush2.msra.mxu0 0.0
  %4999 = vmatprep.subr.mxu0 0.0
  %5000 = vmatpush2.msra.mxu0 0.0
  %5001 = vmatprep.subr.mxu0 0.0
  %5002 = vmatpush2.msra.mxu0 0.0
  %5003 = vmatprep.subr.mxu0 0.0
  %5004 = vmatpush2.msra.mxu0 0.0
  %5005 = vmatprep.subr.mxu0 0.0
  %5006 = vmatpush2.msra.mxu0 0.0
  %5007 = vmatprep.subr.mxu0 0.0
  %5008 = vmatpush2.msra.mxu0 0.0
  %5009 = vmatprep.subr.mxu0 0.0
  %5010 = vmatpush2.msra.mxu0 0.0
  %5011 = vmatprep.subr.mxu0 0.0
  %5012 = vmatpush2.msra.mxu0 0.0
  %5013 = vmatprep.subr.mxu0 0.0
  %5014 = vmatpush2.msra.mxu0 0.0
  %5015 = vmatprep.subr.mxu0 0.0
  %5016 = vmatpush2.msra.mxu0 0.0
  %5017 = vmatprep.subr.mxu0 0.0
  %5018 = vmatpush2.msra.mxu0 0.0
  %5019 = vmatprep.subr.mxu0 0.0
  %5020 = vmatpush2.msra.mxu0 0.0
  %5021 = vmatprep.mubr.f32.mxu0 0.0
  %5022 = vmatmul.mubr.f32.gmra.mxu0 %v4904
  %v5023 = vpop.f32.mrf.mxu0
  %v5024 = vadd.f32 0.0, %v5023
  %v5025 = vpop.f32.mrf.mxu0
  %5026 = vmatprep.mubr.f32.mxu0 0.0
  %5027 = vmatmul.mubr.f32.gmra.mxu0 %v4907
  %v5028 = vpop.f32.mrf.mxu0
  %v5029 = vadd.f32 0.0, %v5028
  %v5030 = vpop.f32.mrf.mxu0
  %5031 = vmatprep.mubr.f32.mxu0 0.0
  %5032 = vmatmul.mubr.f32.gmra.mxu0 %v4910
  %v5033 = vpop.f32.mrf.mxu0
  %v5034 = vadd.f32 0.0, %v5033
  %v5035 = vpop.f32.mrf.mxu0
  %5036 = vmatprep.mubr.f32.mxu0 0.0
  %5037 = vmatmul.mubr.f32.gmra.mxu0 %v4913
  %v5038 = vpop.f32.mrf.mxu0
  %v5039 = vadd.f32 0.0, %v5038
  %v5040 = vpop.f32.mrf.mxu0
  %5041 = vmatprep.mubr.f32.mxu0 0.0
  %5042 = vmatmul.mubr.f32.gmra.mxu0 %v4916
  %v5043 = vpop.f32.mrf.mxu0
  %v5044 = vadd.f32 0.0, %v5043
  %v5045 = vpop.f32.mrf.mxu0
  %5046 = vmatprep.mubr.f32.mxu0 0.0
  %5047 = vmatmul.mubr.f32.gmra.mxu0 %v4919
  %v5048 = vpop.f32.mrf.mxu0
  %v5049 = vadd.f32 0.0, %v5048
  %v5050 = vpop.f32.mrf.mxu0
  %5051 = vmatprep.mubr.f32.mxu0 0.0
  %5052 = vmatmul.mubr.f32.gmra.mxu0 %v4922
  %v5053 = vpop.f32.mrf.mxu0
  %v5054 = vadd.f32 0.0, %v5053
  %v5055 = vpop.f32.mrf.mxu0
  %5056 = vmatprep.mubr.f32.mxu0 0.0
  %5057 = vmatmul.mubr.f32.gmra.mxu0 %v4925
  %v5058 = vpop.f32.mrf.mxu0
  %v5059 = vadd.f32 0.0, %v5058
  %v5060 = vpop.f32.mrf.mxu0
  %5061 = vmatprep.mubr.f32.mxu0 0.0
  %5062 = vmatmul.mubr.f32.gmra.mxu0 %v4928
  %v5063 = vpop.f32.mrf.mxu0
  %v5064 = vadd.f32 0.0, %v5063
  %v5065 = vpop.f32.mrf.mxu0
  %5066 = vmatprep.mubr.f32.mxu0 0.0
  %5067 = vmatmul.mubr.f32.gmra.mxu0 %v4931
  %v5068 = vpop.f32.mrf.mxu0
  %v5069 = vadd.f32 0.0, %v5068
  %v5070 = vpop.f32.mrf.mxu0
  %5071 = vmatprep.mubr.f32.mxu0 0.0
  %5072 = vmatmul.mubr.f32.gmra.mxu0 %v4934
  %v5073 = vpop.f32.mrf.mxu0
  %v5074 = vadd.f32 0.0, %v5073
  %v5075 = vpop.f32.mrf.mxu0
  %5076 = vmatprep.mubr.f32.mxu0 0.0
  %5077 = vmatmul.mubr.f32.gmra.mxu0 %v4937
  %v5078 = vpop.f32.mrf.mxu0
  %v5079 = vadd.f32 0.0, %v5078
  %v5080 = vpop.f32.mrf.mxu0
  %5081 = vmatprep.mubr.f32.mxu0 0.0
  %5082 = vmatmul.mubr.f32.gmra.mxu0 %v4940
  %v5083 = vpop.f32.mrf.mxu0
  %v5084 = vadd.f32 0.0, %v5083
  %v5085 = vpop.f32.mrf.mxu0
  %5086 = vmatprep.mubr.f32.mxu0 0.0
  %5087 = vmatmul.mubr.f32.gmra.mxu0 %v4943
  %v5088 = vpop.f32.mrf.mxu0
  %v5089 = vadd.f32 0.0, %v5088
  %v5090 = vpop.f32.mrf.mxu0
  %5091 = vmatprep.mubr.f32.mxu0 0.0
  %5092 = vmatmul.mubr.f32.gmra.mxu0 %v4946
  %v5093 = vpop.f32.mrf.mxu0
  %v5094 = vadd.f32 0.0, %v5093
  %v5095 = vpop.f32.mrf.mxu0
  %5096 = vmatprep.mubr.f32.mxu0 0.0
  %5097 = vmatmul.mubr.f32.gmra.mxu0 %v4949
  %v5098 = vpop.f32.mrf.mxu0
  %v5099 = vadd.f32 0.0, %v5098
  %v5100 = vpop.f32.mrf.mxu0
  %5101 = vmatprep.mubr.f32.mxu0 0.0
  %5102 = vmatmul.mubr.f32.gmra.mxu0 %v4952
  %v5103 = vpop.f32.mrf.mxu0
  %v5104 = vadd.f32 0.0, %v5103
  %v5105 = vpop.f32.mrf.mxu0
  %5106 = vmatprep.mubr.f32.mxu0 0.0
  %5107 = vmatmul.mubr.f32.gmra.mxu0 %v4955
  %v5108 = vpop.f32.mrf.mxu0
  %v5109 = vadd.f32 0.0, %v5108
  %v5110 = vpop.f32.mrf.mxu0
  %5111 = vdwg.mxu0
  %v5112 = vld [vmem:[%s8] sm:$0x3]
  %v5114 = vlaneseq
  %v5115 = vshrl.u32 %v5114, 7
  %v5116 = vsub.s32 0, %v5115
  %v5117 = vrot.slane %v5112, %v5116
  %v5118 = vlaneseq
  %v5119 = vshrl.u32 %v5118, 7
  %v5120 = vsub.s32 1, %v5119
  %v5121 = vrot.slane %v5112, %v5120
  %5124 = vmatprep.subr.mxu0 %v1234
  %5125 = vmatpush1.msra.mxu0 %v1233
  %5126 = vmatprep.subr.mxu0 %v1232
  %5127 = vmatpush1.msra.mxu0 %v1231
  %5128 = vmatprep.subr.mxu0 %v1230
  %5129 = vmatpush1.msra.mxu0 %v1229
  %5130 = vmatprep.subr.mxu0 %v1228
  %5131 = vmatpush1.msra.mxu0 %v1227
  %5132 = vmatprep.subr.mxu0 %v1226
  %5133 = vmatpush1.msra.mxu0 %v1225
  %5134 = vmatprep.subr.mxu0 %v1224
  %5135 = vmatpush1.msra.mxu0 %v1223
  %5136 = vmatprep.subr.mxu0 %v1222
  %5137 = vmatpush1.msra.mxu0 %v1221
  %5138 = vmatprep.subr.mxu0 %v1220
  %5139 = vmatpush1.msra.mxu0 %v1219
  %5140 = vmatprep.subr.mxu0 %v1218
  %5141 = vmatpush1.msra.mxu0 %v1217
  %5142 = vmatprep.subr.mxu0 %v1216
  %5143 = vmatpush1.msra.mxu0 %v1215
  %5144 = vmatprep.subr.mxu0 %v1214
  %5145 = vmatpush1.msra.mxu0 %v1213
  %5146 = vmatprep.subr.mxu0 %v1212
  %5147 = vmatpush1.msra.mxu0 %v1211
  %5148 = vmatprep.subr.mxu0 %v1210
  %5149 = vmatpush1.msra.mxu0 %v1209
  %5150 = vmatprep.subr.mxu0 %v1208
  %5151 = vmatpush1.msra.mxu0 %v1207
  %5152 = vmatprep.subr.mxu0 %v1206
  %5153 = vmatpush1.msra.mxu0 %v1205
  %5154 = vmatprep.subr.mxu0 %v1204
  %5155 = vmatpush1.msra.mxu0 %v1203
  %5156 = vmatprep.subr.mxu0 %v1266
  %5157 = vmatpush2.msra.mxu0 %v1265
  %5158 = vmatprep.subr.mxu0 %v1264
  %5159 = vmatpush2.msra.mxu0 %v1263
  %5160 = vmatprep.subr.mxu0 %v1262
  %5161 = vmatpush2.msra.mxu0 %v1261
  %5162 = vmatprep.subr.mxu0 %v1260
  %5163 = vmatpush2.msra.mxu0 %v1259
  %5164 = vmatprep.subr.mxu0 %v1258
  %5165 = vmatpush2.msra.mxu0 %v1257
  %5166 = vmatprep.subr.mxu0 %v1256
  %5167 = vmatpush2.msra.mxu0 %v1255
  %5168 = vmatprep.subr.mxu0 %v1254
  %5169 = vmatpush2.msra.mxu0 %v1253
  %5170 = vmatprep.subr.mxu0 %v1252
  %5171 = vmatpush2.msra.mxu0 %v1251
  %5172 = vmatprep.subr.mxu0 %v1250
  %5173 = vmatpush2.msra.mxu0 %v1249
  %5174 = vmatprep.subr.mxu0 %v1248
  %5175 = vmatpush2.msra.mxu0 %v1247
  %5176 = vmatprep.subr.mxu0 %v1246
  %5177 = vmatpush2.msra.mxu0 %v1245
  %5178 = vmatprep.subr.mxu0 %v1244
  %5179 = vmatpush2.msra.mxu0 %v1243
  %5180 = vmatprep.subr.mxu0 %v1242
  %5181 = vmatpush2.msra.mxu0 %v1241
  %5182 = vmatprep.subr.mxu0 %v1240
  %5183 = vmatpush2.msra.mxu0 %v1239
  %5184 = vmatprep.subr.mxu0 %v1238
  %5185 = vmatpush2.msra.mxu0 %v1237
  %5186 = vmatprep.subr.mxu0 %v1236
  %5187 = vmatpush2.msra.mxu0 %v1235
  %5188 = vmatprep.mubr.f32.mxu0 %v5034
  %5189 = vmatmul.mubr.f32.gmra.mxu0 %v5024
  %v5190 = vpop.f32.mrf.mxu0
  %v5191 = vadd.f32 %v5117, %v5190
  %v5192 = vpop.f32.mrf.mxu0
  %v5193 = vadd.f32 %v5121, %v5192
  %5194 = vmatprep.mubr.f32.mxu0 %v5039
  %5195 = vmatmul.mubr.f32.gmra.mxu0 %v5029
  %v5196 = vpop.f32.mrf.mxu0
  %v5197 = vadd.f32 %v5117, %v5196
  %v5198 = vpop.f32.mrf.mxu0
  %v5199 = vadd.f32 %v5121, %v5198
  %5200 = vdwg.mxu0
  %5201 = vmatprep.subr.mxu0 %v1298
  %5202 = vmatpush1.msra.mxu0 %v1297
  %5203 = vmatprep.subr.mxu0 %v1296
  %5204 = vmatpush1.msra.mxu0 %v1295
  %5205 = vmatprep.subr.mxu0 %v1294
  %5206 = vmatpush1.msra.mxu0 %v1293
  %5207 = vmatprep.subr.mxu0 %v1292
  %5208 = vmatpush1.msra.mxu0 %v1291
  %5209 = vmatprep.subr.mxu0 %v1290
  %5210 = vmatpush1.msra.mxu0 %v1289
  %5211 = vmatprep.subr.mxu0 %v1288
  %5212 = vmatpush1.msra.mxu0 %v1287
  %5213 = vmatprep.subr.mxu0 %v1286
  %5214 = vmatpush1.msra.mxu0 %v1285
  %5215 = vmatprep.subr.mxu0 %v1284
  %5216 = vmatpush1.msra.mxu0 %v1283
  %5217 = vmatprep.subr.mxu0 %v1282
  %5218 = vmatpush1.msra.mxu0 %v1281
  %5219 = vmatprep.subr.mxu0 %v1280
  %5220 = vmatpush1.msra.mxu0 %v1279
  %5221 = vmatprep.subr.mxu0 %v1278
  %5222 = vmatpush1.msra.mxu0 %v1277
  %5223 = vmatprep.subr.mxu0 %v1276
  %5224 = vmatpush1.msra.mxu0 %v1275
  %5225 = vmatprep.subr.mxu0 %v1274
  %5226 = vmatpush1.msra.mxu0 %v1273
  %5227 = vmatprep.subr.mxu0 %v1272
  %5228 = vmatpush1.msra.mxu0 %v1271
  %5229 = vmatprep.subr.mxu0 %v1270
  %5230 = vmatpush1.msra.mxu0 %v1269
  %5231 = vmatprep.subr.mxu0 %v1268
  %5232 = vmatpush1.msra.mxu0 %v1267
  %5233 = vmatprep.subr.mxu0 %v1330
  %5234 = vmatpush2.msra.mxu0 %v1329
  %5235 = vmatprep.subr.mxu0 %v1328
  %5236 = vmatpush2.msra.mxu0 %v1327
  %5237 = vmatprep.subr.mxu0 %v1326
  %5238 = vmatpush2.msra.mxu0 %v1325
  %5239 = vmatprep.subr.mxu0 %v1324
  %5240 = vmatpush2.msra.mxu0 %v1323
  %5241 = vmatprep.subr.mxu0 %v1322
  %5242 = vmatpush2.msra.mxu0 %v1321
  %5243 = vmatprep.subr.mxu0 %v1320
  %5244 = vmatpush2.msra.mxu0 %v1319
  %5245 = vmatprep.subr.mxu0 %v1318
  %5246 = vmatpush2.msra.mxu0 %v1317
  %5247 = vmatprep.subr.mxu0 %v1316
  %5248 = vmatpush2.msra.mxu0 %v1315
  %5249 = vmatprep.subr.mxu0 %v1314
  %5250 = vmatpush2.msra.mxu0 %v1313
  %5251 = vmatprep.subr.mxu0 %v1312
  %5252 = vmatpush2.msra.mxu0 %v1311
  %5253 = vmatprep.subr.mxu0 %v1310
  %5254 = vmatpush2.msra.mxu0 %v1309
  %5255 = vmatprep.subr.mxu0 %v1308
  %5256 = vmatpush2.msra.mxu0 %v1307
  %5257 = vmatprep.subr.mxu0 %v1306
  %5258 = vmatpush2.msra.mxu0 %v1305
  %5259 = vmatprep.subr.mxu0 %v1304
  %5260 = vmatpush2.msra.mxu0 %v1303
  %5261 = vmatprep.subr.mxu0 %v1302
  %5262 = vmatpush2.msra.mxu0 %v1301
  %5263 = vmatprep.subr.mxu0 %v1300
  %5264 = vmatpush2.msra.mxu0 %v1299
  %5265 = vmatprep.mubr.f32.mxu0 %v5054
  %5266 = vmatmul.mubr.f32.gmra.mxu0 %v5044
  %v5267 = vpop.f32.mrf.mxu0
  %v5268 = vadd.f32 %v5191, %v5267
  %v5269 = vpop.f32.mrf.mxu0
  %v5270 = vadd.f32 %v5193, %v5269
  %5271 = vmatprep.mubr.f32.mxu0 %v5059
  %5272 = vmatmul.mubr.f32.gmra.mxu0 %v5049
  %v5273 = vpop.f32.mrf.mxu0
  %v5274 = vadd.f32 %v5197, %v5273
  %v5275 = vpop.f32.mrf.mxu0
  %v5276 = vadd.f32 %v5199, %v5275
  %5277 = vdwg.mxu0
  %5278 = vmatprep.subr.mxu0 %v1362
  %5279 = vmatpush1.msra.mxu0 %v1361
  %5280 = vmatprep.subr.mxu0 %v1360
  %5281 = vmatpush1.msra.mxu0 %v1359
  %5282 = vmatprep.subr.mxu0 %v1358
  %5283 = vmatpush1.msra.mxu0 %v1357
  %5284 = vmatprep.subr.mxu0 %v1356
  %5285 = vmatpush1.msra.mxu0 %v1355
  %5286 = vmatprep.subr.mxu0 %v1354
  %5287 = vmatpush1.msra.mxu0 %v1353
  %5288 = vmatprep.subr.mxu0 %v1352
  %5289 = vmatpush1.msra.mxu0 %v1351
  %5290 = vmatprep.subr.mxu0 %v1350
  %5291 = vmatpush1.msra.mxu0 %v1349
  %5292 = vmatprep.subr.mxu0 %v1348
  %5293 = vmatpush1.msra.mxu0 %v1347
  %5294 = vmatprep.subr.mxu0 %v1346
  %5295 = vmatpush1.msra.mxu0 %v1345
  %5296 = vmatprep.subr.mxu0 %v1344
  %5297 = vmatpush1.msra.mxu0 %v1343
  %5298 = vmatprep.subr.mxu0 %v1342
  %5299 = vmatpush1.msra.mxu0 %v1341
  %5300 = vmatprep.subr.mxu0 %v1340
  %5301 = vmatpush1.msra.mxu0 %v1339
  %5302 = vmatprep.subr.mxu0 %v1338
  %5303 = vmatpush1.msra.mxu0 %v1337
  %5304 = vmatprep.subr.mxu0 %v1336
  %5305 = vmatpush1.msra.mxu0 %v1335
  %5306 = vmatprep.subr.mxu0 %v1334
  %5307 = vmatpush1.msra.mxu0 %v1333
  %5308 = vmatprep.subr.mxu0 %v1332
  %5309 = vmatpush1.msra.mxu0 %v1331
  %5310 = vmatprep.subr.mxu0 %v1394
  %5311 = vmatpush2.msra.mxu0 %v1393
  %5312 = vmatprep.subr.mxu0 %v1392
  %5313 = vmatpush2.msra.mxu0 %v1391
  %5314 = vmatprep.subr.mxu0 %v1390
  %5315 = vmatpush2.msra.mxu0 %v1389
  %5316 = vmatprep.subr.mxu0 %v1388
  %5317 = vmatpush2.msra.mxu0 %v1387
  %5318 = vmatprep.subr.mxu0 %v1386
  %5319 = vmatpush2.msra.mxu0 %v1385
  %5320 = vmatprep.subr.mxu0 %v1384
  %5321 = vmatpush2.msra.mxu0 %v1383
  %5322 = vmatprep.subr.mxu0 %v1382
  %5323 = vmatpush2.msra.mxu0 %v1381
  %5324 = vmatprep.subr.mxu0 %v1380
  %5325 = vmatpush2.msra.mxu0 %v1379
  %5326 = vmatprep.subr.mxu0 %v1378
  %5327 = vmatpush2.msra.mxu0 %v1377
  %5328 = vmatprep.subr.mxu0 %v1376
  %5329 = vmatpush2.msra.mxu0 %v1375
  %5330 = vmatprep.subr.mxu0 %v1374
  %5331 = vmatpush2.msra.mxu0 %v1373
  %5332 = vmatprep.subr.mxu0 %v1372
  %5333 = vmatpush2.msra.mxu0 %v1371
  %5334 = vmatprep.subr.mxu0 %v1370
  %5335 = vmatpush2.msra.mxu0 %v1369
  %5336 = vmatprep.subr.mxu0 %v1368
  %5337 = vmatpush2.msra.mxu0 %v1367
  %5338 = vmatprep.subr.mxu0 %v1366
  %5339 = vmatpush2.msra.mxu0 %v1365
  %5340 = vmatprep.subr.mxu0 %v1364
  %5341 = vmatpush2.msra.mxu0 %v1363
  %5342 = vmatprep.mubr.f32.mxu0 %v5074
  %5343 = vmatmul.mubr.f32.gmra.mxu0 %v5064
  %v5344 = vpop.f32.mrf.mxu0
  %v5345 = vadd.f32 %v5268, %v5344
  %v5346 = vpop.f32.mrf.mxu0
  %v5347 = vadd.f32 %v5270, %v5346
  %5348 = vmatprep.mubr.f32.mxu0 %v5079
  %5349 = vmatmul.mubr.f32.gmra.mxu0 %v5069
  %v5350 = vpop.f32.mrf.mxu0
  %v5351 = vadd.f32 %v5274, %v5350
  %v5352 = vpop.f32.mrf.mxu0
  %v5353 = vadd.f32 %v5276, %v5352
  %5354 = vdwg.mxu0
  %5355 = vmatprep.subr.mxu0 %v1426
  %5356 = vmatpush1.msra.mxu0 %v1425
  %5357 = vmatprep.subr.mxu0 %v1424
  %5358 = vmatpush1.msra.mxu0 %v1423
  %5359 = vmatprep.subr.mxu0 %v1422
  %5360 = vmatpush1.msra.mxu0 %v1421
  %5361 = vmatprep.subr.mxu0 %v1420
  %5362 = vmatpush1.msra.mxu0 %v1419
  %5363 = vmatprep.subr.mxu0 %v1418
  %5364 = vmatpush1.msra.mxu0 %v1417
  %5365 = vmatprep.subr.mxu0 %v1416
  %5366 = vmatpush1.msra.mxu0 %v1415
  %5367 = vmatprep.subr.mxu0 %v1414
  %5368 = vmatpush1.msra.mxu0 %v1413
  %5369 = vmatprep.subr.mxu0 %v1412
  %5370 = vmatpush1.msra.mxu0 %v1411
  %5371 = vmatprep.subr.mxu0 %v1410
  %5372 = vmatpush1.msra.mxu0 %v1409
  %5373 = vmatprep.subr.mxu0 %v1408
  %5374 = vmatpush1.msra.mxu0 %v1407
  %5375 = vmatprep.subr.mxu0 %v1406
  %5376 = vmatpush1.msra.mxu0 %v1405
  %5377 = vmatprep.subr.mxu0 %v1404
  %5378 = vmatpush1.msra.mxu0 %v1403
  %5379 = vmatprep.subr.mxu0 %v1402
  %5380 = vmatpush1.msra.mxu0 %v1401
  %5381 = vmatprep.subr.mxu0 %v1400
  %5382 = vmatpush1.msra.mxu0 %v1399
  %5383 = vmatprep.subr.mxu0 %v1398
  %5384 = vmatpush1.msra.mxu0 %v1397
  %5385 = vmatprep.subr.mxu0 %v1396
  %5386 = vmatpush1.msra.mxu0 %v1395
  %5387 = vmatprep.subr.mxu0 %v1458
  %5388 = vmatpush2.msra.mxu0 %v1457
  %5389 = vmatprep.subr.mxu0 %v1456
  %5390 = vmatpush2.msra.mxu0 %v1455
  %5391 = vmatprep.subr.mxu0 %v1454
  %5392 = vmatpush2.msra.mxu0 %v1453
  %5393 = vmatprep.subr.mxu0 %v1452
  %5394 = vmatpush2.msra.mxu0 %v1451
  %5395 = vmatprep.subr.mxu0 %v1450
  %5396 = vmatpush2.msra.mxu0 %v1449
  %5397 = vmatprep.subr.mxu0 %v1448
  %5398 = vmatpush2.msra.mxu0 %v1447
  %5399 = vmatprep.subr.mxu0 %v1446
  %5400 = vmatpush2.msra.mxu0 %v1445
  %5401 = vmatprep.subr.mxu0 %v1444
  %5402 = vmatpush2.msra.mxu0 %v1443
  %5403 = vmatprep.subr.mxu0 %v1442
  %5404 = vmatpush2.msra.mxu0 %v1441
  %5405 = vmatprep.subr.mxu0 %v1440
  %5406 = vmatpush2.msra.mxu0 %v1439
  %5407 = vmatprep.subr.mxu0 %v1438
  %5408 = vmatpush2.msra.mxu0 %v1437
  %5409 = vmatprep.subr.mxu0 %v1436
  %5410 = vmatpush2.msra.mxu0 %v1435
  %5411 = vmatprep.subr.mxu0 %v1434
  %5412 = vmatpush2.msra.mxu0 %v1433
  %5413 = vmatprep.subr.mxu0 %v1432
  %5414 = vmatpush2.msra.mxu0 %v1431
  %5415 = vmatprep.subr.mxu0 %v1430
  %5416 = vmatpush2.msra.mxu0 %v1429
  %5417 = vmatprep.subr.mxu0 %v1428
  %5418 = vmatpush2.msra.mxu0 %v1427
  %5419 = vmatprep.mubr.f32.mxu0 %v5094
  %5420 = vmatmul.mubr.f32.gmra.mxu0 %v5084
  %v5421 = vpop.f32.mrf.mxu0
  %v5422 = vadd.f32 %v5345, %v5421
  %v5423 = vpop.f32.mrf.mxu0
  %v5424 = vadd.f32 %v5347, %v5423
  %5425 = vmatprep.mubr.f32.mxu0 %v5099
  %5426 = vmatmul.mubr.f32.gmra.mxu0 %v5089
  %v5427 = vpop.f32.mrf.mxu0
  %v5428 = vadd.f32 %v5351, %v5427
  %v5429 = vpop.f32.mrf.mxu0
  %v5430 = vadd.f32 %v5353, %v5429
  %5431 = vdwg.mxu0
  %5432 = vmatprep.subr.mxu0 %v1490
  %5433 = vmatpush1.msra.mxu0 %v1489
  %5434 = vmatprep.subr.mxu0 %v1488
  %5435 = vmatpush1.msra.mxu0 %v1487
  %5436 = vmatprep.subr.mxu0 %v1486
  %5437 = vmatpush1.msra.mxu0 %v1485
  %5438 = vmatprep.subr.mxu0 %v1484
  %5439 = vmatpush1.msra.mxu0 %v1483
  %5440 = vmatprep.subr.mxu0 %v1482
  %5441 = vmatpush1.msra.mxu0 %v1481
  %5442 = vmatprep.subr.mxu0 %v1480
  %5443 = vmatpush1.msra.mxu0 %v1479
  %5444 = vmatprep.subr.mxu0 %v1478
  %5445 = vmatpush1.msra.mxu0 %v1477
  %5446 = vmatprep.subr.mxu0 %v1476
  %5447 = vmatpush1.msra.mxu0 %v1475
  %5448 = vmatprep.subr.mxu0 %v1474
  %5449 = vmatpush1.msra.mxu0 %v1473
  %5450 = vmatprep.subr.mxu0 %v1472
  %5451 = vmatpush1.msra.mxu0 %v1471
  %5452 = vmatprep.subr.mxu0 %v1470
  %5453 = vmatpush1.msra.mxu0 %v1469
  %5454 = vmatprep.subr.mxu0 %v1468
  %5455 = vmatpush1.msra.mxu0 %v1467
  %5456 = vmatprep.subr.mxu0 %v1466
  %5457 = vmatpush1.msra.mxu0 %v1465
  %5458 = vmatprep.subr.mxu0 %v1464
  %5459 = vmatpush1.msra.mxu0 %v1463
  %5460 = vmatprep.subr.mxu0 %v1462
  %5461 = vmatpush1.msra.mxu0 %v1461
  %5462 = vmatprep.subr.mxu0 %v1460
  %5463 = vmatpush1.msra.mxu0 %v1459
  %5464 = vmatprep.subr.mxu0 0.0
  %5465 = vmatpush2.msra.mxu0 0.0
  %5466 = vmatprep.subr.mxu0 0.0
  %5467 = vmatpush2.msra.mxu0 0.0
  %5468 = vmatprep.subr.mxu0 0.0
  %5469 = vmatpush2.msra.mxu0 0.0
  %5470 = vmatprep.subr.mxu0 0.0
  %5471 = vmatpush2.msra.mxu0 0.0
  %5472 = vmatprep.subr.mxu0 0.0
  %5473 = vmatpush2.msra.mxu0 0.0
  %5474 = vmatprep.subr.mxu0 0.0
  %5475 = vmatpush2.msra.mxu0 0.0
  %5476 = vmatprep.subr.mxu0 0.0
  %5477 = vmatpush2.msra.mxu0 0.0
  %5478 = vmatprep.subr.mxu0 0.0
  %5479 = vmatpush2.msra.mxu0 0.0
  %5480 = vmatprep.subr.mxu0 0.0
  %5481 = vmatpush2.msra.mxu0 0.0
  %5482 = vmatprep.subr.mxu0 0.0
  %5483 = vmatpush2.msra.mxu0 0.0
  %5484 = vmatprep.subr.mxu0 0.0
  %5485 = vmatpush2.msra.mxu0 0.0
  %5486 = vmatprep.subr.mxu0 0.0
  %5487 = vmatpush2.msra.mxu0 0.0
  %5488 = vmatprep.subr.mxu0 0.0
  %5489 = vmatpush2.msra.mxu0 0.0
  %5490 = vmatprep.subr.mxu0 0.0
  %5491 = vmatpush2.msra.mxu0 0.0
  %5492 = vmatprep.subr.mxu0 0.0
  %5493 = vmatpush2.msra.mxu0 0.0
  %5494 = vmatprep.subr.mxu0 0.0
  %5495 = vmatpush2.msra.mxu0 0.0
  %5496 = vmatprep.mubr.f32.mxu0 0.0
  %5497 = vmatmul.mubr.f32.gmra.mxu0 %v5104
  %v5498 = vpop.f32.mrf.mxu0
  %v5499 = vadd.f32 %v5422, %v5498
  %v5500 = vpop.f32.mrf.mxu0
  %v5501 = vadd.f32 %v5424, %v5500
  %5502 = vmatprep.mubr.f32.mxu0 0.0
  %5503 = vmatmul.mubr.f32.gmra.mxu0 %v5109
  %v5504 = vpop.f32.mrf.mxu0
  %v5505 = vadd.f32 %v5428, %v5504
  %v5506 = vpop.f32.mrf.mxu0
  %v5507 = vadd.f32 %v5430, %v5506
  %5508 = vdwg.mxu0
  %v5509 = vmax.f32 %v5499, 0.0
  %v5510 = vmax.f32 %v5501, 0.0
  %v5511 = vmax.f32 %v5505, 0.0
  %v5512 = vmax.f32 %v5507, 0.0
  %vm5513 = vcmask 130048
  %v5515 = vsel %vm5513, %v1500, 0
  %v5518 = vsel %vm5513, %v1501, 0
  %v5521 = vsel %vm5513, %v1502, 0
  %v5524 = vsel %vm5513, %v1503, 0
  %v5527 = vsel %vm5513, %v1504, 0
  %v5530 = vsel %vm5513, %v1505, 0
  %v5533 = vsel %vm5513, %v1506, 0
  %v5536 = vsel %vm5513, %v1507, 0
  %v5539 = vsel %vm5513, %v1508, 0
  %5541 = vmatprep.subr.mxu0 0.0
  %5542 = vmatpush1.msra.mxu0 0.0
  %5543 = vmatprep.subr.mxu0 0.0
  %5544 = vmatpush1.msra.mxu0 0.0
  %5545 = vmatprep.subr.mxu0 0.0
  %5546 = vmatpush1.msra.mxu0 0.0
  %5547 = vmatprep.subr.mxu0 0.0
  %5548 = vmatpush1.msra.mxu0 0.0
  %5549 = vmatprep.subr.mxu0 0.0
  %5550 = vmatpush1.msra.mxu0 0.0
  %5551 = vmatprep.subr.mxu0 0.0
  %5552 = vmatpush1.msra.mxu0 0.0
  %5553 = vmatprep.subr.mxu0 0.0
  %5554 = vmatpush1.msra.mxu0 0.0
  %5555 = vmatprep.subr.mxu0 0.0
  %5556 = vmatpush1.msra.mxu0 0.0
  %5557 = vmatprep.subr.mxu0 0.0
  %5558 = vmatpush1.msra.mxu0 0.0
  %5559 = vmatprep.subr.mxu0 0.0
  %5560 = vmatpush1.msra.mxu0 0.0
  %5561 = vmatprep.subr.mxu0 0.0
  %5562 = vmatpush1.msra.mxu0 0.0
  %5563 = vmatprep.subr.mxu0 0.0
  %5564 = vmatpush1.msra.mxu0 0.0
  %5565 = vmatprep.subr.mxu0 0.0
  %5566 = vmatpush1.msra.mxu0 0.0
  %5567 = vmatprep.subr.mxu0 0.0
  %5568 = vmatpush1.msra.mxu0 0.0
  %5569 = vmatprep.subr.mxu0 %v5512
  %5570 = vmatpush1.msra.mxu0 %v5511
  %5571 = vmatprep.subr.mxu0 %v5510
  %5572 = vmatpush1.msra.mxu0 %v5509
  %5573 = vmatprep.subr.mxu0 0.0
  %5574 = vmatpush2.msra.mxu0 0.0
  %5575 = vmatprep.subr.mxu0 0.0
  %5576 = vmatpush2.msra.mxu0 0.0
  %5577 = vmatprep.subr.mxu0 0.0
  %5578 = vmatpush2.msra.mxu0 0.0
  %5579 = vmatprep.subr.mxu0 0.0
  %5580 = vmatpush2.msra.mxu0 0.0
  %5581 = vmatprep.subr.mxu0 0.0
  %5582 = vmatpush2.msra.mxu0 0.0
  %5583 = vmatprep.subr.mxu0 0.0
  %5584 = vmatpush2.msra.mxu0 0.0
  %5585 = vmatprep.subr.mxu0 0.0
  %5586 = vmatpush2.msra.mxu0 0.0
  %5587 = vmatprep.subr.mxu0 0.0
  %5588 = vmatpush2.msra.mxu0 0.0
  %5589 = vmatprep.subr.mxu0 0.0
  %5590 = vmatpush2.msra.mxu0 0.0
  %5591 = vmatprep.subr.mxu0 0.0
  %5592 = vmatpush2.msra.mxu0 0.0
  %5593 = vmatprep.subr.mxu0 0.0
  %5594 = vmatpush2.msra.mxu0 0.0
  %5595 = vmatprep.subr.mxu0 0.0
  %5596 = vmatpush2.msra.mxu0 0.0
  %5597 = vmatprep.subr.mxu0 0.0
  %5598 = vmatpush2.msra.mxu0 0.0
  %5599 = vmatprep.subr.mxu0 0.0
  %5600 = vmatpush2.msra.mxu0 0.0
  %5601 = vmatprep.subr.mxu0 0.0
  %5602 = vmatpush2.msra.mxu0 0.0
  %5603 = vmatprep.subr.mxu0 0.0
  %5604 = vmatpush2.msra.mxu0 0.0
  %5605 = vmatprep.mubr.f32.mxu0 0.0
  %5606 = vmatmul.mubr.f32.gmra.mxu0 %v5515
  %v5607 = vpop.f32.mrf.mxu0
  %v5608 = vadd.f32 0.0, %v5607
  %v5609 = vpop.f32.mrf.mxu0
  %v5610 = vadd.f32 0.0, %v5609
  %5611 = vmatprep.mubr.f32.mxu0 0.0
  %5612 = vmatmul.mubr.f32.gmra.mxu0 %v5518
  %v5613 = vpop.f32.mrf.mxu0
  %v5614 = vadd.f32 0.0, %v5613
  %v5615 = vpop.f32.mrf.mxu0
  %v5616 = vadd.f32 0.0, %v5615
  %5617 = vmatprep.mubr.f32.mxu0 0.0
  %5618 = vmatmul.mubr.f32.gmra.mxu0 %v5521
  %v5619 = vpop.f32.mrf.mxu0
  %v5620 = vadd.f32 0.0, %v5619
  %v5621 = vpop.f32.mrf.mxu0
  %v5622 = vadd.f32 0.0, %v5621
  %5623 = vmatprep.mubr.f32.mxu0 0.0
  %5624 = vmatmul.mubr.f32.gmra.mxu0 %v5524
  %v5625 = vpop.f32.mrf.mxu0
  %v5626 = vadd.f32 0.0, %v5625
  %v5627 = vpop.f32.mrf.mxu0
  %v5628 = vadd.f32 0.0, %v5627
  %5629 = vmatprep.mubr.f32.mxu0 0.0
  %5630 = vmatmul.mubr.f32.gmra.mxu0 %v5527
  %v5631 = vpop.f32.mrf.mxu0
  %v5632 = vadd.f32 0.0, %v5631
  %v5633 = vpop.f32.mrf.mxu0
  %v5634 = vadd.f32 0.0, %v5633
  %5635 = vmatprep.mubr.f32.mxu0 0.0
  %5636 = vmatmul.mubr.f32.gmra.mxu0 %v5530
  %v5637 = vpop.f32.mrf.mxu0
  %v5638 = vadd.f32 0.0, %v5637
  %v5639 = vpop.f32.mrf.mxu0
  %v5640 = vadd.f32 0.0, %v5639
  %5641 = vmatprep.mubr.f32.mxu0 0.0
  %5642 = vmatmul.mubr.f32.gmra.mxu0 %v5533
  %v5643 = vpop.f32.mrf.mxu0
  %v5644 = vadd.f32 0.0, %v5643
  %v5645 = vpop.f32.mrf.mxu0
  %v5646 = vadd.f32 0.0, %v5645
  %5647 = vmatprep.mubr.f32.mxu0 0.0
  %5648 = vmatmul.mubr.f32.gmra.mxu0 %v5536
  %v5649 = vpop.f32.mrf.mxu0
  %v5650 = vadd.f32 0.0, %v5649
  %v5651 = vpop.f32.mrf.mxu0
  %v5652 = vadd.f32 0.0, %v5651
  %5653 = vmatprep.mubr.f32.mxu0 0.0
  %5654 = vmatmul.mubr.f32.gmra.mxu0 %v5539
  %v5655 = vpop.f32.mrf.mxu0
  %v5656 = vadd.f32 0.0, %v5655
  %v5657 = vpop.f32.mrf.mxu0
  %v5658 = vadd.f32 0.0, %v5657
  %5659 = vdwg.mxu0
  %v5660 = vld [vmem:[%s11] sm:$0xf]
  %v5662 = vlaneseq
  %v5663 = vshrl.u32 %v5662, 7
  %v5664 = vsub.s32 0, %v5663
  %v5665 = vrot.slane %v5660, %v5664
  %v5666 = vlaneseq
  %v5667 = vshrl.u32 %v5666, 7
  %v5668 = vsub.s32 1, %v5667
  %v5669 = vrot.slane %v5660, %v5668
  %v5670 = vlaneseq
  %v5671 = vshrl.u32 %v5670, 7
  %v5672 = vsub.s32 2, %v5671
  %v5673 = vrot.slane %v5660, %v5672
  %v5674 = vlaneseq
  %v5675 = vshrl.u32 %v5674, 7
  %v5676 = vsub.s32 3, %v5675
  %v5677 = vrot.slane %v5660, %v5676
  %5682 = vmatprep.subr.mxu0 %v2146
  %5683 = vmatpush1.msra.mxu0 %v2145
  %5684 = vmatprep.subr.mxu0 %v2142
  %5685 = vmatpush1.msra.mxu0 %v2141
  %5686 = vmatprep.subr.mxu0 %v2138
  %5687 = vmatpush1.msra.mxu0 %v2137
  %5688 = vmatprep.subr.mxu0 %v2134
  %5689 = vmatpush1.msra.mxu0 %v2133
  %5690 = vmatprep.subr.mxu0 %v2130
  %5691 = vmatpush1.msra.mxu0 %v2129
  %5692 = vmatprep.subr.mxu0 %v2126
  %5693 = vmatpush1.msra.mxu0 %v2125
  %5694 = vmatprep.subr.mxu0 %v2122
  %5695 = vmatpush1.msra.mxu0 %v2121
  %5696 = vmatprep.subr.mxu0 %v2118
  %5697 = vmatpush1.msra.mxu0 %v2117
  %5698 = vmatprep.subr.mxu0 %v2114
  %5699 = vmatpush1.msra.mxu0 %v2113
  %5700 = vmatprep.subr.mxu0 %v2110
  %5701 = vmatpush1.msra.mxu0 %v2109
  %5702 = vmatprep.subr.mxu0 %v2106
  %5703 = vmatpush1.msra.mxu0 %v2105
  %5704 = vmatprep.subr.mxu0 %v2102
  %5705 = vmatpush1.msra.mxu0 %v2101
  %5706 = vmatprep.subr.mxu0 %v2098
  %5707 = vmatpush1.msra.mxu0 %v2097
  %5708 = vmatprep.subr.mxu0 %v2094
  %5709 = vmatpush1.msra.mxu0 %v2093
  %5710 = vmatprep.subr.mxu0 %v2090
  %5711 = vmatpush1.msra.mxu0 %v2089
  %5712 = vmatprep.subr.mxu0 %v2086
  %5713 = vmatpush1.msra.mxu0 %v2085
  %5714 = vmatprep.subr.mxu0 %v2210
  %5715 = vmatpush2.msra.mxu0 %v2209
  %5716 = vmatprep.subr.mxu0 %v2206
  %5717 = vmatpush2.msra.mxu0 %v2205
  %5718 = vmatprep.subr.mxu0 %v2202
  %5719 = vmatpush2.msra.mxu0 %v2201
  %5720 = vmatprep.subr.mxu0 %v2198
  %5721 = vmatpush2.msra.mxu0 %v2197
  %5722 = vmatprep.subr.mxu0 %v2194
  %5723 = vmatpush2.msra.mxu0 %v2193
  %5724 = vmatprep.subr.mxu0 %v2190
  %5725 = vmatpush2.msra.mxu0 %v2189
  %5726 = vmatprep.subr.mxu0 %v2186
  %5727 = vmatpush2.msra.mxu0 %v2185
  %5728 = vmatprep.subr.mxu0 %v2182
  %5729 = vmatpush2.msra.mxu0 %v2181
  %5730 = vmatprep.subr.mxu0 %v2178
  %5731 = vmatpush2.msra.mxu0 %v2177
  %5732 = vmatprep.subr.mxu0 %v2174
  %5733 = vmatpush2.msra.mxu0 %v2173
  %5734 = vmatprep.subr.mxu0 %v2170
  %5735 = vmatpush2.msra.mxu0 %v2169
  %5736 = vmatprep.subr.mxu0 %v2166
  %5737 = vmatpush2.msra.mxu0 %v2165
  %5738 = vmatprep.subr.mxu0 %v2162
  %5739 = vmatpush2.msra.mxu0 %v2161
  %5740 = vmatprep.subr.mxu0 %v2158
  %5741 = vmatpush2.msra.mxu0 %v2157
  %5742 = vmatprep.subr.mxu0 %v2154
  %5743 = vmatpush2.msra.mxu0 %v2153
  %5744 = vmatprep.subr.mxu0 %v2150
  %5745 = vmatpush2.msra.mxu0 %v2149
  %5746 = vmatprep.mubr.f32.mxu0 %v5610
  %5747 = vmatmul.mubr.f32.gmra.mxu0 %v5608
  %v5748 = vpop.f32.mrf.mxu0
  %v5749 = vadd.f32 %v5665, %v5748
  %v5750 = vpop.f32.mrf.mxu0
  %v5751 = vadd.f32 %v5669, %v5750
  %5752 = vdwg.mxu0
  %5753 = vmatprep.subr.mxu0 %v2274
  %5754 = vmatpush1.msra.mxu0 %v2273
  %5755 = vmatprep.subr.mxu0 %v2270
  %5756 = vmatpush1.msra.mxu0 %v2269
  %5757 = vmatprep.subr.mxu0 %v2266
  %5758 = vmatpush1.msra.mxu0 %v2265
  %5759 = vmatprep.subr.mxu0 %v2262
  %5760 = vmatpush1.msra.mxu0 %v2261
  %5761 = vmatprep.subr.mxu0 %v2258
  %5762 = vmatpush1.msra.mxu0 %v2257
  %5763 = vmatprep.subr.mxu0 %v2254
  %5764 = vmatpush1.msra.mxu0 %v2253
  %5765 = vmatprep.subr.mxu0 %v2250
  %5766 = vmatpush1.msra.mxu0 %v2249
  %5767 = vmatprep.subr.mxu0 %v2246
  %5768 = vmatpush1.msra.mxu0 %v2245
  %5769 = vmatprep.subr.mxu0 %v2242
  %5770 = vmatpush1.msra.mxu0 %v2241
  %5771 = vmatprep.subr.mxu0 %v2238
  %5772 = vmatpush1.msra.mxu0 %v2237
  %5773 = vmatprep.subr.mxu0 %v2234
  %5774 = vmatpush1.msra.mxu0 %v2233
  %5775 = vmatprep.subr.mxu0 %v2230
  %5776 = vmatpush1.msra.mxu0 %v2229
  %5777 = vmatprep.subr.mxu0 %v2226
  %5778 = vmatpush1.msra.mxu0 %v2225
  %5779 = vmatprep.subr.mxu0 %v2222
  %5780 = vmatpush1.msra.mxu0 %v2221
  %5781 = vmatprep.subr.mxu0 %v2218
  %5782 = vmatpush1.msra.mxu0 %v2217
  %5783 = vmatprep.subr.mxu0 %v2214
  %5784 = vmatpush1.msra.mxu0 %v2213
  %5785 = vmatprep.subr.mxu0 %v2338
  %5786 = vmatpush2.msra.mxu0 %v2337
  %5787 = vmatprep.subr.mxu0 %v2334
  %5788 = vmatpush2.msra.mxu0 %v2333
  %5789 = vmatprep.subr.mxu0 %v2330
  %5790 = vmatpush2.msra.mxu0 %v2329
  %5791 = vmatprep.subr.mxu0 %v2326
  %5792 = vmatpush2.msra.mxu0 %v2325
  %5793 = vmatprep.subr.mxu0 %v2322
  %5794 = vmatpush2.msra.mxu0 %v2321
  %5795 = vmatprep.subr.mxu0 %v2318
  %5796 = vmatpush2.msra.mxu0 %v2317
  %5797 = vmatprep.subr.mxu0 %v2314
  %5798 = vmatpush2.msra.mxu0 %v2313
  %5799 = vmatprep.subr.mxu0 %v2310
  %5800 = vmatpush2.msra.mxu0 %v2309
  %5801 = vmatprep.subr.mxu0 %v2306
  %5802 = vmatpush2.msra.mxu0 %v2305
  %5803 = vmatprep.subr.mxu0 %v2302
  %5804 = vmatpush2.msra.mxu0 %v2301
  %5805 = vmatprep.subr.mxu0 %v2298
  %5806 = vmatpush2.msra.mxu0 %v2297
  %5807 = vmatprep.subr.mxu0 %v2294
  %5808 = vmatpush2.msra.mxu0 %v2293
  %5809 = vmatprep.subr.mxu0 %v2290
  %5810 = vmatpush2.msra.mxu0 %v2289
  %5811 = vmatprep.subr.mxu0 %v2286
  %5812 = vmatpush2.msra.mxu0 %v2285
  %5813 = vmatprep.subr.mxu0 %v2282
  %5814 = vmatpush2.msra.mxu0 %v2281
  %5815 = vmatprep.subr.mxu0 %v2278
  %5816 = vmatpush2.msra.mxu0 %v2277
  %5817 = vmatprep.mubr.f32.mxu0 %v5616
  %5818 = vmatmul.mubr.f32.gmra.mxu0 %v5614
  %v5819 = vpop.f32.mrf.mxu0
  %v5820 = vadd.f32 %v5749, %v5819
  %v5821 = vpop.f32.mrf.mxu0
  %v5822 = vadd.f32 %v5751, %v5821
  %5823 = vdwg.mxu0
  %5824 = vmatprep.subr.mxu0 %v2402
  %5825 = vmatpush1.msra.mxu0 %v2401
  %5826 = vmatprep.subr.mxu0 %v2398
  %5827 = vmatpush1.msra.mxu0 %v2397
  %5828 = vmatprep.subr.mxu0 %v2394
  %5829 = vmatpush1.msra.mxu0 %v2393
  %5830 = vmatprep.subr.mxu0 %v2390
  %5831 = vmatpush1.msra.mxu0 %v2389
  %5832 = vmatprep.subr.mxu0 %v2386
  %5833 = vmatpush1.msra.mxu0 %v2385
  %5834 = vmatprep.subr.mxu0 %v2382
  %5835 = vmatpush1.msra.mxu0 %v2381
  %5836 = vmatprep.subr.mxu0 %v2378
  %5837 = vmatpush1.msra.mxu0 %v2377
  %5838 = vmatprep.subr.mxu0 %v2374
  %5839 = vmatpush1.msra.mxu0 %v2373
  %5840 = vmatprep.subr.mxu0 %v2370
  %5841 = vmatpush1.msra.mxu0 %v2369
  %5842 = vmatprep.subr.mxu0 %v2366
  %5843 = vmatpush1.msra.mxu0 %v2365
  %5844 = vmatprep.subr.mxu0 %v2362
  %5845 = vmatpush1.msra.mxu0 %v2361
  %5846 = vmatprep.subr.mxu0 %v2358
  %5847 = vmatpush1.msra.mxu0 %v2357
  %5848 = vmatprep.subr.mxu0 %v2354
  %5849 = vmatpush1.msra.mxu0 %v2353
  %5850 = vmatprep.subr.mxu0 %v2350
  %5851 = vmatpush1.msra.mxu0 %v2349
  %5852 = vmatprep.subr.mxu0 %v2346
  %5853 = vmatpush1.msra.mxu0 %v2345
  %5854 = vmatprep.subr.mxu0 %v2342
  %5855 = vmatpush1.msra.mxu0 %v2341
  %5856 = vmatprep.subr.mxu0 %v2466
  %5857 = vmatpush2.msra.mxu0 %v2465
  %5858 = vmatprep.subr.mxu0 %v2462
  %5859 = vmatpush2.msra.mxu0 %v2461
  %5860 = vmatprep.subr.mxu0 %v2458
  %5861 = vmatpush2.msra.mxu0 %v2457
  %5862 = vmatprep.subr.mxu0 %v2454
  %5863 = vmatpush2.msra.mxu0 %v2453
  %5864 = vmatprep.subr.mxu0 %v2450
  %5865 = vmatpush2.msra.mxu0 %v2449
  %5866 = vmatprep.subr.mxu0 %v2446
  %5867 = vmatpush2.msra.mxu0 %v2445
  %5868 = vmatprep.subr.mxu0 %v2442
  %5869 = vmatpush2.msra.mxu0 %v2441
  %5870 = vmatprep.subr.mxu0 %v2438
  %5871 = vmatpush2.msra.mxu0 %v2437
  %5872 = vmatprep.subr.mxu0 %v2434
  %5873 = vmatpush2.msra.mxu0 %v2433
  %5874 = vmatprep.subr.mxu0 %v2430
  %5875 = vmatpush2.msra.mxu0 %v2429
  %5876 = vmatprep.subr.mxu0 %v2426
  %5877 = vmatpush2.msra.mxu0 %v2425
  %5878 = vmatprep.subr.mxu0 %v2422
  %5879 = vmatpush2.msra.mxu0 %v2421
  %5880 = vmatprep.subr.mxu0 %v2418
  %5881 = vmatpush2.msra.mxu0 %v2417
  %5882 = vmatprep.subr.mxu0 %v2414
  %5883 = vmatpush2.msra.mxu0 %v2413
  %5884 = vmatprep.subr.mxu0 %v2410
  %5885 = vmatpush2.msra.mxu0 %v2409
  %5886 = vmatprep.subr.mxu0 %v2406
  %5887 = vmatpush2.msra.mxu0 %v2405
  %5888 = vmatprep.mubr.f32.mxu0 %v5622
  %5889 = vmatmul.mubr.f32.gmra.mxu0 %v5620
  %v5890 = vpop.f32.mrf.mxu0
  %v5891 = vadd.f32 %v5820, %v5890
  %v5892 = vpop.f32.mrf.mxu0
  %v5893 = vadd.f32 %v5822, %v5892
  %5894 = vdwg.mxu0
  %5895 = vmatprep.subr.mxu0 %v2530
  %5896 = vmatpush1.msra.mxu0 %v2529
  %5897 = vmatprep.subr.mxu0 %v2526
  %5898 = vmatpush1.msra.mxu0 %v2525
  %5899 = vmatprep.subr.mxu0 %v2522
  %5900 = vmatpush1.msra.mxu0 %v2521
  %5901 = vmatprep.subr.mxu0 %v2518
  %5902 = vmatpush1.msra.mxu0 %v2517
  %5903 = vmatprep.subr.mxu0 %v2514
  %5904 = vmatpush1.msra.mxu0 %v2513
  %5905 = vmatprep.subr.mxu0 %v2510
  %5906 = vmatpush1.msra.mxu0 %v2509
  %5907 = vmatprep.subr.mxu0 %v2506
  %5908 = vmatpush1.msra.mxu0 %v2505
  %5909 = vmatprep.subr.mxu0 %v2502
  %5910 = vmatpush1.msra.mxu0 %v2501
  %5911 = vmatprep.subr.mxu0 %v2498
  %5912 = vmatpush1.msra.mxu0 %v2497
  %5913 = vmatprep.subr.mxu0 %v2494
  %5914 = vmatpush1.msra.mxu0 %v2493
  %5915 = vmatprep.subr.mxu0 %v2490
  %5916 = vmatpush1.msra.mxu0 %v2489
  %5917 = vmatprep.subr.mxu0 %v2486
  %5918 = vmatpush1.msra.mxu0 %v2485
  %5919 = vmatprep.subr.mxu0 %v2482
  %5920 = vmatpush1.msra.mxu0 %v2481
  %5921 = vmatprep.subr.mxu0 %v2478
  %5922 = vmatpush1.msra.mxu0 %v2477
  %5923 = vmatprep.subr.mxu0 %v2474
  %5924 = vmatpush1.msra.mxu0 %v2473
  %5925 = vmatprep.subr.mxu0 %v2470
  %5926 = vmatpush1.msra.mxu0 %v2469
  %5927 = vmatprep.subr.mxu0 %v2594
  %5928 = vmatpush2.msra.mxu0 %v2593
  %5929 = vmatprep.subr.mxu0 %v2590
  %5930 = vmatpush2.msra.mxu0 %v2589
  %5931 = vmatprep.subr.mxu0 %v2586
  %5932 = vmatpush2.msra.mxu0 %v2585
  %5933 = vmatprep.subr.mxu0 %v2582
  %5934 = vmatpush2.msra.mxu0 %v2581
  %5935 = vmatprep.subr.mxu0 %v2578
  %5936 = vmatpush2.msra.mxu0 %v2577
  %5937 = vmatprep.subr.mxu0 %v2574
  %5938 = vmatpush2.msra.mxu0 %v2573
  %5939 = vmatprep.subr.mxu0 %v2570
  %5940 = vmatpush2.msra.mxu0 %v2569
  %5941 = vmatprep.subr.mxu0 %v2566
  %5942 = vmatpush2.msra.mxu0 %v2565
  %5943 = vmatprep.subr.mxu0 %v2562
  %5944 = vmatpush2.msra.mxu0 %v2561
  %5945 = vmatprep.subr.mxu0 %v2558
  %5946 = vmatpush2.msra.mxu0 %v2557
  %5947 = vmatprep.subr.mxu0 %v2554
  %5948 = vmatpush2.msra.mxu0 %v2553
  %5949 = vmatprep.subr.mxu0 %v2550
  %5950 = vmatpush2.msra.mxu0 %v2549
  %5951 = vmatprep.subr.mxu0 %v2546
  %5952 = vmatpush2.msra.mxu0 %v2545
  %5953 = vmatprep.subr.mxu0 %v2542
  %5954 = vmatpush2.msra.mxu0 %v2541
  %5955 = vmatprep.subr.mxu0 %v2538
  %5956 = vmatpush2.msra.mxu0 %v2537
  %5957 = vmatprep.subr.mxu0 %v2534
  %5958 = vmatpush2.msra.mxu0 %v2533
  %5959 = vmatprep.mubr.f32.mxu0 %v5628
  %5960 = vmatmul.mubr.f32.gmra.mxu0 %v5626
  %v5961 = vpop.f32.mrf.mxu0
  %v5962 = vadd.f32 %v5891, %v5961
  %v5963 = vpop.f32.mrf.mxu0
  %v5964 = vadd.f32 %v5893, %v5963
  %5965 = vdwg.mxu0
  %5966 = vmatprep.subr.mxu0 %v2658
  %5967 = vmatpush1.msra.mxu0 %v2657
  %5968 = vmatprep.subr.mxu0 %v2654
  %5969 = vmatpush1.msra.mxu0 %v2653
  %5970 = vmatprep.subr.mxu0 %v2650
  %5971 = vmatpush1.msra.mxu0 %v2649
  %5972 = vmatprep.subr.mxu0 %v2646
  %5973 = vmatpush1.msra.mxu0 %v2645
  %5974 = vmatprep.subr.mxu0 %v2642
  %5975 = vmatpush1.msra.mxu0 %v2641
  %5976 = vmatprep.subr.mxu0 %v2638
  %5977 = vmatpush1.msra.mxu0 %v2637
  %5978 = vmatprep.subr.mxu0 %v2634
  %5979 = vmatpush1.msra.mxu0 %v2633
  %5980 = vmatprep.subr.mxu0 %v2630
  %5981 = vmatpush1.msra.mxu0 %v2629
  %5982 = vmatprep.subr.mxu0 %v2626
  %5983 = vmatpush1.msra.mxu0 %v2625
  %5984 = vmatprep.subr.mxu0 %v2622
  %5985 = vmatpush1.msra.mxu0 %v2621
  %5986 = vmatprep.subr.mxu0 %v2618
  %5987 = vmatpush1.msra.mxu0 %v2617
  %5988 = vmatprep.subr.mxu0 %v2614
  %5989 = vmatpush1.msra.mxu0 %v2613
  %5990 = vmatprep.subr.mxu0 %v2610
  %5991 = vmatpush1.msra.mxu0 %v2609
  %5992 = vmatprep.subr.mxu0 %v2606
  %5993 = vmatpush1.msra.mxu0 %v2605
  %5994 = vmatprep.subr.mxu0 %v2602
  %5995 = vmatpush1.msra.mxu0 %v2601
  %5996 = vmatprep.subr.mxu0 %v2598
  %5997 = vmatpush1.msra.mxu0 %v2597
  %5998 = vmatprep.subr.mxu0 %v2722
  %5999 = vmatpush2.msra.mxu0 %v2721
  %6000 = vmatprep.subr.mxu0 %v2718
  %6001 = vmatpush2.msra.mxu0 %v2717
  %6002 = vmatprep.subr.mxu0 %v2714
  %6003 = vmatpush2.msra.mxu0 %v2713
  %6004 = vmatprep.subr.mxu0 %v2710
  %6005 = vmatpush2.msra.mxu0 %v2709
  %6006 = vmatprep.subr.mxu0 %v2706
  %6007 = vmatpush2.msra.mxu0 %v2705
  %6008 = vmatprep.subr.mxu0 %v2702
  %6009 = vmatpush2.msra.mxu0 %v2701
  %6010 = vmatprep.subr.mxu0 %v2698
  %6011 = vmatpush2.msra.mxu0 %v2697
  %6012 = vmatprep.subr.mxu0 %v2694
  %6013 = vmatpush2.msra.mxu0 %v2693
  %6014 = vmatprep.subr.mxu0 %v2690
  %6015 = vmatpush2.msra.mxu0 %v2689
  %6016 = vmatprep.subr.mxu0 %v2686
  %6017 = vmatpush2.msra.mxu0 %v2685
  %6018 = vmatprep.subr.mxu0 %v2682
  %6019 = vmatpush2.msra.mxu0 %v2681
  %6020 = vmatprep.subr.mxu0 %v2678
  %6021 = vmatpush2.msra.mxu0 %v2677
  %6022 = vmatprep.subr.mxu0 %v2674
  %6023 = vmatpush2.msra.mxu0 %v2673
  %6024 = vmatprep.subr.mxu0 %v2670
  %6025 = vmatpush2.msra.mxu0 %v2669
  %6026 = vmatprep.subr.mxu0 %v2666
  %6027 = vmatpush2.msra.mxu0 %v2665
  %6028 = vmatprep.subr.mxu0 %v2662
  %6029 = vmatpush2.msra.mxu0 %v2661
  %6030 = vmatprep.mubr.f32.mxu0 %v5634
  %6031 = vmatmul.mubr.f32.gmra.mxu0 %v5632
  %v6032 = vpop.f32.mrf.mxu0
  %v6033 = vadd.f32 %v5962, %v6032
  %v6034 = vpop.f32.mrf.mxu0
  %v6035 = vadd.f32 %v5964, %v6034
  %6036 = vdwg.mxu0
  %6037 = vmatprep.subr.mxu0 %v2786
  %6038 = vmatpush1.msra.mxu0 %v2785
  %6039 = vmatprep.subr.mxu0 %v2782
  %6040 = vmatpush1.msra.mxu0 %v2781
  %6041 = vmatprep.subr.mxu0 %v2778
  %6042 = vmatpush1.msra.mxu0 %v2777
  %6043 = vmatprep.subr.mxu0 %v2774
  %6044 = vmatpush1.msra.mxu0 %v2773
  %6045 = vmatprep.subr.mxu0 %v2770
  %6046 = vmatpush1.msra.mxu0 %v2769
  %6047 = vmatprep.subr.mxu0 %v2766
  %6048 = vmatpush1.msra.mxu0 %v2765
  %6049 = vmatprep.subr.mxu0 %v2762
  %6050 = vmatpush1.msra.mxu0 %v2761
  %6051 = vmatprep.subr.mxu0 %v2758
  %6052 = vmatpush1.msra.mxu0 %v2757
  %6053 = vmatprep.subr.mxu0 %v2754
  %6054 = vmatpush1.msra.mxu0 %v2753
  %6055 = vmatprep.subr.mxu0 %v2750
  %6056 = vmatpush1.msra.mxu0 %v2749
  %6057 = vmatprep.subr.mxu0 %v2746
  %6058 = vmatpush1.msra.mxu0 %v2745
  %6059 = vmatprep.subr.mxu0 %v2742
  %6060 = vmatpush1.msra.mxu0 %v2741
  %6061 = vmatprep.subr.mxu0 %v2738
  %6062 = vmatpush1.msra.mxu0 %v2737
  %6063 = vmatprep.subr.mxu0 %v2734
  %6064 = vmatpush1.msra.mxu0 %v2733
  %6065 = vmatprep.subr.mxu0 %v2730
  %6066 = vmatpush1.msra.mxu0 %v2729
  %6067 = vmatprep.subr.mxu0 %v2726
  %6068 = vmatpush1.msra.mxu0 %v2725
  %6069 = vmatprep.subr.mxu0 %v2850
  %6070 = vmatpush2.msra.mxu0 %v2849
  %6071 = vmatprep.subr.mxu0 %v2846
  %6072 = vmatpush2.msra.mxu0 %v2845
  %6073 = vmatprep.subr.mxu0 %v2842
  %6074 = vmatpush2.msra.mxu0 %v2841
  %6075 = vmatprep.subr.mxu0 %v2838
  %6076 = vmatpush2.msra.mxu0 %v2837
  %6077 = vmatprep.subr.mxu0 %v2834
  %6078 = vmatpush2.msra.mxu0 %v2833
  %6079 = vmatprep.subr.mxu0 %v2830
  %6080 = vmatpush2.msra.mxu0 %v2829
  %6081 = vmatprep.subr.mxu0 %v2826
  %6082 = vmatpush2.msra.mxu0 %v2825
  %6083 = vmatprep.subr.mxu0 %v2822
  %6084 = vmatpush2.msra.mxu0 %v2821
  %6085 = vmatprep.subr.mxu0 %v2818
  %6086 = vmatpush2.msra.mxu0 %v2817
  %6087 = vmatprep.subr.mxu0 %v2814
  %6088 = vmatpush2.msra.mxu0 %v2813
  %6089 = vmatprep.subr.mxu0 %v2810
  %6090 = vmatpush2.msra.mxu0 %v2809
  %6091 = vmatprep.subr.mxu0 %v2806
  %6092 = vmatpush2.msra.mxu0 %v2805
  %6093 = vmatprep.subr.mxu0 %v2802
  %6094 = vmatpush2.msra.mxu0 %v2801
  %6095 = vmatprep.subr.mxu0 %v2798
  %6096 = vmatpush2.msra.mxu0 %v2797
  %6097 = vmatprep.subr.mxu0 %v2794
  %6098 = vmatpush2.msra.mxu0 %v2793
  %6099 = vmatprep.subr.mxu0 %v2790
  %6100 = vmatpush2.msra.mxu0 %v2789
  %6101 = vmatprep.mubr.f32.mxu0 %v5640
  %6102 = vmatmul.mubr.f32.gmra.mxu0 %v5638
  %v6103 = vpop.f32.mrf.mxu0
  %v6104 = vadd.f32 %v6033, %v6103
  %v6105 = vpop.f32.mrf.mxu0
  %v6106 = vadd.f32 %v6035, %v6105
  %6107 = vdwg.mxu0
  %6108 = vmatprep.subr.mxu0 %v2914
  %6109 = vmatpush1.msra.mxu0 %v2913
  %6110 = vmatprep.subr.mxu0 %v2910
  %6111 = vmatpush1.msra.mxu0 %v2909
  %6112 = vmatprep.subr.mxu0 %v2906
  %6113 = vmatpush1.msra.mxu0 %v2905
  %6114 = vmatprep.subr.mxu0 %v2902
  %6115 = vmatpush1.msra.mxu0 %v2901
  %6116 = vmatprep.subr.mxu0 %v2898
  %6117 = vmatpush1.msra.mxu0 %v2897
  %6118 = vmatprep.subr.mxu0 %v2894
  %6119 = vmatpush1.msra.mxu0 %v2893
  %6120 = vmatprep.subr.mxu0 %v2890
  %6121 = vmatpush1.msra.mxu0 %v2889
  %6122 = vmatprep.subr.mxu0 %v2886
  %6123 = vmatpush1.msra.mxu0 %v2885
  %6124 = vmatprep.subr.mxu0 %v2882
  %6125 = vmatpush1.msra.mxu0 %v2881
  %6126 = vmatprep.subr.mxu0 %v2878
  %6127 = vmatpush1.msra.mxu0 %v2877
  %6128 = vmatprep.subr.mxu0 %v2874
  %6129 = vmatpush1.msra.mxu0 %v2873
  %6130 = vmatprep.subr.mxu0 %v2870
  %6131 = vmatpush1.msra.mxu0 %v2869
  %6132 = vmatprep.subr.mxu0 %v2866
  %6133 = vmatpush1.msra.mxu0 %v2865
  %6134 = vmatprep.subr.mxu0 %v2862
  %6135 = vmatpush1.msra.mxu0 %v2861
  %6136 = vmatprep.subr.mxu0 %v2858
  %6137 = vmatpush1.msra.mxu0 %v2857
  %6138 = vmatprep.subr.mxu0 %v2854
  %6139 = vmatpush1.msra.mxu0 %v2853
  %6140 = vmatprep.subr.mxu0 %v2978
  %6141 = vmatpush2.msra.mxu0 %v2977
  %6142 = vmatprep.subr.mxu0 %v2974
  %6143 = vmatpush2.msra.mxu0 %v2973
  %6144 = vmatprep.subr.mxu0 %v2970
  %6145 = vmatpush2.msra.mxu0 %v2969
  %6146 = vmatprep.subr.mxu0 %v2966
  %6147 = vmatpush2.msra.mxu0 %v2965
  %6148 = vmatprep.subr.mxu0 %v2962
  %6149 = vmatpush2.msra.mxu0 %v2961
  %6150 = vmatprep.subr.mxu0 %v2958
  %6151 = vmatpush2.msra.mxu0 %v2957
  %6152 = vmatprep.subr.mxu0 %v2954
  %6153 = vmatpush2.msra.mxu0 %v2953
  %6154 = vmatprep.subr.mxu0 %v2950
  %6155 = vmatpush2.msra.mxu0 %v2949
  %6156 = vmatprep.subr.mxu0 %v2946
  %6157 = vmatpush2.msra.mxu0 %v2945
  %6158 = vmatprep.subr.mxu0 %v2942
  %6159 = vmatpush2.msra.mxu0 %v2941
  %6160 = vmatprep.subr.mxu0 %v2938
  %6161 = vmatpush2.msra.mxu0 %v2937
  %6162 = vmatprep.subr.mxu0 %v2934
  %6163 = vmatpush2.msra.mxu0 %v2933
  %6164 = vmatprep.subr.mxu0 %v2930
  %6165 = vmatpush2.msra.mxu0 %v2929
  %6166 = vmatprep.subr.mxu0 %v2926
  %6167 = vmatpush2.msra.mxu0 %v2925
  %6168 = vmatprep.subr.mxu0 %v2922
  %6169 = vmatpush2.msra.mxu0 %v2921
  %6170 = vmatprep.subr.mxu0 %v2918
  %6171 = vmatpush2.msra.mxu0 %v2917
  %6172 = vmatprep.mubr.f32.mxu0 %v5646
  %6173 = vmatmul.mubr.f32.gmra.mxu0 %v5644
  %v6174 = vpop.f32.mrf.mxu0
  %v6175 = vadd.f32 %v6104, %v6174
  %v6176 = vpop.f32.mrf.mxu0
  %v6177 = vadd.f32 %v6106, %v6176
  %6178 = vdwg.mxu0
  %6179 = vmatprep.subr.mxu0 %v3042
  %6180 = vmatpush1.msra.mxu0 %v3041
  %6181 = vmatprep.subr.mxu0 %v3038
  %6182 = vmatpush1.msra.mxu0 %v3037
  %6183 = vmatprep.subr.mxu0 %v3034
  %6184 = vmatpush1.msra.mxu0 %v3033
  %6185 = vmatprep.subr.mxu0 %v3030
  %6186 = vmatpush1.msra.mxu0 %v3029
  %6187 = vmatprep.subr.mxu0 %v3026
  %6188 = vmatpush1.msra.mxu0 %v3025
  %6189 = vmatprep.subr.mxu0 %v3022
  %6190 = vmatpush1.msra.mxu0 %v3021
  %6191 = vmatprep.subr.mxu0 %v3018
  %6192 = vmatpush1.msra.mxu0 %v3017
  %6193 = vmatprep.subr.mxu0 %v3014
  %6194 = vmatpush1.msra.mxu0 %v3013
  %6195 = vmatprep.subr.mxu0 %v3010
  %6196 = vmatpush1.msra.mxu0 %v3009
  %6197 = vmatprep.subr.mxu0 %v3006
  %6198 = vmatpush1.msra.mxu0 %v3005
  %6199 = vmatprep.subr.mxu0 %v3002
  %6200 = vmatpush1.msra.mxu0 %v3001
  %6201 = vmatprep.subr.mxu0 %v2998
  %6202 = vmatpush1.msra.mxu0 %v2997
  %6203 = vmatprep.subr.mxu0 %v2994
  %6204 = vmatpush1.msra.mxu0 %v2993
  %6205 = vmatprep.subr.mxu0 %v2990
  %6206 = vmatpush1.msra.mxu0 %v2989
  %6207 = vmatprep.subr.mxu0 %v2986
  %6208 = vmatpush1.msra.mxu0 %v2985
  %6209 = vmatprep.subr.mxu0 %v2982
  %6210 = vmatpush1.msra.mxu0 %v2981
  %6211 = vmatprep.subr.mxu0 %v3106
  %6212 = vmatpush2.msra.mxu0 %v3105
  %6213 = vmatprep.subr.mxu0 %v3102
  %6214 = vmatpush2.msra.mxu0 %v3101
  %6215 = vmatprep.subr.mxu0 %v3098
  %6216 = vmatpush2.msra.mxu0 %v3097
  %6217 = vmatprep.subr.mxu0 %v3094
  %6218 = vmatpush2.msra.mxu0 %v3093
  %6219 = vmatprep.subr.mxu0 %v3090
  %6220 = vmatpush2.msra.mxu0 %v3089
  %6221 = vmatprep.subr.mxu0 %v3086
  %6222 = vmatpush2.msra.mxu0 %v3085
  %6223 = vmatprep.subr.mxu0 %v3082
  %6224 = vmatpush2.msra.mxu0 %v3081
  %6225 = vmatprep.subr.mxu0 %v3078
  %6226 = vmatpush2.msra.mxu0 %v3077
  %6227 = vmatprep.subr.mxu0 %v3074
  %6228 = vmatpush2.msra.mxu0 %v3073
  %6229 = vmatprep.subr.mxu0 %v3070
  %6230 = vmatpush2.msra.mxu0 %v3069
  %6231 = vmatprep.subr.mxu0 %v3066
  %6232 = vmatpush2.msra.mxu0 %v3065
  %6233 = vmatprep.subr.mxu0 %v3062
  %6234 = vmatpush2.msra.mxu0 %v3061
  %6235 = vmatprep.subr.mxu0 %v3058
  %6236 = vmatpush2.msra.mxu0 %v3057
  %6237 = vmatprep.subr.mxu0 %v3054
  %6238 = vmatpush2.msra.mxu0 %v3053
  %6239 = vmatprep.subr.mxu0 %v3050
  %6240 = vmatpush2.msra.mxu0 %v3049
  %6241 = vmatprep.subr.mxu0 %v3046
  %6242 = vmatpush2.msra.mxu0 %v3045
  %6243 = vmatprep.mubr.f32.mxu0 %v5652
  %6244 = vmatmul.mubr.f32.gmra.mxu0 %v5650
  %v6245 = vpop.f32.mrf.mxu0
  %v6246 = vadd.f32 %v6175, %v6245
  %v6247 = vpop.f32.mrf.mxu0
  %v6248 = vadd.f32 %v6177, %v6247
  %6249 = vdwg.mxu0
  %6250 = vmatprep.subr.mxu0 %v3170
  %6251 = vmatpush1.msra.mxu0 %v3169
  %6252 = vmatprep.subr.mxu0 %v3166
  %6253 = vmatpush1.msra.mxu0 %v3165
  %6254 = vmatprep.subr.mxu0 %v3162
  %6255 = vmatpush1.msra.mxu0 %v3161
  %6256 = vmatprep.subr.mxu0 %v3158
  %6257 = vmatpush1.msra.mxu0 %v3157
  %6258 = vmatprep.subr.mxu0 %v3154
  %6259 = vmatpush1.msra.mxu0 %v3153
  %6260 = vmatprep.subr.mxu0 %v3150
  %6261 = vmatpush1.msra.mxu0 %v3149
  %6262 = vmatprep.subr.mxu0 %v3146
  %6263 = vmatpush1.msra.mxu0 %v3145
  %6264 = vmatprep.subr.mxu0 %v3142
  %6265 = vmatpush1.msra.mxu0 %v3141
  %6266 = vmatprep.subr.mxu0 %v3138
  %6267 = vmatpush1.msra.mxu0 %v3137
  %6268 = vmatprep.subr.mxu0 %v3134
  %6269 = vmatpush1.msra.mxu0 %v3133
  %6270 = vmatprep.subr.mxu0 %v3130
  %6271 = vmatpush1.msra.mxu0 %v3129
  %6272 = vmatprep.subr.mxu0 %v3126
  %6273 = vmatpush1.msra.mxu0 %v3125
  %6274 = vmatprep.subr.mxu0 %v3122
  %6275 = vmatpush1.msra.mxu0 %v3121
  %6276 = vmatprep.subr.mxu0 %v3118
  %6277 = vmatpush1.msra.mxu0 %v3117
  %6278 = vmatprep.subr.mxu0 %v3114
  %6279 = vmatpush1.msra.mxu0 %v3113
  %6280 = vmatprep.subr.mxu0 %v3110
  %6281 = vmatpush1.msra.mxu0 %v3109
  %6282 = vmatprep.subr.mxu0 %v3234
  %6283 = vmatpush2.msra.mxu0 %v3233
  %6284 = vmatprep.subr.mxu0 %v3230
  %6285 = vmatpush2.msra.mxu0 %v3229
  %6286 = vmatprep.subr.mxu0 %v3226
  %6287 = vmatpush2.msra.mxu0 %v3225
  %6288 = vmatprep.subr.mxu0 %v3222
  %6289 = vmatpush2.msra.mxu0 %v3221
  %6290 = vmatprep.subr.mxu0 %v3218
  %6291 = vmatpush2.msra.mxu0 %v3217
  %6292 = vmatprep.subr.mxu0 %v3214
  %6293 = vmatpush2.msra.mxu0 %v3213
  %6294 = vmatprep.subr.mxu0 %v3210
  %6295 = vmatpush2.msra.mxu0 %v3209
  %6296 = vmatprep.subr.mxu0 %v3206
  %6297 = vmatpush2.msra.mxu0 %v3205
  %6298 = vmatprep.subr.mxu0 %v3202
  %6299 = vmatpush2.msra.mxu0 %v3201
  %6300 = vmatprep.subr.mxu0 %v3198
  %6301 = vmatpush2.msra.mxu0 %v3197
  %6302 = vmatprep.subr.mxu0 %v3194
  %6303 = vmatpush2.msra.mxu0 %v3193
  %6304 = vmatprep.subr.mxu0 %v3190
  %6305 = vmatpush2.msra.mxu0 %v3189
  %6306 = vmatprep.subr.mxu0 %v3186
  %6307 = vmatpush2.msra.mxu0 %v3185
  %6308 = vmatprep.subr.mxu0 %v3182
  %6309 = vmatpush2.msra.mxu0 %v3181
  %6310 = vmatprep.subr.mxu0 %v3178
  %6311 = vmatpush2.msra.mxu0 %v3177
  %6312 = vmatprep.subr.mxu0 %v3174
  %6313 = vmatpush2.msra.mxu0 %v3173
  %6314 = vmatprep.mubr.f32.mxu0 %v5658
  %6315 = vmatmul.mubr.f32.gmra.mxu0 %v5656
  %v6316 = vpop.f32.mrf.mxu0
  %v6317 = vadd.f32 %v6246, %v6316
  %v6318 = vpop.f32.mrf.mxu0
  %v6319 = vadd.f32 %v6248, %v6318
  %6320 = vdwg.mxu0
  %6321 = vmatprep.subr.mxu0 %v2148
  %6322 = vmatpush1.msra.mxu0 %v2147
  %6323 = vmatprep.subr.mxu0 %v2144
  %6324 = vmatpush1.msra.mxu0 %v2143
  %6325 = vmatprep.subr.mxu0 %v2140
  %6326 = vmatpush1.msra.mxu0 %v2139
  %6327 = vmatprep.subr.mxu0 %v2136
  %6328 = vmatpush1.msra.mxu0 %v2135
  %6329 = vmatprep.subr.mxu0 %v2132
  %6330 = vmatpush1.msra.mxu0 %v2131
  %6331 = vmatprep.subr.mxu0 %v2128
  %6332 = vmatpush1.msra.mxu0 %v2127
  %6333 = vmatprep.subr.mxu0 %v2124
  %6334 = vmatpush1.msra.mxu0 %v2123
  %6335 = vmatprep.subr.mxu0 %v2120
  %6336 = vmatpush1.msra.mxu0 %v2119
  %6337 = vmatprep.subr.mxu0 %v2116
  %6338 = vmatpush1.msra.mxu0 %v2115
  %6339 = vmatprep.subr.mxu0 %v2112
  %6340 = vmatpush1.msra.mxu0 %v2111
  %6341 = vmatprep.subr.mxu0 %v2108
  %6342 = vmatpush1.msra.mxu0 %v2107
  %6343 = vmatprep.subr.mxu0 %v2104
  %6344 = vmatpush1.msra.mxu0 %v2103
  %6345 = vmatprep.subr.mxu0 %v2100
  %6346 = vmatpush1.msra.mxu0 %v2099
  %6347 = vmatprep.subr.mxu0 %v2096
  %6348 = vmatpush1.msra.mxu0 %v2095
  %6349 = vmatprep.subr.mxu0 %v2092
  %6350 = vmatpush1.msra.mxu0 %v2091
  %6351 = vmatprep.subr.mxu0 %v2088
  %6352 = vmatpush1.msra.mxu0 %v2087
  %6353 = vmatprep.subr.mxu0 %v2212
  %6354 = vmatpush2.msra.mxu0 %v2211
  %6355 = vmatprep.subr.mxu0 %v2208
  %6356 = vmatpush2.msra.mxu0 %v2207
  %6357 = vmatprep.subr.mxu0 %v2204
  %6358 = vmatpush2.msra.mxu0 %v2203
  %6359 = vmatprep.subr.mxu0 %v2200
  %6360 = vmatpush2.msra.mxu0 %v2199
  %6361 = vmatprep.subr.mxu0 %v2196
  %6362 = vmatpush2.msra.mxu0 %v2195
  %6363 = vmatprep.subr.mxu0 %v2192
  %6364 = vmatpush2.msra.mxu0 %v2191
  %6365 = vmatprep.subr.mxu0 %v2188
  %6366 = vmatpush2.msra.mxu0 %v2187
  %6367 = vmatprep.subr.mxu0 %v2184
  %6368 = vmatpush2.msra.mxu0 %v2183
  %6369 = vmatprep.subr.mxu0 %v2180
  %6370 = vmatpush2.msra.mxu0 %v2179
  %6371 = vmatprep.subr.mxu0 %v2176
  %6372 = vmatpush2.msra.mxu0 %v2175
  %6373 = vmatprep.subr.mxu0 %v2172
  %6374 = vmatpush2.msra.mxu0 %v2171
  %6375 = vmatprep.subr.mxu0 %v2168
  %6376 = vmatpush2.msra.mxu0 %v2167
  %6377 = vmatprep.subr.mxu0 %v2164
  %6378 = vmatpush2.msra.mxu0 %v2163
  %6379 = vmatprep.subr.mxu0 %v2160
  %6380 = vmatpush2.msra.mxu0 %v2159
  %6381 = vmatprep.subr.mxu0 %v2156
  %6382 = vmatpush2.msra.mxu0 %v2155
  %6383 = vmatprep.subr.mxu0 %v2152
  %6384 = vmatpush2.msra.mxu0 %v2151
  %6385 = vmatprep.mubr.f32.mxu0 %v5610
  %6386 = vmatmul.mubr.f32.gmra.mxu0 %v5608
  %v6387 = vpop.f32.mrf.mxu0
  %v6388 = vadd.f32 %v5673, %v6387
  %v6389 = vpop.f32.mrf.mxu0
  %v6390 = vadd.f32 %v5677, %v6389
  %6391 = vdwg.mxu0
  %6392 = vmatprep.subr.mxu0 %v2276
  %6393 = vmatpush1.msra.mxu0 %v2275
  %6394 = vmatprep.subr.mxu0 %v2272
  %6395 = vmatpush1.msra.mxu0 %v2271
  %6396 = vmatprep.subr.mxu0 %v2268
  %6397 = vmatpush1.msra.mxu0 %v2267
  %6398 = vmatprep.subr.mxu0 %v2264
  %6399 = vmatpush1.msra.mxu0 %v2263
  %6400 = vmatprep.subr.mxu0 %v2260
  %6401 = vmatpush1.msra.mxu0 %v2259
  %6402 = vmatprep.subr.mxu0 %v2256
  %6403 = vmatpush1.msra.mxu0 %v2255
  %6404 = vmatprep.subr.mxu0 %v2252
  %6405 = vmatpush1.msra.mxu0 %v2251
  %6406 = vmatprep.subr.mxu0 %v2248
  %6407 = vmatpush1.msra.mxu0 %v2247
  %6408 = vmatprep.subr.mxu0 %v2244
  %6409 = vmatpush1.msra.mxu0 %v2243
  %6410 = vmatprep.subr.mxu0 %v2240
  %6411 = vmatpush1.msra.mxu0 %v2239
  %6412 = vmatprep.subr.mxu0 %v2236
  %6413 = vmatpush1.msra.mxu0 %v2235
  %6414 = vmatprep.subr.mxu0 %v2232
  %6415 = vmatpush1.msra.mxu0 %v2231
  %6416 = vmatprep.subr.mxu0 %v2228
  %6417 = vmatpush1.msra.mxu0 %v2227
  %6418 = vmatprep.subr.mxu0 %v2224
  %6419 = vmatpush1.msra.mxu0 %v2223
  %6420 = vmatprep.subr.mxu0 %v2220
  %6421 = vmatpush1.msra.mxu0 %v2219
  %6422 = vmatprep.subr.mxu0 %v2216
  %6423 = vmatpush1.msra.mxu0 %v2215
  %6424 = vmatprep.subr.mxu0 %v2340
  %6425 = vmatpush2.msra.mxu0 %v2339
  %6426 = vmatprep.subr.mxu0 %v2336
  %6427 = vmatpush2.msra.mxu0 %v2335
  %6428 = vmatprep.subr.mxu0 %v2332
  %6429 = vmatpush2.msra.mxu0 %v2331
  %6430 = vmatprep.subr.mxu0 %v2328
  %6431 = vmatpush2.msra.mxu0 %v2327
  %6432 = vmatprep.subr.mxu0 %v2324
  %6433 = vmatpush2.msra.mxu0 %v2323
  %6434 = vmatprep.subr.mxu0 %v2320
  %6435 = vmatpush2.msra.mxu0 %v2319
  %6436 = vmatprep.subr.mxu0 %v2316
  %6437 = vmatpush2.msra.mxu0 %v2315
  %6438 = vmatprep.subr.mxu0 %v2312
  %6439 = vmatpush2.msra.mxu0 %v2311
  %6440 = vmatprep.subr.mxu0 %v2308
  %6441 = vmatpush2.msra.mxu0 %v2307
  %6442 = vmatprep.subr.mxu0 %v2304
  %6443 = vmatpush2.msra.mxu0 %v2303
  %6444 = vmatprep.subr.mxu0 %v2300
  %6445 = vmatpush2.msra.mxu0 %v2299
  %6446 = vmatprep.subr.mxu0 %v2296
  %6447 = vmatpush2.msra.mxu0 %v2295
  %6448 = vmatprep.subr.mxu0 %v2292
  %6449 = vmatpush2.msra.mxu0 %v2291
  %6450 = vmatprep.subr.mxu0 %v2288
  %6451 = vmatpush2.msra.mxu0 %v2287
  %6452 = vmatprep.subr.mxu0 %v2284
  %6453 = vmatpush2.msra.mxu0 %v2283
  %6454 = vmatprep.subr.mxu0 %v2280
  %6455 = vmatpush2.msra.mxu0 %v2279
  %6456 = vmatprep.mubr.f32.mxu0 %v5616
  %6457 = vmatmul.mubr.f32.gmra.mxu0 %v5614
  %v6458 = vpop.f32.mrf.mxu0
  %v6459 = vadd.f32 %v6388, %v6458
  %v6460 = vpop.f32.mrf.mxu0
  %v6461 = vadd.f32 %v6390, %v6460
  %6462 = vdwg.mxu0
  %6463 = vmatprep.subr.mxu0 %v2404
  %6464 = vmatpush1.msra.mxu0 %v2403
  %6465 = vmatprep.subr.mxu0 %v2400
  %6466 = vmatpush1.msra.mxu0 %v2399
  %6467 = vmatprep.subr.mxu0 %v2396
  %6468 = vmatpush1.msra.mxu0 %v2395
  %6469 = vmatprep.subr.mxu0 %v2392
  %6470 = vmatpush1.msra.mxu0 %v2391
  %6471 = vmatprep.subr.mxu0 %v2388
  %6472 = vmatpush1.msra.mxu0 %v2387
  %6473 = vmatprep.subr.mxu0 %v2384
  %6474 = vmatpush1.msra.mxu0 %v2383
  %6475 = vmatprep.subr.mxu0 %v2380
  %6476 = vmatpush1.msra.mxu0 %v2379
  %6477 = vmatprep.subr.mxu0 %v2376
  %6478 = vmatpush1.msra.mxu0 %v2375
  %6479 = vmatprep.subr.mxu0 %v2372
  %6480 = vmatpush1.msra.mxu0 %v2371
  %6481 = vmatprep.subr.mxu0 %v2368
  %6482 = vmatpush1.msra.mxu0 %v2367
  %6483 = vmatprep.subr.mxu0 %v2364
  %6484 = vmatpush1.msra.mxu0 %v2363
  %6485 = vmatprep.subr.mxu0 %v2360
  %6486 = vmatpush1.msra.mxu0 %v2359
  %6487 = vmatprep.subr.mxu0 %v2356
  %6488 = vmatpush1.msra.mxu0 %v2355
  %6489 = vmatprep.subr.mxu0 %v2352
  %6490 = vmatpush1.msra.mxu0 %v2351
  %6491 = vmatprep.subr.mxu0 %v2348
  %6492 = vmatpush1.msra.mxu0 %v2347
  %6493 = vmatprep.subr.mxu0 %v2344
  %6494 = vmatpush1.msra.mxu0 %v2343
  %6495 = vmatprep.subr.mxu0 %v2468
  %6496 = vmatpush2.msra.mxu0 %v2467
  %6497 = vmatprep.subr.mxu0 %v2464
  %6498 = vmatpush2.msra.mxu0 %v2463
  %6499 = vmatprep.subr.mxu0 %v2460
  %6500 = vmatpush2.msra.mxu0 %v2459
  %6501 = vmatprep.subr.mxu0 %v2456
  %6502 = vmatpush2.msra.mxu0 %v2455
  %6503 = vmatprep.subr.mxu0 %v2452
  %6504 = vmatpush2.msra.mxu0 %v2451
  %6505 = vmatprep.subr.mxu0 %v2448
  %6506 = vmatpush2.msra.mxu0 %v2447
  %6507 = vmatprep.subr.mxu0 %v2444
  %6508 = vmatpush2.msra.mxu0 %v2443
  %6509 = vmatprep.subr.mxu0 %v2440
  %6510 = vmatpush2.msra.mxu0 %v2439
  %6511 = vmatprep.subr.mxu0 %v2436
  %6512 = vmatpush2.msra.mxu0 %v2435
  %6513 = vmatprep.subr.mxu0 %v2432
  %6514 = vmatpush2.msra.mxu0 %v2431
  %6515 = vmatprep.subr.mxu0 %v2428
  %6516 = vmatpush2.msra.mxu0 %v2427
  %6517 = vmatprep.subr.mxu0 %v2424
  %6518 = vmatpush2.msra.mxu0 %v2423
  %6519 = vmatprep.subr.mxu0 %v2420
  %6520 = vmatpush2.msra.mxu0 %v2419
  %6521 = vmatprep.subr.mxu0 %v2416
  %6522 = vmatpush2.msra.mxu0 %v2415
  %6523 = vmatprep.subr.mxu0 %v2412
  %6524 = vmatpush2.msra.mxu0 %v2411
  %6525 = vmatprep.subr.mxu0 %v2408
  %6526 = vmatpush2.msra.mxu0 %v2407
  %6527 = vmatprep.mubr.f32.mxu0 %v5622
  %6528 = vmatmul.mubr.f32.gmra.mxu0 %v5620
  %v6529 = vpop.f32.mrf.mxu0
  %v6530 = vadd.f32 %v6459, %v6529
  %v6531 = vpop.f32.mrf.mxu0
  %v6532 = vadd.f32 %v6461, %v6531
  %6533 = vdwg.mxu0
  %6534 = vmatprep.subr.mxu0 %v2532
  %6535 = vmatpush1.msra.mxu0 %v2531
  %6536 = vmatprep.subr.mxu0 %v2528
  %6537 = vmatpush1.msra.mxu0 %v2527
  %6538 = vmatprep.subr.mxu0 %v2524
  %6539 = vmatpush1.msra.mxu0 %v2523
  %6540 = vmatprep.subr.mxu0 %v2520
  %6541 = vmatpush1.msra.mxu0 %v2519
  %6542 = vmatprep.subr.mxu0 %v2516
  %6543 = vmatpush1.msra.mxu0 %v2515
  %6544 = vmatprep.subr.mxu0 %v2512
  %6545 = vmatpush1.msra.mxu0 %v2511
  %6546 = vmatprep.subr.mxu0 %v2508
  %6547 = vmatpush1.msra.mxu0 %v2507
  %6548 = vmatprep.subr.mxu0 %v2504
  %6549 = vmatpush1.msra.mxu0 %v2503
  %6550 = vmatprep.subr.mxu0 %v2500
  %6551 = vmatpush1.msra.mxu0 %v2499
  %6552 = vmatprep.subr.mxu0 %v2496
  %6553 = vmatpush1.msra.mxu0 %v2495
  %6554 = vmatprep.subr.mxu0 %v2492
  %6555 = vmatpush1.msra.mxu0 %v2491
  %6556 = vmatprep.subr.mxu0 %v2488
  %6557 = vmatpush1.msra.mxu0 %v2487
  %6558 = vmatprep.subr.mxu0 %v2484
  %6559 = vmatpush1.msra.mxu0 %v2483
  %6560 = vmatprep.subr.mxu0 %v2480
  %6561 = vmatpush1.msra.mxu0 %v2479
  %6562 = vmatprep.subr.mxu0 %v2476
  %6563 = vmatpush1.msra.mxu0 %v2475
  %6564 = vmatprep.subr.mxu0 %v2472
  %6565 = vmatpush1.msra.mxu0 %v2471
  %6566 = vmatprep.subr.mxu0 %v2596
  %6567 = vmatpush2.msra.mxu0 %v2595
  %6568 = vmatprep.subr.mxu0 %v2592
  %6569 = vmatpush2.msra.mxu0 %v2591
  %6570 = vmatprep.subr.mxu0 %v2588
  %6571 = vmatpush2.msra.mxu0 %v2587
  %6572 = vmatprep.subr.mxu0 %v2584
  %6573 = vmatpush2.msra.mxu0 %v2583
  %6574 = vmatprep.subr.mxu0 %v2580
  %6575 = vmatpush2.msra.mxu0 %v2579
  %6576 = vmatprep.subr.mxu0 %v2576
  %6577 = vmatpush2.msra.mxu0 %v2575
  %6578 = vmatprep.subr.mxu0 %v2572
  %6579 = vmatpush2.msra.mxu0 %v2571
  %6580 = vmatprep.subr.mxu0 %v2568
  %6581 = vmatpush2.msra.mxu0 %v2567
  %6582 = vmatprep.subr.mxu0 %v2564
  %6583 = vmatpush2.msra.mxu0 %v2563
  %6584 = vmatprep.subr.mxu0 %v2560
  %6585 = vmatpush2.msra.mxu0 %v2559
  %6586 = vmatprep.subr.mxu0 %v2556
  %6587 = vmatpush2.msra.mxu0 %v2555
  %6588 = vmatprep.subr.mxu0 %v2552
  %6589 = vmatpush2.msra.mxu0 %v2551
  %6590 = vmatprep.subr.mxu0 %v2548
  %6591 = vmatpush2.msra.mxu0 %v2547
  %6592 = vmatprep.subr.mxu0 %v2544
  %6593 = vmatpush2.msra.mxu0 %v2543
  %6594 = vmatprep.subr.mxu0 %v2540
  %6595 = vmatpush2.msra.mxu0 %v2539
  %6596 = vmatprep.subr.mxu0 %v2536
  %6597 = vmatpush2.msra.mxu0 %v2535
  %6598 = vmatprep.mubr.f32.mxu0 %v5628
  %6599 = vmatmul.mubr.f32.gmra.mxu0 %v5626
  %v6600 = vpop.f32.mrf.mxu0
  %v6601 = vadd.f32 %v6530, %v6600
  %v6602 = vpop.f32.mrf.mxu0
  %v6603 = vadd.f32 %v6532, %v6602
  %6604 = vdwg.mxu0
  %6605 = vmatprep.subr.mxu0 %v2660
  %6606 = vmatpush1.msra.mxu0 %v2659
  %6607 = vmatprep.subr.mxu0 %v2656
  %6608 = vmatpush1.msra.mxu0 %v2655
  %6609 = vmatprep.subr.mxu0 %v2652
  %6610 = vmatpush1.msra.mxu0 %v2651
  %6611 = vmatprep.subr.mxu0 %v2648
  %6612 = vmatpush1.msra.mxu0 %v2647
  %6613 = vmatprep.subr.mxu0 %v2644
  %6614 = vmatpush1.msra.mxu0 %v2643
  %6615 = vmatprep.subr.mxu0 %v2640
  %6616 = vmatpush1.msra.mxu0 %v2639
  %6617 = vmatprep.subr.mxu0 %v2636
  %6618 = vmatpush1.msra.mxu0 %v2635
  %6619 = vmatprep.subr.mxu0 %v2632
  %6620 = vmatpush1.msra.mxu0 %v2631
  %6621 = vmatprep.subr.mxu0 %v2628
  %6622 = vmatpush1.msra.mxu0 %v2627
  %6623 = vmatprep.subr.mxu0 %v2624
  %6624 = vmatpush1.msra.mxu0 %v2623
  %6625 = vmatprep.subr.mxu0 %v2620
  %6626 = vmatpush1.msra.mxu0 %v2619
  %6627 = vmatprep.subr.mxu0 %v2616
  %6628 = vmatpush1.msra.mxu0 %v2615
  %6629 = vmatprep.subr.mxu0 %v2612
  %6630 = vmatpush1.msra.mxu0 %v2611
  %6631 = vmatprep.subr.mxu0 %v2608
  %6632 = vmatpush1.msra.mxu0 %v2607
  %6633 = vmatprep.subr.mxu0 %v2604
  %6634 = vmatpush1.msra.mxu0 %v2603
  %6635 = vmatprep.subr.mxu0 %v2600
  %6636 = vmatpush1.msra.mxu0 %v2599
  %6637 = vmatprep.subr.mxu0 %v2724
  %6638 = vmatpush2.msra.mxu0 %v2723
  %6639 = vmatprep.subr.mxu0 %v2720
  %6640 = vmatpush2.msra.mxu0 %v2719
  %6641 = vmatprep.subr.mxu0 %v2716
  %6642 = vmatpush2.msra.mxu0 %v2715
  %6643 = vmatprep.subr.mxu0 %v2712
  %6644 = vmatpush2.msra.mxu0 %v2711
  %6645 = vmatprep.subr.mxu0 %v2708
  %6646 = vmatpush2.msra.mxu0 %v2707
  %6647 = vmatprep.subr.mxu0 %v2704
  %6648 = vmatpush2.msra.mxu0 %v2703
  %6649 = vmatprep.subr.mxu0 %v2700
  %6650 = vmatpush2.msra.mxu0 %v2699
  %6651 = vmatprep.subr.mxu0 %v2696
  %6652 = vmatpush2.msra.mxu0 %v2695
  %6653 = vmatprep.subr.mxu0 %v2692
  %6654 = vmatpush2.msra.mxu0 %v2691
  %6655 = vmatprep.subr.mxu0 %v2688
  %6656 = vmatpush2.msra.mxu0 %v2687
  %6657 = vmatprep.subr.mxu0 %v2684
  %6658 = vmatpush2.msra.mxu0 %v2683
  %6659 = vmatprep.subr.mxu0 %v2680
  %6660 = vmatpush2.msra.mxu0 %v2679
  %6661 = vmatprep.subr.mxu0 %v2676
  %6662 = vmatpush2.msra.mxu0 %v2675
  %6663 = vmatprep.subr.mxu0 %v2672
  %6664 = vmatpush2.msra.mxu0 %v2671
  %6665 = vmatprep.subr.mxu0 %v2668
  %6666 = vmatpush2.msra.mxu0 %v2667
  %6667 = vmatprep.subr.mxu0 %v2664
  %6668 = vmatpush2.msra.mxu0 %v2663
  %6669 = vmatprep.mubr.f32.mxu0 %v5634
  %6670 = vmatmul.mubr.f32.gmra.mxu0 %v5632
  %v6671 = vpop.f32.mrf.mxu0
  %v6672 = vadd.f32 %v6601, %v6671
  %v6673 = vpop.f32.mrf.mxu0
  %v6674 = vadd.f32 %v6603, %v6673
  %6675 = vdwg.mxu0
  %6676 = vmatprep.subr.mxu0 %v2788
  %6677 = vmatpush1.msra.mxu0 %v2787
  %6678 = vmatprep.subr.mxu0 %v2784
  %6679 = vmatpush1.msra.mxu0 %v2783
  %6680 = vmatprep.subr.mxu0 %v2780
  %6681 = vmatpush1.msra.mxu0 %v2779
  %6682 = vmatprep.subr.mxu0 %v2776
  %6683 = vmatpush1.msra.mxu0 %v2775
  %6684 = vmatprep.subr.mxu0 %v2772
  %6685 = vmatpush1.msra.mxu0 %v2771
  %6686 = vmatprep.subr.mxu0 %v2768
  %6687 = vmatpush1.msra.mxu0 %v2767
  %6688 = vmatprep.subr.mxu0 %v2764
  %6689 = vmatpush1.msra.mxu0 %v2763
  %6690 = vmatprep.subr.mxu0 %v2760
  %6691 = vmatpush1.msra.mxu0 %v2759
  %6692 = vmatprep.subr.mxu0 %v2756
  %6693 = vmatpush1.msra.mxu0 %v2755
  %6694 = vmatprep.subr.mxu0 %v2752
  %6695 = vmatpush1.msra.mxu0 %v2751
  %6696 = vmatprep.subr.mxu0 %v2748
  %6697 = vmatpush1.msra.mxu0 %v2747
  %6698 = vmatprep.subr.mxu0 %v2744
  %6699 = vmatpush1.msra.mxu0 %v2743
  %6700 = vmatprep.subr.mxu0 %v2740
  %6701 = vmatpush1.msra.mxu0 %v2739
  %6702 = vmatprep.subr.mxu0 %v2736
  %6703 = vmatpush1.msra.mxu0 %v2735
  %6704 = vmatprep.subr.mxu0 %v2732
  %6705 = vmatpush1.msra.mxu0 %v2731
  %6706 = vmatprep.subr.mxu0 %v2728
  %6707 = vmatpush1.msra.mxu0 %v2727
  %6708 = vmatprep.subr.mxu0 %v2852
  %6709 = vmatpush2.msra.mxu0 %v2851
  %6710 = vmatprep.subr.mxu0 %v2848
  %6711 = vmatpush2.msra.mxu0 %v2847
  %6712 = vmatprep.subr.mxu0 %v2844
  %6713 = vmatpush2.msra.mxu0 %v2843
  %6714 = vmatprep.subr.mxu0 %v2840
  %6715 = vmatpush2.msra.mxu0 %v2839
  %6716 = vmatprep.subr.mxu0 %v2836
  %6717 = vmatpush2.msra.mxu0 %v2835
  %6718 = vmatprep.subr.mxu0 %v2832
  %6719 = vmatpush2.msra.mxu0 %v2831
  %6720 = vmatprep.subr.mxu0 %v2828
  %6721 = vmatpush2.msra.mxu0 %v2827
  %6722 = vmatprep.subr.mxu0 %v2824
  %6723 = vmatpush2.msra.mxu0 %v2823
  %6724 = vmatprep.subr.mxu0 %v2820
  %6725 = vmatpush2.msra.mxu0 %v2819
  %6726 = vmatprep.subr.mxu0 %v2816
  %6727 = vmatpush2.msra.mxu0 %v2815
  %6728 = vmatprep.subr.mxu0 %v2812
  %6729 = vmatpush2.msra.mxu0 %v2811
  %6730 = vmatprep.subr.mxu0 %v2808
  %6731 = vmatpush2.msra.mxu0 %v2807
  %6732 = vmatprep.subr.mxu0 %v2804
  %6733 = vmatpush2.msra.mxu0 %v2803
  %6734 = vmatprep.subr.mxu0 %v2800
  %6735 = vmatpush2.msra.mxu0 %v2799
  %6736 = vmatprep.subr.mxu0 %v2796
  %6737 = vmatpush2.msra.mxu0 %v2795
  %6738 = vmatprep.subr.mxu0 %v2792
  %6739 = vmatpush2.msra.mxu0 %v2791
  %6740 = vmatprep.mubr.f32.mxu0 %v5640
  %6741 = vmatmul.mubr.f32.gmra.mxu0 %v5638
  %v6742 = vpop.f32.mrf.mxu0
  %v6743 = vadd.f32 %v6672, %v6742
  %v6744 = vpop.f32.mrf.mxu0
  %v6745 = vadd.f32 %v6674, %v6744
  %6746 = vdwg.mxu0
  %6747 = vmatprep.subr.mxu0 %v2916
  %6748 = vmatpush1.msra.mxu0 %v2915
  %6749 = vmatprep.subr.mxu0 %v2912
  %6750 = vmatpush1.msra.mxu0 %v2911
  %6751 = vmatprep.subr.mxu0 %v2908
  %6752 = vmatpush1.msra.mxu0 %v2907
  %6753 = vmatprep.subr.mxu0 %v2904
  %6754 = vmatpush1.msra.mxu0 %v2903
  %6755 = vmatprep.subr.mxu0 %v2900
  %6756 = vmatpush1.msra.mxu0 %v2899
  %6757 = vmatprep.subr.mxu0 %v2896
  %6758 = vmatpush1.msra.mxu0 %v2895
  %6759 = vmatprep.subr.mxu0 %v2892
  %6760 = vmatpush1.msra.mxu0 %v2891
  %6761 = vmatprep.subr.mxu0 %v2888
  %6762 = vmatpush1.msra.mxu0 %v2887
  %6763 = vmatprep.subr.mxu0 %v2884
  %6764 = vmatpush1.msra.mxu0 %v2883
  %6765 = vmatprep.subr.mxu0 %v2880
  %6766 = vmatpush1.msra.mxu0 %v2879
  %6767 = vmatprep.subr.mxu0 %v2876
  %6768 = vmatpush1.msra.mxu0 %v2875
  %6769 = vmatprep.subr.mxu0 %v2872
  %6770 = vmatpush1.msra.mxu0 %v2871
  %6771 = vmatprep.subr.mxu0 %v2868
  %6772 = vmatpush1.msra.mxu0 %v2867
  %6773 = vmatprep.subr.mxu0 %v2864
  %6774 = vmatpush1.msra.mxu0 %v2863
  %6775 = vmatprep.subr.mxu0 %v2860
  %6776 = vmatpush1.msra.mxu0 %v2859
  %6777 = vmatprep.subr.mxu0 %v2856
  %6778 = vmatpush1.msra.mxu0 %v2855
  %6779 = vmatprep.subr.mxu0 %v2980
  %6780 = vmatpush2.msra.mxu0 %v2979
  %6781 = vmatprep.subr.mxu0 %v2976
  %6782 = vmatpush2.msra.mxu0 %v2975
  %6783 = vmatprep.subr.mxu0 %v2972
  %6784 = vmatpush2.msra.mxu0 %v2971
  %6785 = vmatprep.subr.mxu0 %v2968
  %6786 = vmatpush2.msra.mxu0 %v2967
  %6787 = vmatprep.subr.mxu0 %v2964
  %6788 = vmatpush2.msra.mxu0 %v2963
  %6789 = vmatprep.subr.mxu0 %v2960
  %6790 = vmatpush2.msra.mxu0 %v2959
  %6791 = vmatprep.subr.mxu0 %v2956
  %6792 = vmatpush2.msra.mxu0 %v2955
  %6793 = vmatprep.subr.mxu0 %v2952
  %6794 = vmatpush2.msra.mxu0 %v2951
  %6795 = vmatprep.subr.mxu0 %v2948
  %6796 = vmatpush2.msra.mxu0 %v2947
  %6797 = vmatprep.subr.mxu0 %v2944
  %6798 = vmatpush2.msra.mxu0 %v2943
  %6799 = vmatprep.subr.mxu0 %v2940
  %6800 = vmatpush2.msra.mxu0 %v2939
  %6801 = vmatprep.subr.mxu0 %v2936
  %6802 = vmatpush2.msra.mxu0 %v2935
  %6803 = vmatprep.subr.mxu0 %v2932
  %6804 = vmatpush2.msra.mxu0 %v2931
  %6805 = vmatprep.subr.mxu0 %v2928
  %6806 = vmatpush2.msra.mxu0 %v2927
  %6807 = vmatprep.subr.mxu0 %v2924
  %6808 = vmatpush2.msra.mxu0 %v2923
  %6809 = vmatprep.subr.mxu0 %v2920
  %6810 = vmatpush2.msra.mxu0 %v2919
  %6811 = vmatprep.mubr.f32.mxu0 %v5646
  %6812 = vmatmul.mubr.f32.gmra.mxu0 %v5644
  %v6813 = vpop.f32.mrf.mxu0
  %v6814 = vadd.f32 %v6743, %v6813
  %v6815 = vpop.f32.mrf.mxu0
  %v6816 = vadd.f32 %v6745, %v6815
  %6817 = vdwg.mxu0
  %6818 = vmatprep.subr.mxu0 %v3044
  %6819 = vmatpush1.msra.mxu0 %v3043
  %6820 = vmatprep.subr.mxu0 %v3040
  %6821 = vmatpush1.msra.mxu0 %v3039
  %6822 = vmatprep.subr.mxu0 %v3036
  %6823 = vmatpush1.msra.mxu0 %v3035
  %6824 = vmatprep.subr.mxu0 %v3032
  %6825 = vmatpush1.msra.mxu0 %v3031
  %6826 = vmatprep.subr.mxu0 %v3028
  %6827 = vmatpush1.msra.mxu0 %v3027
  %6828 = vmatprep.subr.mxu0 %v3024
  %6829 = vmatpush1.msra.mxu0 %v3023
  %6830 = vmatprep.subr.mxu0 %v3020
  %6831 = vmatpush1.msra.mxu0 %v3019
  %6832 = vmatprep.subr.mxu0 %v3016
  %6833 = vmatpush1.msra.mxu0 %v3015
  %6834 = vmatprep.subr.mxu0 %v3012
  %6835 = vmatpush1.msra.mxu0 %v3011
  %6836 = vmatprep.subr.mxu0 %v3008
  %6837 = vmatpush1.msra.mxu0 %v3007
  %6838 = vmatprep.subr.mxu0 %v3004
  %6839 = vmatpush1.msra.mxu0 %v3003
  %6840 = vmatprep.subr.mxu0 %v3000
  %6841 = vmatpush1.msra.mxu0 %v2999
  %6842 = vmatprep.subr.mxu0 %v2996
  %6843 = vmatpush1.msra.mxu0 %v2995
  %6844 = vmatprep.subr.mxu0 %v2992
  %6845 = vmatpush1.msra.mxu0 %v2991
  %6846 = vmatprep.subr.mxu0 %v2988
  %6847 = vmatpush1.msra.mxu0 %v2987
  %6848 = vmatprep.subr.mxu0 %v2984
  %6849 = vmatpush1.msra.mxu0 %v2983
  %6850 = vmatprep.subr.mxu0 %v3108
  %6851 = vmatpush2.msra.mxu0 %v3107
  %6852 = vmatprep.subr.mxu0 %v3104
  %6853 = vmatpush2.msra.mxu0 %v3103
  %6854 = vmatprep.subr.mxu0 %v3100
  %6855 = vmatpush2.msra.mxu0 %v3099
  %6856 = vmatprep.subr.mxu0 %v3096
  %6857 = vmatpush2.msra.mxu0 %v3095
  %6858 = vmatprep.subr.mxu0 %v3092
  %6859 = vmatpush2.msra.mxu0 %v3091
  %6860 = vmatprep.subr.mxu0 %v3088
  %6861 = vmatpush2.msra.mxu0 %v3087
  %6862 = vmatprep.subr.mxu0 %v3084
  %6863 = vmatpush2.msra.mxu0 %v3083
  %6864 = vmatprep.subr.mxu0 %v3080
  %6865 = vmatpush2.msra.mxu0 %v3079
  %6866 = vmatprep.subr.mxu0 %v3076
  %6867 = vmatpush2.msra.mxu0 %v3075
  %6868 = vmatprep.subr.mxu0 %v3072
  %6869 = vmatpush2.msra.mxu0 %v3071
  %6870 = vmatprep.subr.mxu0 %v3068
  %6871 = vmatpush2.msra.mxu0 %v3067
  %6872 = vmatprep.subr.mxu0 %v3064
  %6873 = vmatpush2.msra.mxu0 %v3063
  %6874 = vmatprep.subr.mxu0 %v3060
  %6875 = vmatpush2.msra.mxu0 %v3059
  %6876 = vmatprep.subr.mxu0 %v3056
  %6877 = vmatpush2.msra.mxu0 %v3055
  %6878 = vmatprep.subr.mxu0 %v3052
  %6879 = vmatpush2.msra.mxu0 %v3051
  %6880 = vmatprep.subr.mxu0 %v3048
  %6881 = vmatpush2.msra.mxu0 %v3047
  %6882 = vmatprep.mubr.f32.mxu0 %v5652
  %6883 = vmatmul.mubr.f32.gmra.mxu0 %v5650
  %v6884 = vpop.f32.mrf.mxu0
  %v6885 = vadd.f32 %v6814, %v6884
  %v6886 = vpop.f32.mrf.mxu0
  %v6887 = vadd.f32 %v6816, %v6886
  %6888 = vdwg.mxu0
  %6889 = vmatprep.subr.mxu0 %v3172
  %6890 = vmatpush1.msra.mxu0 %v3171
  %6891 = vmatprep.subr.mxu0 %v3168
  %6892 = vmatpush1.msra.mxu0 %v3167
  %6893 = vmatprep.subr.mxu0 %v3164
  %6894 = vmatpush1.msra.mxu0 %v3163
  %6895 = vmatprep.subr.mxu0 %v3160
  %6896 = vmatpush1.msra.mxu0 %v3159
  %6897 = vmatprep.subr.mxu0 %v3156
  %6898 = vmatpush1.msra.mxu0 %v3155
  %6899 = vmatprep.subr.mxu0 %v3152
  %6900 = vmatpush1.msra.mxu0 %v3151
  %6901 = vmatprep.subr.mxu0 %v3148
  %6902 = vmatpush1.msra.mxu0 %v3147
  %6903 = vmatprep.subr.mxu0 %v3144
  %6904 = vmatpush1.msra.mxu0 %v3143
  %6905 = vmatprep.subr.mxu0 %v3140
  %6906 = vmatpush1.msra.mxu0 %v3139
  %6907 = vmatprep.subr.mxu0 %v3136
  %6908 = vmatpush1.msra.mxu0 %v3135
  %6909 = vmatprep.subr.mxu0 %v3132
  %6910 = vmatpush1.msra.mxu0 %v3131
  %6911 = vmatprep.subr.mxu0 %v3128
  %6912 = vmatpush1.msra.mxu0 %v3127
  %6913 = vmatprep.subr.mxu0 %v3124
  %6914 = vmatpush1.msra.mxu0 %v3123
  %6915 = vmatprep.subr.mxu0 %v3120
  %6916 = vmatpush1.msra.mxu0 %v3119
  %6917 = vmatprep.subr.mxu0 %v3116
  %6918 = vmatpush1.msra.mxu0 %v3115
  %6919 = vmatprep.subr.mxu0 %v3112
  %6920 = vmatpush1.msra.mxu0 %v3111
  %6921 = vmatprep.subr.mxu0 %v3236
  %6922 = vmatpush2.msra.mxu0 %v3235
  %6923 = vmatprep.subr.mxu0 %v3232
  %6924 = vmatpush2.msra.mxu0 %v3231
  %6925 = vmatprep.subr.mxu0 %v3228
  %6926 = vmatpush2.msra.mxu0 %v3227
  %6927 = vmatprep.subr.mxu0 %v3224
  %6928 = vmatpush2.msra.mxu0 %v3223
  %6929 = vmatprep.subr.mxu0 %v3220
  %6930 = vmatpush2.msra.mxu0 %v3219
  %6931 = vmatprep.subr.mxu0 %v3216
  %6932 = vmatpush2.msra.mxu0 %v3215
  %6933 = vmatprep.subr.mxu0 %v3212
  %6934 = vmatpush2.msra.mxu0 %v3211
  %6935 = vmatprep.subr.mxu0 %v3208
  %6936 = vmatpush2.msra.mxu0 %v3207
  %6937 = vmatprep.subr.mxu0 %v3204
  %6938 = vmatpush2.msra.mxu0 %v3203
  %6939 = vmatprep.subr.mxu0 %v3200
  %6940 = vmatpush2.msra.mxu0 %v3199
  %6941 = vmatprep.subr.mxu0 %v3196
  %6942 = vmatpush2.msra.mxu0 %v3195
  %6943 = vmatprep.subr.mxu0 %v3192
  %6944 = vmatpush2.msra.mxu0 %v3191
  %6945 = vmatprep.subr.mxu0 %v3188
  %6946 = vmatpush2.msra.mxu0 %v3187
  %6947 = vmatprep.subr.mxu0 %v3184
  %6948 = vmatpush2.msra.mxu0 %v3183
  %6949 = vmatprep.subr.mxu0 %v3180
  %6950 = vmatpush2.msra.mxu0 %v3179
  %6951 = vmatprep.subr.mxu0 %v3176
  %6952 = vmatpush2.msra.mxu0 %v3175
  %6953 = vmatprep.mubr.f32.mxu0 %v5658
  %6954 = vmatmul.mubr.f32.gmra.mxu0 %v5656
  %v6955 = vpop.f32.mrf.mxu0
  %v6956 = vadd.f32 %v6885, %v6955
  %v6957 = vpop.f32.mrf.mxu0
  %v6958 = vadd.f32 %v6887, %v6957
  %6959 = vdwg.mxu0
  %v6960 = vmax.f32 %v6317, 0.0
  %v6961 = vmax.f32 %v6319, 0.0
  %v6962 = vmax.f32 %v6956, 0.0
  %v6963 = vmax.f32 %v6958, 0.0
  %6964 = vmatprep.subr.mxu0 0.0
  %6965 = vmatpush1.msra.mxu0 %v646
  %6966 = vmatprep.subr.mxu0 0.0
  %6967 = vmatpush1.msra.mxu0 %v645
  %6968 = vmatprep.subr.mxu0 0.0
  %6969 = vmatpush1.msra.mxu0 %v644
  %6970 = vmatprep.subr.mxu0 0.0
  %6971 = vmatpush1.msra.mxu0 %v643
  %6972 = vmatprep.subr.mxu0 0.0
  %6973 = vmatpush1.msra.mxu0 %v642
  %6974 = vmatprep.subr.mxu0 0.0
  %6975 = vmatpush1.msra.mxu0 %v641
  %6976 = vmatprep.subr.mxu0 0.0
  %6977 = vmatpush1.msra.mxu0 %v640
  %6978 = vmatprep.subr.mxu0 0.0
  %6979 = vmatpush1.msra.mxu0 %v639
  %6980 = vmatprep.subr.mxu0 0.0
  %6981 = vmatpush1.msra.mxu0 %v638
  %6982 = vmatprep.subr.mxu0 0.0
  %6983 = vmatpush1.msra.mxu0 %v637
  %6984 = vmatprep.subr.mxu0 0.0
  %6985 = vmatpush1.msra.mxu0 %v636
  %6986 = vmatprep.subr.mxu0 0.0
  %6987 = vmatpush1.msra.mxu0 %v635
  %6988 = vmatprep.subr.mxu0 0.0
  %6989 = vmatpush1.msra.mxu0 %v634
  %6990 = vmatprep.subr.mxu0 0.0
  %6991 = vmatpush1.msra.mxu0 %v633
  %6992 = vmatprep.subr.mxu0 0.0
  %6993 = vmatpush1.msra.mxu0 %v632
  %6994 = vmatprep.subr.mxu0 0.0
  %6995 = vmatpush1.msra.mxu0 %v631
  %6996 = vmatprep.subr.mxu0 0.0
  %6997 = vmatpush2.msra.mxu0 %v662
  %6998 = vmatprep.subr.mxu0 0.0
  %6999 = vmatpush2.msra.mxu0 %v661
  %7000 = vmatprep.subr.mxu0 0.0
  %7001 = vmatpush2.msra.mxu0 %v660
  %7002 = vmatprep.subr.mxu0 0.0
  %7003 = vmatpush2.msra.mxu0 %v659
  %7004 = vmatprep.subr.mxu0 0.0
  %7005 = vmatpush2.msra.mxu0 %v658
  %7006 = vmatprep.subr.mxu0 0.0
  %7007 = vmatpush2.msra.mxu0 %v657
  %7008 = vmatprep.subr.mxu0 0.0
  %7009 = vmatpush2.msra.mxu0 %v656
  %7010 = vmatprep.subr.mxu0 0.0
  %7011 = vmatpush2.msra.mxu0 %v655
  %7012 = vmatprep.subr.mxu0 0.0
  %7013 = vmatpush2.msra.mxu0 %v654
  %7014 = vmatprep.subr.mxu0 0.0
  %7015 = vmatpush2.msra.mxu0 %v653
  %7016 = vmatprep.subr.mxu0 0.0
  %7017 = vmatpush2.msra.mxu0 %v652
  %7018 = vmatprep.subr.mxu0 0.0
  %7019 = vmatpush2.msra.mxu0 %v651
  %7020 = vmatprep.subr.mxu0 0.0
  %7021 = vmatpush2.msra.mxu0 %v650
  %7022 = vmatprep.subr.mxu0 0.0
  %7023 = vmatpush2.msra.mxu0 %v649
  %7024 = vmatprep.subr.mxu0 0.0
  %7025 = vmatpush2.msra.mxu0 %v648
  %7026 = vmatprep.subr.mxu0 0.0
  %7027 = vmatpush2.msra.mxu0 %v647
  %7028 = vmatprep.mubr.f32.mxu0 %v736
  %7029 = vmatmul.mubr.f32.gmra.mxu0 %v735
  %v7030 = vpop.f32.mrf.mxu0
  %v7031 = vadd.f32 0.0, %v7030
  %v7032 = vpop.f32.mrf.mxu0
  %7033 = vmatprep.mubr.f32.mxu0 %v738
  %7034 = vmatmul.mubr.f32.gmra.mxu0 %v737
  %v7035 = vpop.f32.mrf.mxu0
  %v7036 = vadd.f32 0.0, %v7035
  %v7037 = vpop.f32.mrf.mxu0
  %7038 = vmatprep.mubr.f32.mxu0 %v740
  %7039 = vmatmul.mubr.f32.gmra.mxu0 %v739
  %v7040 = vpop.f32.mrf.mxu0
  %v7041 = vadd.f32 0.0, %v7040
  %v7042 = vpop.f32.mrf.mxu0
  %7043 = vmatprep.mubr.f32.mxu0 %v742
  %7044 = vmatmul.mubr.f32.gmra.mxu0 %v741
  %v7045 = vpop.f32.mrf.mxu0
  %v7046 = vadd.f32 0.0, %v7045
  %v7047 = vpop.f32.mrf.mxu0
  %7048 = vmatprep.mubr.f32.mxu0 %v744
  %7049 = vmatmul.mubr.f32.gmra.mxu0 %v743
  %v7050 = vpop.f32.mrf.mxu0
  %v7051 = vadd.f32 0.0, %v7050
  %v7052 = vpop.f32.mrf.mxu0
  %7053 = vmatprep.mubr.f32.mxu0 %v746
  %7054 = vmatmul.mubr.f32.gmra.mxu0 %v745
  %v7055 = vpop.f32.mrf.mxu0
  %v7056 = vadd.f32 0.0, %v7055
  %v7057 = vpop.f32.mrf.mxu0
  %7058 = vmatprep.mubr.f32.mxu0 %v748
  %7059 = vmatmul.mubr.f32.gmra.mxu0 %v747
  %v7060 = vpop.f32.mrf.mxu0
  %v7061 = vadd.f32 0.0, %v7060
  %v7062 = vpop.f32.mrf.mxu0
  %7063 = vmatprep.mubr.f32.mxu0 %v750
  %7064 = vmatmul.mubr.f32.gmra.mxu0 %v749
  %v7065 = vpop.f32.mrf.mxu0
  %v7066 = vadd.f32 0.0, %v7065
  %v7067 = vpop.f32.mrf.mxu0
  %7068 = vmatprep.mubr.f32.mxu0 %v752
  %7069 = vmatmul.mubr.f32.gmra.mxu0 %v751
  %v7070 = vpop.f32.mrf.mxu0
  %v7071 = vadd.f32 0.0, %v7070
  %v7072 = vpop.f32.mrf.mxu0
  %7073 = vmatprep.mubr.f32.mxu0 %v754
  %7074 = vmatmul.mubr.f32.gmra.mxu0 %v753
  %v7075 = vpop.f32.mrf.mxu0
  %v7076 = vadd.f32 0.0, %v7075
  %v7077 = vpop.f32.mrf.mxu0
  %7078 = vmatprep.mubr.f32.mxu0 %v756
  %7079 = vmatmul.mubr.f32.gmra.mxu0 %v755
  %v7080 = vpop.f32.mrf.mxu0
  %v7081 = vadd.f32 0.0, %v7080
  %v7082 = vpop.f32.mrf.mxu0
  %7083 = vmatprep.mubr.f32.mxu0 %v758
  %7084 = vmatmul.mubr.f32.gmra.mxu0 %v757
  %v7085 = vpop.f32.mrf.mxu0
  %v7086 = vadd.f32 0.0, %v7085
  %v7087 = vpop.f32.mrf.mxu0
  %7088 = vmatprep.mubr.f32.mxu0 %v760
  %7089 = vmatmul.mubr.f32.gmra.mxu0 %v759
  %v7090 = vpop.f32.mrf.mxu0
  %v7091 = vadd.f32 0.0, %v7090
  %v7092 = vpop.f32.mrf.mxu0
  %7093 = vmatprep.mubr.f32.mxu0 %v762
  %7094 = vmatmul.mubr.f32.gmra.mxu0 %v761
  %v7095 = vpop.f32.mrf.mxu0
  %v7096 = vadd.f32 0.0, %v7095
  %v7097 = vpop.f32.mrf.mxu0
  %7098 = vmatprep.mubr.f32.mxu0 %v764
  %7099 = vmatmul.mubr.f32.gmra.mxu0 %v763
  %v7100 = vpop.f32.mrf.mxu0
  %v7101 = vadd.f32 0.0, %v7100
  %v7102 = vpop.f32.mrf.mxu0
  %7103 = vmatprep.mubr.f32.mxu0 %v766
  %7104 = vmatmul.mubr.f32.gmra.mxu0 %v765
  %v7105 = vpop.f32.mrf.mxu0
  %v7106 = vadd.f32 0.0, %v7105
  %v7107 = vpop.f32.mrf.mxu0
  %7108 = vmatprep.mubr.f32.mxu0 %v768
  %7109 = vmatmul.mubr.f32.gmra.mxu0 %v767
  %v7110 = vpop.f32.mrf.mxu0
  %v7111 = vadd.f32 0.0, %v7110
  %v7112 = vpop.f32.mrf.mxu0
  %7113 = vmatprep.mubr.f32.mxu0 %v770
  %7114 = vmatmul.mubr.f32.gmra.mxu0 %v769
  %v7115 = vpop.f32.mrf.mxu0
  %v7116 = vadd.f32 0.0, %v7115
  %v7117 = vpop.f32.mrf.mxu0
  %7118 = vmatprep.mubr.f32.mxu0 %v772
  %7119 = vmatmul.mubr.f32.gmra.mxu0 %v771
  %v7120 = vpop.f32.mrf.mxu0
  %v7121 = vadd.f32 0.0, %v7120
  %v7122 = vpop.f32.mrf.mxu0
  %7123 = vmatprep.mubr.f32.mxu0 %v774
  %7124 = vmatmul.mubr.f32.gmra.mxu0 %v773
  %v7125 = vpop.f32.mrf.mxu0
  %v7126 = vadd.f32 0.0, %v7125
  %v7127 = vpop.f32.mrf.mxu0
  %7128 = vmatprep.mubr.f32.mxu0 %v776
  %7129 = vmatmul.mubr.f32.gmra.mxu0 %v775
  %v7130 = vpop.f32.mrf.mxu0
  %v7131 = vadd.f32 0.0, %v7130
  %v7132 = vpop.f32.mrf.mxu0
  %7133 = vmatprep.mubr.f32.mxu0 %v778
  %7134 = vmatmul.mubr.f32.gmra.mxu0 %v777
  %v7135 = vpop.f32.mrf.mxu0
  %v7136 = vadd.f32 0.0, %v7135
  %v7137 = vpop.f32.mrf.mxu0
  %7138 = vmatprep.mubr.f32.mxu0 %v780
  %7139 = vmatmul.mubr.f32.gmra.mxu0 %v779
  %v7140 = vpop.f32.mrf.mxu0
  %v7141 = vadd.f32 0.0, %v7140
  %v7142 = vpop.f32.mrf.mxu0
  %7143 = vmatprep.mubr.f32.mxu0 %v782
  %7144 = vmatmul.mubr.f32.gmra.mxu0 %v781
  %v7145 = vpop.f32.mrf.mxu0
  %v7146 = vadd.f32 0.0, %v7145
  %v7147 = vpop.f32.mrf.mxu0
  %7148 = vmatprep.mubr.f32.mxu0 %v784
  %7149 = vmatmul.mubr.f32.gmra.mxu0 %v783
  %v7150 = vpop.f32.mrf.mxu0
  %v7151 = vadd.f32 0.0, %v7150
  %v7152 = vpop.f32.mrf.mxu0
  %7153 = vmatprep.mubr.f32.mxu0 %v786
  %7154 = vmatmul.mubr.f32.gmra.mxu0 %v785
  %v7155 = vpop.f32.mrf.mxu0
  %v7156 = vadd.f32 0.0, %v7155
  %v7157 = vpop.f32.mrf.mxu0
  %7158 = vmatprep.mubr.f32.mxu0 %v788
  %7159 = vmatmul.mubr.f32.gmra.mxu0 %v787
  %v7160 = vpop.f32.mrf.mxu0
  %v7161 = vadd.f32 0.0, %v7160
  %v7162 = vpop.f32.mrf.mxu0
  %7163 = vmatprep.mubr.f32.mxu0 %v790
  %7164 = vmatmul.mubr.f32.gmra.mxu0 %v789
  %v7165 = vpop.f32.mrf.mxu0
  %v7166 = vadd.f32 0.0, %v7165
  %v7167 = vpop.f32.mrf.mxu0
  %7168 = vmatprep.mubr.f32.mxu0 %v792
  %7169 = vmatmul.mubr.f32.gmra.mxu0 %v791
  %v7170 = vpop.f32.mrf.mxu0
  %v7171 = vadd.f32 0.0, %v7170
  %v7172 = vpop.f32.mrf.mxu0
  %7173 = vmatprep.mubr.f32.mxu0 %v794
  %7174 = vmatmul.mubr.f32.gmra.mxu0 %v793
  %v7175 = vpop.f32.mrf.mxu0
  %v7176 = vadd.f32 0.0, %v7175
  %v7177 = vpop.f32.mrf.mxu0
  %7178 = vmatprep.mubr.f32.mxu0 %v796
  %7179 = vmatmul.mubr.f32.gmra.mxu0 %v795
  %v7180 = vpop.f32.mrf.mxu0
  %v7181 = vadd.f32 0.0, %v7180
  %v7182 = vpop.f32.mrf.mxu0
  %7183 = vmatprep.mubr.f32.mxu0 %v798
  %7184 = vmatmul.mubr.f32.gmra.mxu0 %v797
  %v7185 = vpop.f32.mrf.mxu0
  %v7186 = vadd.f32 0.0, %v7185
  %v7187 = vpop.f32.mrf.mxu0
  %7188 = vmatprep.mubr.f32.mxu0 %v800
  %7189 = vmatmul.mubr.f32.gmra.mxu0 %v799
  %v7190 = vpop.f32.mrf.mxu0
  %v7191 = vadd.f32 0.0, %v7190
  %v7192 = vpop.f32.mrf.mxu0
  %7193 = vmatprep.mubr.f32.mxu0 %v802
  %7194 = vmatmul.mubr.f32.gmra.mxu0 %v801
  %v7195 = vpop.f32.mrf.mxu0
  %v7196 = vadd.f32 0.0, %v7195
  %v7197 = vpop.f32.mrf.mxu0
  %7198 = vmatprep.mubr.f32.mxu0 %v804
  %7199 = vmatmul.mubr.f32.gmra.mxu0 %v803
  %v7200 = vpop.f32.mrf.mxu0
  %v7201 = vadd.f32 0.0, %v7200
  %v7202 = vpop.f32.mrf.mxu0
  %7203 = vmatprep.mubr.f32.mxu0 %v806
  %7204 = vmatmul.mubr.f32.gmra.mxu0 %v805
  %v7205 = vpop.f32.mrf.mxu0
  %v7206 = vadd.f32 0.0, %v7205
  %v7207 = vpop.f32.mrf.mxu0
  %7208 = vmatprep.mubr.f32.mxu0 %v808
  %7209 = vmatmul.mubr.f32.gmra.mxu0 %v807
  %v7210 = vpop.f32.mrf.mxu0
  %v7211 = vadd.f32 0.0, %v7210
  %v7212 = vpop.f32.mrf.mxu0
  %7213 = vmatprep.mubr.f32.mxu0 %v810
  %7214 = vmatmul.mubr.f32.gmra.mxu0 %v809
  %v7215 = vpop.f32.mrf.mxu0
  %v7216 = vadd.f32 0.0, %v7215
  %v7217 = vpop.f32.mrf.mxu0
  %7218 = vmatprep.mubr.f32.mxu0 %v812
  %7219 = vmatmul.mubr.f32.gmra.mxu0 %v811
  %v7220 = vpop.f32.mrf.mxu0
  %v7221 = vadd.f32 0.0, %v7220
  %v7222 = vpop.f32.mrf.mxu0
  %7223 = vmatprep.mubr.f32.mxu0 %v814
  %7224 = vmatmul.mubr.f32.gmra.mxu0 %v813
  %v7225 = vpop.f32.mrf.mxu0
  %v7226 = vadd.f32 0.0, %v7225
  %v7227 = vpop.f32.mrf.mxu0
  %7228 = vmatprep.mubr.f32.mxu0 %v816
  %7229 = vmatmul.mubr.f32.gmra.mxu0 %v815
  %v7230 = vpop.f32.mrf.mxu0
  %v7231 = vadd.f32 0.0, %v7230
  %v7232 = vpop.f32.mrf.mxu0
  %7233 = vmatprep.mubr.f32.mxu0 %v818
  %7234 = vmatmul.mubr.f32.gmra.mxu0 %v817
  %v7235 = vpop.f32.mrf.mxu0
  %v7236 = vadd.f32 0.0, %v7235
  %v7237 = vpop.f32.mrf.mxu0
  %7238 = vmatprep.mubr.f32.mxu0 %v820
  %7239 = vmatmul.mubr.f32.gmra.mxu0 %v819
  %v7240 = vpop.f32.mrf.mxu0
  %v7241 = vadd.f32 0.0, %v7240
  %v7242 = vpop.f32.mrf.mxu0
  %7243 = vmatprep.mubr.f32.mxu0 %v822
  %7244 = vmatmul.mubr.f32.gmra.mxu0 %v821
  %v7245 = vpop.f32.mrf.mxu0
  %v7246 = vadd.f32 0.0, %v7245
  %v7247 = vpop.f32.mrf.mxu0
  %7248 = vmatprep.mubr.f32.mxu0 %v824
  %7249 = vmatmul.mubr.f32.gmra.mxu0 %v823
  %v7250 = vpop.f32.mrf.mxu0
  %v7251 = vadd.f32 0.0, %v7250
  %v7252 = vpop.f32.mrf.mxu0
  %7253 = vmatprep.mubr.f32.mxu0 %v826
  %7254 = vmatmul.mubr.f32.gmra.mxu0 %v825
  %v7255 = vpop.f32.mrf.mxu0
  %v7256 = vadd.f32 0.0, %v7255
  %v7257 = vpop.f32.mrf.mxu0
  %7258 = vmatprep.mubr.f32.mxu0 %v828
  %7259 = vmatmul.mubr.f32.gmra.mxu0 %v827
  %v7260 = vpop.f32.mrf.mxu0
  %v7261 = vadd.f32 0.0, %v7260
  %v7262 = vpop.f32.mrf.mxu0
  %7263 = vmatprep.mubr.f32.mxu0 %v830
  %7264 = vmatmul.mubr.f32.gmra.mxu0 %v829
  %v7265 = vpop.f32.mrf.mxu0
  %v7266 = vadd.f32 0.0, %v7265
  %v7267 = vpop.f32.mrf.mxu0
  %7268 = vmatprep.mubr.f32.mxu0 %v832
  %7269 = vmatmul.mubr.f32.gmra.mxu0 %v831
  %v7270 = vpop.f32.mrf.mxu0
  %v7271 = vadd.f32 0.0, %v7270
  %v7272 = vpop.f32.mrf.mxu0
  %7273 = vmatprep.mubr.f32.mxu0 %v834
  %7274 = vmatmul.mubr.f32.gmra.mxu0 %v833
  %v7275 = vpop.f32.mrf.mxu0
  %v7276 = vadd.f32 0.0, %v7275
  %v7277 = vpop.f32.mrf.mxu0
  %7278 = vmatprep.mubr.f32.mxu0 %v836
  %7279 = vmatmul.mubr.f32.gmra.mxu0 %v835
  %v7280 = vpop.f32.mrf.mxu0
  %v7281 = vadd.f32 0.0, %v7280
  %v7282 = vpop.f32.mrf.mxu0
  %7283 = vmatprep.mubr.f32.mxu0 %v838
  %7284 = vmatmul.mubr.f32.gmra.mxu0 %v837
  %v7285 = vpop.f32.mrf.mxu0
  %v7286 = vadd.f32 0.0, %v7285
  %v7287 = vpop.f32.mrf.mxu0
  %7288 = vmatprep.mubr.f32.mxu0 %v840
  %7289 = vmatmul.mubr.f32.gmra.mxu0 %v839
  %v7290 = vpop.f32.mrf.mxu0
  %v7291 = vadd.f32 0.0, %v7290
  %v7292 = vpop.f32.mrf.mxu0
  %7293 = vmatprep.mubr.f32.mxu0 %v842
  %7294 = vmatmul.mubr.f32.gmra.mxu0 %v841
  %v7295 = vpop.f32.mrf.mxu0
  %v7296 = vadd.f32 0.0, %v7295
  %v7297 = vpop.f32.mrf.mxu0
  %7298 = vmatprep.mubr.f32.mxu0 %v844
  %7299 = vmatmul.mubr.f32.gmra.mxu0 %v843
  %v7300 = vpop.f32.mrf.mxu0
  %v7301 = vadd.f32 0.0, %v7300
  %v7302 = vpop.f32.mrf.mxu0
  %7303 = vmatprep.mubr.f32.mxu0 %v846
  %7304 = vmatmul.mubr.f32.gmra.mxu0 %v845
  %v7305 = vpop.f32.mrf.mxu0
  %v7306 = vadd.f32 0.0, %v7305
  %v7307 = vpop.f32.mrf.mxu0
  %7308 = vmatprep.mubr.f32.mxu0 %v848
  %7309 = vmatmul.mubr.f32.gmra.mxu0 %v847
  %v7310 = vpop.f32.mrf.mxu0
  %v7311 = vadd.f32 0.0, %v7310
  %v7312 = vpop.f32.mrf.mxu0
  %7313 = vmatprep.mubr.f32.mxu0 %v850
  %7314 = vmatmul.mubr.f32.gmra.mxu0 %v849
  %v7315 = vpop.f32.mrf.mxu0
  %v7316 = vadd.f32 0.0, %v7315
  %v7317 = vpop.f32.mrf.mxu0
  %7318 = vmatprep.mubr.f32.mxu0 %v852
  %7319 = vmatmul.mubr.f32.gmra.mxu0 %v851
  %v7320 = vpop.f32.mrf.mxu0
  %v7321 = vadd.f32 0.0, %v7320
  %v7322 = vpop.f32.mrf.mxu0
  %7323 = vmatprep.mubr.f32.mxu0 %v854
  %7324 = vmatmul.mubr.f32.gmra.mxu0 %v853
  %v7325 = vpop.f32.mrf.mxu0
  %v7326 = vadd.f32 0.0, %v7325
  %v7327 = vpop.f32.mrf.mxu0
  %7328 = vmatprep.mubr.f32.mxu0 %v856
  %7329 = vmatmul.mubr.f32.gmra.mxu0 %v855
  %v7330 = vpop.f32.mrf.mxu0
  %v7331 = vadd.f32 0.0, %v7330
  %v7332 = vpop.f32.mrf.mxu0
  %7333 = vmatprep.mubr.f32.mxu0 %v858
  %7334 = vmatmul.mubr.f32.gmra.mxu0 %v857
  %v7335 = vpop.f32.mrf.mxu0
  %v7336 = vadd.f32 0.0, %v7335
  %v7337 = vpop.f32.mrf.mxu0
  %7338 = vmatprep.mubr.f32.mxu0 %v860
  %7339 = vmatmul.mubr.f32.gmra.mxu0 %v859
  %v7340 = vpop.f32.mrf.mxu0
  %v7341 = vadd.f32 0.0, %v7340
  %v7342 = vpop.f32.mrf.mxu0
  %7343 = vmatprep.mubr.f32.mxu0 %v862
  %7344 = vmatmul.mubr.f32.gmra.mxu0 %v861
  %v7345 = vpop.f32.mrf.mxu0
  %v7346 = vadd.f32 0.0, %v7345
  %v7347 = vpop.f32.mrf.mxu0
  %7348 = vmatprep.mubr.f32.mxu0 %v864
  %7349 = vmatmul.mubr.f32.gmra.mxu0 %v863
  %v7350 = vpop.f32.mrf.mxu0
  %v7351 = vadd.f32 0.0, %v7350
  %v7352 = vpop.f32.mrf.mxu0
  %7353 = vmatprep.mubr.f32.mxu0 %v866
  %7354 = vmatmul.mubr.f32.gmra.mxu0 %v865
  %v7355 = vpop.f32.mrf.mxu0
  %v7356 = vadd.f32 0.0, %v7355
  %v7357 = vpop.f32.mrf.mxu0
  %7358 = vmatprep.mubr.f32.mxu0 %v868
  %7359 = vmatmul.mubr.f32.gmra.mxu0 %v867
  %v7360 = vpop.f32.mrf.mxu0
  %v7361 = vadd.f32 0.0, %v7360
  %v7362 = vpop.f32.mrf.mxu0
  %7363 = vmatprep.mubr.f32.mxu0 %v870
  %7364 = vmatmul.mubr.f32.gmra.mxu0 %v869
  %v7365 = vpop.f32.mrf.mxu0
  %v7366 = vadd.f32 0.0, %v7365
  %v7367 = vpop.f32.mrf.mxu0
  %7368 = vmatprep.mubr.f32.mxu0 %v872
  %7369 = vmatmul.mubr.f32.gmra.mxu0 %v871
  %v7370 = vpop.f32.mrf.mxu0
  %v7371 = vadd.f32 0.0, %v7370
  %v7372 = vpop.f32.mrf.mxu0
  %7373 = vmatprep.mubr.f32.mxu0 %v874
  %7374 = vmatmul.mubr.f32.gmra.mxu0 %v873
  %v7375 = vpop.f32.mrf.mxu0
  %v7376 = vadd.f32 0.0, %v7375
  %v7377 = vpop.f32.mrf.mxu0
  %7378 = vmatprep.mubr.f32.mxu0 %v876
  %7379 = vmatmul.mubr.f32.gmra.mxu0 %v875
  %v7380 = vpop.f32.mrf.mxu0
  %v7381 = vadd.f32 0.0, %v7380
  %v7382 = vpop.f32.mrf.mxu0
  %7383 = vmatprep.mubr.f32.mxu0 %v878
  %7384 = vmatmul.mubr.f32.gmra.mxu0 %v877
  %v7385 = vpop.f32.mrf.mxu0
  %v7386 = vadd.f32 0.0, %v7385
  %v7387 = vpop.f32.mrf.mxu0
  %7388 = vdwg.mxu0
  %v7390 = vsel %vm3662, %v7071, 0
  %v7393 = vsel %vm3662, %v7076, 0
  %v7396 = vsel %vm3662, %v7081, 0
  %v7399 = vsel %vm3662, %v7086, 0
  %v7402 = vsel %vm3662, %v7091, 0
  %v7405 = vsel %vm3662, %v7096, 0
  %v7408 = vsel %vm3662, %v7101, 0
  %v7411 = vsel %vm3662, %v7106, 0
  %7413 = vmatprep.subr.mxu0 0.0
  %7414 = vmatpush1.msra.mxu0 0.0
  %7415 = vmatprep.subr.mxu0 0.0
  %7416 = vmatpush1.msra.mxu0 0.0
  %7417 = vmatprep.subr.mxu0 0.0
  %7418 = vmatpush1.msra.mxu0 0.0
  %7419 = vmatprep.subr.mxu0 0.0
  %7420 = vmatpush1.msra.mxu0 0.0
  %7421 = vmatprep.subr.mxu0 0.0
  %7422 = vmatpush1.msra.mxu0 0.0
  %7423 = vmatprep.subr.mxu0 0.0
  %7424 = vmatpush1.msra.mxu0 0.0
  %7425 = vmatprep.subr.mxu0 0.0
  %7426 = vmatpush1.msra.mxu0 0.0
  %7427 = vmatprep.subr.mxu0 0.0
  %7428 = vmatpush1.msra.mxu0 0.0
  %7429 = vmatprep.subr.mxu0 0.0
  %7430 = vmatpush1.msra.mxu0 %v966
  %7431 = vmatprep.subr.mxu0 0.0
  %7432 = vmatpush1.msra.mxu0 %v965
  %7433 = vmatprep.subr.mxu0 0.0
  %7434 = vmatpush1.msra.mxu0 %v964
  %7435 = vmatprep.subr.mxu0 0.0
  %7436 = vmatpush1.msra.mxu0 %v963
  %7437 = vmatprep.subr.mxu0 0.0
  %7438 = vmatpush1.msra.mxu0 %v962
  %7439 = vmatprep.subr.mxu0 0.0
  %7440 = vmatpush1.msra.mxu0 %v961
  %7441 = vmatprep.subr.mxu0 0.0
  %7442 = vmatpush1.msra.mxu0 %v960
  %7443 = vmatprep.subr.mxu0 0.0
  %7444 = vmatpush1.msra.mxu0 %v959
  %7445 = vmatprep.subr.mxu0 0.0
  %7446 = vmatpush2.msra.mxu0 0.0
  %7447 = vmatprep.subr.mxu0 0.0
  %7448 = vmatpush2.msra.mxu0 0.0
  %7449 = vmatprep.subr.mxu0 0.0
  %7450 = vmatpush2.msra.mxu0 0.0
  %7451 = vmatprep.subr.mxu0 0.0
  %7452 = vmatpush2.msra.mxu0 0.0
  %7453 = vmatprep.subr.mxu0 0.0
  %7454 = vmatpush2.msra.mxu0 0.0
  %7455 = vmatprep.subr.mxu0 0.0
  %7456 = vmatpush2.msra.mxu0 0.0
  %7457 = vmatprep.subr.mxu0 0.0
  %7458 = vmatpush2.msra.mxu0 0.0
  %7459 = vmatprep.subr.mxu0 0.0
  %7460 = vmatpush2.msra.mxu0 0.0
  %7461 = vmatprep.subr.mxu0 0.0
  %7462 = vmatpush2.msra.mxu0 0.0
  %7463 = vmatprep.subr.mxu0 0.0
  %7464 = vmatpush2.msra.mxu0 0.0
  %7465 = vmatprep.subr.mxu0 0.0
  %7466 = vmatpush2.msra.mxu0 0.0
  %7467 = vmatprep.subr.mxu0 0.0
  %7468 = vmatpush2.msra.mxu0 0.0
  %7469 = vmatprep.subr.mxu0 0.0
  %7470 = vmatpush2.msra.mxu0 0.0
  %7471 = vmatprep.subr.mxu0 0.0
  %7472 = vmatpush2.msra.mxu0 0.0
  %7473 = vmatprep.subr.mxu0 0.0
  %7474 = vmatpush2.msra.mxu0 0.0
  %7475 = vmatprep.subr.mxu0 0.0
  %7476 = vmatpush2.msra.mxu0 0.0
  %7477 = vmatprep.mubr.f32.mxu0 0.0
  %7478 = vmatmul.mubr.f32.gmra.mxu0 %v7390
  %v7479 = vpop.f32.mrf.mxu0
  %v7480 = vadd.f32 0.0, %v7479
  %v7481 = vpop.f32.mrf.mxu0
  %7482 = vmatprep.mubr.f32.mxu0 0.0
  %7483 = vmatmul.mubr.f32.gmra.mxu0 %v7393
  %v7484 = vpop.f32.mrf.mxu0
  %v7485 = vadd.f32 0.0, %v7484
  %v7486 = vpop.f32.mrf.mxu0
  %7487 = vmatprep.mubr.f32.mxu0 0.0
  %7488 = vmatmul.mubr.f32.gmra.mxu0 %v7396
  %v7489 = vpop.f32.mrf.mxu0
  %v7490 = vadd.f32 0.0, %v7489
  %v7491 = vpop.f32.mrf.mxu0
  %7492 = vmatprep.mubr.f32.mxu0 0.0
  %7493 = vmatmul.mubr.f32.gmra.mxu0 %v7399
  %v7494 = vpop.f32.mrf.mxu0
  %v7495 = vadd.f32 0.0, %v7494
  %v7496 = vpop.f32.mrf.mxu0
  %7497 = vmatprep.mubr.f32.mxu0 0.0
  %7498 = vmatmul.mubr.f32.gmra.mxu0 %v7402
  %v7499 = vpop.f32.mrf.mxu0
  %v7500 = vadd.f32 0.0, %v7499
  %v7501 = vpop.f32.mrf.mxu0
  %7502 = vmatprep.mubr.f32.mxu0 0.0
  %7503 = vmatmul.mubr.f32.gmra.mxu0 %v7405
  %v7504 = vpop.f32.mrf.mxu0
  %v7505 = vadd.f32 0.0, %v7504
  %v7506 = vpop.f32.mrf.mxu0
  %7507 = vmatprep.mubr.f32.mxu0 0.0
  %7508 = vmatmul.mubr.f32.gmra.mxu0 %v7408
  %v7509 = vpop.f32.mrf.mxu0
  %v7510 = vadd.f32 0.0, %v7509
  %v7511 = vpop.f32.mrf.mxu0
  %7512 = vmatprep.mubr.f32.mxu0 0.0
  %7513 = vmatmul.mubr.f32.gmra.mxu0 %v7411
  %v7514 = vpop.f32.mrf.mxu0
  %v7515 = vadd.f32 0.0, %v7514
  %v7516 = vpop.f32.mrf.mxu0
  %7517 = vdwg.mxu0
  %v7519 = vsel %vm3662, %v7031, 0
  %v7522 = vsel %vm3662, %v7036, 0
  %v7525 = vsel %vm3662, %v7041, 0
  %v7528 = vsel %vm3662, %v7046, 0
  %v7531 = vsel %vm3662, %v7051, 0
  %v7534 = vsel %vm3662, %v7056, 0
  %v7537 = vsel %vm3662, %v7061, 0
  %v7540 = vsel %vm3662, %v7066, 0
  %7542 = vmatprep.subr.mxu0 0.0
  %7543 = vmatpush1.msra.mxu0 0.0
  %7544 = vmatprep.subr.mxu0 0.0
  %7545 = vmatpush1.msra.mxu0 0.0
  %7546 = vmatprep.subr.mxu0 0.0
  %7547 = vmatpush1.msra.mxu0 0.0
  %7548 = vmatprep.subr.mxu0 0.0
  %7549 = vmatpush1.msra.mxu0 0.0
  %7550 = vmatprep.subr.mxu0 0.0
  %7551 = vmatpush1.msra.mxu0 0.0
  %7552 = vmatprep.subr.mxu0 0.0
  %7553 = vmatpush1.msra.mxu0 0.0
  %7554 = vmatprep.subr.mxu0 0.0
  %7555 = vmatpush1.msra.mxu0 0.0
  %7556 = vmatprep.subr.mxu0 0.0
  %7557 = vmatpush1.msra.mxu0 0.0
  %7558 = vmatprep.subr.mxu0 0.0
  %7559 = vmatpush1.msra.mxu0 %v958
  %7560 = vmatprep.subr.mxu0 0.0
  %7561 = vmatpush1.msra.mxu0 %v957
  %7562 = vmatprep.subr.mxu0 0.0
  %7563 = vmatpush1.msra.mxu0 %v956
  %7564 = vmatprep.subr.mxu0 0.0
  %7565 = vmatpush1.msra.mxu0 %v955
  %7566 = vmatprep.subr.mxu0 0.0
  %7567 = vmatpush1.msra.mxu0 %v954
  %7568 = vmatprep.subr.mxu0 0.0
  %7569 = vmatpush1.msra.mxu0 %v953
  %7570 = vmatprep.subr.mxu0 0.0
  %7571 = vmatpush1.msra.mxu0 %v952
  %7572 = vmatprep.subr.mxu0 0.0
  %7573 = vmatpush1.msra.mxu0 %v951
  %7574 = vmatprep.subr.mxu0 0.0
  %7575 = vmatpush2.msra.mxu0 0.0
  %7576 = vmatprep.subr.mxu0 0.0
  %7577 = vmatpush2.msra.mxu0 0.0
  %7578 = vmatprep.subr.mxu0 0.0
  %7579 = vmatpush2.msra.mxu0 0.0
  %7580 = vmatprep.subr.mxu0 0.0
  %7581 = vmatpush2.msra.mxu0 0.0
  %7582 = vmatprep.subr.mxu0 0.0
  %7583 = vmatpush2.msra.mxu0 0.0
  %7584 = vmatprep.subr.mxu0 0.0
  %7585 = vmatpush2.msra.mxu0 0.0
  %7586 = vmatprep.subr.mxu0 0.0
  %7587 = vmatpush2.msra.mxu0 0.0
  %7588 = vmatprep.subr.mxu0 0.0
  %7589 = vmatpush2.msra.mxu0 0.0
  %7590 = vmatprep.subr.mxu0 0.0
  %7591 = vmatpush2.msra.mxu0 0.0
  %7592 = vmatprep.subr.mxu0 0.0
  %7593 = vmatpush2.msra.mxu0 0.0
  %7594 = vmatprep.subr.mxu0 0.0
  %7595 = vmatpush2.msra.mxu0 0.0
  %7596 = vmatprep.subr.mxu0 0.0
  %7597 = vmatpush2.msra.mxu0 0.0
  %7598 = vmatprep.subr.mxu0 0.0
  %7599 = vmatpush2.msra.mxu0 0.0
  %7600 = vmatprep.subr.mxu0 0.0
  %7601 = vmatpush2.msra.mxu0 0.0
  %7602 = vmatprep.subr.mxu0 0.0
  %7603 = vmatpush2.msra.mxu0 0.0
  %7604 = vmatprep.subr.mxu0 0.0
  %7605 = vmatpush2.msra.mxu0 0.0
  %7606 = vmatprep.mubr.f32.mxu0 0.0
  %7607 = vmatmul.mubr.f32.gmra.mxu0 %v7519
  %v7608 = vpop.f32.mrf.mxu0
  %v7609 = vadd.f32 %v7480, %v7608
  %v7610 = vpop.f32.mrf.mxu0
  %7611 = vmatprep.mubr.f32.mxu0 0.0
  %7612 = vmatmul.mubr.f32.gmra.mxu0 %v7522
  %v7613 = vpop.f32.mrf.mxu0
  %v7614 = vadd.f32 %v7485, %v7613
  %v7615 = vpop.f32.mrf.mxu0
  %7616 = vmatprep.mubr.f32.mxu0 0.0
  %7617 = vmatmul.mubr.f32.gmra.mxu0 %v7525
  %v7618 = vpop.f32.mrf.mxu0
  %v7619 = vadd.f32 %v7490, %v7618
  %v7620 = vpop.f32.mrf.mxu0
  %7621 = vmatprep.mubr.f32.mxu0 0.0
  %7622 = vmatmul.mubr.f32.gmra.mxu0 %v7528
  %v7623 = vpop.f32.mrf.mxu0
  %v7624 = vadd.f32 %v7495, %v7623
  %v7625 = vpop.f32.mrf.mxu0
  %7626 = vmatprep.mubr.f32.mxu0 0.0
  %7627 = vmatmul.mubr.f32.gmra.mxu0 %v7531
  %v7628 = vpop.f32.mrf.mxu0
  %v7629 = vadd.f32 %v7500, %v7628
  %v7630 = vpop.f32.mrf.mxu0
  %7631 = vmatprep.mubr.f32.mxu0 0.0
  %7632 = vmatmul.mubr.f32.gmra.mxu0 %v7534
  %v7633 = vpop.f32.mrf.mxu0
  %v7634 = vadd.f32 %v7505, %v7633
  %v7635 = vpop.f32.mrf.mxu0
  %7636 = vmatprep.mubr.f32.mxu0 0.0
  %7637 = vmatmul.mubr.f32.gmra.mxu0 %v7537
  %v7638 = vpop.f32.mrf.mxu0
  %v7639 = vadd.f32 %v7510, %v7638
  %v7640 = vpop.f32.mrf.mxu0
  %7641 = vmatprep.mubr.f32.mxu0 0.0
  %7642 = vmatmul.mubr.f32.gmra.mxu0 %v7540
  %v7643 = vpop.f32.mrf.mxu0
  %v7644 = vadd.f32 %v7515, %v7643
  %v7645 = vpop.f32.mrf.mxu0
  %7646 = vdwg.mxu0
  %v7648 = vsel %vm3662, %v7111, 0
  %v7651 = vsel %vm3662, %v7116, 0
  %v7654 = vsel %vm3662, %v7121, 0
  %v7657 = vsel %vm3662, %v7126, 0
  %v7660 = vsel %vm3662, %v7131, 0
  %v7663 = vsel %vm3662, %v7136, 0
  %v7666 = vsel %vm3662, %v7141, 0
  %v7669 = vsel %vm3662, %v7146, 0
  %7671 = vmatprep.subr.mxu0 0.0
  %7672 = vmatpush1.msra.mxu0 0.0
  %7673 = vmatprep.subr.mxu0 0.0
  %7674 = vmatpush1.msra.mxu0 0.0
  %7675 = vmatprep.subr.mxu0 0.0
  %7676 = vmatpush1.msra.mxu0 0.0
  %7677 = vmatprep.subr.mxu0 0.0
  %7678 = vmatpush1.msra.mxu0 0.0
  %7679 = vmatprep.subr.mxu0 0.0
  %7680 = vmatpush1.msra.mxu0 0.0
  %7681 = vmatprep.subr.mxu0 0.0
  %7682 = vmatpush1.msra.mxu0 0.0
  %7683 = vmatprep.subr.mxu0 0.0
  %7684 = vmatpush1.msra.mxu0 0.0
  %7685 = vmatprep.subr.mxu0 0.0
  %7686 = vmatpush1.msra.mxu0 0.0
  %7687 = vmatprep.subr.mxu0 0.0
  %7688 = vmatpush1.msra.mxu0 %v974
  %7689 = vmatprep.subr.mxu0 0.0
  %7690 = vmatpush1.msra.mxu0 %v973
  %7691 = vmatprep.subr.mxu0 0.0
  %7692 = vmatpush1.msra.mxu0 %v972
  %7693 = vmatprep.subr.mxu0 0.0
  %7694 = vmatpush1.msra.mxu0 %v971
  %7695 = vmatprep.subr.mxu0 0.0
  %7696 = vmatpush1.msra.mxu0 %v970
  %7697 = vmatprep.subr.mxu0 0.0
  %7698 = vmatpush1.msra.mxu0 %v969
  %7699 = vmatprep.subr.mxu0 0.0
  %7700 = vmatpush1.msra.mxu0 %v968
  %7701 = vmatprep.subr.mxu0 0.0
  %7702 = vmatpush1.msra.mxu0 %v967
  %7703 = vmatprep.subr.mxu0 0.0
  %7704 = vmatpush2.msra.mxu0 0.0
  %7705 = vmatprep.subr.mxu0 0.0
  %7706 = vmatpush2.msra.mxu0 0.0
  %7707 = vmatprep.subr.mxu0 0.0
  %7708 = vmatpush2.msra.mxu0 0.0
  %7709 = vmatprep.subr.mxu0 0.0
  %7710 = vmatpush2.msra.mxu0 0.0
  %7711 = vmatprep.subr.mxu0 0.0
  %7712 = vmatpush2.msra.mxu0 0.0
  %7713 = vmatprep.subr.mxu0 0.0
  %7714 = vmatpush2.msra.mxu0 0.0
  %7715 = vmatprep.subr.mxu0 0.0
  %7716 = vmatpush2.msra.mxu0 0.0
  %7717 = vmatprep.subr.mxu0 0.0
  %7718 = vmatpush2.msra.mxu0 0.0
  %7719 = vmatprep.subr.mxu0 0.0
  %7720 = vmatpush2.msra.mxu0 0.0
  %7721 = vmatprep.subr.mxu0 0.0
  %7722 = vmatpush2.msra.mxu0 0.0
  %7723 = vmatprep.subr.mxu0 0.0
  %7724 = vmatpush2.msra.mxu0 0.0
  %7725 = vmatprep.subr.mxu0 0.0
  %7726 = vmatpush2.msra.mxu0 0.0
  %7727 = vmatprep.subr.mxu0 0.0
  %7728 = vmatpush2.msra.mxu0 0.0
  %7729 = vmatprep.subr.mxu0 0.0
  %7730 = vmatpush2.msra.mxu0 0.0
  %7731 = vmatprep.subr.mxu0 0.0
  %7732 = vmatpush2.msra.mxu0 0.0
  %7733 = vmatprep.subr.mxu0 0.0
  %7734 = vmatpush2.msra.mxu0 0.0
  %7735 = vmatprep.mubr.f32.mxu0 0.0
  %7736 = vmatmul.mubr.f32.gmra.mxu0 %v7648
  %v7737 = vpop.f32.mrf.mxu0
  %v7738 = vadd.f32 0.0, %v7737
  %v7739 = vpop.f32.mrf.mxu0
  %7740 = vmatprep.mubr.f32.mxu0 0.0
  %7741 = vmatmul.mubr.f32.gmra.mxu0 %v7651
  %v7742 = vpop.f32.mrf.mxu0
  %v7743 = vadd.f32 0.0, %v7742
  %v7744 = vpop.f32.mrf.mxu0
  %7745 = vmatprep.mubr.f32.mxu0 0.0
  %7746 = vmatmul.mubr.f32.gmra.mxu0 %v7654
  %v7747 = vpop.f32.mrf.mxu0
  %v7748 = vadd.f32 0.0, %v7747
  %v7749 = vpop.f32.mrf.mxu0
  %7750 = vmatprep.mubr.f32.mxu0 0.0
  %7751 = vmatmul.mubr.f32.gmra.mxu0 %v7657
  %v7752 = vpop.f32.mrf.mxu0
  %v7753 = vadd.f32 0.0, %v7752
  %v7754 = vpop.f32.mrf.mxu0
  %7755 = vmatprep.mubr.f32.mxu0 0.0
  %7756 = vmatmul.mubr.f32.gmra.mxu0 %v7660
  %v7757 = vpop.f32.mrf.mxu0
  %v7758 = vadd.f32 0.0, %v7757
  %v7759 = vpop.f32.mrf.mxu0
  %7760 = vmatprep.mubr.f32.mxu0 0.0
  %7761 = vmatmul.mubr.f32.gmra.mxu0 %v7663
  %v7762 = vpop.f32.mrf.mxu0
  %v7763 = vadd.f32 0.0, %v7762
  %v7764 = vpop.f32.mrf.mxu0
  %7765 = vmatprep.mubr.f32.mxu0 0.0
  %7766 = vmatmul.mubr.f32.gmra.mxu0 %v7666
  %v7767 = vpop.f32.mrf.mxu0
  %v7768 = vadd.f32 0.0, %v7767
  %v7769 = vpop.f32.mrf.mxu0
  %7770 = vmatprep.mubr.f32.mxu0 0.0
  %7771 = vmatmul.mubr.f32.gmra.mxu0 %v7669
  %v7772 = vpop.f32.mrf.mxu0
  %v7773 = vadd.f32 0.0, %v7772
  %v7774 = vpop.f32.mrf.mxu0
  %7775 = vdwg.mxu0
  %v7776 = vadd.f32 %v7609, %v7738
  %v7777 = vadd.f32 %v7614, %v7743
  %v7778 = vadd.f32 %v7619, %v7748
  %v7779 = vadd.f32 %v7624, %v7753
  %v7780 = vadd.f32 %v7629, %v7758
  %v7781 = vadd.f32 %v7634, %v7763
  %v7782 = vadd.f32 %v7639, %v7768
  %v7783 = vadd.f32 %v7644, %v7773
  %v7785 = vsel %vm3662, %v7151, 0
  %v7788 = vsel %vm3662, %v7156, 0
  %v7791 = vsel %vm3662, %v7161, 0
  %v7794 = vsel %vm3662, %v7166, 0
  %v7797 = vsel %vm3662, %v7171, 0
  %v7800 = vsel %vm3662, %v7176, 0
  %v7803 = vsel %vm3662, %v7181, 0
  %v7806 = vsel %vm3662, %v7186, 0
  %7808 = vmatprep.subr.mxu0 0.0
  %7809 = vmatpush1.msra.mxu0 0.0
  %7810 = vmatprep.subr.mxu0 0.0
  %7811 = vmatpush1.msra.mxu0 0.0
  %7812 = vmatprep.subr.mxu0 0.0
  %7813 = vmatpush1.msra.mxu0 0.0
  %7814 = vmatprep.subr.mxu0 0.0
  %7815 = vmatpush1.msra.mxu0 0.0
  %7816 = vmatprep.subr.mxu0 0.0
  %7817 = vmatpush1.msra.mxu0 0.0
  %7818 = vmatprep.subr.mxu0 0.0
  %7819 = vmatpush1.msra.mxu0 0.0
  %7820 = vmatprep.subr.mxu0 0.0
  %7821 = vmatpush1.msra.mxu0 0.0
  %7822 = vmatprep.subr.mxu0 0.0
  %7823 = vmatpush1.msra.mxu0 0.0
  %7824 = vmatprep.subr.mxu0 0.0
  %7825 = vmatpush1.msra.mxu0 %v982
  %7826 = vmatprep.subr.mxu0 0.0
  %7827 = vmatpush1.msra.mxu0 %v981
  %7828 = vmatprep.subr.mxu0 0.0
  %7829 = vmatpush1.msra.mxu0 %v980
  %7830 = vmatprep.subr.mxu0 0.0
  %7831 = vmatpush1.msra.mxu0 %v979
  %7832 = vmatprep.subr.mxu0 0.0
  %7833 = vmatpush1.msra.mxu0 %v978
  %7834 = vmatprep.subr.mxu0 0.0
  %7835 = vmatpush1.msra.mxu0 %v977
  %7836 = vmatprep.subr.mxu0 0.0
  %7837 = vmatpush1.msra.mxu0 %v976
  %7838 = vmatprep.subr.mxu0 0.0
  %7839 = vmatpush1.msra.mxu0 %v975
  %7840 = vmatprep.subr.mxu0 0.0
  %7841 = vmatpush2.msra.mxu0 0.0
  %7842 = vmatprep.subr.mxu0 0.0
  %7843 = vmatpush2.msra.mxu0 0.0
  %7844 = vmatprep.subr.mxu0 0.0
  %7845 = vmatpush2.msra.mxu0 0.0
  %7846 = vmatprep.subr.mxu0 0.0
  %7847 = vmatpush2.msra.mxu0 0.0
  %7848 = vmatprep.subr.mxu0 0.0
  %7849 = vmatpush2.msra.mxu0 0.0
  %7850 = vmatprep.subr.mxu0 0.0
  %7851 = vmatpush2.msra.mxu0 0.0
  %7852 = vmatprep.subr.mxu0 0.0
  %7853 = vmatpush2.msra.mxu0 0.0
  %7854 = vmatprep.subr.mxu0 0.0
  %7855 = vmatpush2.msra.mxu0 0.0
  %7856 = vmatprep.subr.mxu0 0.0
  %7857 = vmatpush2.msra.mxu0 0.0
  %7858 = vmatprep.subr.mxu0 0.0
  %7859 = vmatpush2.msra.mxu0 0.0
  %7860 = vmatprep.subr.mxu0 0.0
  %7861 = vmatpush2.msra.mxu0 0.0
  %7862 = vmatprep.subr.mxu0 0.0
  %7863 = vmatpush2.msra.mxu0 0.0
  %7864 = vmatprep.subr.mxu0 0.0
  %7865 = vmatpush2.msra.mxu0 0.0
  %7866 = vmatprep.subr.mxu0 0.0
  %7867 = vmatpush2.msra.mxu0 0.0
  %7868 = vmatprep.subr.mxu0 0.0
  %7869 = vmatpush2.msra.mxu0 0.0
  %7870 = vmatprep.subr.mxu0 0.0
  %7871 = vmatpush2.msra.mxu0 0.0
  %7872 = vmatprep.mubr.f32.mxu0 0.0
  %7873 = vmatmul.mubr.f32.gmra.mxu0 %v7785
  %v7874 = vpop.f32.mrf.mxu0
  %v7875 = vadd.f32 0.0, %v7874
  %v7876 = vpop.f32.mrf.mxu0
  %7877 = vmatprep.mubr.f32.mxu0 0.0
  %7878 = vmatmul.mubr.f32.gmra.mxu0 %v7788
  %v7879 = vpop.f32.mrf.mxu0
  %v7880 = vadd.f32 0.0, %v7879
  %v7881 = vpop.f32.mrf.mxu0
  %7882 = vmatprep.mubr.f32.mxu0 0.0
  %7883 = vmatmul.mubr.f32.gmra.mxu0 %v7791
  %v7884 = vpop.f32.mrf.mxu0
  %v7885 = vadd.f32 0.0, %v7884
  %v7886 = vpop.f32.mrf.mxu0
  %7887 = vmatprep.mubr.f32.mxu0 0.0
  %7888 = vmatmul.mubr.f32.gmra.mxu0 %v7794
  %v7889 = vpop.f32.mrf.mxu0
  %v7890 = vadd.f32 0.0, %v7889
  %v7891 = vpop.f32.mrf.mxu0
  %7892 = vmatprep.mubr.f32.mxu0 0.0
  %7893 = vmatmul.mubr.f32.gmra.mxu0 %v7797
  %v7894 = vpop.f32.mrf.mxu0
  %v7895 = vadd.f32 0.0, %v7894
  %v7896 = vpop.f32.mrf.mxu0
  %7897 = vmatprep.mubr.f32.mxu0 0.0
  %7898 = vmatmul.mubr.f32.gmra.mxu0 %v7800
  %v7899 = vpop.f32.mrf.mxu0
  %v7900 = vadd.f32 0.0, %v7899
  %v7901 = vpop.f32.mrf.mxu0
  %7902 = vmatprep.mubr.f32.mxu0 0.0
  %7903 = vmatmul.mubr.f32.gmra.mxu0 %v7803
  %v7904 = vpop.f32.mrf.mxu0
  %v7905 = vadd.f32 0.0, %v7904
  %v7906 = vpop.f32.mrf.mxu0
  %7907 = vmatprep.mubr.f32.mxu0 0.0
  %7908 = vmatmul.mubr.f32.gmra.mxu0 %v7806
  %v7909 = vpop.f32.mrf.mxu0
  %v7910 = vadd.f32 0.0, %v7909
  %v7911 = vpop.f32.mrf.mxu0
  %7912 = vdwg.mxu0
  %v7913 = vadd.f32 %v7776, %v7875
  %v7914 = vadd.f32 %v7777, %v7880
  %v7915 = vadd.f32 %v7778, %v7885
  %v7916 = vadd.f32 %v7779, %v7890
  %v7917 = vadd.f32 %v7780, %v7895
  %v7918 = vadd.f32 %v7781, %v7900
  %v7919 = vadd.f32 %v7782, %v7905
  %v7920 = vadd.f32 %v7783, %v7910
  %v7922 = vsel %vm3662, %v7191, 0
  %v7925 = vsel %vm3662, %v7196, 0
  %v7928 = vsel %vm3662, %v7201, 0
  %v7931 = vsel %vm3662, %v7206, 0
  %v7934 = vsel %vm3662, %v7211, 0
  %v7937 = vsel %vm3662, %v7216, 0
  %v7940 = vsel %vm3662, %v7221, 0
  %v7943 = vsel %vm3662, %v7226, 0
  %7945 = vmatprep.subr.mxu0 0.0
  %7946 = vmatpush1.msra.mxu0 0.0
  %7947 = vmatprep.subr.mxu0 0.0
  %7948 = vmatpush1.msra.mxu0 0.0
  %7949 = vmatprep.subr.mxu0 0.0
  %7950 = vmatpush1.msra.mxu0 0.0
  %7951 = vmatprep.subr.mxu0 0.0
  %7952 = vmatpush1.msra.mxu0 0.0
  %7953 = vmatprep.subr.mxu0 0.0
  %7954 = vmatpush1.msra.mxu0 0.0
  %7955 = vmatprep.subr.mxu0 0.0
  %7956 = vmatpush1.msra.mxu0 0.0
  %7957 = vmatprep.subr.mxu0 0.0
  %7958 = vmatpush1.msra.mxu0 0.0
  %7959 = vmatprep.subr.mxu0 0.0
  %7960 = vmatpush1.msra.mxu0 0.0
  %7961 = vmatprep.subr.mxu0 0.0
  %7962 = vmatpush1.msra.mxu0 %v990
  %7963 = vmatprep.subr.mxu0 0.0
  %7964 = vmatpush1.msra.mxu0 %v989
  %7965 = vmatprep.subr.mxu0 0.0
  %7966 = vmatpush1.msra.mxu0 %v988
  %7967 = vmatprep.subr.mxu0 0.0
  %7968 = vmatpush1.msra.mxu0 %v987
  %7969 = vmatprep.subr.mxu0 0.0
  %7970 = vmatpush1.msra.mxu0 %v986
  %7971 = vmatprep.subr.mxu0 0.0
  %7972 = vmatpush1.msra.mxu0 %v985
  %7973 = vmatprep.subr.mxu0 0.0
  %7974 = vmatpush1.msra.mxu0 %v984
  %7975 = vmatprep.subr.mxu0 0.0
  %7976 = vmatpush1.msra.mxu0 %v983
  %7977 = vmatprep.subr.mxu0 0.0
  %7978 = vmatpush2.msra.mxu0 0.0
  %7979 = vmatprep.subr.mxu0 0.0
  %7980 = vmatpush2.msra.mxu0 0.0
  %7981 = vmatprep.subr.mxu0 0.0
  %7982 = vmatpush2.msra.mxu0 0.0
  %7983 = vmatprep.subr.mxu0 0.0
  %7984 = vmatpush2.msra.mxu0 0.0
  %7985 = vmatprep.subr.mxu0 0.0
  %7986 = vmatpush2.msra.mxu0 0.0
  %7987 = vmatprep.subr.mxu0 0.0
  %7988 = vmatpush2.msra.mxu0 0.0
  %7989 = vmatprep.subr.mxu0 0.0
  %7990 = vmatpush2.msra.mxu0 0.0
  %7991 = vmatprep.subr.mxu0 0.0
  %7992 = vmatpush2.msra.mxu0 0.0
  %7993 = vmatprep.subr.mxu0 0.0
  %7994 = vmatpush2.msra.mxu0 0.0
  %7995 = vmatprep.subr.mxu0 0.0
  %7996 = vmatpush2.msra.mxu0 0.0
  %7997 = vmatprep.subr.mxu0 0.0
  %7998 = vmatpush2.msra.mxu0 0.0
  %7999 = vmatprep.subr.mxu0 0.0
  %8000 = vmatpush2.msra.mxu0 0.0
  %8001 = vmatprep.subr.mxu0 0.0
  %8002 = vmatpush2.msra.mxu0 0.0
  %8003 = vmatprep.subr.mxu0 0.0
  %8004 = vmatpush2.msra.mxu0 0.0
  %8005 = vmatprep.subr.mxu0 0.0
  %8006 = vmatpush2.msra.mxu0 0.0
  %8007 = vmatprep.subr.mxu0 0.0
  %8008 = vmatpush2.msra.mxu0 0.0
  %8009 = vmatprep.mubr.f32.mxu0 0.0
  %8010 = vmatmul.mubr.f32.gmra.mxu0 %v7922
  %v8011 = vpop.f32.mrf.mxu0
  %v8012 = vadd.f32 0.0, %v8011
  %v8013 = vpop.f32.mrf.mxu0
  %8014 = vmatprep.mubr.f32.mxu0 0.0
  %8015 = vmatmul.mubr.f32.gmra.mxu0 %v7925
  %v8016 = vpop.f32.mrf.mxu0
  %v8017 = vadd.f32 0.0, %v8016
  %v8018 = vpop.f32.mrf.mxu0
  %8019 = vmatprep.mubr.f32.mxu0 0.0
  %8020 = vmatmul.mubr.f32.gmra.mxu0 %v7928
  %v8021 = vpop.f32.mrf.mxu0
  %v8022 = vadd.f32 0.0, %v8021
  %v8023 = vpop.f32.mrf.mxu0
  %8024 = vmatprep.mubr.f32.mxu0 0.0
  %8025 = vmatmul.mubr.f32.gmra.mxu0 %v7931
  %v8026 = vpop.f32.mrf.mxu0
  %v8027 = vadd.f32 0.0, %v8026
  %v8028 = vpop.f32.mrf.mxu0
  %8029 = vmatprep.mubr.f32.mxu0 0.0
  %8030 = vmatmul.mubr.f32.gmra.mxu0 %v7934
  %v8031 = vpop.f32.mrf.mxu0
  %v8032 = vadd.f32 0.0, %v8031
  %v8033 = vpop.f32.mrf.mxu0
  %8034 = vmatprep.mubr.f32.mxu0 0.0
  %8035 = vmatmul.mubr.f32.gmra.mxu0 %v7937
  %v8036 = vpop.f32.mrf.mxu0
  %v8037 = vadd.f32 0.0, %v8036
  %v8038 = vpop.f32.mrf.mxu0
  %8039 = vmatprep.mubr.f32.mxu0 0.0
  %8040 = vmatmul.mubr.f32.gmra.mxu0 %v7940
  %v8041 = vpop.f32.mrf.mxu0
  %v8042 = vadd.f32 0.0, %v8041
  %v8043 = vpop.f32.mrf.mxu0
  %8044 = vmatprep.mubr.f32.mxu0 0.0
  %8045 = vmatmul.mubr.f32.gmra.mxu0 %v7943
  %v8046 = vpop.f32.mrf.mxu0
  %v8047 = vadd.f32 0.0, %v8046
  %v8048 = vpop.f32.mrf.mxu0
  %8049 = vdwg.mxu0
  %v8050 = vadd.f32 %v7913, %v8012
  %v8051 = vadd.f32 %v7914, %v8017
  %v8052 = vadd.f32 %v7915, %v8022
  %v8053 = vadd.f32 %v7916, %v8027
  %v8054 = vadd.f32 %v7917, %v8032
  %v8055 = vadd.f32 %v7918, %v8037
  %v8056 = vadd.f32 %v7919, %v8042
  %v8057 = vadd.f32 %v7920, %v8047
  %v8059 = vsel %vm3662, %v7231, 0
  %v8062 = vsel %vm3662, %v7236, 0
  %v8065 = vsel %vm3662, %v7241, 0
  %v8068 = vsel %vm3662, %v7246, 0
  %v8071 = vsel %vm3662, %v7251, 0
  %v8074 = vsel %vm3662, %v7256, 0
  %v8077 = vsel %vm3662, %v7261, 0
  %v8080 = vsel %vm3662, %v7266, 0
  %8082 = vmatprep.subr.mxu0 0.0
  %8083 = vmatpush1.msra.mxu0 0.0
  %8084 = vmatprep.subr.mxu0 0.0
  %8085 = vmatpush1.msra.mxu0 0.0
  %8086 = vmatprep.subr.mxu0 0.0
  %8087 = vmatpush1.msra.mxu0 0.0
  %8088 = vmatprep.subr.mxu0 0.0
  %8089 = vmatpush1.msra.mxu0 0.0
  %8090 = vmatprep.subr.mxu0 0.0
  %8091 = vmatpush1.msra.mxu0 0.0
  %8092 = vmatprep.subr.mxu0 0.0
  %8093 = vmatpush1.msra.mxu0 0.0
  %8094 = vmatprep.subr.mxu0 0.0
  %8095 = vmatpush1.msra.mxu0 0.0
  %8096 = vmatprep.subr.mxu0 0.0
  %8097 = vmatpush1.msra.mxu0 0.0
  %8098 = vmatprep.subr.mxu0 0.0
  %8099 = vmatpush1.msra.mxu0 %v998
  %8100 = vmatprep.subr.mxu0 0.0
  %8101 = vmatpush1.msra.mxu0 %v997
  %8102 = vmatprep.subr.mxu0 0.0
  %8103 = vmatpush1.msra.mxu0 %v996
  %8104 = vmatprep.subr.mxu0 0.0
  %8105 = vmatpush1.msra.mxu0 %v995
  %8106 = vmatprep.subr.mxu0 0.0
  %8107 = vmatpush1.msra.mxu0 %v994
  %8108 = vmatprep.subr.mxu0 0.0
  %8109 = vmatpush1.msra.mxu0 %v993
  %8110 = vmatprep.subr.mxu0 0.0
  %8111 = vmatpush1.msra.mxu0 %v992
  %8112 = vmatprep.subr.mxu0 0.0
  %8113 = vmatpush1.msra.mxu0 %v991
  %8114 = vmatprep.subr.mxu0 0.0
  %8115 = vmatpush2.msra.mxu0 0.0
  %8116 = vmatprep.subr.mxu0 0.0
  %8117 = vmatpush2.msra.mxu0 0.0
  %8118 = vmatprep.subr.mxu0 0.0
  %8119 = vmatpush2.msra.mxu0 0.0
  %8120 = vmatprep.subr.mxu0 0.0
  %8121 = vmatpush2.msra.mxu0 0.0
  %8122 = vmatprep.subr.mxu0 0.0
  %8123 = vmatpush2.msra.mxu0 0.0
  %8124 = vmatprep.subr.mxu0 0.0
  %8125 = vmatpush2.msra.mxu0 0.0
  %8126 = vmatprep.subr.mxu0 0.0
  %8127 = vmatpush2.msra.mxu0 0.0
  %8128 = vmatprep.subr.mxu0 0.0
  %8129 = vmatpush2.msra.mxu0 0.0
  %8130 = vmatprep.subr.mxu0 0.0
  %8131 = vmatpush2.msra.mxu0 0.0
  %8132 = vmatprep.subr.mxu0 0.0
  %8133 = vmatpush2.msra.mxu0 0.0
  %8134 = vmatprep.subr.mxu0 0.0
  %8135 = vmatpush2.msra.mxu0 0.0
  %8136 = vmatprep.subr.mxu0 0.0
  %8137 = vmatpush2.msra.mxu0 0.0
  %8138 = vmatprep.subr.mxu0 0.0
  %8139 = vmatpush2.msra.mxu0 0.0
  %8140 = vmatprep.subr.mxu0 0.0
  %8141 = vmatpush2.msra.mxu0 0.0
  %8142 = vmatprep.subr.mxu0 0.0
  %8143 = vmatpush2.msra.mxu0 0.0
  %8144 = vmatprep.subr.mxu0 0.0
  %8145 = vmatpush2.msra.mxu0 0.0
  %8146 = vmatprep.mubr.f32.mxu0 0.0
  %8147 = vmatmul.mubr.f32.gmra.mxu0 %v8059
  %v8148 = vpop.f32.mrf.mxu0
  %v8149 = vadd.f32 0.0, %v8148
  %v8150 = vpop.f32.mrf.mxu0
  %8151 = vmatprep.mubr.f32.mxu0 0.0
  %8152 = vmatmul.mubr.f32.gmra.mxu0 %v8062
  %v8153 = vpop.f32.mrf.mxu0
  %v8154 = vadd.f32 0.0, %v8153
  %v8155 = vpop.f32.mrf.mxu0
  %8156 = vmatprep.mubr.f32.mxu0 0.0
  %8157 = vmatmul.mubr.f32.gmra.mxu0 %v8065
  %v8158 = vpop.f32.mrf.mxu0
  %v8159 = vadd.f32 0.0, %v8158
  %v8160 = vpop.f32.mrf.mxu0
  %8161 = vmatprep.mubr.f32.mxu0 0.0
  %8162 = vmatmul.mubr.f32.gmra.mxu0 %v8068
  %v8163 = vpop.f32.mrf.mxu0
  %v8164 = vadd.f32 0.0, %v8163
  %v8165 = vpop.f32.mrf.mxu0
  %8166 = vmatprep.mubr.f32.mxu0 0.0
  %8167 = vmatmul.mubr.f32.gmra.mxu0 %v8071
  %v8168 = vpop.f32.mrf.mxu0
  %v8169 = vadd.f32 0.0, %v8168
  %v8170 = vpop.f32.mrf.mxu0
  %8171 = vmatprep.mubr.f32.mxu0 0.0
  %8172 = vmatmul.mubr.f32.gmra.mxu0 %v8074
  %v8173 = vpop.f32.mrf.mxu0
  %v8174 = vadd.f32 0.0, %v8173
  %v8175 = vpop.f32.mrf.mxu0
  %8176 = vmatprep.mubr.f32.mxu0 0.0
  %8177 = vmatmul.mubr.f32.gmra.mxu0 %v8077
  %v8178 = vpop.f32.mrf.mxu0
  %v8179 = vadd.f32 0.0, %v8178
  %v8180 = vpop.f32.mrf.mxu0
  %8181 = vmatprep.mubr.f32.mxu0 0.0
  %8182 = vmatmul.mubr.f32.gmra.mxu0 %v8080
  %v8183 = vpop.f32.mrf.mxu0
  %v8184 = vadd.f32 0.0, %v8183
  %v8185 = vpop.f32.mrf.mxu0
  %8186 = vdwg.mxu0
  %v8187 = vadd.f32 %v8050, %v8149
  %v8188 = vadd.f32 %v8051, %v8154
  %v8189 = vadd.f32 %v8052, %v8159
  %v8190 = vadd.f32 %v8053, %v8164
  %v8191 = vadd.f32 %v8054, %v8169
  %v8192 = vadd.f32 %v8055, %v8174
  %v8193 = vadd.f32 %v8056, %v8179
  %v8194 = vadd.f32 %v8057, %v8184
  %v8196 = vsel %vm3662, %v7271, 0
  %v8199 = vsel %vm3662, %v7276, 0
  %v8202 = vsel %vm3662, %v7281, 0
  %v8205 = vsel %vm3662, %v7286, 0
  %v8208 = vsel %vm3662, %v7291, 0
  %v8211 = vsel %vm3662, %v7296, 0
  %v8214 = vsel %vm3662, %v7301, 0
  %v8217 = vsel %vm3662, %v7306, 0
  %8219 = vmatprep.subr.mxu0 0.0
  %8220 = vmatpush1.msra.mxu0 0.0
  %8221 = vmatprep.subr.mxu0 0.0
  %8222 = vmatpush1.msra.mxu0 0.0
  %8223 = vmatprep.subr.mxu0 0.0
  %8224 = vmatpush1.msra.mxu0 0.0
  %8225 = vmatprep.subr.mxu0 0.0
  %8226 = vmatpush1.msra.mxu0 0.0
  %8227 = vmatprep.subr.mxu0 0.0
  %8228 = vmatpush1.msra.mxu0 0.0
  %8229 = vmatprep.subr.mxu0 0.0
  %8230 = vmatpush1.msra.mxu0 0.0
  %8231 = vmatprep.subr.mxu0 0.0
  %8232 = vmatpush1.msra.mxu0 0.0
  %8233 = vmatprep.subr.mxu0 0.0
  %8234 = vmatpush1.msra.mxu0 0.0
  %8235 = vmatprep.subr.mxu0 0.0
  %8236 = vmatpush1.msra.mxu0 %v1006
  %8237 = vmatprep.subr.mxu0 0.0
  %8238 = vmatpush1.msra.mxu0 %v1005
  %8239 = vmatprep.subr.mxu0 0.0
  %8240 = vmatpush1.msra.mxu0 %v1004
  %8241 = vmatprep.subr.mxu0 0.0
  %8242 = vmatpush1.msra.mxu0 %v1003
  %8243 = vmatprep.subr.mxu0 0.0
  %8244 = vmatpush1.msra.mxu0 %v1002
  %8245 = vmatprep.subr.mxu0 0.0
  %8246 = vmatpush1.msra.mxu0 %v1001
  %8247 = vmatprep.subr.mxu0 0.0
  %8248 = vmatpush1.msra.mxu0 %v1000
  %8249 = vmatprep.subr.mxu0 0.0
  %8250 = vmatpush1.msra.mxu0 %v999
  %8251 = vmatprep.subr.mxu0 0.0
  %8252 = vmatpush2.msra.mxu0 0.0
  %8253 = vmatprep.subr.mxu0 0.0
  %8254 = vmatpush2.msra.mxu0 0.0
  %8255 = vmatprep.subr.mxu0 0.0
  %8256 = vmatpush2.msra.mxu0 0.0
  %8257 = vmatprep.subr.mxu0 0.0
  %8258 = vmatpush2.msra.mxu0 0.0
  %8259 = vmatprep.subr.mxu0 0.0
  %8260 = vmatpush2.msra.mxu0 0.0
  %8261 = vmatprep.subr.mxu0 0.0
  %8262 = vmatpush2.msra.mxu0 0.0
  %8263 = vmatprep.subr.mxu0 0.0
  %8264 = vmatpush2.msra.mxu0 0.0
  %8265 = vmatprep.subr.mxu0 0.0
  %8266 = vmatpush2.msra.mxu0 0.0
  %8267 = vmatprep.subr.mxu0 0.0
  %8268 = vmatpush2.msra.mxu0 0.0
  %8269 = vmatprep.subr.mxu0 0.0
  %8270 = vmatpush2.msra.mxu0 0.0
  %8271 = vmatprep.subr.mxu0 0.0
  %8272 = vmatpush2.msra.mxu0 0.0
  %8273 = vmatprep.subr.mxu0 0.0
  %8274 = vmatpush2.msra.mxu0 0.0
  %8275 = vmatprep.subr.mxu0 0.0
  %8276 = vmatpush2.msra.mxu0 0.0
  %8277 = vmatprep.subr.mxu0 0.0
  %8278 = vmatpush2.msra.mxu0 0.0
  %8279 = vmatprep.subr.mxu0 0.0
  %8280 = vmatpush2.msra.mxu0 0.0
  %8281 = vmatprep.subr.mxu0 0.0
  %8282 = vmatpush2.msra.mxu0 0.0
  %8283 = vmatprep.mubr.f32.mxu0 0.0
  %8284 = vmatmul.mubr.f32.gmra.mxu0 %v8196
  %v8285 = vpop.f32.mrf.mxu0
  %v8286 = vadd.f32 0.0, %v8285
  %v8287 = vpop.f32.mrf.mxu0
  %8288 = vmatprep.mubr.f32.mxu0 0.0
  %8289 = vmatmul.mubr.f32.gmra.mxu0 %v8199
  %v8290 = vpop.f32.mrf.mxu0
  %v8291 = vadd.f32 0.0, %v8290
  %v8292 = vpop.f32.mrf.mxu0
  %8293 = vmatprep.mubr.f32.mxu0 0.0
  %8294 = vmatmul.mubr.f32.gmra.mxu0 %v8202
  %v8295 = vpop.f32.mrf.mxu0
  %v8296 = vadd.f32 0.0, %v8295
  %v8297 = vpop.f32.mrf.mxu0
  %8298 = vmatprep.mubr.f32.mxu0 0.0
  %8299 = vmatmul.mubr.f32.gmra.mxu0 %v8205
  %v8300 = vpop.f32.mrf.mxu0
  %v8301 = vadd.f32 0.0, %v8300
  %v8302 = vpop.f32.mrf.mxu0
  %8303 = vmatprep.mubr.f32.mxu0 0.0
  %8304 = vmatmul.mubr.f32.gmra.mxu0 %v8208
  %v8305 = vpop.f32.mrf.mxu0
  %v8306 = vadd.f32 0.0, %v8305
  %v8307 = vpop.f32.mrf.mxu0
  %8308 = vmatprep.mubr.f32.mxu0 0.0
  %8309 = vmatmul.mubr.f32.gmra.mxu0 %v8211
  %v8310 = vpop.f32.mrf.mxu0
  %v8311 = vadd.f32 0.0, %v8310
  %v8312 = vpop.f32.mrf.mxu0
  %8313 = vmatprep.mubr.f32.mxu0 0.0
  %8314 = vmatmul.mubr.f32.gmra.mxu0 %v8214
  %v8315 = vpop.f32.mrf.mxu0
  %v8316 = vadd.f32 0.0, %v8315
  %v8317 = vpop.f32.mrf.mxu0
  %8318 = vmatprep.mubr.f32.mxu0 0.0
  %8319 = vmatmul.mubr.f32.gmra.mxu0 %v8217
  %v8320 = vpop.f32.mrf.mxu0
  %v8321 = vadd.f32 0.0, %v8320
  %v8322 = vpop.f32.mrf.mxu0
  %8323 = vdwg.mxu0
  %v8324 = vadd.f32 %v8187, %v8286
  %v8325 = vadd.f32 %v8188, %v8291
  %v8326 = vadd.f32 %v8189, %v8296
  %v8327 = vadd.f32 %v8190, %v8301
  %v8328 = vadd.f32 %v8191, %v8306
  %v8329 = vadd.f32 %v8192, %v8311
  %v8330 = vadd.f32 %v8193, %v8316
  %v8331 = vadd.f32 %v8194, %v8321
  %v8333 = vsel %vm3662, %v7311, 0
  %v8336 = vsel %vm3662, %v7316, 0
  %v8339 = vsel %vm3662, %v7321, 0
  %v8342 = vsel %vm3662, %v7326, 0
  %v8345 = vsel %vm3662, %v7331, 0
  %v8348 = vsel %vm3662, %v7336, 0
  %v8351 = vsel %vm3662, %v7341, 0
  %v8354 = vsel %vm3662, %v7346, 0
  %8356 = vmatprep.subr.mxu0 0.0
  %8357 = vmatpush1.msra.mxu0 0.0
  %8358 = vmatprep.subr.mxu0 0.0
  %8359 = vmatpush1.msra.mxu0 0.0
  %8360 = vmatprep.subr.mxu0 0.0
  %8361 = vmatpush1.msra.mxu0 0.0
  %8362 = vmatprep.subr.mxu0 0.0
  %8363 = vmatpush1.msra.mxu0 0.0
  %8364 = vmatprep.subr.mxu0 0.0
  %8365 = vmatpush1.msra.mxu0 0.0
  %8366 = vmatprep.subr.mxu0 0.0
  %8367 = vmatpush1.msra.mxu0 0.0
  %8368 = vmatprep.subr.mxu0 0.0
  %8369 = vmatpush1.msra.mxu0 0.0
  %8370 = vmatprep.subr.mxu0 0.0
  %8371 = vmatpush1.msra.mxu0 0.0
  %8372 = vmatprep.subr.mxu0 0.0
  %8373 = vmatpush1.msra.mxu0 %v1014
  %8374 = vmatprep.subr.mxu0 0.0
  %8375 = vmatpush1.msra.mxu0 %v1013
  %8376 = vmatprep.subr.mxu0 0.0
  %8377 = vmatpush1.msra.mxu0 %v1012
  %8378 = vmatprep.subr.mxu0 0.0
  %8379 = vmatpush1.msra.mxu0 %v1011
  %8380 = vmatprep.subr.mxu0 0.0
  %8381 = vmatpush1.msra.mxu0 %v1010
  %8382 = vmatprep.subr.mxu0 0.0
  %8383 = vmatpush1.msra.mxu0 %v1009
  %8384 = vmatprep.subr.mxu0 0.0
  %8385 = vmatpush1.msra.mxu0 %v1008
  %8386 = vmatprep.subr.mxu0 0.0
  %8387 = vmatpush1.msra.mxu0 %v1007
  %8388 = vmatprep.subr.mxu0 0.0
  %8389 = vmatpush2.msra.mxu0 0.0
  %8390 = vmatprep.subr.mxu0 0.0
  %8391 = vmatpush2.msra.mxu0 0.0
  %8392 = vmatprep.subr.mxu0 0.0
  %8393 = vmatpush2.msra.mxu0 0.0
  %8394 = vmatprep.subr.mxu0 0.0
  %8395 = vmatpush2.msra.mxu0 0.0
  %8396 = vmatprep.subr.mxu0 0.0
  %8397 = vmatpush2.msra.mxu0 0.0
  %8398 = vmatprep.subr.mxu0 0.0
  %8399 = vmatpush2.msra.mxu0 0.0
  %8400 = vmatprep.subr.mxu0 0.0
  %8401 = vmatpush2.msra.mxu0 0.0
  %8402 = vmatprep.subr.mxu0 0.0
  %8403 = vmatpush2.msra.mxu0 0.0
  %8404 = vmatprep.subr.mxu0 0.0
  %8405 = vmatpush2.msra.mxu0 0.0
  %8406 = vmatprep.subr.mxu0 0.0
  %8407 = vmatpush2.msra.mxu0 0.0
  %8408 = vmatprep.subr.mxu0 0.0
  %8409 = vmatpush2.msra.mxu0 0.0
  %8410 = vmatprep.subr.mxu0 0.0
  %8411 = vmatpush2.msra.mxu0 0.0
  %8412 = vmatprep.subr.mxu0 0.0
  %8413 = vmatpush2.msra.mxu0 0.0
  %8414 = vmatprep.subr.mxu0 0.0
  %8415 = vmatpush2.msra.mxu0 0.0
  %8416 = vmatprep.subr.mxu0 0.0
  %8417 = vmatpush2.msra.mxu0 0.0
  %8418 = vmatprep.subr.mxu0 0.0
  %8419 = vmatpush2.msra.mxu0 0.0
  %8420 = vmatprep.mubr.f32.mxu0 0.0
  %8421 = vmatmul.mubr.f32.gmra.mxu0 %v8333
  %v8422 = vpop.f32.mrf.mxu0
  %v8423 = vadd.f32 0.0, %v8422
  %v8424 = vpop.f32.mrf.mxu0
  %8425 = vmatprep.mubr.f32.mxu0 0.0
  %8426 = vmatmul.mubr.f32.gmra.mxu0 %v8336
  %v8427 = vpop.f32.mrf.mxu0
  %v8428 = vadd.f32 0.0, %v8427
  %v8429 = vpop.f32.mrf.mxu0
  %8430 = vmatprep.mubr.f32.mxu0 0.0
  %8431 = vmatmul.mubr.f32.gmra.mxu0 %v8339
  %v8432 = vpop.f32.mrf.mxu0
  %v8433 = vadd.f32 0.0, %v8432
  %v8434 = vpop.f32.mrf.mxu0
  %8435 = vmatprep.mubr.f32.mxu0 0.0
  %8436 = vmatmul.mubr.f32.gmra.mxu0 %v8342
  %v8437 = vpop.f32.mrf.mxu0
  %v8438 = vadd.f32 0.0, %v8437
  %v8439 = vpop.f32.mrf.mxu0
  %8440 = vmatprep.mubr.f32.mxu0 0.0
  %8441 = vmatmul.mubr.f32.gmra.mxu0 %v8345
  %v8442 = vpop.f32.mrf.mxu0
  %v8443 = vadd.f32 0.0, %v8442
  %v8444 = vpop.f32.mrf.mxu0
  %8445 = vmatprep.mubr.f32.mxu0 0.0
  %8446 = vmatmul.mubr.f32.gmra.mxu0 %v8348
  %v8447 = vpop.f32.mrf.mxu0
  %v8448 = vadd.f32 0.0, %v8447
  %v8449 = vpop.f32.mrf.mxu0
  %8450 = vmatprep.mubr.f32.mxu0 0.0
  %8451 = vmatmul.mubr.f32.gmra.mxu0 %v8351
  %v8452 = vpop.f32.mrf.mxu0
  %v8453 = vadd.f32 0.0, %v8452
  %v8454 = vpop.f32.mrf.mxu0
  %8455 = vmatprep.mubr.f32.mxu0 0.0
  %8456 = vmatmul.mubr.f32.gmra.mxu0 %v8354
  %v8457 = vpop.f32.mrf.mxu0
  %v8458 = vadd.f32 0.0, %v8457
  %v8459 = vpop.f32.mrf.mxu0
  %8460 = vdwg.mxu0
  %v8461 = vadd.f32 %v8324, %v8423
  %v8462 = vadd.f32 %v8325, %v8428
  %v8463 = vadd.f32 %v8326, %v8433
  %v8464 = vadd.f32 %v8327, %v8438
  %v8465 = vadd.f32 %v8328, %v8443
  %v8466 = vadd.f32 %v8329, %v8448
  %v8467 = vadd.f32 %v8330, %v8453
  %v8468 = vadd.f32 %v8331, %v8458
  %v8470 = vsel %vm3662, %v7351, 0
  %v8473 = vsel %vm3662, %v7356, 0
  %v8476 = vsel %vm3662, %v7361, 0
  %v8479 = vsel %vm3662, %v7366, 0
  %v8482 = vsel %vm3662, %v7371, 0
  %v8485 = vsel %vm3662, %v7376, 0
  %v8488 = vsel %vm3662, %v7381, 0
  %v8491 = vsel %vm3662, %v7386, 0
  %8493 = vmatprep.subr.mxu0 0.0
  %8494 = vmatpush1.msra.mxu0 0.0
  %8495 = vmatprep.subr.mxu0 0.0
  %8496 = vmatpush1.msra.mxu0 0.0
  %8497 = vmatprep.subr.mxu0 0.0
  %8498 = vmatpush1.msra.mxu0 0.0
  %8499 = vmatprep.subr.mxu0 0.0
  %8500 = vmatpush1.msra.mxu0 0.0
  %8501 = vmatprep.subr.mxu0 0.0
  %8502 = vmatpush1.msra.mxu0 0.0
  %8503 = vmatprep.subr.mxu0 0.0
  %8504 = vmatpush1.msra.mxu0 0.0
  %8505 = vmatprep.subr.mxu0 0.0
  %8506 = vmatpush1.msra.mxu0 0.0
  %8507 = vmatprep.subr.mxu0 0.0
  %8508 = vmatpush1.msra.mxu0 0.0
  %8509 = vmatprep.subr.mxu0 0.0
  %8510 = vmatpush1.msra.mxu0 %v1022
  %8511 = vmatprep.subr.mxu0 0.0
  %8512 = vmatpush1.msra.mxu0 %v1021
  %8513 = vmatprep.subr.mxu0 0.0
  %8514 = vmatpush1.msra.mxu0 %v1020
  %8515 = vmatprep.subr.mxu0 0.0
  %8516 = vmatpush1.msra.mxu0 %v1019
  %8517 = vmatprep.subr.mxu0 0.0
  %8518 = vmatpush1.msra.mxu0 %v1018
  %8519 = vmatprep.subr.mxu0 0.0
  %8520 = vmatpush1.msra.mxu0 %v1017
  %8521 = vmatprep.subr.mxu0 0.0
  %8522 = vmatpush1.msra.mxu0 %v1016
  %8523 = vmatprep.subr.mxu0 0.0
  %8524 = vmatpush1.msra.mxu0 %v1015
  %8525 = vmatprep.subr.mxu0 0.0
  %8526 = vmatpush2.msra.mxu0 0.0
  %8527 = vmatprep.subr.mxu0 0.0
  %8528 = vmatpush2.msra.mxu0 0.0
  %8529 = vmatprep.subr.mxu0 0.0
  %8530 = vmatpush2.msra.mxu0 0.0
  %8531 = vmatprep.subr.mxu0 0.0
  %8532 = vmatpush2.msra.mxu0 0.0
  %8533 = vmatprep.subr.mxu0 0.0
  %8534 = vmatpush2.msra.mxu0 0.0
  %8535 = vmatprep.subr.mxu0 0.0
  %8536 = vmatpush2.msra.mxu0 0.0
  %8537 = vmatprep.subr.mxu0 0.0
  %8538 = vmatpush2.msra.mxu0 0.0
  %8539 = vmatprep.subr.mxu0 0.0
  %8540 = vmatpush2.msra.mxu0 0.0
  %8541 = vmatprep.subr.mxu0 0.0
  %8542 = vmatpush2.msra.mxu0 0.0
  %8543 = vmatprep.subr.mxu0 0.0
  %8544 = vmatpush2.msra.mxu0 0.0
  %8545 = vmatprep.subr.mxu0 0.0
  %8546 = vmatpush2.msra.mxu0 0.0
  %8547 = vmatprep.subr.mxu0 0.0
  %8548 = vmatpush2.msra.mxu0 0.0
  %8549 = vmatprep.subr.mxu0 0.0
  %8550 = vmatpush2.msra.mxu0 0.0
  %8551 = vmatprep.subr.mxu0 0.0
  %8552 = vmatpush2.msra.mxu0 0.0
  %8553 = vmatprep.subr.mxu0 0.0
  %8554 = vmatpush2.msra.mxu0 0.0
  %8555 = vmatprep.subr.mxu0 0.0
  %8556 = vmatpush2.msra.mxu0 0.0
  %8557 = vmatprep.mubr.f32.mxu0 0.0
  %8558 = vmatmul.mubr.f32.gmra.mxu0 %v8470
  %v8559 = vpop.f32.mrf.mxu0
  %v8560 = vadd.f32 0.0, %v8559
  %v8561 = vpop.f32.mrf.mxu0
  %8562 = vmatprep.mubr.f32.mxu0 0.0
  %8563 = vmatmul.mubr.f32.gmra.mxu0 %v8473
  %v8564 = vpop.f32.mrf.mxu0
  %v8565 = vadd.f32 0.0, %v8564
  %v8566 = vpop.f32.mrf.mxu0
  %8567 = vmatprep.mubr.f32.mxu0 0.0
  %8568 = vmatmul.mubr.f32.gmra.mxu0 %v8476
  %v8569 = vpop.f32.mrf.mxu0
  %v8570 = vadd.f32 0.0, %v8569
  %v8571 = vpop.f32.mrf.mxu0
  %8572 = vmatprep.mubr.f32.mxu0 0.0
  %8573 = vmatmul.mubr.f32.gmra.mxu0 %v8479
  %v8574 = vpop.f32.mrf.mxu0
  %v8575 = vadd.f32 0.0, %v8574
  %v8576 = vpop.f32.mrf.mxu0
  %8577 = vmatprep.mubr.f32.mxu0 0.0
  %8578 = vmatmul.mubr.f32.gmra.mxu0 %v8482
  %v8579 = vpop.f32.mrf.mxu0
  %v8580 = vadd.f32 0.0, %v8579
  %v8581 = vpop.f32.mrf.mxu0
  %8582 = vmatprep.mubr.f32.mxu0 0.0
  %8583 = vmatmul.mubr.f32.gmra.mxu0 %v8485
  %v8584 = vpop.f32.mrf.mxu0
  %v8585 = vadd.f32 0.0, %v8584
  %v8586 = vpop.f32.mrf.mxu0
  %8587 = vmatprep.mubr.f32.mxu0 0.0
  %8588 = vmatmul.mubr.f32.gmra.mxu0 %v8488
  %v8589 = vpop.f32.mrf.mxu0
  %v8590 = vadd.f32 0.0, %v8589
  %v8591 = vpop.f32.mrf.mxu0
  %8592 = vmatprep.mubr.f32.mxu0 0.0
  %8593 = vmatmul.mubr.f32.gmra.mxu0 %v8491
  %v8594 = vpop.f32.mrf.mxu0
  %v8595 = vadd.f32 0.0, %v8594
  %v8596 = vpop.f32.mrf.mxu0
  %8597 = vdwg.mxu0
  %v8598 = vadd.f32 %v8461, %v8560
  %v8599 = vadd.f32 %v8462, %v8565
  %v8600 = vadd.f32 %v8463, %v8570
  %v8601 = vadd.f32 %v8464, %v8575
  %v8602 = vadd.f32 %v8465, %v8580
  %v8603 = vadd.f32 %v8466, %v8585
  %v8604 = vadd.f32 %v8467, %v8590
  %v8605 = vadd.f32 %v8468, %v8595
  %v8606 = vadd.f32 %v8598, %v4885
  %v8607 = vadd.f32 %v8599, %v4885
  %v8608 = vadd.f32 %v8600, %v4885
  %v8609 = vadd.f32 %v8601, %v4885
  %v8610 = vadd.f32 %v8602, %v4885
  %v8611 = vadd.f32 %v8603, %v4885
  %v8612 = vadd.f32 %v8604, %v4885
  %v8613 = vadd.f32 %v8605, %v4885
  %v8614 = vmax.f32 %v8606, 0.0
  %v8615 = vmax.f32 %v8607, 0.0
  %v8616 = vmax.f32 %v8608, 0.0
  %v8617 = vmax.f32 %v8609, 0.0
  %v8618 = vmax.f32 %v8610, 0.0
  %v8619 = vmax.f32 %v8611, 0.0
  %v8620 = vmax.f32 %v8612, 0.0
  %v8621 = vmax.f32 %v8613, 0.0
  %8622 = vmatprep.subr.mxu0 0.0
  %8623 = vmatpush1.msra.mxu0 0.0
  %8624 = vmatprep.subr.mxu0 0.0
  %8625 = vmatpush1.msra.mxu0 0.0
  %8626 = vmatprep.subr.mxu0 0.0
  %8627 = vmatpush1.msra.mxu0 0.0
  %8628 = vmatprep.subr.mxu0 0.0
  %8629 = vmatpush1.msra.mxu0 0.0
  %8630 = vmatprep.subr.mxu0 0.0
  %8631 = vmatpush1.msra.mxu0 0.0
  %8632 = vmatprep.subr.mxu0 0.0
  %8633 = vmatpush1.msra.mxu0 0.0
  %8634 = vmatprep.subr.mxu0 0.0
  %8635 = vmatpush1.msra.mxu0 0.0
  %8636 = vmatprep.subr.mxu0 0.0
  %8637 = vmatpush1.msra.mxu0 0.0
  %8638 = vmatprep.subr.mxu0 0.0
  %8639 = vmatpush1.msra.mxu0 %v8621
  %8640 = vmatprep.subr.mxu0 0.0
  %8641 = vmatpush1.msra.mxu0 %v8620
  %8642 = vmatprep.subr.mxu0 0.0
  %8643 = vmatpush1.msra.mxu0 %v8619
  %8644 = vmatprep.subr.mxu0 0.0
  %8645 = vmatpush1.msra.mxu0 %v8618
  %8646 = vmatprep.subr.mxu0 0.0
  %8647 = vmatpush1.msra.mxu0 %v8617
  %8648 = vmatprep.subr.mxu0 0.0
  %8649 = vmatpush1.msra.mxu0 %v8616
  %8650 = vmatprep.subr.mxu0 0.0
  %8651 = vmatpush1.msra.mxu0 %v8615
  %8652 = vmatprep.subr.mxu0 0.0
  %8653 = vmatpush1.msra.mxu0 %v8614
  %8654 = vmatprep.subr.mxu0 0.0
  %8655 = vmatpush2.msra.mxu0 0.0
  %8656 = vmatprep.subr.mxu0 0.0
  %8657 = vmatpush2.msra.mxu0 0.0
  %8658 = vmatprep.subr.mxu0 0.0
  %8659 = vmatpush2.msra.mxu0 0.0
  %8660 = vmatprep.subr.mxu0 0.0
  %8661 = vmatpush2.msra.mxu0 0.0
  %8662 = vmatprep.subr.mxu0 0.0
  %8663 = vmatpush2.msra.mxu0 0.0
  %8664 = vmatprep.subr.mxu0 0.0
  %8665 = vmatpush2.msra.mxu0 0.0
  %8666 = vmatprep.subr.mxu0 0.0
  %8667 = vmatpush2.msra.mxu0 0.0
  %8668 = vmatprep.subr.mxu0 0.0
  %8669 = vmatpush2.msra.mxu0 0.0
  %8670 = vmatprep.subr.mxu0 0.0
  %8671 = vmatpush2.msra.mxu0 0.0
  %8672 = vmatprep.subr.mxu0 0.0
  %8673 = vmatpush2.msra.mxu0 0.0
  %8674 = vmatprep.subr.mxu0 0.0
  %8675 = vmatpush2.msra.mxu0 0.0
  %8676 = vmatprep.subr.mxu0 0.0
  %8677 = vmatpush2.msra.mxu0 0.0
  %8678 = vmatprep.subr.mxu0 0.0
  %8679 = vmatpush2.msra.mxu0 0.0
  %8680 = vmatprep.subr.mxu0 0.0
  %8681 = vmatpush2.msra.mxu0 0.0
  %8682 = vmatprep.subr.mxu0 0.0
  %8683 = vmatpush2.msra.mxu0 0.0
  %8684 = vmatprep.subr.mxu0 0.0
  %8685 = vmatpush2.msra.mxu0 0.0
  %8686 = vmatprep.mubr.f32.mxu0 0.0
  %8687 = vmatmul.mubr.f32.gmra.mxu0 %v4904
  %v8688 = vpop.f32.mrf.mxu0
  %v8689 = vadd.f32 0.0, %v8688
  %v8690 = vpop.f32.mrf.mxu0
  %8691 = vmatprep.mubr.f32.mxu0 0.0
  %8692 = vmatmul.mubr.f32.gmra.mxu0 %v4907
  %v8693 = vpop.f32.mrf.mxu0
  %v8694 = vadd.f32 0.0, %v8693
  %v8695 = vpop.f32.mrf.mxu0
  %8696 = vmatprep.mubr.f32.mxu0 0.0
  %8697 = vmatmul.mubr.f32.gmra.mxu0 %v4910
  %v8698 = vpop.f32.mrf.mxu0
  %v8699 = vadd.f32 0.0, %v8698
  %v8700 = vpop.f32.mrf.mxu0
  %8701 = vmatprep.mubr.f32.mxu0 0.0
  %8702 = vmatmul.mubr.f32.gmra.mxu0 %v4913
  %v8703 = vpop.f32.mrf.mxu0
  %v8704 = vadd.f32 0.0, %v8703
  %v8705 = vpop.f32.mrf.mxu0
  %8706 = vmatprep.mubr.f32.mxu0 0.0
  %8707 = vmatmul.mubr.f32.gmra.mxu0 %v4916
  %v8708 = vpop.f32.mrf.mxu0
  %v8709 = vadd.f32 0.0, %v8708
  %v8710 = vpop.f32.mrf.mxu0
  %8711 = vmatprep.mubr.f32.mxu0 0.0
  %8712 = vmatmul.mubr.f32.gmra.mxu0 %v4919
  %v8713 = vpop.f32.mrf.mxu0
  %v8714 = vadd.f32 0.0, %v8713
  %v8715 = vpop.f32.mrf.mxu0
  %8716 = vmatprep.mubr.f32.mxu0 0.0
  %8717 = vmatmul.mubr.f32.gmra.mxu0 %v4922
  %v8718 = vpop.f32.mrf.mxu0
  %v8719 = vadd.f32 0.0, %v8718
  %v8720 = vpop.f32.mrf.mxu0
  %8721 = vmatprep.mubr.f32.mxu0 0.0
  %8722 = vmatmul.mubr.f32.gmra.mxu0 %v4925
  %v8723 = vpop.f32.mrf.mxu0
  %v8724 = vadd.f32 0.0, %v8723
  %v8725 = vpop.f32.mrf.mxu0
  %8726 = vmatprep.mubr.f32.mxu0 0.0
  %8727 = vmatmul.mubr.f32.gmra.mxu0 %v4928
  %v8728 = vpop.f32.mrf.mxu0
  %v8729 = vadd.f32 0.0, %v8728
  %v8730 = vpop.f32.mrf.mxu0
  %8731 = vmatprep.mubr.f32.mxu0 0.0
  %8732 = vmatmul.mubr.f32.gmra.mxu0 %v4931
  %v8733 = vpop.f32.mrf.mxu0
  %v8734 = vadd.f32 0.0, %v8733
  %v8735 = vpop.f32.mrf.mxu0
  %8736 = vmatprep.mubr.f32.mxu0 0.0
  %8737 = vmatmul.mubr.f32.gmra.mxu0 %v4934
  %v8738 = vpop.f32.mrf.mxu0
  %v8739 = vadd.f32 0.0, %v8738
  %v8740 = vpop.f32.mrf.mxu0
  %8741 = vmatprep.mubr.f32.mxu0 0.0
  %8742 = vmatmul.mubr.f32.gmra.mxu0 %v4937
  %v8743 = vpop.f32.mrf.mxu0
  %v8744 = vadd.f32 0.0, %v8743
  %v8745 = vpop.f32.mrf.mxu0
  %8746 = vmatprep.mubr.f32.mxu0 0.0
  %8747 = vmatmul.mubr.f32.gmra.mxu0 %v4940
  %v8748 = vpop.f32.mrf.mxu0
  %v8749 = vadd.f32 0.0, %v8748
  %v8750 = vpop.f32.mrf.mxu0
  %8751 = vmatprep.mubr.f32.mxu0 0.0
  %8752 = vmatmul.mubr.f32.gmra.mxu0 %v4943
  %v8753 = vpop.f32.mrf.mxu0
  %v8754 = vadd.f32 0.0, %v8753
  %v8755 = vpop.f32.mrf.mxu0
  %8756 = vmatprep.mubr.f32.mxu0 0.0
  %8757 = vmatmul.mubr.f32.gmra.mxu0 %v4946
  %v8758 = vpop.f32.mrf.mxu0
  %v8759 = vadd.f32 0.0, %v8758
  %v8760 = vpop.f32.mrf.mxu0
  %8761 = vmatprep.mubr.f32.mxu0 0.0
  %8762 = vmatmul.mubr.f32.gmra.mxu0 %v4949
  %v8763 = vpop.f32.mrf.mxu0
  %v8764 = vadd.f32 0.0, %v8763
  %v8765 = vpop.f32.mrf.mxu0
  %8766 = vmatprep.mubr.f32.mxu0 0.0
  %8767 = vmatmul.mubr.f32.gmra.mxu0 %v4952
  %v8768 = vpop.f32.mrf.mxu0
  %v8769 = vadd.f32 0.0, %v8768
  %v8770 = vpop.f32.mrf.mxu0
  %8771 = vmatprep.mubr.f32.mxu0 0.0
  %8772 = vmatmul.mubr.f32.gmra.mxu0 %v4955
  %v8773 = vpop.f32.mrf.mxu0
  %v8774 = vadd.f32 0.0, %v8773
  %v8775 = vpop.f32.mrf.mxu0
  %8776 = vdwg.mxu0
  %8777 = vmatprep.subr.mxu0 %v1234
  %8778 = vmatpush1.msra.mxu0 %v1233
  %8779 = vmatprep.subr.mxu0 %v1232
  %8780 = vmatpush1.msra.mxu0 %v1231
  %8781 = vmatprep.subr.mxu0 %v1230
  %8782 = vmatpush1.msra.mxu0 %v1229
  %8783 = vmatprep.subr.mxu0 %v1228
  %8784 = vmatpush1.msra.mxu0 %v1227
  %8785 = vmatprep.subr.mxu0 %v1226
  %8786 = vmatpush1.msra.mxu0 %v1225
  %8787 = vmatprep.subr.mxu0 %v1224
  %8788 = vmatpush1.msra.mxu0 %v1223
  %8789 = vmatprep.subr.mxu0 %v1222
  %8790 = vmatpush1.msra.mxu0 %v1221
  %8791 = vmatprep.subr.mxu0 %v1220
  %8792 = vmatpush1.msra.mxu0 %v1219
  %8793 = vmatprep.subr.mxu0 %v1218
  %8794 = vmatpush1.msra.mxu0 %v1217
  %8795 = vmatprep.subr.mxu0 %v1216
  %8796 = vmatpush1.msra.mxu0 %v1215
  %8797 = vmatprep.subr.mxu0 %v1214
  %8798 = vmatpush1.msra.mxu0 %v1213
  %8799 = vmatprep.subr.mxu0 %v1212
  %8800 = vmatpush1.msra.mxu0 %v1211
  %8801 = vmatprep.subr.mxu0 %v1210
  %8802 = vmatpush1.msra.mxu0 %v1209
  %8803 = vmatprep.subr.mxu0 %v1208
  %8804 = vmatpush1.msra.mxu0 %v1207
  %8805 = vmatprep.subr.mxu0 %v1206
  %8806 = vmatpush1.msra.mxu0 %v1205
  %8807 = vmatprep.subr.mxu0 %v1204
  %8808 = vmatpush1.msra.mxu0 %v1203
  %8809 = vmatprep.subr.mxu0 %v1266
  %8810 = vmatpush2.msra.mxu0 %v1265
  %8811 = vmatprep.subr.mxu0 %v1264
  %8812 = vmatpush2.msra.mxu0 %v1263
  %8813 = vmatprep.subr.mxu0 %v1262
  %8814 = vmatpush2.msra.mxu0 %v1261
  %8815 = vmatprep.subr.mxu0 %v1260
  %8816 = vmatpush2.msra.mxu0 %v1259
  %8817 = vmatprep.subr.mxu0 %v1258
  %8818 = vmatpush2.msra.mxu0 %v1257
  %8819 = vmatprep.subr.mxu0 %v1256
  %8820 = vmatpush2.msra.mxu0 %v1255
  %8821 = vmatprep.subr.mxu0 %v1254
  %8822 = vmatpush2.msra.mxu0 %v1253
  %8823 = vmatprep.subr.mxu0 %v1252
  %8824 = vmatpush2.msra.mxu0 %v1251
  %8825 = vmatprep.subr.mxu0 %v1250
  %8826 = vmatpush2.msra.mxu0 %v1249
  %8827 = vmatprep.subr.mxu0 %v1248
  %8828 = vmatpush2.msra.mxu0 %v1247
  %8829 = vmatprep.subr.mxu0 %v1246
  %8830 = vmatpush2.msra.mxu0 %v1245
  %8831 = vmatprep.subr.mxu0 %v1244
  %8832 = vmatpush2.msra.mxu0 %v1243
  %8833 = vmatprep.subr.mxu0 %v1242
  %8834 = vmatpush2.msra.mxu0 %v1241
  %8835 = vmatprep.subr.mxu0 %v1240
  %8836 = vmatpush2.msra.mxu0 %v1239
  %8837 = vmatprep.subr.mxu0 %v1238
  %8838 = vmatpush2.msra.mxu0 %v1237
  %8839 = vmatprep.subr.mxu0 %v1236
  %8840 = vmatpush2.msra.mxu0 %v1235
  %8841 = vmatprep.mubr.f32.mxu0 %v8699
  %8842 = vmatmul.mubr.f32.gmra.mxu0 %v8689
  %v8843 = vpop.f32.mrf.mxu0
  %v8844 = vadd.f32 %v5117, %v8843
  %v8845 = vpop.f32.mrf.mxu0
  %v8846 = vadd.f32 %v5121, %v8845
  %8847 = vmatprep.mubr.f32.mxu0 %v8704
  %8848 = vmatmul.mubr.f32.gmra.mxu0 %v8694
  %v8849 = vpop.f32.mrf.mxu0
  %v8850 = vadd.f32 %v5117, %v8849
  %v8851 = vpop.f32.mrf.mxu0
  %v8852 = vadd.f32 %v5121, %v8851
  %8853 = vdwg.mxu0
  %8854 = vmatprep.subr.mxu0 %v1298
  %8855 = vmatpush1.msra.mxu0 %v1297
  %8856 = vmatprep.subr.mxu0 %v1296
  %8857 = vmatpush1.msra.mxu0 %v1295
  %8858 = vmatprep.subr.mxu0 %v1294
  %8859 = vmatpush1.msra.mxu0 %v1293
  %8860 = vmatprep.subr.mxu0 %v1292
  %8861 = vmatpush1.msra.mxu0 %v1291
  %8862 = vmatprep.subr.mxu0 %v1290
  %8863 = vmatpush1.msra.mxu0 %v1289
  %8864 = vmatprep.subr.mxu0 %v1288
  %8865 = vmatpush1.msra.mxu0 %v1287
  %8866 = vmatprep.subr.mxu0 %v1286
  %8867 = vmatpush1.msra.mxu0 %v1285
  %8868 = vmatprep.subr.mxu0 %v1284
  %8869 = vmatpush1.msra.mxu0 %v1283
  %8870 = vmatprep.subr.mxu0 %v1282
  %8871 = vmatpush1.msra.mxu0 %v1281
  %8872 = vmatprep.subr.mxu0 %v1280
  %8873 = vmatpush1.msra.mxu0 %v1279
  %8874 = vmatprep.subr.mxu0 %v1278
  %8875 = vmatpush1.msra.mxu0 %v1277
  %8876 = vmatprep.subr.mxu0 %v1276
  %8877 = vmatpush1.msra.mxu0 %v1275
  %8878 = vmatprep.subr.mxu0 %v1274
  %8879 = vmatpush1.msra.mxu0 %v1273
  %8880 = vmatprep.subr.mxu0 %v1272
  %8881 = vmatpush1.msra.mxu0 %v1271
  %8882 = vmatprep.subr.mxu0 %v1270
  %8883 = vmatpush1.msra.mxu0 %v1269
  %8884 = vmatprep.subr.mxu0 %v1268
  %8885 = vmatpush1.msra.mxu0 %v1267
  %8886 = vmatprep.subr.mxu0 %v1330
  %8887 = vmatpush2.msra.mxu0 %v1329
  %8888 = vmatprep.subr.mxu0 %v1328
  %8889 = vmatpush2.msra.mxu0 %v1327
  %8890 = vmatprep.subr.mxu0 %v1326
  %8891 = vmatpush2.msra.mxu0 %v1325
  %8892 = vmatprep.subr.mxu0 %v1324
  %8893 = vmatpush2.msra.mxu0 %v1323
  %8894 = vmatprep.subr.mxu0 %v1322
  %8895 = vmatpush2.msra.mxu0 %v1321
  %8896 = vmatprep.subr.mxu0 %v1320
  %8897 = vmatpush2.msra.mxu0 %v1319
  %8898 = vmatprep.subr.mxu0 %v1318
  %8899 = vmatpush2.msra.mxu0 %v1317
  %8900 = vmatprep.subr.mxu0 %v1316
  %8901 = vmatpush2.msra.mxu0 %v1315
  %8902 = vmatprep.subr.mxu0 %v1314
  %8903 = vmatpush2.msra.mxu0 %v1313
  %8904 = vmatprep.subr.mxu0 %v1312
  %8905 = vmatpush2.msra.mxu0 %v1311
  %8906 = vmatprep.subr.mxu0 %v1310
  %8907 = vmatpush2.msra.mxu0 %v1309
  %8908 = vmatprep.subr.mxu0 %v1308
  %8909 = vmatpush2.msra.mxu0 %v1307
  %8910 = vmatprep.subr.mxu0 %v1306
  %8911 = vmatpush2.msra.mxu0 %v1305
  %8912 = vmatprep.subr.mxu0 %v1304
  %8913 = vmatpush2.msra.mxu0 %v1303
  %8914 = vmatprep.subr.mxu0 %v1302
  %8915 = vmatpush2.msra.mxu0 %v1301
  %8916 = vmatprep.subr.mxu0 %v1300
  %8917 = vmatpush2.msra.mxu0 %v1299
  %8918 = vmatprep.mubr.f32.mxu0 %v8719
  %8919 = vmatmul.mubr.f32.gmra.mxu0 %v8709
  %v8920 = vpop.f32.mrf.mxu0
  %v8921 = vadd.f32 %v8844, %v8920
  %v8922 = vpop.f32.mrf.mxu0
  %v8923 = vadd.f32 %v8846, %v8922
  %8924 = vmatprep.mubr.f32.mxu0 %v8724
  %8925 = vmatmul.mubr.f32.gmra.mxu0 %v8714
  %v8926 = vpop.f32.mrf.mxu0
  %v8927 = vadd.f32 %v8850, %v8926
  %v8928 = vpop.f32.mrf.mxu0
  %v8929 = vadd.f32 %v8852, %v8928
  %8930 = vdwg.mxu0
  %8931 = vmatprep.subr.mxu0 %v1362
  %8932 = vmatpush1.msra.mxu0 %v1361
  %8933 = vmatprep.subr.mxu0 %v1360
  %8934 = vmatpush1.msra.mxu0 %v1359
  %8935 = vmatprep.subr.mxu0 %v1358
  %8936 = vmatpush1.msra.mxu0 %v1357
  %8937 = vmatprep.subr.mxu0 %v1356
  %8938 = vmatpush1.msra.mxu0 %v1355
  %8939 = vmatprep.subr.mxu0 %v1354
  %8940 = vmatpush1.msra.mxu0 %v1353
  %8941 = vmatprep.subr.mxu0 %v1352
  %8942 = vmatpush1.msra.mxu0 %v1351
  %8943 = vmatprep.subr.mxu0 %v1350
  %8944 = vmatpush1.msra.mxu0 %v1349
  %8945 = vmatprep.subr.mxu0 %v1348
  %8946 = vmatpush1.msra.mxu0 %v1347
  %8947 = vmatprep.subr.mxu0 %v1346
  %8948 = vmatpush1.msra.mxu0 %v1345
  %8949 = vmatprep.subr.mxu0 %v1344
  %8950 = vmatpush1.msra.mxu0 %v1343
  %8951 = vmatprep.subr.mxu0 %v1342
  %8952 = vmatpush1.msra.mxu0 %v1341
  %8953 = vmatprep.subr.mxu0 %v1340
  %8954 = vmatpush1.msra.mxu0 %v1339
  %8955 = vmatprep.subr.mxu0 %v1338
  %8956 = vmatpush1.msra.mxu0 %v1337
  %8957 = vmatprep.subr.mxu0 %v1336
  %8958 = vmatpush1.msra.mxu0 %v1335
  %8959 = vmatprep.subr.mxu0 %v1334
  %8960 = vmatpush1.msra.mxu0 %v1333
  %8961 = vmatprep.subr.mxu0 %v1332
  %8962 = vmatpush1.msra.mxu0 %v1331
  %8963 = vmatprep.subr.mxu0 %v1394
  %8964 = vmatpush2.msra.mxu0 %v1393
  %8965 = vmatprep.subr.mxu0 %v1392
  %8966 = vmatpush2.msra.mxu0 %v1391
  %8967 = vmatprep.subr.mxu0 %v1390
  %8968 = vmatpush2.msra.mxu0 %v1389
  %8969 = vmatprep.subr.mxu0 %v1388
  %8970 = vmatpush2.msra.mxu0 %v1387
  %8971 = vmatprep.subr.mxu0 %v1386
  %8972 = vmatpush2.msra.mxu0 %v1385
  %8973 = vmatprep.subr.mxu0 %v1384
  %8974 = vmatpush2.msra.mxu0 %v1383
  %8975 = vmatprep.subr.mxu0 %v1382
  %8976 = vmatpush2.msra.mxu0 %v1381
  %8977 = vmatprep.subr.mxu0 %v1380
  %8978 = vmatpush2.msra.mxu0 %v1379
  %8979 = vmatprep.subr.mxu0 %v1378
  %8980 = vmatpush2.msra.mxu0 %v1377
  %8981 = vmatprep.subr.mxu0 %v1376
  %8982 = vmatpush2.msra.mxu0 %v1375
  %8983 = vmatprep.subr.mxu0 %v1374
  %8984 = vmatpush2.msra.mxu0 %v1373
  %8985 = vmatprep.subr.mxu0 %v1372
  %8986 = vmatpush2.msra.mxu0 %v1371
  %8987 = vmatprep.subr.mxu0 %v1370
  %8988 = vmatpush2.msra.mxu0 %v1369
  %8989 = vmatprep.subr.mxu0 %v1368
  %8990 = vmatpush2.msra.mxu0 %v1367
  %8991 = vmatprep.subr.mxu0 %v1366
  %8992 = vmatpush2.msra.mxu0 %v1365
  %8993 = vmatprep.subr.mxu0 %v1364
  %8994 = vmatpush2.msra.mxu0 %v1363
  %8995 = vmatprep.mubr.f32.mxu0 %v8739
  %8996 = vmatmul.mubr.f32.gmra.mxu0 %v8729
  %v8997 = vpop.f32.mrf.mxu0
  %v8998 = vadd.f32 %v8921, %v8997
  %v8999 = vpop.f32.mrf.mxu0
  %v9000 = vadd.f32 %v8923, %v8999
  %9001 = vmatprep.mubr.f32.mxu0 %v8744
  %9002 = vmatmul.mubr.f32.gmra.mxu0 %v8734
  %v9003 = vpop.f32.mrf.mxu0
  %v9004 = vadd.f32 %v8927, %v9003
  %v9005 = vpop.f32.mrf.mxu0
  %v9006 = vadd.f32 %v8929, %v9005
  %9007 = vdwg.mxu0
  %9008 = vmatprep.subr.mxu0 %v1426
  %9009 = vmatpush1.msra.mxu0 %v1425
  %9010 = vmatprep.subr.mxu0 %v1424
  %9011 = vmatpush1.msra.mxu0 %v1423
  %9012 = vmatprep.subr.mxu0 %v1422
  %9013 = vmatpush1.msra.mxu0 %v1421
  %9014 = vmatprep.subr.mxu0 %v1420
  %9015 = vmatpush1.msra.mxu0 %v1419
  %9016 = vmatprep.subr.mxu0 %v1418
  %9017 = vmatpush1.msra.mxu0 %v1417
  %9018 = vmatprep.subr.mxu0 %v1416
  %9019 = vmatpush1.msra.mxu0 %v1415
  %9020 = vmatprep.subr.mxu0 %v1414
  %9021 = vmatpush1.msra.mxu0 %v1413
  %9022 = vmatprep.subr.mxu0 %v1412
  %9023 = vmatpush1.msra.mxu0 %v1411
  %9024 = vmatprep.subr.mxu0 %v1410
  %9025 = vmatpush1.msra.mxu0 %v1409
  %9026 = vmatprep.subr.mxu0 %v1408
  %9027 = vmatpush1.msra.mxu0 %v1407
  %9028 = vmatprep.subr.mxu0 %v1406
  %9029 = vmatpush1.msra.mxu0 %v1405
  %9030 = vmatprep.subr.mxu0 %v1404
  %9031 = vmatpush1.msra.mxu0 %v1403
  %9032 = vmatprep.subr.mxu0 %v1402
  %9033 = vmatpush1.msra.mxu0 %v1401
  %9034 = vmatprep.subr.mxu0 %v1400
  %9035 = vmatpush1.msra.mxu0 %v1399
  %9036 = vmatprep.subr.mxu0 %v1398
  %9037 = vmatpush1.msra.mxu0 %v1397
  %9038 = vmatprep.subr.mxu0 %v1396
  %9039 = vmatpush1.msra.mxu0 %v1395
  %9040 = vmatprep.subr.mxu0 %v1458
  %9041 = vmatpush2.msra.mxu0 %v1457
  %9042 = vmatprep.subr.mxu0 %v1456
  %9043 = vmatpush2.msra.mxu0 %v1455
  %9044 = vmatprep.subr.mxu0 %v1454
  %9045 = vmatpush2.msra.mxu0 %v1453
  %9046 = vmatprep.subr.mxu0 %v1452
  %9047 = vmatpush2.msra.mxu0 %v1451
  %9048 = vmatprep.subr.mxu0 %v1450
  %9049 = vmatpush2.msra.mxu0 %v1449
  %9050 = vmatprep.subr.mxu0 %v1448
  %9051 = vmatpush2.msra.mxu0 %v1447
  %9052 = vmatprep.subr.mxu0 %v1446
  %9053 = vmatpush2.msra.mxu0 %v1445
  %9054 = vmatprep.subr.mxu0 %v1444
  %9055 = vmatpush2.msra.mxu0 %v1443
  %9056 = vmatprep.subr.mxu0 %v1442
  %9057 = vmatpush2.msra.mxu0 %v1441
  %9058 = vmatprep.subr.mxu0 %v1440
  %9059 = vmatpush2.msra.mxu0 %v1439
  %9060 = vmatprep.subr.mxu0 %v1438
  %9061 = vmatpush2.msra.mxu0 %v1437
  %9062 = vmatprep.subr.mxu0 %v1436
  %9063 = vmatpush2.msra.mxu0 %v1435
  %9064 = vmatprep.subr.mxu0 %v1434
  %9065 = vmatpush2.msra.mxu0 %v1433
  %9066 = vmatprep.subr.mxu0 %v1432
  %9067 = vmatpush2.msra.mxu0 %v1431
  %9068 = vmatprep.subr.mxu0 %v1430
  %9069 = vmatpush2.msra.mxu0 %v1429
  %9070 = vmatprep.subr.mxu0 %v1428
  %9071 = vmatpush2.msra.mxu0 %v1427
  %9072 = vmatprep.mubr.f32.mxu0 %v8759
  %9073 = vmatmul.mubr.f32.gmra.mxu0 %v8749
  %v9074 = vpop.f32.mrf.mxu0
  %v9075 = vadd.f32 %v8998, %v9074
  %v9076 = vpop.f32.mrf.mxu0
  %v9077 = vadd.f32 %v9000, %v9076
  %9078 = vmatprep.mubr.f32.mxu0 %v8764
  %9079 = vmatmul.mubr.f32.gmra.mxu0 %v8754
  %v9080 = vpop.f32.mrf.mxu0
  %v9081 = vadd.f32 %v9004, %v9080
  %v9082 = vpop.f32.mrf.mxu0
  %v9083 = vadd.f32 %v9006, %v9082
  %9084 = vdwg.mxu0
  %9085 = vmatprep.subr.mxu0 %v1490
  %9086 = vmatpush1.msra.mxu0 %v1489
  %9087 = vmatprep.subr.mxu0 %v1488
  %9088 = vmatpush1.msra.mxu0 %v1487
  %9089 = vmatprep.subr.mxu0 %v1486
  %9090 = vmatpush1.msra.mxu0 %v1485
  %9091 = vmatprep.subr.mxu0 %v1484
  %9092 = vmatpush1.msra.mxu0 %v1483
  %9093 = vmatprep.subr.mxu0 %v1482
  %9094 = vmatpush1.msra.mxu0 %v1481
  %9095 = vmatprep.subr.mxu0 %v1480
  %9096 = vmatpush1.msra.mxu0 %v1479
  %9097 = vmatprep.subr.mxu0 %v1478
  %9098 = vmatpush1.msra.mxu0 %v1477
  %9099 = vmatprep.subr.mxu0 %v1476
  %9100 = vmatpush1.msra.mxu0 %v1475
  %9101 = vmatprep.subr.mxu0 %v1474
  %9102 = vmatpush1.msra.mxu0 %v1473
  %9103 = vmatprep.subr.mxu0 %v1472
  %9104 = vmatpush1.msra.mxu0 %v1471
  %9105 = vmatprep.subr.mxu0 %v1470
  %9106 = vmatpush1.msra.mxu0 %v1469
  %9107 = vmatprep.subr.mxu0 %v1468
  %9108 = vmatpush1.msra.mxu0 %v1467
  %9109 = vmatprep.subr.mxu0 %v1466
  %9110 = vmatpush1.msra.mxu0 %v1465
  %9111 = vmatprep.subr.mxu0 %v1464
  %9112 = vmatpush1.msra.mxu0 %v1463
  %9113 = vmatprep.subr.mxu0 %v1462
  %9114 = vmatpush1.msra.mxu0 %v1461
  %9115 = vmatprep.subr.mxu0 %v1460
  %9116 = vmatpush1.msra.mxu0 %v1459
  %9117 = vmatprep.subr.mxu0 0.0
  %9118 = vmatpush2.msra.mxu0 0.0
  %9119 = vmatprep.subr.mxu0 0.0
  %9120 = vmatpush2.msra.mxu0 0.0
  %9121 = vmatprep.subr.mxu0 0.0
  %9122 = vmatpush2.msra.mxu0 0.0
  %9123 = vmatprep.subr.mxu0 0.0
  %9124 = vmatpush2.msra.mxu0 0.0
  %9125 = vmatprep.subr.mxu0 0.0
  %9126 = vmatpush2.msra.mxu0 0.0
  %9127 = vmatprep.subr.mxu0 0.0
  %9128 = vmatpush2.msra.mxu0 0.0
  %9129 = vmatprep.subr.mxu0 0.0
  %9130 = vmatpush2.msra.mxu0 0.0
  %9131 = vmatprep.subr.mxu0 0.0
  %9132 = vmatpush2.msra.mxu0 0.0
  %9133 = vmatprep.subr.mxu0 0.0
  %9134 = vmatpush2.msra.mxu0 0.0
  %9135 = vmatprep.subr.mxu0 0.0
  %9136 = vmatpush2.msra.mxu0 0.0
  %9137 = vmatprep.subr.mxu0 0.0
  %9138 = vmatpush2.msra.mxu0 0.0
  %9139 = vmatprep.subr.mxu0 0.0
  %9140 = vmatpush2.msra.mxu0 0.0
  %9141 = vmatprep.subr.mxu0 0.0
  %9142 = vmatpush2.msra.mxu0 0.0
  %9143 = vmatprep.subr.mxu0 0.0
  %9144 = vmatpush2.msra.mxu0 0.0
  %9145 = vmatprep.subr.mxu0 0.0
  %9146 = vmatpush2.msra.mxu0 0.0
  %9147 = vmatprep.subr.mxu0 0.0
  %9148 = vmatpush2.msra.mxu0 0.0
  %9149 = vmatprep.mubr.f32.mxu0 0.0
  %9150 = vmatmul.mubr.f32.gmra.mxu0 %v8769
  %v9151 = vpop.f32.mrf.mxu0
  %v9152 = vadd.f32 %v9075, %v9151
  %v9153 = vpop.f32.mrf.mxu0
  %v9154 = vadd.f32 %v9077, %v9153
  %9155 = vmatprep.mubr.f32.mxu0 0.0
  %9156 = vmatmul.mubr.f32.gmra.mxu0 %v8774
  %v9157 = vpop.f32.mrf.mxu0
  %v9158 = vadd.f32 %v9081, %v9157
  %v9159 = vpop.f32.mrf.mxu0
  %v9160 = vadd.f32 %v9083, %v9159
  %9161 = vdwg.mxu0
  %v9162 = vmax.f32 %v9152, 0.0
  %v9163 = vmax.f32 %v9154, 0.0
  %v9164 = vmax.f32 %v9158, 0.0
  %v9165 = vmax.f32 %v9160, 0.0
  %9166 = vmatprep.subr.mxu0 0.0
  %9167 = vmatpush1.msra.mxu0 0.0
  %9168 = vmatprep.subr.mxu0 0.0
  %9169 = vmatpush1.msra.mxu0 0.0
  %9170 = vmatprep.subr.mxu0 0.0
  %9171 = vmatpush1.msra.mxu0 0.0
  %9172 = vmatprep.subr.mxu0 0.0
  %9173 = vmatpush1.msra.mxu0 0.0
  %9174 = vmatprep.subr.mxu0 0.0
  %9175 = vmatpush1.msra.mxu0 0.0
  %9176 = vmatprep.subr.mxu0 0.0
  %9177 = vmatpush1.msra.mxu0 0.0
  %9178 = vmatprep.subr.mxu0 0.0
  %9179 = vmatpush1.msra.mxu0 0.0
  %9180 = vmatprep.subr.mxu0 0.0
  %9181 = vmatpush1.msra.mxu0 0.0
  %9182 = vmatprep.subr.mxu0 0.0
  %9183 = vmatpush1.msra.mxu0 0.0
  %9184 = vmatprep.subr.mxu0 0.0
  %9185 = vmatpush1.msra.mxu0 0.0
  %9186 = vmatprep.subr.mxu0 0.0
  %9187 = vmatpush1.msra.mxu0 0.0
  %9188 = vmatprep.subr.mxu0 0.0
  %9189 = vmatpush1.msra.mxu0 0.0
  %9190 = vmatprep.subr.mxu0 0.0
  %9191 = vmatpush1.msra.mxu0 0.0
  %9192 = vmatprep.subr.mxu0 0.0
  %9193 = vmatpush1.msra.mxu0 0.0
  %9194 = vmatprep.subr.mxu0 %v9165
  %9195 = vmatpush1.msra.mxu0 %v9164
  %9196 = vmatprep.subr.mxu0 %v9163
  %9197 = vmatpush1.msra.mxu0 %v9162
  %9198 = vmatprep.subr.mxu0 0.0
  %9199 = vmatpush2.msra.mxu0 0.0
  %9200 = vmatprep.subr.mxu0 0.0
  %9201 = vmatpush2.msra.mxu0 0.0
  %9202 = vmatprep.subr.mxu0 0.0
  %9203 = vmatpush2.msra.mxu0 0.0
  %9204 = vmatprep.subr.mxu0 0.0
  %9205 = vmatpush2.msra.mxu0 0.0
  %9206 = vmatprep.subr.mxu0 0.0
  %9207 = vmatpush2.msra.mxu0 0.0
  %9208 = vmatprep.subr.mxu0 0.0
  %9209 = vmatpush2.msra.mxu0 0.0
  %9210 = vmatprep.subr.mxu0 0.0
  %9211 = vmatpush2.msra.mxu0 0.0
  %9212 = vmatprep.subr.mxu0 0.0
  %9213 = vmatpush2.msra.mxu0 0.0
  %9214 = vmatprep.subr.mxu0 0.0
  %9215 = vmatpush2.msra.mxu0 0.0
  %9216 = vmatprep.subr.mxu0 0.0
  %9217 = vmatpush2.msra.mxu0 0.0
  %9218 = vmatprep.subr.mxu0 0.0
  %9219 = vmatpush2.msra.mxu0 0.0
  %9220 = vmatprep.subr.mxu0 0.0
  %9221 = vmatpush2.msra.mxu0 0.0
  %9222 = vmatprep.subr.mxu0 0.0
  %9223 = vmatpush2.msra.mxu0 0.0
  %9224 = vmatprep.subr.mxu0 0.0
  %9225 = vmatpush2.msra.mxu0 0.0
  %9226 = vmatprep.subr.mxu0 0.0
  %9227 = vmatpush2.msra.mxu0 0.0
  %9228 = vmatprep.subr.mxu0 0.0
  %9229 = vmatpush2.msra.mxu0 0.0
  %9230 = vmatprep.mubr.f32.mxu0 0.0
  %9231 = vmatmul.mubr.f32.gmra.mxu0 %v5515
  %v9232 = vpop.f32.mrf.mxu0
  %v9233 = vadd.f32 0.0, %v9232
  %v9234 = vpop.f32.mrf.mxu0
  %v9235 = vadd.f32 0.0, %v9234
  %9236 = vmatprep.mubr.f32.mxu0 0.0
  %9237 = vmatmul.mubr.f32.gmra.mxu0 %v5518
  %v9238 = vpop.f32.mrf.mxu0
  %v9239 = vadd.f32 0.0, %v9238
  %v9240 = vpop.f32.mrf.mxu0
  %v9241 = vadd.f32 0.0, %v9240
  %9242 = vmatprep.mubr.f32.mxu0 0.0
  %9243 = vmatmul.mubr.f32.gmra.mxu0 %v5521
  %v9244 = vpop.f32.mrf.mxu0
  %v9245 = vadd.f32 0.0, %v9244
  %v9246 = vpop.f32.mrf.mxu0
  %v9247 = vadd.f32 0.0, %v9246
  %9248 = vmatprep.mubr.f32.mxu0 0.0
  %9249 = vmatmul.mubr.f32.gmra.mxu0 %v5524
  %v9250 = vpop.f32.mrf.mxu0
  %v9251 = vadd.f32 0.0, %v9250
  %v9252 = vpop.f32.mrf.mxu0
  %v9253 = vadd.f32 0.0, %v9252
  %9254 = vmatprep.mubr.f32.mxu0 0.0
  %9255 = vmatmul.mubr.f32.gmra.mxu0 %v5527
  %v9256 = vpop.f32.mrf.mxu0
  %v9257 = vadd.f32 0.0, %v9256
  %v9258 = vpop.f32.mrf.mxu0
  %v9259 = vadd.f32 0.0, %v9258
  %9260 = vmatprep.mubr.f32.mxu0 0.0
  %9261 = vmatmul.mubr.f32.gmra.mxu0 %v5530
  %v9262 = vpop.f32.mrf.mxu0
  %v9263 = vadd.f32 0.0, %v9262
  %v9264 = vpop.f32.mrf.mxu0
  %v9265 = vadd.f32 0.0, %v9264
  %9266 = vmatprep.mubr.f32.mxu0 0.0
  %9267 = vmatmul.mubr.f32.gmra.mxu0 %v5533
  %v9268 = vpop.f32.mrf.mxu0
  %v9269 = vadd.f32 0.0, %v9268
  %v9270 = vpop.f32.mrf.mxu0
  %v9271 = vadd.f32 0.0, %v9270
  %9272 = vmatprep.mubr.f32.mxu0 0.0
  %9273 = vmatmul.mubr.f32.gmra.mxu0 %v5536
  %v9274 = vpop.f32.mrf.mxu0
  %v9275 = vadd.f32 0.0, %v9274
  %v9276 = vpop.f32.mrf.mxu0
  %v9277 = vadd.f32 0.0, %v9276
  %9278 = vmatprep.mubr.f32.mxu0 0.0
  %9279 = vmatmul.mubr.f32.gmra.mxu0 %v5539
  %v9280 = vpop.f32.mrf.mxu0
  %v9281 = vadd.f32 0.0, %v9280
  %v9282 = vpop.f32.mrf.mxu0
  %v9283 = vadd.f32 0.0, %v9282
  %9284 = vdwg.mxu0
  %9285 = vmatprep.subr.mxu0 %v2146
  %9286 = vmatpush1.msra.mxu0 %v2145
  %9287 = vmatprep.subr.mxu0 %v2142
  %9288 = vmatpush1.msra.mxu0 %v2141
  %9289 = vmatprep.subr.mxu0 %v2138
  %9290 = vmatpush1.msra.mxu0 %v2137
  %9291 = vmatprep.subr.mxu0 %v2134
  %9292 = vmatpush1.msra.mxu0 %v2133
  %9293 = vmatprep.subr.mxu0 %v2130
  %9294 = vmatpush1.msra.mxu0 %v2129
  %9295 = vmatprep.subr.mxu0 %v2126
  %9296 = vmatpush1.msra.mxu0 %v2125
  %9297 = vmatprep.subr.mxu0 %v2122
  %9298 = vmatpush1.msra.mxu0 %v2121
  %9299 = vmatprep.subr.mxu0 %v2118
  %9300 = vmatpush1.msra.mxu0 %v2117
  %9301 = vmatprep.subr.mxu0 %v2114
  %9302 = vmatpush1.msra.mxu0 %v2113
  %9303 = vmatprep.subr.mxu0 %v2110
  %9304 = vmatpush1.msra.mxu0 %v2109
  %9305 = vmatprep.subr.mxu0 %v2106
  %9306 = vmatpush1.msra.mxu0 %v2105
  %9307 = vmatprep.subr.mxu0 %v2102
  %9308 = vmatpush1.msra.mxu0 %v2101
  %9309 = vmatprep.subr.mxu0 %v2098
  %9310 = vmatpush1.msra.mxu0 %v2097
  %9311 = vmatprep.subr.mxu0 %v2094
  %9312 = vmatpush1.msra.mxu0 %v2093
  %9313 = vmatprep.subr.mxu0 %v2090
  %9314 = vmatpush1.msra.mxu0 %v2089
  %9315 = vmatprep.subr.mxu0 %v2086
  %9316 = vmatpush1.msra.mxu0 %v2085
  %9317 = vmatprep.subr.mxu0 %v2210
  %9318 = vmatpush2.msra.mxu0 %v2209
  %9319 = vmatprep.subr.mxu0 %v2206
  %9320 = vmatpush2.msra.mxu0 %v2205
  %9321 = vmatprep.subr.mxu0 %v2202
  %9322 = vmatpush2.msra.mxu0 %v2201
  %9323 = vmatprep.subr.mxu0 %v2198
  %9324 = vmatpush2.msra.mxu0 %v2197
  %9325 = vmatprep.subr.mxu0 %v2194
  %9326 = vmatpush2.msra.mxu0 %v2193
  %9327 = vmatprep.subr.mxu0 %v2190
  %9328 = vmatpush2.msra.mxu0 %v2189
  %9329 = vmatprep.subr.mxu0 %v2186
  %9330 = vmatpush2.msra.mxu0 %v2185
  %9331 = vmatprep.subr.mxu0 %v2182
  %9332 = vmatpush2.msra.mxu0 %v2181
  %9333 = vmatprep.subr.mxu0 %v2178
  %9334 = vmatpush2.msra.mxu0 %v2177
  %9335 = vmatprep.subr.mxu0 %v2174
  %9336 = vmatpush2.msra.mxu0 %v2173
  %9337 = vmatprep.subr.mxu0 %v2170
  %9338 = vmatpush2.msra.mxu0 %v2169
  %9339 = vmatprep.subr.mxu0 %v2166
  %9340 = vmatpush2.msra.mxu0 %v2165
  %9341 = vmatprep.subr.mxu0 %v2162
  %9342 = vmatpush2.msra.mxu0 %v2161
  %9343 = vmatprep.subr.mxu0 %v2158
  %9344 = vmatpush2.msra.mxu0 %v2157
  %9345 = vmatprep.subr.mxu0 %v2154
  %9346 = vmatpush2.msra.mxu0 %v2153
  %9347 = vmatprep.subr.mxu0 %v2150
  %9348 = vmatpush2.msra.mxu0 %v2149
  %9349 = vmatprep.mubr.f32.mxu0 %v9235
  %9350 = vmatmul.mubr.f32.gmra.mxu0 %v9233
  %v9351 = vpop.f32.mrf.mxu0
  %v9352 = vadd.f32 %v5665, %v9351
  %v9353 = vpop.f32.mrf.mxu0
  %v9354 = vadd.f32 %v5669, %v9353
  %9355 = vdwg.mxu0
  %9356 = vmatprep.subr.mxu0 %v2274
  %9357 = vmatpush1.msra.mxu0 %v2273
  %9358 = vmatprep.subr.mxu0 %v2270
  %9359 = vmatpush1.msra.mxu0 %v2269
  %9360 = vmatprep.subr.mxu0 %v2266
  %9361 = vmatpush1.msra.mxu0 %v2265
  %9362 = vmatprep.subr.mxu0 %v2262
  %9363 = vmatpush1.msra.mxu0 %v2261
  %9364 = vmatprep.subr.mxu0 %v2258
  %9365 = vmatpush1.msra.mxu0 %v2257
  %9366 = vmatprep.subr.mxu0 %v2254
  %9367 = vmatpush1.msra.mxu0 %v2253
  %9368 = vmatprep.subr.mxu0 %v2250
  %9369 = vmatpush1.msra.mxu0 %v2249
  %9370 = vmatprep.subr.mxu0 %v2246
  %9371 = vmatpush1.msra.mxu0 %v2245
  %9372 = vmatprep.subr.mxu0 %v2242
  %9373 = vmatpush1.msra.mxu0 %v2241
  %9374 = vmatprep.subr.mxu0 %v2238
  %9375 = vmatpush1.msra.mxu0 %v2237
  %9376 = vmatprep.subr.mxu0 %v2234
  %9377 = vmatpush1.msra.mxu0 %v2233
  %9378 = vmatprep.subr.mxu0 %v2230
  %9379 = vmatpush1.msra.mxu0 %v2229
  %9380 = vmatprep.subr.mxu0 %v2226
  %9381 = vmatpush1.msra.mxu0 %v2225
  %9382 = vmatprep.subr.mxu0 %v2222
  %9383 = vmatpush1.msra.mxu0 %v2221
  %9384 = vmatprep.subr.mxu0 %v2218
  %9385 = vmatpush1.msra.mxu0 %v2217
  %9386 = vmatprep.subr.mxu0 %v2214
  %9387 = vmatpush1.msra.mxu0 %v2213
  %9388 = vmatprep.subr.mxu0 %v2338
  %9389 = vmatpush2.msra.mxu0 %v2337
  %9390 = vmatprep.subr.mxu0 %v2334
  %9391 = vmatpush2.msra.mxu0 %v2333
  %9392 = vmatprep.subr.mxu0 %v2330
  %9393 = vmatpush2.msra.mxu0 %v2329
  %9394 = vmatprep.subr.mxu0 %v2326
  %9395 = vmatpush2.msra.mxu0 %v2325
  %9396 = vmatprep.subr.mxu0 %v2322
  %9397 = vmatpush2.msra.mxu0 %v2321
  %9398 = vmatprep.subr.mxu0 %v2318
  %9399 = vmatpush2.msra.mxu0 %v2317
  %9400 = vmatprep.subr.mxu0 %v2314
  %9401 = vmatpush2.msra.mxu0 %v2313
  %9402 = vmatprep.subr.mxu0 %v2310
  %9403 = vmatpush2.msra.mxu0 %v2309
  %9404 = vmatprep.subr.mxu0 %v2306
  %9405 = vmatpush2.msra.mxu0 %v2305
  %9406 = vmatprep.subr.mxu0 %v2302
  %9407 = vmatpush2.msra.mxu0 %v2301
  %9408 = vmatprep.subr.mxu0 %v2298
  %9409 = vmatpush2.msra.mxu0 %v2297
  %9410 = vmatprep.subr.mxu0 %v2294
  %9411 = vmatpush2.msra.mxu0 %v2293
  %9412 = vmatprep.subr.mxu0 %v2290
  %9413 = vmatpush2.msra.mxu0 %v2289
  %9414 = vmatprep.subr.mxu0 %v2286
  %9415 = vmatpush2.msra.mxu0 %v2285
  %9416 = vmatprep.subr.mxu0 %v2282
  %9417 = vmatpush2.msra.mxu0 %v2281
  %9418 = vmatprep.subr.mxu0 %v2278
  %9419 = vmatpush2.msra.mxu0 %v2277
  %9420 = vmatprep.mubr.f32.mxu0 %v9241
  %9421 = vmatmul.mubr.f32.gmra.mxu0 %v9239
  %v9422 = vpop.f32.mrf.mxu0
  %v9423 = vadd.f32 %v9352, %v9422
  %v9424 = vpop.f32.mrf.mxu0
  %v9425 = vadd.f32 %v9354, %v9424
  %9426 = vdwg.mxu0
  %9427 = vmatprep.subr.mxu0 %v2402
  %9428 = vmatpush1.msra.mxu0 %v2401
  %9429 = vmatprep.subr.mxu0 %v2398
  %9430 = vmatpush1.msra.mxu0 %v2397
  %9431 = vmatprep.subr.mxu0 %v2394
  %9432 = vmatpush1.msra.mxu0 %v2393
  %9433 = vmatprep.subr.mxu0 %v2390
  %9434 = vmatpush1.msra.mxu0 %v2389
  %9435 = vmatprep.subr.mxu0 %v2386
  %9436 = vmatpush1.msra.mxu0 %v2385
  %9437 = vmatprep.subr.mxu0 %v2382
  %9438 = vmatpush1.msra.mxu0 %v2381
  %9439 = vmatprep.subr.mxu0 %v2378
  %9440 = vmatpush1.msra.mxu0 %v2377
  %9441 = vmatprep.subr.mxu0 %v2374
  %9442 = vmatpush1.msra.mxu0 %v2373
  %9443 = vmatprep.subr.mxu0 %v2370
  %9444 = vmatpush1.msra.mxu0 %v2369
  %9445 = vmatprep.subr.mxu0 %v2366
  %9446 = vmatpush1.msra.mxu0 %v2365
  %9447 = vmatprep.subr.mxu0 %v2362
  %9448 = vmatpush1.msra.mxu0 %v2361
  %9449 = vmatprep.subr.mxu0 %v2358
  %9450 = vmatpush1.msra.mxu0 %v2357
  %9451 = vmatprep.subr.mxu0 %v2354
  %9452 = vmatpush1.msra.mxu0 %v2353
  %9453 = vmatprep.subr.mxu0 %v2350
  %9454 = vmatpush1.msra.mxu0 %v2349
  %9455 = vmatprep.subr.mxu0 %v2346
  %9456 = vmatpush1.msra.mxu0 %v2345
  %9457 = vmatprep.subr.mxu0 %v2342
  %9458 = vmatpush1.msra.mxu0 %v2341
  %9459 = vmatprep.subr.mxu0 %v2466
  %9460 = vmatpush2.msra.mxu0 %v2465
  %9461 = vmatprep.subr.mxu0 %v2462
  %9462 = vmatpush2.msra.mxu0 %v2461
  %9463 = vmatprep.subr.mxu0 %v2458
  %9464 = vmatpush2.msra.mxu0 %v2457
  %9465 = vmatprep.subr.mxu0 %v2454
  %9466 = vmatpush2.msra.mxu0 %v2453
  %9467 = vmatprep.subr.mxu0 %v2450
  %9468 = vmatpush2.msra.mxu0 %v2449
  %9469 = vmatprep.subr.mxu0 %v2446
  %9470 = vmatpush2.msra.mxu0 %v2445
  %9471 = vmatprep.subr.mxu0 %v2442
  %9472 = vmatpush2.msra.mxu0 %v2441
  %9473 = vmatprep.subr.mxu0 %v2438
  %9474 = vmatpush2.msra.mxu0 %v2437
  %9475 = vmatprep.subr.mxu0 %v2434
  %9476 = vmatpush2.msra.mxu0 %v2433
  %9477 = vmatprep.subr.mxu0 %v2430
  %9478 = vmatpush2.msra.mxu0 %v2429
  %9479 = vmatprep.subr.mxu0 %v2426
  %9480 = vmatpush2.msra.mxu0 %v2425
  %9481 = vmatprep.subr.mxu0 %v2422
  %9482 = vmatpush2.msra.mxu0 %v2421
  %9483 = vmatprep.subr.mxu0 %v2418
  %9484 = vmatpush2.msra.mxu0 %v2417
  %9485 = vmatprep.subr.mxu0 %v2414
  %9486 = vmatpush2.msra.mxu0 %v2413
  %9487 = vmatprep.subr.mxu0 %v2410
  %9488 = vmatpush2.msra.mxu0 %v2409
  %9489 = vmatprep.subr.mxu0 %v2406
  %9490 = vmatpush2.msra.mxu0 %v2405
  %9491 = vmatprep.mubr.f32.mxu0 %v9247
  %9492 = vmatmul.mubr.f32.gmra.mxu0 %v9245
  %v9493 = vpop.f32.mrf.mxu0
  %v9494 = vadd.f32 %v9423, %v9493
  %v9495 = vpop.f32.mrf.mxu0
  %v9496 = vadd.f32 %v9425, %v9495
  %9497 = vdwg.mxu0
  %9498 = vmatprep.subr.mxu0 %v2530
  %9499 = vmatpush1.msra.mxu0 %v2529
  %9500 = vmatprep.subr.mxu0 %v2526
  %9501 = vmatpush1.msra.mxu0 %v2525
  %9502 = vmatprep.subr.mxu0 %v2522
  %9503 = vmatpush1.msra.mxu0 %v2521
  %9504 = vmatprep.subr.mxu0 %v2518
  %9505 = vmatpush1.msra.mxu0 %v2517
  %9506 = vmatprep.subr.mxu0 %v2514
  %9507 = vmatpush1.msra.mxu0 %v2513
  %9508 = vmatprep.subr.mxu0 %v2510
  %9509 = vmatpush1.msra.mxu0 %v2509
  %9510 = vmatprep.subr.mxu0 %v2506
  %9511 = vmatpush1.msra.mxu0 %v2505
  %9512 = vmatprep.subr.mxu0 %v2502
  %9513 = vmatpush1.msra.mxu0 %v2501
  %9514 = vmatprep.subr.mxu0 %v2498
  %9515 = vmatpush1.msra.mxu0 %v2497
  %9516 = vmatprep.subr.mxu0 %v2494
  %9517 = vmatpush1.msra.mxu0 %v2493
  %9518 = vmatprep.subr.mxu0 %v2490
  %9519 = vmatpush1.msra.mxu0 %v2489
  %9520 = vmatprep.subr.mxu0 %v2486
  %9521 = vmatpush1.msra.mxu0 %v2485
  %9522 = vmatprep.subr.mxu0 %v2482
  %9523 = vmatpush1.msra.mxu0 %v2481
  %9524 = vmatprep.subr.mxu0 %v2478
  %9525 = vmatpush1.msra.mxu0 %v2477
  %9526 = vmatprep.subr.mxu0 %v2474
  %9527 = vmatpush1.msra.mxu0 %v2473
  %9528 = vmatprep.subr.mxu0 %v2470
  %9529 = vmatpush1.msra.mxu0 %v2469
  %9530 = vmatprep.subr.mxu0 %v2594
  %9531 = vmatpush2.msra.mxu0 %v2593
  %9532 = vmatprep.subr.mxu0 %v2590
  %9533 = vmatpush2.msra.mxu0 %v2589
  %9534 = vmatprep.subr.mxu0 %v2586
  %9535 = vmatpush2.msra.mxu0 %v2585
  %9536 = vmatprep.subr.mxu0 %v2582
  %9537 = vmatpush2.msra.mxu0 %v2581
  %9538 = vmatprep.subr.mxu0 %v2578
  %9539 = vmatpush2.msra.mxu0 %v2577
  %9540 = vmatprep.subr.mxu0 %v2574
  %9541 = vmatpush2.msra.mxu0 %v2573
  %9542 = vmatprep.subr.mxu0 %v2570
  %9543 = vmatpush2.msra.mxu0 %v2569
  %9544 = vmatprep.subr.mxu0 %v2566
  %9545 = vmatpush2.msra.mxu0 %v2565
  %9546 = vmatprep.subr.mxu0 %v2562
  %9547 = vmatpush2.msra.mxu0 %v2561
  %9548 = vmatprep.subr.mxu0 %v2558
  %9549 = vmatpush2.msra.mxu0 %v2557
  %9550 = vmatprep.subr.mxu0 %v2554
  %9551 = vmatpush2.msra.mxu0 %v2553
  %9552 = vmatprep.subr.mxu0 %v2550
  %9553 = vmatpush2.msra.mxu0 %v2549
  %9554 = vmatprep.subr.mxu0 %v2546
  %9555 = vmatpush2.msra.mxu0 %v2545
  %9556 = vmatprep.subr.mxu0 %v2542
  %9557 = vmatpush2.msra.mxu0 %v2541
  %9558 = vmatprep.subr.mxu0 %v2538
  %9559 = vmatpush2.msra.mxu0 %v2537
  %9560 = vmatprep.subr.mxu0 %v2534
  %9561 = vmatpush2.msra.mxu0 %v2533
  %9562 = vmatprep.mubr.f32.mxu0 %v9253
  %9563 = vmatmul.mubr.f32.gmra.mxu0 %v9251
  %v9564 = vpop.f32.mrf.mxu0
  %v9565 = vadd.f32 %v9494, %v9564
  %v9566 = vpop.f32.mrf.mxu0
  %v9567 = vadd.f32 %v9496, %v9566
  %9568 = vdwg.mxu0
  %9569 = vmatprep.subr.mxu0 %v2658
  %9570 = vmatpush1.msra.mxu0 %v2657
  %9571 = vmatprep.subr.mxu0 %v2654
  %9572 = vmatpush1.msra.mxu0 %v2653
  %9573 = vmatprep.subr.mxu0 %v2650
  %9574 = vmatpush1.msra.mxu0 %v2649
  %9575 = vmatprep.subr.mxu0 %v2646
  %9576 = vmatpush1.msra.mxu0 %v2645
  %9577 = vmatprep.subr.mxu0 %v2642
  %9578 = vmatpush1.msra.mxu0 %v2641
  %9579 = vmatprep.subr.mxu0 %v2638
  %9580 = vmatpush1.msra.mxu0 %v2637
  %9581 = vmatprep.subr.mxu0 %v2634
  %9582 = vmatpush1.msra.mxu0 %v2633
  %9583 = vmatprep.subr.mxu0 %v2630
  %9584 = vmatpush1.msra.mxu0 %v2629
  %9585 = vmatprep.subr.mxu0 %v2626
  %9586 = vmatpush1.msra.mxu0 %v2625
  %9587 = vmatprep.subr.mxu0 %v2622
  %9588 = vmatpush1.msra.mxu0 %v2621
  %9589 = vmatprep.subr.mxu0 %v2618
  %9590 = vmatpush1.msra.mxu0 %v2617
  %9591 = vmatprep.subr.mxu0 %v2614
  %9592 = vmatpush1.msra.mxu0 %v2613
  %9593 = vmatprep.subr.mxu0 %v2610
  %9594 = vmatpush1.msra.mxu0 %v2609
  %9595 = vmatprep.subr.mxu0 %v2606
  %9596 = vmatpush1.msra.mxu0 %v2605
  %9597 = vmatprep.subr.mxu0 %v2602
  %9598 = vmatpush1.msra.mxu0 %v2601
  %9599 = vmatprep.subr.mxu0 %v2598
  %9600 = vmatpush1.msra.mxu0 %v2597
  %9601 = vmatprep.subr.mxu0 %v2722
  %9602 = vmatpush2.msra.mxu0 %v2721
  %9603 = vmatprep.subr.mxu0 %v2718
  %9604 = vmatpush2.msra.mxu0 %v2717
  %9605 = vmatprep.subr.mxu0 %v2714
  %9606 = vmatpush2.msra.mxu0 %v2713
  %9607 = vmatprep.subr.mxu0 %v2710
  %9608 = vmatpush2.msra.mxu0 %v2709
  %9609 = vmatprep.subr.mxu0 %v2706
  %9610 = vmatpush2.msra.mxu0 %v2705
  %9611 = vmatprep.subr.mxu0 %v2702
  %9612 = vmatpush2.msra.mxu0 %v2701
  %9613 = vmatprep.subr.mxu0 %v2698
  %9614 = vmatpush2.msra.mxu0 %v2697
  %9615 = vmatprep.subr.mxu0 %v2694
  %9616 = vmatpush2.msra.mxu0 %v2693
  %9617 = vmatprep.subr.mxu0 %v2690
  %9618 = vmatpush2.msra.mxu0 %v2689
  %9619 = vmatprep.subr.mxu0 %v2686
  %9620 = vmatpush2.msra.mxu0 %v2685
  %9621 = vmatprep.subr.mxu0 %v2682
  %9622 = vmatpush2.msra.mxu0 %v2681
  %9623 = vmatprep.subr.mxu0 %v2678
  %9624 = vmatpush2.msra.mxu0 %v2677
  %9625 = vmatprep.subr.mxu0 %v2674
  %9626 = vmatpush2.msra.mxu0 %v2673
  %9627 = vmatprep.subr.mxu0 %v2670
  %9628 = vmatpush2.msra.mxu0 %v2669
  %9629 = vmatprep.subr.mxu0 %v2666
  %9630 = vmatpush2.msra.mxu0 %v2665
  %9631 = vmatprep.subr.mxu0 %v2662
  %9632 = vmatpush2.msra.mxu0 %v2661
  %9633 = vmatprep.mubr.f32.mxu0 %v9259
  %9634 = vmatmul.mubr.f32.gmra.mxu0 %v9257
  %v9635 = vpop.f32.mrf.mxu0
  %v9636 = vadd.f32 %v9565, %v9635
  %v9637 = vpop.f32.mrf.mxu0
  %v9638 = vadd.f32 %v9567, %v9637
  %9639 = vdwg.mxu0
  %9640 = vmatprep.subr.mxu0 %v2786
  %9641 = vmatpush1.msra.mxu0 %v2785
  %9642 = vmatprep.subr.mxu0 %v2782
  %9643 = vmatpush1.msra.mxu0 %v2781
  %9644 = vmatprep.subr.mxu0 %v2778
  %9645 = vmatpush1.msra.mxu0 %v2777
  %9646 = vmatprep.subr.mxu0 %v2774
  %9647 = vmatpush1.msra.mxu0 %v2773
  %9648 = vmatprep.subr.mxu0 %v2770
  %9649 = vmatpush1.msra.mxu0 %v2769
  %9650 = vmatprep.subr.mxu0 %v2766
  %9651 = vmatpush1.msra.mxu0 %v2765
  %9652 = vmatprep.subr.mxu0 %v2762
  %9653 = vmatpush1.msra.mxu0 %v2761
  %9654 = vmatprep.subr.mxu0 %v2758
  %9655 = vmatpush1.msra.mxu0 %v2757
  %9656 = vmatprep.subr.mxu0 %v2754
  %9657 = vmatpush1.msra.mxu0 %v2753
  %9658 = vmatprep.subr.mxu0 %v2750
  %9659 = vmatpush1.msra.mxu0 %v2749
  %9660 = vmatprep.subr.mxu0 %v2746
  %9661 = vmatpush1.msra.mxu0 %v2745
  %9662 = vmatprep.subr.mxu0 %v2742
  %9663 = vmatpush1.msra.mxu0 %v2741
  %9664 = vmatprep.subr.mxu0 %v2738
  %9665 = vmatpush1.msra.mxu0 %v2737
  %9666 = vmatprep.subr.mxu0 %v2734
  %9667 = vmatpush1.msra.mxu0 %v2733
  %9668 = vmatprep.subr.mxu0 %v2730
  %9669 = vmatpush1.msra.mxu0 %v2729
  %9670 = vmatprep.subr.mxu0 %v2726
  %9671 = vmatpush1.msra.mxu0 %v2725
  %9672 = vmatprep.subr.mxu0 %v2850
  %9673 = vmatpush2.msra.mxu0 %v2849
  %9674 = vmatprep.subr.mxu0 %v2846
  %9675 = vmatpush2.msra.mxu0 %v2845
  %9676 = vmatprep.subr.mxu0 %v2842
  %9677 = vmatpush2.msra.mxu0 %v2841
  %9678 = vmatprep.subr.mxu0 %v2838
  %9679 = vmatpush2.msra.mxu0 %v2837
  %9680 = vmatprep.subr.mxu0 %v2834
  %9681 = vmatpush2.msra.mxu0 %v2833
  %9682 = vmatprep.subr.mxu0 %v2830
  %9683 = vmatpush2.msra.mxu0 %v2829
  %9684 = vmatprep.subr.mxu0 %v2826
  %9685 = vmatpush2.msra.mxu0 %v2825
  %9686 = vmatprep.subr.mxu0 %v2822
  %9687 = vmatpush2.msra.mxu0 %v2821
  %9688 = vmatprep.subr.mxu0 %v2818
  %9689 = vmatpush2.msra.mxu0 %v2817
  %9690 = vmatprep.subr.mxu0 %v2814
  %9691 = vmatpush2.msra.mxu0 %v2813
  %9692 = vmatprep.subr.mxu0 %v2810
  %9693 = vmatpush2.msra.mxu0 %v2809
  %9694 = vmatprep.subr.mxu0 %v2806
  %9695 = vmatpush2.msra.mxu0 %v2805
  %9696 = vmatprep.subr.mxu0 %v2802
  %9697 = vmatpush2.msra.mxu0 %v2801
  %9698 = vmatprep.subr.mxu0 %v2798
  %9699 = vmatpush2.msra.mxu0 %v2797
  %9700 = vmatprep.subr.mxu0 %v2794
  %9701 = vmatpush2.msra.mxu0 %v2793
  %9702 = vmatprep.subr.mxu0 %v2790
  %9703 = vmatpush2.msra.mxu0 %v2789
  %9704 = vmatprep.mubr.f32.mxu0 %v9265
  %9705 = vmatmul.mubr.f32.gmra.mxu0 %v9263
  %v9706 = vpop.f32.mrf.mxu0
  %v9707 = vadd.f32 %v9636, %v9706
  %v9708 = vpop.f32.mrf.mxu0
  %v9709 = vadd.f32 %v9638, %v9708
  %9710 = vdwg.mxu0
  %9711 = vmatprep.subr.mxu0 %v2914
  %9712 = vmatpush1.msra.mxu0 %v2913
  %9713 = vmatprep.subr.mxu0 %v2910
  %9714 = vmatpush1.msra.mxu0 %v2909
  %9715 = vmatprep.subr.mxu0 %v2906
  %9716 = vmatpush1.msra.mxu0 %v2905
  %9717 = vmatprep.subr.mxu0 %v2902
  %9718 = vmatpush1.msra.mxu0 %v2901
  %9719 = vmatprep.subr.mxu0 %v2898
  %9720 = vmatpush1.msra.mxu0 %v2897
  %9721 = vmatprep.subr.mxu0 %v2894
  %9722 = vmatpush1.msra.mxu0 %v2893
  %9723 = vmatprep.subr.mxu0 %v2890
  %9724 = vmatpush1.msra.mxu0 %v2889
  %9725 = vmatprep.subr.mxu0 %v2886
  %9726 = vmatpush1.msra.mxu0 %v2885
  %9727 = vmatprep.subr.mxu0 %v2882
  %9728 = vmatpush1.msra.mxu0 %v2881
  %9729 = vmatprep.subr.mxu0 %v2878
  %9730 = vmatpush1.msra.mxu0 %v2877
  %9731 = vmatprep.subr.mxu0 %v2874
  %9732 = vmatpush1.msra.mxu0 %v2873
  %9733 = vmatprep.subr.mxu0 %v2870
  %9734 = vmatpush1.msra.mxu0 %v2869
  %9735 = vmatprep.subr.mxu0 %v2866
  %9736 = vmatpush1.msra.mxu0 %v2865
  %9737 = vmatprep.subr.mxu0 %v2862
  %9738 = vmatpush1.msra.mxu0 %v2861
  %9739 = vmatprep.subr.mxu0 %v2858
  %9740 = vmatpush1.msra.mxu0 %v2857
  %9741 = vmatprep.subr.mxu0 %v2854
  %9742 = vmatpush1.msra.mxu0 %v2853
  %9743 = vmatprep.subr.mxu0 %v2978
  %9744 = vmatpush2.msra.mxu0 %v2977
  %9745 = vmatprep.subr.mxu0 %v2974
  %9746 = vmatpush2.msra.mxu0 %v2973
  %9747 = vmatprep.subr.mxu0 %v2970
  %9748 = vmatpush2.msra.mxu0 %v2969
  %9749 = vmatprep.subr.mxu0 %v2966
  %9750 = vmatpush2.msra.mxu0 %v2965
  %9751 = vmatprep.subr.mxu0 %v2962
  %9752 = vmatpush2.msra.mxu0 %v2961
  %9753 = vmatprep.subr.mxu0 %v2958
  %9754 = vmatpush2.msra.mxu0 %v2957
  %9755 = vmatprep.subr.mxu0 %v2954
  %9756 = vmatpush2.msra.mxu0 %v2953
  %9757 = vmatprep.subr.mxu0 %v2950
  %9758 = vmatpush2.msra.mxu0 %v2949
  %9759 = vmatprep.subr.mxu0 %v2946
  %9760 = vmatpush2.msra.mxu0 %v2945
  %9761 = vmatprep.subr.mxu0 %v2942
  %9762 = vmatpush2.msra.mxu0 %v2941
  %9763 = vmatprep.subr.mxu0 %v2938
  %9764 = vmatpush2.msra.mxu0 %v2937
  %9765 = vmatprep.subr.mxu0 %v2934
  %9766 = vmatpush2.msra.mxu0 %v2933
  %9767 = vmatprep.subr.mxu0 %v2930
  %9768 = vmatpush2.msra.mxu0 %v2929
  %9769 = vmatprep.subr.mxu0 %v2926
  %9770 = vmatpush2.msra.mxu0 %v2925
  %9771 = vmatprep.subr.mxu0 %v2922
  %9772 = vmatpush2.msra.mxu0 %v2921
  %9773 = vmatprep.subr.mxu0 %v2918
  %9774 = vmatpush2.msra.mxu0 %v2917
  %9775 = vmatprep.mubr.f32.mxu0 %v9271
  %9776 = vmatmul.mubr.f32.gmra.mxu0 %v9269
  %v9777 = vpop.f32.mrf.mxu0
  %v9778 = vadd.f32 %v9707, %v9777
  %v9779 = vpop.f32.mrf.mxu0
  %v9780 = vadd.f32 %v9709, %v9779
  %9781 = vdwg.mxu0
  %9782 = vmatprep.subr.mxu0 %v3042
  %9783 = vmatpush1.msra.mxu0 %v3041
  %9784 = vmatprep.subr.mxu0 %v3038
  %9785 = vmatpush1.msra.mxu0 %v3037
  %9786 = vmatprep.subr.mxu0 %v3034
  %9787 = vmatpush1.msra.mxu0 %v3033
  %9788 = vmatprep.subr.mxu0 %v3030
  %9789 = vmatpush1.msra.mxu0 %v3029
  %9790 = vmatprep.subr.mxu0 %v3026
  %9791 = vmatpush1.msra.mxu0 %v3025
  %9792 = vmatprep.subr.mxu0 %v3022
  %9793 = vmatpush1.msra.mxu0 %v3021
  %9794 = vmatprep.subr.mxu0 %v3018
  %9795 = vmatpush1.msra.mxu0 %v3017
  %9796 = vmatprep.subr.mxu0 %v3014
  %9797 = vmatpush1.msra.mxu0 %v3013
  %9798 = vmatprep.subr.mxu0 %v3010
  %9799 = vmatpush1.msra.mxu0 %v3009
  %9800 = vmatprep.subr.mxu0 %v3006
  %9801 = vmatpush1.msra.mxu0 %v3005
  %9802 = vmatprep.subr.mxu0 %v3002
  %9803 = vmatpush1.msra.mxu0 %v3001
  %9804 = vmatprep.subr.mxu0 %v2998
  %9805 = vmatpush1.msra.mxu0 %v2997
  %9806 = vmatprep.subr.mxu0 %v2994
  %9807 = vmatpush1.msra.mxu0 %v2993
  %9808 = vmatprep.subr.mxu0 %v2990
  %9809 = vmatpush1.msra.mxu0 %v2989
  %9810 = vmatprep.subr.mxu0 %v2986
  %9811 = vmatpush1.msra.mxu0 %v2985
  %9812 = vmatprep.subr.mxu0 %v2982
  %9813 = vmatpush1.msra.mxu0 %v2981
  %9814 = vmatprep.subr.mxu0 %v3106
  %9815 = vmatpush2.msra.mxu0 %v3105
  %9816 = vmatprep.subr.mxu0 %v3102
  %9817 = vmatpush2.msra.mxu0 %v3101
  %9818 = vmatprep.subr.mxu0 %v3098
  %9819 = vmatpush2.msra.mxu0 %v3097
  %9820 = vmatprep.subr.mxu0 %v3094
  %9821 = vmatpush2.msra.mxu0 %v3093
  %9822 = vmatprep.subr.mxu0 %v3090
  %9823 = vmatpush2.msra.mxu0 %v3089
  %9824 = vmatprep.subr.mxu0 %v3086
  %9825 = vmatpush2.msra.mxu0 %v3085
  %9826 = vmatprep.subr.mxu0 %v3082
  %9827 = vmatpush2.msra.mxu0 %v3081
  %9828 = vmatprep.subr.mxu0 %v3078
  %9829 = vmatpush2.msra.mxu0 %v3077
  %9830 = vmatprep.subr.mxu0 %v3074
  %9831 = vmatpush2.msra.mxu0 %v3073
  %9832 = vmatprep.subr.mxu0 %v3070
  %9833 = vmatpush2.msra.mxu0 %v3069
  %9834 = vmatprep.subr.mxu0 %v3066
  %9835 = vmatpush2.msra.mxu0 %v3065
  %9836 = vmatprep.subr.mxu0 %v3062
  %9837 = vmatpush2.msra.mxu0 %v3061
  %9838 = vmatprep.subr.mxu0 %v3058
  %9839 = vmatpush2.msra.mxu0 %v3057
  %9840 = vmatprep.subr.mxu0 %v3054
  %9841 = vmatpush2.msra.mxu0 %v3053
  %9842 = vmatprep.subr.mxu0 %v3050
  %9843 = vmatpush2.msra.mxu0 %v3049
  %9844 = vmatprep.subr.mxu0 %v3046
  %9845 = vmatpush2.msra.mxu0 %v3045
  %9846 = vmatprep.mubr.f32.mxu0 %v9277
  %9847 = vmatmul.mubr.f32.gmra.mxu0 %v9275
  %v9848 = vpop.f32.mrf.mxu0
  %v9849 = vadd.f32 %v9778, %v9848
  %v9850 = vpop.f32.mrf.mxu0
  %v9851 = vadd.f32 %v9780, %v9850
  %9852 = vdwg.mxu0
  %9853 = vmatprep.subr.mxu0 %v3170
  %9854 = vmatpush1.msra.mxu0 %v3169
  %9855 = vmatprep.subr.mxu0 %v3166
  %9856 = vmatpush1.msra.mxu0 %v3165
  %9857 = vmatprep.subr.mxu0 %v3162
  %9858 = vmatpush1.msra.mxu0 %v3161
  %9859 = vmatprep.subr.mxu0 %v3158
  %9860 = vmatpush1.msra.mxu0 %v3157
  %9861 = vmatprep.subr.mxu0 %v3154
  %9862 = vmatpush1.msra.mxu0 %v3153
  %9863 = vmatprep.subr.mxu0 %v3150
  %9864 = vmatpush1.msra.mxu0 %v3149
  %9865 = vmatprep.subr.mxu0 %v3146
  %9866 = vmatpush1.msra.mxu0 %v3145
  %9867 = vmatprep.subr.mxu0 %v3142
  %9868 = vmatpush1.msra.mxu0 %v3141
  %9869 = vmatprep.subr.mxu0 %v3138
  %9870 = vmatpush1.msra.mxu0 %v3137
  %9871 = vmatprep.subr.mxu0 %v3134
  %9872 = vmatpush1.msra.mxu0 %v3133
  %9873 = vmatprep.subr.mxu0 %v3130
  %9874 = vmatpush1.msra.mxu0 %v3129
  %9875 = vmatprep.subr.mxu0 %v3126
  %9876 = vmatpush1.msra.mxu0 %v3125
  %9877 = vmatprep.subr.mxu0 %v3122
  %9878 = vmatpush1.msra.mxu0 %v3121
  %9879 = vmatprep.subr.mxu0 %v3118
  %9880 = vmatpush1.msra.mxu0 %v3117
  %9881 = vmatprep.subr.mxu0 %v3114
  %9882 = vmatpush1.msra.mxu0 %v3113
  %9883 = vmatprep.subr.mxu0 %v3110
  %9884 = vmatpush1.msra.mxu0 %v3109
  %9885 = vmatprep.subr.mxu0 %v3234
  %9886 = vmatpush2.msra.mxu0 %v3233
  %9887 = vmatprep.subr.mxu0 %v3230
  %9888 = vmatpush2.msra.mxu0 %v3229
  %9889 = vmatprep.subr.mxu0 %v3226
  %9890 = vmatpush2.msra.mxu0 %v3225
  %9891 = vmatprep.subr.mxu0 %v3222
  %9892 = vmatpush2.msra.mxu0 %v3221
  %9893 = vmatprep.subr.mxu0 %v3218
  %9894 = vmatpush2.msra.mxu0 %v3217
  %9895 = vmatprep.subr.mxu0 %v3214
  %9896 = vmatpush2.msra.mxu0 %v3213
  %9897 = vmatprep.subr.mxu0 %v3210
  %9898 = vmatpush2.msra.mxu0 %v3209
  %9899 = vmatprep.subr.mxu0 %v3206
  %9900 = vmatpush2.msra.mxu0 %v3205
  %9901 = vmatprep.subr.mxu0 %v3202
  %9902 = vmatpush2.msra.mxu0 %v3201
  %9903 = vmatprep.subr.mxu0 %v3198
  %9904 = vmatpush2.msra.mxu0 %v3197
  %9905 = vmatprep.subr.mxu0 %v3194
  %9906 = vmatpush2.msra.mxu0 %v3193
  %9907 = vmatprep.subr.mxu0 %v3190
  %9908 = vmatpush2.msra.mxu0 %v3189
  %9909 = vmatprep.subr.mxu0 %v3186
  %9910 = vmatpush2.msra.mxu0 %v3185
  %9911 = vmatprep.subr.mxu0 %v3182
  %9912 = vmatpush2.msra.mxu0 %v3181
  %9913 = vmatprep.subr.mxu0 %v3178
  %9914 = vmatpush2.msra.mxu0 %v3177
  %9915 = vmatprep.subr.mxu0 %v3174
  %9916 = vmatpush2.msra.mxu0 %v3173
  %9917 = vmatprep.mubr.f32.mxu0 %v9283
  %9918 = vmatmul.mubr.f32.gmra.mxu0 %v9281
  %v9919 = vpop.f32.mrf.mxu0
  %v9920 = vadd.f32 %v9849, %v9919
  %v9921 = vpop.f32.mrf.mxu0
  %v9922 = vadd.f32 %v9851, %v9921
  %9923 = vdwg.mxu0
  %9924 = vmatprep.subr.mxu0 %v2148
  %9925 = vmatpush1.msra.mxu0 %v2147
  %9926 = vmatprep.subr.mxu0 %v2144
  %9927 = vmatpush1.msra.mxu0 %v2143
  %9928 = vmatprep.subr.mxu0 %v2140
  %9929 = vmatpush1.msra.mxu0 %v2139
  %9930 = vmatprep.subr.mxu0 %v2136
  %9931 = vmatpush1.msra.mxu0 %v2135
  %9932 = vmatprep.subr.mxu0 %v2132
  %9933 = vmatpush1.msra.mxu0 %v2131
  %9934 = vmatprep.subr.mxu0 %v2128
  %9935 = vmatpush1.msra.mxu0 %v2127
  %9936 = vmatprep.subr.mxu0 %v2124
  %9937 = vmatpush1.msra.mxu0 %v2123
  %9938 = vmatprep.subr.mxu0 %v2120
  %9939 = vmatpush1.msra.mxu0 %v2119
  %9940 = vmatprep.subr.mxu0 %v2116
  %9941 = vmatpush1.msra.mxu0 %v2115
  %9942 = vmatprep.subr.mxu0 %v2112
  %9943 = vmatpush1.msra.mxu0 %v2111
  %9944 = vmatprep.subr.mxu0 %v2108
  %9945 = vmatpush1.msra.mxu0 %v2107
  %9946 = vmatprep.subr.mxu0 %v2104
  %9947 = vmatpush1.msra.mxu0 %v2103
  %9948 = vmatprep.subr.mxu0 %v2100
  %9949 = vmatpush1.msra.mxu0 %v2099
  %9950 = vmatprep.subr.mxu0 %v2096
  %9951 = vmatpush1.msra.mxu0 %v2095
  %9952 = vmatprep.subr.mxu0 %v2092
  %9953 = vmatpush1.msra.mxu0 %v2091
  %9954 = vmatprep.subr.mxu0 %v2088
  %9955 = vmatpush1.msra.mxu0 %v2087
  %9956 = vmatprep.subr.mxu0 %v2212
  %9957 = vmatpush2.msra.mxu0 %v2211
  %9958 = vmatprep.subr.mxu0 %v2208
  %9959 = vmatpush2.msra.mxu0 %v2207
  %9960 = vmatprep.subr.mxu0 %v2204
  %9961 = vmatpush2.msra.mxu0 %v2203
  %9962 = vmatprep.subr.mxu0 %v2200
  %9963 = vmatpush2.msra.mxu0 %v2199
  %9964 = vmatprep.subr.mxu0 %v2196
  %9965 = vmatpush2.msra.mxu0 %v2195
  %9966 = vmatprep.subr.mxu0 %v2192
  %9967 = vmatpush2.msra.mxu0 %v2191
  %9968 = vmatprep.subr.mxu0 %v2188
  %9969 = vmatpush2.msra.mxu0 %v2187
  %9970 = vmatprep.subr.mxu0 %v2184
  %9971 = vmatpush2.msra.mxu0 %v2183
  %9972 = vmatprep.subr.mxu0 %v2180
  %9973 = vmatpush2.msra.mxu0 %v2179
  %9974 = vmatprep.subr.mxu0 %v2176
  %9975 = vmatpush2.msra.mxu0 %v2175
  %9976 = vmatprep.subr.mxu0 %v2172
  %9977 = vmatpush2.msra.mxu0 %v2171
  %9978 = vmatprep.subr.mxu0 %v2168
  %9979 = vmatpush2.msra.mxu0 %v2167
  %9980 = vmatprep.subr.mxu0 %v2164
  %9981 = vmatpush2.msra.mxu0 %v2163
  %9982 = vmatprep.subr.mxu0 %v2160
  %9983 = vmatpush2.msra.mxu0 %v2159
  %9984 = vmatprep.subr.mxu0 %v2156
  %9985 = vmatpush2.msra.mxu0 %v2155
  %9986 = vmatprep.subr.mxu0 %v2152
  %9987 = vmatpush2.msra.mxu0 %v2151
  %9988 = vmatprep.mubr.f32.mxu0 %v9235
  %9989 = vmatmul.mubr.f32.gmra.mxu0 %v9233
  %v9990 = vpop.f32.mrf.mxu0
  %v9991 = vadd.f32 %v5673, %v9990
  %v9992 = vpop.f32.mrf.mxu0
  %v9993 = vadd.f32 %v5677, %v9992
  %9994 = vdwg.mxu0
  %9995 = vmatprep.subr.mxu0 %v2276
  %9996 = vmatpush1.msra.mxu0 %v2275
  %9997 = vmatprep.subr.mxu0 %v2272
  %9998 = vmatpush1.msra.mxu0 %v2271
  %9999 = vmatprep.subr.mxu0 %v2268
  %10000 = vmatpush1.msra.mxu0 %v2267
  %10001 = vmatprep.subr.mxu0 %v2264
  %10002 = vmatpush1.msra.mxu0 %v2263
  %10003 = vmatprep.subr.mxu0 %v2260
  %10004 = vmatpush1.msra.mxu0 %v2259
  %10005 = vmatprep.subr.mxu0 %v2256
  %10006 = vmatpush1.msra.mxu0 %v2255
  %10007 = vmatprep.subr.mxu0 %v2252
  %10008 = vmatpush1.msra.mxu0 %v2251
  %10009 = vmatprep.subr.mxu0 %v2248
  %10010 = vmatpush1.msra.mxu0 %v2247
  %10011 = vmatprep.subr.mxu0 %v2244
  %10012 = vmatpush1.msra.mxu0 %v2243
  %10013 = vmatprep.subr.mxu0 %v2240
  %10014 = vmatpush1.msra.mxu0 %v2239
  %10015 = vmatprep.subr.mxu0 %v2236
  %10016 = vmatpush1.msra.mxu0 %v2235
  %10017 = vmatprep.subr.mxu0 %v2232
  %10018 = vmatpush1.msra.mxu0 %v2231
  %10019 = vmatprep.subr.mxu0 %v2228
  %10020 = vmatpush1.msra.mxu0 %v2227
  %10021 = vmatprep.subr.mxu0 %v2224
  %10022 = vmatpush1.msra.mxu0 %v2223
  %10023 = vmatprep.subr.mxu0 %v2220
  %10024 = vmatpush1.msra.mxu0 %v2219
  %10025 = vmatprep.subr.mxu0 %v2216
  %10026 = vmatpush1.msra.mxu0 %v2215
  %10027 = vmatprep.subr.mxu0 %v2340
  %10028 = vmatpush2.msra.mxu0 %v2339
  %10029 = vmatprep.subr.mxu0 %v2336
  %10030 = vmatpush2.msra.mxu0 %v2335
  %10031 = vmatprep.subr.mxu0 %v2332
  %10032 = vmatpush2.msra.mxu0 %v2331
  %10033 = vmatprep.subr.mxu0 %v2328
  %10034 = vmatpush2.msra.mxu0 %v2327
  %10035 = vmatprep.subr.mxu0 %v2324
  %10036 = vmatpush2.msra.mxu0 %v2323
  %10037 = vmatprep.subr.mxu0 %v2320
  %10038 = vmatpush2.msra.mxu0 %v2319
  %10039 = vmatprep.subr.mxu0 %v2316
  %10040 = vmatpush2.msra.mxu0 %v2315
  %10041 = vmatprep.subr.mxu0 %v2312
  %10042 = vmatpush2.msra.mxu0 %v2311
  %10043 = vmatprep.subr.mxu0 %v2308
  %10044 = vmatpush2.msra.mxu0 %v2307
  %10045 = vmatprep.subr.mxu0 %v2304
  %10046 = vmatpush2.msra.mxu0 %v2303
  %10047 = vmatprep.subr.mxu0 %v2300
  %10048 = vmatpush2.msra.mxu0 %v2299
  %10049 = vmatprep.subr.mxu0 %v2296
  %10050 = vmatpush2.msra.mxu0 %v2295
  %10051 = vmatprep.subr.mxu0 %v2292
  %10052 = vmatpush2.msra.mxu0 %v2291
  %10053 = vmatprep.subr.mxu0 %v2288
  %10054 = vmatpush2.msra.mxu0 %v2287
  %10055 = vmatprep.subr.mxu0 %v2284
  %10056 = vmatpush2.msra.mxu0 %v2283
  %10057 = vmatprep.subr.mxu0 %v2280
  %10058 = vmatpush2.msra.mxu0 %v2279
  %10059 = vmatprep.mubr.f32.mxu0 %v9241
  %10060 = vmatmul.mubr.f32.gmra.mxu0 %v9239
  %v10061 = vpop.f32.mrf.mxu0
  %v10062 = vadd.f32 %v9991, %v10061
  %v10063 = vpop.f32.mrf.mxu0
  %v10064 = vadd.f32 %v9993, %v10063
  %10065 = vdwg.mxu0
  %10066 = vmatprep.subr.mxu0 %v2404
  %10067 = vmatpush1.msra.mxu0 %v2403
  %10068 = vmatprep.subr.mxu0 %v2400
  %10069 = vmatpush1.msra.mxu0 %v2399
  %10070 = vmatprep.subr.mxu0 %v2396
  %10071 = vmatpush1.msra.mxu0 %v2395
  %10072 = vmatprep.subr.mxu0 %v2392
  %10073 = vmatpush1.msra.mxu0 %v2391
  %10074 = vmatprep.subr.mxu0 %v2388
  %10075 = vmatpush1.msra.mxu0 %v2387
  %10076 = vmatprep.subr.mxu0 %v2384
  %10077 = vmatpush1.msra.mxu0 %v2383
  %10078 = vmatprep.subr.mxu0 %v2380
  %10079 = vmatpush1.msra.mxu0 %v2379
  %10080 = vmatprep.subr.mxu0 %v2376
  %10081 = vmatpush1.msra.mxu0 %v2375
  %10082 = vmatprep.subr.mxu0 %v2372
  %10083 = vmatpush1.msra.mxu0 %v2371
  %10084 = vmatprep.subr.mxu0 %v2368
  %10085 = vmatpush1.msra.mxu0 %v2367
  %10086 = vmatprep.subr.mxu0 %v2364
  %10087 = vmatpush1.msra.mxu0 %v2363
  %10088 = vmatprep.subr.mxu0 %v2360
  %10089 = vmatpush1.msra.mxu0 %v2359
  %10090 = vmatprep.subr.mxu0 %v2356
  %10091 = vmatpush1.msra.mxu0 %v2355
  %10092 = vmatprep.subr.mxu0 %v2352
  %10093 = vmatpush1.msra.mxu0 %v2351
  %10094 = vmatprep.subr.mxu0 %v2348
  %10095 = vmatpush1.msra.mxu0 %v2347
  %10096 = vmatprep.subr.mxu0 %v2344
  %10097 = vmatpush1.msra.mxu0 %v2343
  %10098 = vmatprep.subr.mxu0 %v2468
  %10099 = vmatpush2.msra.mxu0 %v2467
  %10100 = vmatprep.subr.mxu0 %v2464
  %10101 = vmatpush2.msra.mxu0 %v2463
  %10102 = vmatprep.subr.mxu0 %v2460
  %10103 = vmatpush2.msra.mxu0 %v2459
  %10104 = vmatprep.subr.mxu0 %v2456
  %10105 = vmatpush2.msra.mxu0 %v2455
  %10106 = vmatprep.subr.mxu0 %v2452
  %10107 = vmatpush2.msra.mxu0 %v2451
  %10108 = vmatprep.subr.mxu0 %v2448
  %10109 = vmatpush2.msra.mxu0 %v2447
  %10110 = vmatprep.subr.mxu0 %v2444
  %10111 = vmatpush2.msra.mxu0 %v2443
  %10112 = vmatprep.subr.mxu0 %v2440
  %10113 = vmatpush2.msra.mxu0 %v2439
  %10114 = vmatprep.subr.mxu0 %v2436
  %10115 = vmatpush2.msra.mxu0 %v2435
  %10116 = vmatprep.subr.mxu0 %v2432
  %10117 = vmatpush2.msra.mxu0 %v2431
  %10118 = vmatprep.subr.mxu0 %v2428
  %10119 = vmatpush2.msra.mxu0 %v2427
  %10120 = vmatprep.subr.mxu0 %v2424
  %10121 = vmatpush2.msra.mxu0 %v2423
  %10122 = vmatprep.subr.mxu0 %v2420
  %10123 = vmatpush2.msra.mxu0 %v2419
  %10124 = vmatprep.subr.mxu0 %v2416
  %10125 = vmatpush2.msra.mxu0 %v2415
  %10126 = vmatprep.subr.mxu0 %v2412
  %10127 = vmatpush2.msra.mxu0 %v2411
  %10128 = vmatprep.subr.mxu0 %v2408
  %10129 = vmatpush2.msra.mxu0 %v2407
  %10130 = vmatprep.mubr.f32.mxu0 %v9247
  %10131 = vmatmul.mubr.f32.gmra.mxu0 %v9245
  %v10132 = vpop.f32.mrf.mxu0
  %v10133 = vadd.f32 %v10062, %v10132
  %v10134 = vpop.f32.mrf.mxu0
  %v10135 = vadd.f32 %v10064, %v10134
  %10136 = vdwg.mxu0
  %10137 = vmatprep.subr.mxu0 %v2532
  %10138 = vmatpush1.msra.mxu0 %v2531
  %10139 = vmatprep.subr.mxu0 %v2528
  %10140 = vmatpush1.msra.mxu0 %v2527
  %10141 = vmatprep.subr.mxu0 %v2524
  %10142 = vmatpush1.msra.mxu0 %v2523
  %10143 = vmatprep.subr.mxu0 %v2520
  %10144 = vmatpush1.msra.mxu0 %v2519
  %10145 = vmatprep.subr.mxu0 %v2516
  %10146 = vmatpush1.msra.mxu0 %v2515
  %10147 = vmatprep.subr.mxu0 %v2512
  %10148 = vmatpush1.msra.mxu0 %v2511
  %10149 = vmatprep.subr.mxu0 %v2508
  %10150 = vmatpush1.msra.mxu0 %v2507
  %10151 = vmatprep.subr.mxu0 %v2504
  %10152 = vmatpush1.msra.mxu0 %v2503
  %10153 = vmatprep.subr.mxu0 %v2500
  %10154 = vmatpush1.msra.mxu0 %v2499
  %10155 = vmatprep.subr.mxu0 %v2496
  %10156 = vmatpush1.msra.mxu0 %v2495
  %10157 = vmatprep.subr.mxu0 %v2492
  %10158 = vmatpush1.msra.mxu0 %v2491
  %10159 = vmatprep.subr.mxu0 %v2488
  %10160 = vmatpush1.msra.mxu0 %v2487
  %10161 = vmatprep.subr.mxu0 %v2484
  %10162 = vmatpush1.msra.mxu0 %v2483
  %10163 = vmatprep.subr.mxu0 %v2480
  %10164 = vmatpush1.msra.mxu0 %v2479
  %10165 = vmatprep.subr.mxu0 %v2476
  %10166 = vmatpush1.msra.mxu0 %v2475
  %10167 = vmatprep.subr.mxu0 %v2472
  %10168 = vmatpush1.msra.mxu0 %v2471
  %10169 = vmatprep.subr.mxu0 %v2596
  %10170 = vmatpush2.msra.mxu0 %v2595
  %10171 = vmatprep.subr.mxu0 %v2592
  %10172 = vmatpush2.msra.mxu0 %v2591
  %10173 = vmatprep.subr.mxu0 %v2588
  %10174 = vmatpush2.msra.mxu0 %v2587
  %10175 = vmatprep.subr.mxu0 %v2584
  %10176 = vmatpush2.msra.mxu0 %v2583
  %10177 = vmatprep.subr.mxu0 %v2580
  %10178 = vmatpush2.msra.mxu0 %v2579
  %10179 = vmatprep.subr.mxu0 %v2576
  %10180 = vmatpush2.msra.mxu0 %v2575
  %10181 = vmatprep.subr.mxu0 %v2572
  %10182 = vmatpush2.msra.mxu0 %v2571
  %10183 = vmatprep.subr.mxu0 %v2568
  %10184 = vmatpush2.msra.mxu0 %v2567
  %10185 = vmatprep.subr.mxu0 %v2564
  %10186 = vmatpush2.msra.mxu0 %v2563
  %10187 = vmatprep.subr.mxu0 %v2560
  %10188 = vmatpush2.msra.mxu0 %v2559
  %10189 = vmatprep.subr.mxu0 %v2556
  %10190 = vmatpush2.msra.mxu0 %v2555
  %10191 = vmatprep.subr.mxu0 %v2552
  %10192 = vmatpush2.msra.mxu0 %v2551
  %10193 = vmatprep.subr.mxu0 %v2548
  %10194 = vmatpush2.msra.mxu0 %v2547
  %10195 = vmatprep.subr.mxu0 %v2544
  %10196 = vmatpush2.msra.mxu0 %v2543
  %10197 = vmatprep.subr.mxu0 %v2540
  %10198 = vmatpush2.msra.mxu0 %v2539
  %10199 = vmatprep.subr.mxu0 %v2536
  %10200 = vmatpush2.msra.mxu0 %v2535
  %10201 = vmatprep.mubr.f32.mxu0 %v9253
  %10202 = vmatmul.mubr.f32.gmra.mxu0 %v9251
  %v10203 = vpop.f32.mrf.mxu0
  %v10204 = vadd.f32 %v10133, %v10203
  %v10205 = vpop.f32.mrf.mxu0
  %v10206 = vadd.f32 %v10135, %v10205
  %10207 = vdwg.mxu0
  %10208 = vmatprep.subr.mxu0 %v2660
  %10209 = vmatpush1.msra.mxu0 %v2659
  %10210 = vmatprep.subr.mxu0 %v2656
  %10211 = vmatpush1.msra.mxu0 %v2655
  %10212 = vmatprep.subr.mxu0 %v2652
  %10213 = vmatpush1.msra.mxu0 %v2651
  %10214 = vmatprep.subr.mxu0 %v2648
  %10215 = vmatpush1.msra.mxu0 %v2647
  %10216 = vmatprep.subr.mxu0 %v2644
  %10217 = vmatpush1.msra.mxu0 %v2643
  %10218 = vmatprep.subr.mxu0 %v2640
  %10219 = vmatpush1.msra.mxu0 %v2639
  %10220 = vmatprep.subr.mxu0 %v2636
  %10221 = vmatpush1.msra.mxu0 %v2635
  %10222 = vmatprep.subr.mxu0 %v2632
  %10223 = vmatpush1.msra.mxu0 %v2631
  %10224 = vmatprep.subr.mxu0 %v2628
  %10225 = vmatpush1.msra.mxu0 %v2627
  %10226 = vmatprep.subr.mxu0 %v2624
  %10227 = vmatpush1.msra.mxu0 %v2623
  %10228 = vmatprep.subr.mxu0 %v2620
  %10229 = vmatpush1.msra.mxu0 %v2619
  %10230 = vmatprep.subr.mxu0 %v2616
  %10231 = vmatpush1.msra.mxu0 %v2615
  %10232 = vmatprep.subr.mxu0 %v2612
  %10233 = vmatpush1.msra.mxu0 %v2611
  %10234 = vmatprep.subr.mxu0 %v2608
  %10235 = vmatpush1.msra.mxu0 %v2607
  %10236 = vmatprep.subr.mxu0 %v2604
  %10237 = vmatpush1.msra.mxu0 %v2603
  %10238 = vmatprep.subr.mxu0 %v2600
  %10239 = vmatpush1.msra.mxu0 %v2599
  %10240 = vmatprep.subr.mxu0 %v2724
  %10241 = vmatpush2.msra.mxu0 %v2723
  %10242 = vmatprep.subr.mxu0 %v2720
  %10243 = vmatpush2.msra.mxu0 %v2719
  %10244 = vmatprep.subr.mxu0 %v2716
  %10245 = vmatpush2.msra.mxu0 %v2715
  %10246 = vmatprep.subr.mxu0 %v2712
  %10247 = vmatpush2.msra.mxu0 %v2711
  %10248 = vmatprep.subr.mxu0 %v2708
  %10249 = vmatpush2.msra.mxu0 %v2707
  %10250 = vmatprep.subr.mxu0 %v2704
  %10251 = vmatpush2.msra.mxu0 %v2703
  %10252 = vmatprep.subr.mxu0 %v2700
  %10253 = vmatpush2.msra.mxu0 %v2699
  %10254 = vmatprep.subr.mxu0 %v2696
  %10255 = vmatpush2.msra.mxu0 %v2695
  %10256 = vmatprep.subr.mxu0 %v2692
  %10257 = vmatpush2.msra.mxu0 %v2691
  %10258 = vmatprep.subr.mxu0 %v2688
  %10259 = vmatpush2.msra.mxu0 %v2687
  %10260 = vmatprep.subr.mxu0 %v2684
  %10261 = vmatpush2.msra.mxu0 %v2683
  %10262 = vmatprep.subr.mxu0 %v2680
  %10263 = vmatpush2.msra.mxu0 %v2679
  %10264 = vmatprep.subr.mxu0 %v2676
  %10265 = vmatpush2.msra.mxu0 %v2675
  %10266 = vmatprep.subr.mxu0 %v2672
  %10267 = vmatpush2.msra.mxu0 %v2671
  %10268 = vmatprep.subr.mxu0 %v2668
  %10269 = vmatpush2.msra.mxu0 %v2667
  %10270 = vmatprep.subr.mxu0 %v2664
  %10271 = vmatpush2.msra.mxu0 %v2663
  %10272 = vmatprep.mubr.f32.mxu0 %v9259
  %10273 = vmatmul.mubr.f32.gmra.mxu0 %v9257
  %v10274 = vpop.f32.mrf.mxu0
  %v10275 = vadd.f32 %v10204, %v10274
  %v10276 = vpop.f32.mrf.mxu0
  %v10277 = vadd.f32 %v10206, %v10276
  %10278 = vdwg.mxu0
  %10279 = vmatprep.subr.mxu0 %v2788
  %10280 = vmatpush1.msra.mxu0 %v2787
  %10281 = vmatprep.subr.mxu0 %v2784
  %10282 = vmatpush1.msra.mxu0 %v2783
  %10283 = vmatprep.subr.mxu0 %v2780
  %10284 = vmatpush1.msra.mxu0 %v2779
  %10285 = vmatprep.subr.mxu0 %v2776
  %10286 = vmatpush1.msra.mxu0 %v2775
  %10287 = vmatprep.subr.mxu0 %v2772
  %10288 = vmatpush1.msra.mxu0 %v2771
  %10289 = vmatprep.subr.mxu0 %v2768
  %10290 = vmatpush1.msra.mxu0 %v2767
  %10291 = vmatprep.subr.mxu0 %v2764
  %10292 = vmatpush1.msra.mxu0 %v2763
  %10293 = vmatprep.subr.mxu0 %v2760
  %10294 = vmatpush1.msra.mxu0 %v2759
  %10295 = vmatprep.subr.mxu0 %v2756
  %10296 = vmatpush1.msra.mxu0 %v2755
  %10297 = vmatprep.subr.mxu0 %v2752
  %10298 = vmatpush1.msra.mxu0 %v2751
  %10299 = vmatprep.subr.mxu0 %v2748
  %10300 = vmatpush1.msra.mxu0 %v2747
  %10301 = vmatprep.subr.mxu0 %v2744
  %10302 = vmatpush1.msra.mxu0 %v2743
  %10303 = vmatprep.subr.mxu0 %v2740
  %10304 = vmatpush1.msra.mxu0 %v2739
  %10305 = vmatprep.subr.mxu0 %v2736
  %10306 = vmatpush1.msra.mxu0 %v2735
  %10307 = vmatprep.subr.mxu0 %v2732
  %10308 = vmatpush1.msra.mxu0 %v2731
  %10309 = vmatprep.subr.mxu0 %v2728
  %10310 = vmatpush1.msra.mxu0 %v2727
  %10311 = vmatprep.subr.mxu0 %v2852
  %10312 = vmatpush2.msra.mxu0 %v2851
  %10313 = vmatprep.subr.mxu0 %v2848
  %10314 = vmatpush2.msra.mxu0 %v2847
  %10315 = vmatprep.subr.mxu0 %v2844
  %10316 = vmatpush2.msra.mxu0 %v2843
  %10317 = vmatprep.subr.mxu0 %v2840
  %10318 = vmatpush2.msra.mxu0 %v2839
  %10319 = vmatprep.subr.mxu0 %v2836
  %10320 = vmatpush2.msra.mxu0 %v2835
  %10321 = vmatprep.subr.mxu0 %v2832
  %10322 = vmatpush2.msra.mxu0 %v2831
  %10323 = vmatprep.subr.mxu0 %v2828
  %10324 = vmatpush2.msra.mxu0 %v2827
  %10325 = vmatprep.subr.mxu0 %v2824
  %10326 = vmatpush2.msra.mxu0 %v2823
  %10327 = vmatprep.subr.mxu0 %v2820
  %10328 = vmatpush2.msra.mxu0 %v2819
  %10329 = vmatprep.subr.mxu0 %v2816
  %10330 = vmatpush2.msra.mxu0 %v2815
  %10331 = vmatprep.subr.mxu0 %v2812
  %10332 = vmatpush2.msra.mxu0 %v2811
  %10333 = vmatprep.subr.mxu0 %v2808
  %10334 = vmatpush2.msra.mxu0 %v2807
  %10335 = vmatprep.subr.mxu0 %v2804
  %10336 = vmatpush2.msra.mxu0 %v2803
  %10337 = vmatprep.subr.mxu0 %v2800
  %10338 = vmatpush2.msra.mxu0 %v2799
  %10339 = vmatprep.subr.mxu0 %v2796
  %10340 = vmatpush2.msra.mxu0 %v2795
  %10341 = vmatprep.subr.mxu0 %v2792
  %10342 = vmatpush2.msra.mxu0 %v2791
  %10343 = vmatprep.mubr.f32.mxu0 %v9265
  %10344 = vmatmul.mubr.f32.gmra.mxu0 %v9263
  %v10345 = vpop.f32.mrf.mxu0
  %v10346 = vadd.f32 %v10275, %v10345
  %v10347 = vpop.f32.mrf.mxu0
  %v10348 = vadd.f32 %v10277, %v10347
  %10349 = vdwg.mxu0
  %10350 = vmatprep.subr.mxu0 %v2916
  %10351 = vmatpush1.msra.mxu0 %v2915
  %10352 = vmatprep.subr.mxu0 %v2912
  %10353 = vmatpush1.msra.mxu0 %v2911
  %10354 = vmatprep.subr.mxu0 %v2908
  %10355 = vmatpush1.msra.mxu0 %v2907
  %10356 = vmatprep.subr.mxu0 %v2904
  %10357 = vmatpush1.msra.mxu0 %v2903
  %10358 = vmatprep.subr.mxu0 %v2900
  %10359 = vmatpush1.msra.mxu0 %v2899
  %10360 = vmatprep.subr.mxu0 %v2896
  %10361 = vmatpush1.msra.mxu0 %v2895
  %10362 = vmatprep.subr.mxu0 %v2892
  %10363 = vmatpush1.msra.mxu0 %v2891
  %10364 = vmatprep.subr.mxu0 %v2888
  %10365 = vmatpush1.msra.mxu0 %v2887
  %10366 = vmatprep.subr.mxu0 %v2884
  %10367 = vmatpush1.msra.mxu0 %v2883
  %10368 = vmatprep.subr.mxu0 %v2880
  %10369 = vmatpush1.msra.mxu0 %v2879
  %10370 = vmatprep.subr.mxu0 %v2876
  %10371 = vmatpush1.msra.mxu0 %v2875
  %10372 = vmatprep.subr.mxu0 %v2872
  %10373 = vmatpush1.msra.mxu0 %v2871
  %10374 = vmatprep.subr.mxu0 %v2868
  %10375 = vmatpush1.msra.mxu0 %v2867
  %10376 = vmatprep.subr.mxu0 %v2864
  %10377 = vmatpush1.msra.mxu0 %v2863
  %10378 = vmatprep.subr.mxu0 %v2860
  %10379 = vmatpush1.msra.mxu0 %v2859
  %10380 = vmatprep.subr.mxu0 %v2856
  %10381 = vmatpush1.msra.mxu0 %v2855
  %10382 = vmatprep.subr.mxu0 %v2980
  %10383 = vmatpush2.msra.mxu0 %v2979
  %10384 = vmatprep.subr.mxu0 %v2976
  %10385 = vmatpush2.msra.mxu0 %v2975
  %10386 = vmatprep.subr.mxu0 %v2972
  %10387 = vmatpush2.msra.mxu0 %v2971
  %10388 = vmatprep.subr.mxu0 %v2968
  %10389 = vmatpush2.msra.mxu0 %v2967
  %10390 = vmatprep.subr.mxu0 %v2964
  %10391 = vmatpush2.msra.mxu0 %v2963
  %10392 = vmatprep.subr.mxu0 %v2960
  %10393 = vmatpush2.msra.mxu0 %v2959
  %10394 = vmatprep.subr.mxu0 %v2956
  %10395 = vmatpush2.msra.mxu0 %v2955
  %10396 = vmatprep.subr.mxu0 %v2952
  %10397 = vmatpush2.msra.mxu0 %v2951
  %10398 = vmatprep.subr.mxu0 %v2948
  %10399 = vmatpush2.msra.mxu0 %v2947
  %10400 = vmatprep.subr.mxu0 %v2944
  %10401 = vmatpush2.msra.mxu0 %v2943
  %10402 = vmatprep.subr.mxu0 %v2940
  %10403 = vmatpush2.msra.mxu0 %v2939
  %10404 = vmatprep.subr.mxu0 %v2936
  %10405 = vmatpush2.msra.mxu0 %v2935
  %10406 = vmatprep.subr.mxu0 %v2932
  %10407 = vmatpush2.msra.mxu0 %v2931
  %10408 = vmatprep.subr.mxu0 %v2928
  %10409 = vmatpush2.msra.mxu0 %v2927
  %10410 = vmatprep.subr.mxu0 %v2924
  %10411 = vmatpush2.msra.mxu0 %v2923
  %10412 = vmatprep.subr.mxu0 %v2920
  %10413 = vmatpush2.msra.mxu0 %v2919
  %10414 = vmatprep.mubr.f32.mxu0 %v9271
  %10415 = vmatmul.mubr.f32.gmra.mxu0 %v9269
  %v10416 = vpop.f32.mrf.mxu0
  %v10417 = vadd.f32 %v10346, %v10416
  %v10418 = vpop.f32.mrf.mxu0
  %v10419 = vadd.f32 %v10348, %v10418
  %10420 = vdwg.mxu0
  %10421 = vmatprep.subr.mxu0 %v3044
  %10422 = vmatpush1.msra.mxu0 %v3043
  %10423 = vmatprep.subr.mxu0 %v3040
  %10424 = vmatpush1.msra.mxu0 %v3039
  %10425 = vmatprep.subr.mxu0 %v3036
  %10426 = vmatpush1.msra.mxu0 %v3035
  %10427 = vmatprep.subr.mxu0 %v3032
  %10428 = vmatpush1.msra.mxu0 %v3031
  %10429 = vmatprep.subr.mxu0 %v3028
  %10430 = vmatpush1.msra.mxu0 %v3027
  %10431 = vmatprep.subr.mxu0 %v3024
  %10432 = vmatpush1.msra.mxu0 %v3023
  %10433 = vmatprep.subr.mxu0 %v3020
  %10434 = vmatpush1.msra.mxu0 %v3019
  %10435 = vmatprep.subr.mxu0 %v3016
  %10436 = vmatpush1.msra.mxu0 %v3015
  %10437 = vmatprep.subr.mxu0 %v3012
  %10438 = vmatpush1.msra.mxu0 %v3011
  %10439 = vmatprep.subr.mxu0 %v3008
  %10440 = vmatpush1.msra.mxu0 %v3007
  %10441 = vmatprep.subr.mxu0 %v3004
  %10442 = vmatpush1.msra.mxu0 %v3003
  %10443 = vmatprep.subr.mxu0 %v3000
  %10444 = vmatpush1.msra.mxu0 %v2999
  %10445 = vmatprep.subr.mxu0 %v2996
  %10446 = vmatpush1.msra.mxu0 %v2995
  %10447 = vmatprep.subr.mxu0 %v2992
  %10448 = vmatpush1.msra.mxu0 %v2991
  %10449 = vmatprep.subr.mxu0 %v2988
  %10450 = vmatpush1.msra.mxu0 %v2987
  %10451 = vmatprep.subr.mxu0 %v2984
  %10452 = vmatpush1.msra.mxu0 %v2983
  %10453 = vmatprep.subr.mxu0 %v3108
  %10454 = vmatpush2.msra.mxu0 %v3107
  %10455 = vmatprep.subr.mxu0 %v3104
  %10456 = vmatpush2.msra.mxu0 %v3103
  %10457 = vmatprep.subr.mxu0 %v3100
  %10458 = vmatpush2.msra.mxu0 %v3099
  %10459 = vmatprep.subr.mxu0 %v3096
  %10460 = vmatpush2.msra.mxu0 %v3095
  %10461 = vmatprep.subr.mxu0 %v3092
  %10462 = vmatpush2.msra.mxu0 %v3091
  %10463 = vmatprep.subr.mxu0 %v3088
  %10464 = vmatpush2.msra.mxu0 %v3087
  %10465 = vmatprep.subr.mxu0 %v3084
  %10466 = vmatpush2.msra.mxu0 %v3083
  %10467 = vmatprep.subr.mxu0 %v3080
  %10468 = vmatpush2.msra.mxu0 %v3079
  %10469 = vmatprep.subr.mxu0 %v3076
  %10470 = vmatpush2.msra.mxu0 %v3075
  %10471 = vmatprep.subr.mxu0 %v3072
  %10472 = vmatpush2.msra.mxu0 %v3071
  %10473 = vmatprep.subr.mxu0 %v3068
  %10474 = vmatpush2.msra.mxu0 %v3067
  %10475 = vmatprep.subr.mxu0 %v3064
  %10476 = vmatpush2.msra.mxu0 %v3063
  %10477 = vmatprep.subr.mxu0 %v3060
  %10478 = vmatpush2.msra.mxu0 %v3059
  %10479 = vmatprep.subr.mxu0 %v3056
  %10480 = vmatpush2.msra.mxu0 %v3055
  %10481 = vmatprep.subr.mxu0 %v3052
  %10482 = vmatpush2.msra.mxu0 %v3051
  %10483 = vmatprep.subr.mxu0 %v3048
  %10484 = vmatpush2.msra.mxu0 %v3047
  %10485 = vmatprep.mubr.f32.mxu0 %v9277
  %10486 = vmatmul.mubr.f32.gmra.mxu0 %v9275
  %v10487 = vpop.f32.mrf.mxu0
  %v10488 = vadd.f32 %v10417, %v10487
  %v10489 = vpop.f32.mrf.mxu0
  %v10490 = vadd.f32 %v10419, %v10489
  %10491 = vdwg.mxu0
  %10492 = vmatprep.subr.mxu0 %v3172
  %10493 = vmatpush1.msra.mxu0 %v3171
  %10494 = vmatprep.subr.mxu0 %v3168
  %10495 = vmatpush1.msra.mxu0 %v3167
  %10496 = vmatprep.subr.mxu0 %v3164
  %10497 = vmatpush1.msra.mxu0 %v3163
  %10498 = vmatprep.subr.mxu0 %v3160
  %10499 = vmatpush1.msra.mxu0 %v3159
  %10500 = vmatprep.subr.mxu0 %v3156
  %10501 = vmatpush1.msra.mxu0 %v3155
  %10502 = vmatprep.subr.mxu0 %v3152
  %10503 = vmatpush1.msra.mxu0 %v3151
  %10504 = vmatprep.subr.mxu0 %v3148
  %10505 = vmatpush1.msra.mxu0 %v3147
  %10506 = vmatprep.subr.mxu0 %v3144
  %10507 = vmatpush1.msra.mxu0 %v3143
  %10508 = vmatprep.subr.mxu0 %v3140
  %10509 = vmatpush1.msra.mxu0 %v3139
  %10510 = vmatprep.subr.mxu0 %v3136
  %10511 = vmatpush1.msra.mxu0 %v3135
  %10512 = vmatprep.subr.mxu0 %v3132
  %10513 = vmatpush1.msra.mxu0 %v3131
  %10514 = vmatprep.subr.mxu0 %v3128
  %10515 = vmatpush1.msra.mxu0 %v3127
  %10516 = vmatprep.subr.mxu0 %v3124
  %10517 = vmatpush1.msra.mxu0 %v3123
  %10518 = vmatprep.subr.mxu0 %v3120
  %10519 = vmatpush1.msra.mxu0 %v3119
  %10520 = vmatprep.subr.mxu0 %v3116
  %10521 = vmatpush1.msra.mxu0 %v3115
  %10522 = vmatprep.subr.mxu0 %v3112
  %10523 = vmatpush1.msra.mxu0 %v3111
  %10524 = vmatprep.subr.mxu0 %v3236
  %10525 = vmatpush2.msra.mxu0 %v3235
  %10526 = vmatprep.subr.mxu0 %v3232
  %10527 = vmatpush2.msra.mxu0 %v3231
  %10528 = vmatprep.subr.mxu0 %v3228
  %10529 = vmatpush2.msra.mxu0 %v3227
  %10530 = vmatprep.subr.mxu0 %v3224
  %10531 = vmatpush2.msra.mxu0 %v3223
  %10532 = vmatprep.subr.mxu0 %v3220
  %10533 = vmatpush2.msra.mxu0 %v3219
  %10534 = vmatprep.subr.mxu0 %v3216
  %10535 = vmatpush2.msra.mxu0 %v3215
  %10536 = vmatprep.subr.mxu0 %v3212
  %10537 = vmatpush2.msra.mxu0 %v3211
  %10538 = vmatprep.subr.mxu0 %v3208
  %10539 = vmatpush2.msra.mxu0 %v3207
  %10540 = vmatprep.subr.mxu0 %v3204
  %10541 = vmatpush2.msra.mxu0 %v3203
  %10542 = vmatprep.subr.mxu0 %v3200
  %10543 = vmatpush2.msra.mxu0 %v3199
  %10544 = vmatprep.subr.mxu0 %v3196
  %10545 = vmatpush2.msra.mxu0 %v3195
  %10546 = vmatprep.subr.mxu0 %v3192
  %10547 = vmatpush2.msra.mxu0 %v3191
  %10548 = vmatprep.subr.mxu0 %v3188
  %10549 = vmatpush2.msra.mxu0 %v3187
  %10550 = vmatprep.subr.mxu0 %v3184
  %10551 = vmatpush2.msra.mxu0 %v3183
  %10552 = vmatprep.subr.mxu0 %v3180
  %10553 = vmatpush2.msra.mxu0 %v3179
  %10554 = vmatprep.subr.mxu0 %v3176
  %10555 = vmatpush2.msra.mxu0 %v3175
  %10556 = vmatprep.mubr.f32.mxu0 %v9283
  %10557 = vmatmul.mubr.f32.gmra.mxu0 %v9281
  %v10558 = vpop.f32.mrf.mxu0
  %v10559 = vadd.f32 %v10488, %v10558
  %v10560 = vpop.f32.mrf.mxu0
  %v10561 = vadd.f32 %v10490, %v10560
  %10562 = vdwg.mxu0
  %v10563 = vmax.f32 %v9920, 0.0
  %v10564 = vmax.f32 %v9922, 0.0
  %v10565 = vmax.f32 %v10559, 0.0
  %v10566 = vmax.f32 %v10561, 0.0
  %v10567 = vlaneseq
  %v10568 = vshrl.u32 %v10567, 7
  %v10569 = vlaneseq
  %v10570 = vand.u32 %v10569, 127
  %v10571 = vmul.u32 %v10568, 8
  %vm10572 = vcmp.ge.s32.totalorder %v10570, %v10571
  %v10573 = vadd.s32 %v10571, 4
  %vm10574 = vcmp.lt.s32.totalorder %v10570, %v10573
  %vm10575 = vmand %vm10572, %vm10574
  %v10576 = vsel %vm10575, 0.25, 0.0
  %v10578 = vsel %vm5513, %v10576, 0
  %10580 = vmatprep.subr.mxu0 0.0
  %10581 = vmatpush1.msra.mxu0 0.0
  %10582 = vmatprep.subr.mxu0 0.0
  %10583 = vmatpush1.msra.mxu0 0.0
  %10584 = vmatprep.subr.mxu0 0.0
  %10585 = vmatpush1.msra.mxu0 0.0
  %10586 = vmatprep.subr.mxu0 0.0
  %10587 = vmatpush1.msra.mxu0 0.0
  %10588 = vmatprep.subr.mxu0 0.0
  %10589 = vmatpush1.msra.mxu0 0.0
  %10590 = vmatprep.subr.mxu0 0.0
  %10591 = vmatpush1.msra.mxu0 0.0
  %10592 = vmatprep.subr.mxu0 0.0
  %10593 = vmatpush1.msra.mxu0 0.0
  %10594 = vmatprep.subr.mxu0 0.0
  %10595 = vmatpush1.msra.mxu0 0.0
  %10596 = vmatprep.subr.mxu0 0.0
  %10597 = vmatpush1.msra.mxu0 0.0
  %10598 = vmatprep.subr.mxu0 0.0
  %10599 = vmatpush1.msra.mxu0 0.0
  %10600 = vmatprep.subr.mxu0 0.0
  %10601 = vmatpush1.msra.mxu0 0.0
  %10602 = vmatprep.subr.mxu0 0.0
  %10603 = vmatpush1.msra.mxu0 0.0
  %10604 = vmatprep.subr.mxu0 0.0
  %10605 = vmatpush1.msra.mxu0 0.0
  %10606 = vmatprep.subr.mxu0 0.0
  %10607 = vmatpush1.msra.mxu0 0.0
  %10608 = vmatprep.subr.mxu0 %v10564
  %10609 = vmatpush1.msra.mxu0 %v10563
  %10610 = vmatprep.subr.mxu0 %v6961
  %10611 = vmatpush1.msra.mxu0 %v6960
  %10612 = vmatprep.subr.mxu0 0.0
  %10613 = vmatpush2.msra.mxu0 0.0
  %10614 = vmatprep.subr.mxu0 0.0
  %10615 = vmatpush2.msra.mxu0 0.0
  %10616 = vmatprep.subr.mxu0 0.0
  %10617 = vmatpush2.msra.mxu0 0.0
  %10618 = vmatprep.subr.mxu0 0.0
  %10619 = vmatpush2.msra.mxu0 0.0
  %10620 = vmatprep.subr.mxu0 0.0
  %10621 = vmatpush2.msra.mxu0 0.0
  %10622 = vmatprep.subr.mxu0 0.0
  %10623 = vmatpush2.msra.mxu0 0.0
  %10624 = vmatprep.subr.mxu0 0.0
  %10625 = vmatpush2.msra.mxu0 0.0
  %10626 = vmatprep.subr.mxu0 0.0
  %10627 = vmatpush2.msra.mxu0 0.0
  %10628 = vmatprep.subr.mxu0 0.0
  %10629 = vmatpush2.msra.mxu0 0.0
  %10630 = vmatprep.subr.mxu0 0.0
  %10631 = vmatpush2.msra.mxu0 0.0
  %10632 = vmatprep.subr.mxu0 0.0
  %10633 = vmatpush2.msra.mxu0 0.0
  %10634 = vmatprep.subr.mxu0 0.0
  %10635 = vmatpush2.msra.mxu0 0.0
  %10636 = vmatprep.subr.mxu0 0.0
  %10637 = vmatpush2.msra.mxu0 0.0
  %10638 = vmatprep.subr.mxu0 0.0
  %10639 = vmatpush2.msra.mxu0 0.0
  %10640 = vmatprep.subr.mxu0 0.0
  %10641 = vmatpush2.msra.mxu0 0.0
  %10642 = vmatprep.subr.mxu0 0.0
  %10643 = vmatpush2.msra.mxu0 0.0
  %10644 = vmatprep.mubr.f32.mxu0 0.0
  %10645 = vmatmul.mubr.f32.gmra.mxu0 %v10578
  %v10646 = vpop.f32.mrf.mxu0
  %v10647 = vadd.f32 0.0, %v10646
  %v10648 = vpop.f32.mrf.mxu0
  %v10649 = vadd.f32 0.0, %v10648
  %10650 = vdwg.mxu0
  %10651 = vmatprep.subr.mxu0 0.0
  %10652 = vmatpush1.msra.mxu0 0.0
  %10653 = vmatprep.subr.mxu0 0.0
  %10654 = vmatpush1.msra.mxu0 0.0
  %10655 = vmatprep.subr.mxu0 0.0
  %10656 = vmatpush1.msra.mxu0 0.0
  %10657 = vmatprep.subr.mxu0 0.0
  %10658 = vmatpush1.msra.mxu0 0.0
  %10659 = vmatprep.subr.mxu0 0.0
  %10660 = vmatpush1.msra.mxu0 0.0
  %10661 = vmatprep.subr.mxu0 0.0
  %10662 = vmatpush1.msra.mxu0 0.0
  %10663 = vmatprep.subr.mxu0 0.0
  %10664 = vmatpush1.msra.mxu0 0.0
  %10665 = vmatprep.subr.mxu0 0.0
  %10666 = vmatpush1.msra.mxu0 0.0
  %10667 = vmatprep.subr.mxu0 0.0
  %10668 = vmatpush1.msra.mxu0 0.0
  %10669 = vmatprep.subr.mxu0 0.0
  %10670 = vmatpush1.msra.mxu0 0.0
  %10671 = vmatprep.subr.mxu0 0.0
  %10672 = vmatpush1.msra.mxu0 0.0
  %10673 = vmatprep.subr.mxu0 0.0
  %10674 = vmatpush1.msra.mxu0 0.0
  %10675 = vmatprep.subr.mxu0 0.0
  %10676 = vmatpush1.msra.mxu0 0.0
  %10677 = vmatprep.subr.mxu0 0.0
  %10678 = vmatpush1.msra.mxu0 0.0
  %10679 = vmatprep.subr.mxu0 %v10566
  %10680 = vmatpush1.msra.mxu0 %v10565
  %10681 = vmatprep.subr.mxu0 %v6963
  %10682 = vmatpush1.msra.mxu0 %v6962
  %10683 = vmatprep.subr.mxu0 0.0
  %10684 = vmatpush2.msra.mxu0 0.0
  %10685 = vmatprep.subr.mxu0 0.0
  %10686 = vmatpush2.msra.mxu0 0.0
  %10687 = vmatprep.subr.mxu0 0.0
  %10688 = vmatpush2.msra.mxu0 0.0
  %10689 = vmatprep.subr.mxu0 0.0
  %10690 = vmatpush2.msra.mxu0 0.0
  %10691 = vmatprep.subr.mxu0 0.0
  %10692 = vmatpush2.msra.mxu0 0.0
  %10693 = vmatprep.subr.mxu0 0.0
  %10694 = vmatpush2.msra.mxu0 0.0
  %10695 = vmatprep.subr.mxu0 0.0
  %10696 = vmatpush2.msra.mxu0 0.0
  %10697 = vmatprep.subr.mxu0 0.0
  %10698 = vmatpush2.msra.mxu0 0.0
  %10699 = vmatprep.subr.mxu0 0.0
  %10700 = vmatpush2.msra.mxu0 0.0
  %10701 = vmatprep.subr.mxu0 0.0
  %10702 = vmatpush2.msra.mxu0 0.0
  %10703 = vmatprep.subr.mxu0 0.0
  %10704 = vmatpush2.msra.mxu0 0.0
  %10705 = vmatprep.subr.mxu0 0.0
  %10706 = vmatpush2.msra.mxu0 0.0
  %10707 = vmatprep.subr.mxu0 0.0
  %10708 = vmatpush2.msra.mxu0 0.0
  %10709 = vmatprep.subr.mxu0 0.0
  %10710 = vmatpush2.msra.mxu0 0.0
  %10711 = vmatprep.subr.mxu0 0.0
  %10712 = vmatpush2.msra.mxu0 0.0
  %10713 = vmatprep.subr.mxu0 0.0
  %10714 = vmatpush2.msra.mxu0 0.0
  %10715 = vmatprep.mubr.f32.mxu0 0.0
  %10716 = vmatmul.mubr.f32.gmra.mxu0 %v10578
  %v10717 = vpop.f32.mrf.mxu0
  %v10718 = vadd.f32 0.0, %v10717
  %v10719 = vpop.f32.mrf.mxu0
  %v10720 = vadd.f32 0.0, %v10719
  %10721 = vdwg.mxu0
  %v10722 = vld [vmem:[%s12] sm:$0xf]
  %v10723 = vld [vmem:[%s12 + $0x4] sm:$0xf]
  %v10724 = vld [vmem:[%s12 + $0x8] sm:$0xf]
  %v10725 = vld [vmem:[%s12 + $0xc] sm:$0xf]
  %v10726 = vld [vmem:[%s12 + $0x10] sm:$0xf]
  %v10727 = vld [vmem:[%s12 + $0x14] sm:$0xf]
  %v10728 = vld [vmem:[%s12 + $0x18] sm:$0xf]
  %v10729 = vld [vmem:[%s12 + $0x1c] sm:$0xf]
  %v10730 = vld [vmem:[%s12 + $0x20] sm:$0xf]
  %v10731 = vld [vmem:[%s12 + $0x24] sm:$0xf]
  %v10732 = vld [vmem:[%s12 + $0x28] sm:$0xf]
  %v10733 = vld [vmem:[%s12 + $0x2c] sm:$0xf]
  %v10734 = vld [vmem:[%s12 + $0x30] sm:$0xf]
  %v10735 = vld [vmem:[%s12 + $0x34] sm:$0xf]
  %v10736 = vld [vmem:[%s12 + $0x38] sm:$0xf]
  %v10737 = vld [vmem:[%s12 + $0x3c] sm:$0xf]
  %v10738 = vld [vmem:[%s12 + $0x40] sm:$0xf]
  %v10739 = vld [vmem:[%s12 + $0x44] sm:$0xf]
  %v10740 = vld [vmem:[%s12 + $0x48] sm:$0xf]
  %v10741 = vld [vmem:[%s12 + $0x4c] sm:$0xf]
  %v10742 = vld [vmem:[%s12 + $0x50] sm:$0xf]
  %v10743 = vld [vmem:[%s12 + $0x54] sm:$0xf]
  %v10744 = vld [vmem:[%s12 + $0x58] sm:$0xf]
  %v10745 = vld [vmem:[%s12 + $0x5c] sm:$0xf]
  %v10746 = vld [vmem:[%s12 + $0x60] sm:$0xf]
  %v10747 = vld [vmem:[%s12 + $0x64] sm:$0xf]
  %v10748 = vld [vmem:[%s12 + $0x68] sm:$0xf]
  %v10749 = vld [vmem:[%s12 + $0x6c] sm:$0xf]
  %v10750 = vld [vmem:[%s12 + $0x70] sm:$0xf]
  %v10751 = vld [vmem:[%s12 + $0x74] sm:$0xf]
  %v10752 = vld [vmem:[%s12 + $0x78] sm:$0xf]
  %v10753 = vld [vmem:[%s12 + $0x7c] sm:$0xf]
  %v10754 = vld [vmem:[%s12 + $0x80] sm:$0xf]
  %v10755 = vld [vmem:[%s12 + $0x84] sm:$0xf]
  %v10756 = vld [vmem:[%s12 + $0x88] sm:$0xf]
  %v10757 = vld [vmem:[%s12 + $0x8c] sm:$0xf]
  %v10758 = vld [vmem:[%s12 + $0x90] sm:$0xf]
  %v10759 = vld [vmem:[%s12 + $0x94] sm:$0xf]
  %v10760 = vld [vmem:[%s12 + $0x98] sm:$0xf]
  %v10761 = vld [vmem:[%s12 + $0x9c] sm:$0xf]
  %v10762 = vld [vmem:[%s12 + $0xa0] sm:$0xf]
  %v10763 = vld [vmem:[%s12 + $0xa4] sm:$0xf]
  %v10764 = vld [vmem:[%s12 + $0xa8] sm:$0xf]
  %v10765 = vld [vmem:[%s12 + $0xac] sm:$0xf]
  %v10766 = vld [vmem:[%s12 + $0xb0] sm:$0xf]
  %v10767 = vld [vmem:[%s12 + $0xb4] sm:$0xf]
  %v10768 = vld [vmem:[%s12 + $0xb8] sm:$0xf]
  %v10769 = vld [vmem:[%s12 + $0xbc] sm:$0xf]
  %v10770 = vld [vmem:[%s12 + $0xc0] sm:$0xf]
  %v10771 = vld [vmem:[%s12 + $0xc4] sm:$0xf]
  %v10772 = vld [vmem:[%s12 + $0xc8] sm:$0xf]
  %v10773 = vld [vmem:[%s12 + $0xcc] sm:$0xf]
  %v10774 = vld [vmem:[%s12 + $0xd0] sm:$0xf]
  %v10775 = vld [vmem:[%s12 + $0xd4] sm:$0xf]
  %v10776 = vld [vmem:[%s12 + $0xd8] sm:$0xf]
  %v10777 = vld [vmem:[%s12 + $0xdc] sm:$0xf]
  %v10778 = vld [vmem:[%s12 + $0xe0] sm:$0xf]
  %v10779 = vld [vmem:[%s12 + $0xe4] sm:$0xf]
  %v10780 = vld [vmem:[%s12 + $0xe8] sm:$0xf]
  %v10781 = vld [vmem:[%s12 + $0xec] sm:$0xf]
  %v10782 = vld [vmem:[%s12 + $0xf0] sm:$0xf]
  %v10783 = vld [vmem:[%s12 + $0xf4] sm:$0xf]
  %v10784 = vld [vmem:[%s12 + $0xf8] sm:$0xf]
  %v10785 = vld [vmem:[%s12 + $0xfc] sm:$0xf]
  %v10786 = vunpack.c.l.bf16 %v10722
  %v10787 = vunpack.c.l.bf16 %v10723
  %v10788 = vunpack.c.l.bf16 %v10724
  %v10789 = vunpack.c.l.bf16 %v10725
  %v10790 = vunpack.c.l.bf16 %v10726
  %v10791 = vunpack.c.l.bf16 %v10727
  %v10792 = vunpack.c.l.bf16 %v10728
  %v10793 = vunpack.c.l.bf16 %v10729
  %v10794 = vunpack.c.l.bf16 %v10730
  %v10795 = vunpack.c.l.bf16 %v10731
  %v10796 = vunpack.c.l.bf16 %v10732
  %v10797 = vunpack.c.l.bf16 %v10733
  %v10798 = vunpack.c.l.bf16 %v10734
  %v10799 = vunpack.c.l.bf16 %v10735
  %v10800 = vunpack.c.l.bf16 %v10736
  %v10801 = vunpack.c.l.bf16 %v10737
  %v10802 = vunpack.c.l.bf16 %v10738
  %v10803 = vunpack.c.l.bf16 %v10739
  %v10804 = vunpack.c.l.bf16 %v10740
  %v10805 = vunpack.c.l.bf16 %v10741
  %v10806 = vunpack.c.l.bf16 %v10742
  %v10807 = vunpack.c.l.bf16 %v10743
  %v10808 = vunpack.c.l.bf16 %v10744
  %v10809 = vunpack.c.l.bf16 %v10745
  %v10810 = vunpack.c.l.bf16 %v10746
  %v10811 = vunpack.c.l.bf16 %v10747
  %v10812 = vunpack.c.l.bf16 %v10748
  %v10813 = vunpack.c.l.bf16 %v10749
  %v10814 = vunpack.c.l.bf16 %v10750
  %v10815 = vunpack.c.l.bf16 %v10751
  %v10816 = vunpack.c.l.bf16 %v10752
  %v10817 = vunpack.c.l.bf16 %v10753
  %v10818 = vunpack.c.l.bf16 %v10754
  %v10819 = vunpack.c.l.bf16 %v10755
  %v10820 = vunpack.c.l.bf16 %v10756
  %v10821 = vunpack.c.l.bf16 %v10757
  %v10822 = vunpack.c.l.bf16 %v10758
  %v10823 = vunpack.c.l.bf16 %v10759
  %v10824 = vunpack.c.l.bf16 %v10760
  %v10825 = vunpack.c.l.bf16 %v10761
  %v10826 = vunpack.c.l.bf16 %v10762
  %v10827 = vunpack.c.l.bf16 %v10763
  %v10828 = vunpack.c.l.bf16 %v10764
  %v10829 = vunpack.c.l.bf16 %v10765
  %v10830 = vunpack.c.l.bf16 %v10766
  %v10831 = vunpack.c.l.bf16 %v10767
  %v10832 = vunpack.c.l.bf16 %v10768
  %v10833 = vunpack.c.l.bf16 %v10769
  %v10834 = vunpack.c.l.bf16 %v10770
  %v10835 = vunpack.c.l.bf16 %v10771
  %v10836 = vunpack.c.l.bf16 %v10772
  %v10837 = vunpack.c.l.bf16 %v10773
  %v10838 = vunpack.c.l.bf16 %v10774
  %v10839 = vunpack.c.l.bf16 %v10775
  %v10840 = vunpack.c.l.bf16 %v10776
  %v10841 = vunpack.c.l.bf16 %v10777
  %v10842 = vunpack.c.l.bf16 %v10778
  %v10843 = vunpack.c.l.bf16 %v10779
  %v10844 = vunpack.c.l.bf16 %v10780
  %v10845 = vunpack.c.l.bf16 %v10781
  %v10846 = vunpack.c.l.bf16 %v10782
  %v10847 = vunpack.c.l.bf16 %v10783
  %v10848 = vunpack.c.l.bf16 %v10784
  %v10849 = vunpack.c.l.bf16 %v10785
  %v10850 = vld [vmem:[%s13] sm:$0x1]
  %v10852 = vlaneseq
  %v10853 = vshrl.u32 %v10852, 7
  %v10854 = vsub.s32 0, %v10853
  %v10855 = vrot.slane %v10850, %v10854
  %10857 = vmatprep.subr.mxu0 0.0
  %10858 = vmatpush1.msra.mxu0 %v10801
  %10859 = vmatprep.subr.mxu0 0.0
  %10860 = vmatpush1.msra.mxu0 %v10800
  %10861 = vmatprep.subr.mxu0 0.0
  %10862 = vmatpush1.msra.mxu0 %v10799
  %10863 = vmatprep.subr.mxu0 0.0
  %10864 = vmatpush1.msra.mxu0 %v10798
  %10865 = vmatprep.subr.mxu0 0.0
  %10866 = vmatpush1.msra.mxu0 %v10797
  %10867 = vmatprep.subr.mxu0 0.0
  %10868 = vmatpush1.msra.mxu0 %v10796
  %10869 = vmatprep.subr.mxu0 0.0
  %10870 = vmatpush1.msra.mxu0 %v10795
  %10871 = vmatprep.subr.mxu0 0.0
  %10872 = vmatpush1.msra.mxu0 %v10794
  %10873 = vmatprep.subr.mxu0 0.0
  %10874 = vmatpush1.msra.mxu0 %v10793
  %10875 = vmatprep.subr.mxu0 0.0
  %10876 = vmatpush1.msra.mxu0 %v10792
  %10877 = vmatprep.subr.mxu0 0.0
  %10878 = vmatpush1.msra.mxu0 %v10791
  %10879 = vmatprep.subr.mxu0 0.0
  %10880 = vmatpush1.msra.mxu0 %v10790
  %10881 = vmatprep.subr.mxu0 0.0
  %10882 = vmatpush1.msra.mxu0 %v10789
  %10883 = vmatprep.subr.mxu0 0.0
  %10884 = vmatpush1.msra.mxu0 %v10788
  %10885 = vmatprep.subr.mxu0 0.0
  %10886 = vmatpush1.msra.mxu0 %v10787
  %10887 = vmatprep.subr.mxu0 0.0
  %10888 = vmatpush1.msra.mxu0 %v10786
  %10889 = vmatprep.subr.mxu0 0.0
  %10890 = vmatpush2.msra.mxu0 %v10817
  %10891 = vmatprep.subr.mxu0 0.0
  %10892 = vmatpush2.msra.mxu0 %v10816
  %10893 = vmatprep.subr.mxu0 0.0
  %10894 = vmatpush2.msra.mxu0 %v10815
  %10895 = vmatprep.subr.mxu0 0.0
  %10896 = vmatpush2.msra.mxu0 %v10814
  %10897 = vmatprep.subr.mxu0 0.0
  %10898 = vmatpush2.msra.mxu0 %v10813
  %10899 = vmatprep.subr.mxu0 0.0
  %10900 = vmatpush2.msra.mxu0 %v10812
  %10901 = vmatprep.subr.mxu0 0.0
  %10902 = vmatpush2.msra.mxu0 %v10811
  %10903 = vmatprep.subr.mxu0 0.0
  %10904 = vmatpush2.msra.mxu0 %v10810
  %10905 = vmatprep.subr.mxu0 0.0
  %10906 = vmatpush2.msra.mxu0 %v10809
  %10907 = vmatprep.subr.mxu0 0.0
  %10908 = vmatpush2.msra.mxu0 %v10808
  %10909 = vmatprep.subr.mxu0 0.0
  %10910 = vmatpush2.msra.mxu0 %v10807
  %10911 = vmatprep.subr.mxu0 0.0
  %10912 = vmatpush2.msra.mxu0 %v10806
  %10913 = vmatprep.subr.mxu0 0.0
  %10914 = vmatpush2.msra.mxu0 %v10805
  %10915 = vmatprep.subr.mxu0 0.0
  %10916 = vmatpush2.msra.mxu0 %v10804
  %10917 = vmatprep.subr.mxu0 0.0
  %10918 = vmatpush2.msra.mxu0 %v10803
  %10919 = vmatprep.subr.mxu0 0.0
  %10920 = vmatpush2.msra.mxu0 %v10802
  %10921 = vmatprep.mubr.f32.mxu0 %v10649
  %10922 = vmatmul.mubr.f32.gmra.mxu0 %v10647
  %v10923 = vpop.f32.mrf.mxu0
  %v10924 = vadd.f32 %v10855, %v10923
  %v10925 = vpop.f32.mrf.mxu0
  %10926 = vdwg.mxu0
  %10927 = vmatprep.subr.mxu0 0.0
  %10928 = vmatpush1.msra.mxu0 %v10833
  %10929 = vmatprep.subr.mxu0 0.0
  %10930 = vmatpush1.msra.mxu0 %v10832
  %10931 = vmatprep.subr.mxu0 0.0
  %10932 = vmatpush1.msra.mxu0 %v10831
  %10933 = vmatprep.subr.mxu0 0.0
  %10934 = vmatpush1.msra.mxu0 %v10830
  %10935 = vmatprep.subr.mxu0 0.0
  %10936 = vmatpush1.msra.mxu0 %v10829
  %10937 = vmatprep.subr.mxu0 0.0
  %10938 = vmatpush1.msra.mxu0 %v10828
  %10939 = vmatprep.subr.mxu0 0.0
  %10940 = vmatpush1.msra.mxu0 %v10827
  %10941 = vmatprep.subr.mxu0 0.0
  %10942 = vmatpush1.msra.mxu0 %v10826
  %10943 = vmatprep.subr.mxu0 0.0
  %10944 = vmatpush1.msra.mxu0 %v10825
  %10945 = vmatprep.subr.mxu0 0.0
  %10946 = vmatpush1.msra.mxu0 %v10824
  %10947 = vmatprep.subr.mxu0 0.0
  %10948 = vmatpush1.msra.mxu0 %v10823
  %10949 = vmatprep.subr.mxu0 0.0
  %10950 = vmatpush1.msra.mxu0 %v10822
  %10951 = vmatprep.subr.mxu0 0.0
  %10952 = vmatpush1.msra.mxu0 %v10821
  %10953 = vmatprep.subr.mxu0 0.0
  %10954 = vmatpush1.msra.mxu0 %v10820
  %10955 = vmatprep.subr.mxu0 0.0
  %10956 = vmatpush1.msra.mxu0 %v10819
  %10957 = vmatprep.subr.mxu0 0.0
  %10958 = vmatpush1.msra.mxu0 %v10818
  %10959 = vmatprep.subr.mxu0 0.0
  %10960 = vmatpush2.msra.mxu0 %v10849
  %10961 = vmatprep.subr.mxu0 0.0
  %10962 = vmatpush2.msra.mxu0 %v10848
  %10963 = vmatprep.subr.mxu0 0.0
  %10964 = vmatpush2.msra.mxu0 %v10847
  %10965 = vmatprep.subr.mxu0 0.0
  %10966 = vmatpush2.msra.mxu0 %v10846
  %10967 = vmatprep.subr.mxu0 0.0
  %10968 = vmatpush2.msra.mxu0 %v10845
  %10969 = vmatprep.subr.mxu0 0.0
  %10970 = vmatpush2.msra.mxu0 %v10844
  %10971 = vmatprep.subr.mxu0 0.0
  %10972 = vmatpush2.msra.mxu0 %v10843
  %10973 = vmatprep.subr.mxu0 0.0
  %10974 = vmatpush2.msra.mxu0 %v10842
  %10975 = vmatprep.subr.mxu0 0.0
  %10976 = vmatpush2.msra.mxu0 %v10841
  %10977 = vmatprep.subr.mxu0 0.0
  %10978 = vmatpush2.msra.mxu0 %v10840
  %10979 = vmatprep.subr.mxu0 0.0
  %10980 = vmatpush2.msra.mxu0 %v10839
  %10981 = vmatprep.subr.mxu0 0.0
  %10982 = vmatpush2.msra.mxu0 %v10838
  %10983 = vmatprep.subr.mxu0 0.0
  %10984 = vmatpush2.msra.mxu0 %v10837
  %10985 = vmatprep.subr.mxu0 0.0
  %10986 = vmatpush2.msra.mxu0 %v10836
  %10987 = vmatprep.subr.mxu0 0.0
  %10988 = vmatpush2.msra.mxu0 %v10835
  %10989 = vmatprep.subr.mxu0 0.0
  %10990 = vmatpush2.msra.mxu0 %v10834
  %10991 = vmatprep.mubr.f32.mxu0 %v10720
  %10992 = vmatmul.mubr.f32.gmra.mxu0 %v10718
  %v10993 = vpop.f32.mrf.mxu0
  %v10994 = vadd.f32 %v10924, %v10993
  %v10995 = vpop.f32.mrf.mxu0
  %10996 = vdwg.mxu0
  %10997 = vst [vmem:[%s14] sm:$0x3] %v10994
  // Predicated region
  $region58: #{cnn_planner_forward.1} parent=0 // pred_check
    _
  $region59: #{cnn_planner_forward.1} parent=0 // pred_check_branch
    %10999 = sbr.rel (0) target = $region61
  $region60: #{cnn_planner_forward.1} parent=0 // pred_region
    _
  $region61: #{cnn_planner_forward.1} parent=0 // pred_fallthru
    _
  // Predicated region
  $region62: #{cnn_planner_forward.1} parent=0 // pred_check
    _
  $region63: #{cnn_planner_forward.1} parent=0 // pred_check_branch
    %11001 = sbr.rel (0) target = $region65
  $region64: #{cnn_planner_forward.1} parent=0 // pred_region
    _
  $region65: #{cnn_planner_forward.1} parent=0 // pred_fallthru
    _

</llo_original>
